<compile_context>
chip_gen: v5e
topology: v5e:2x2
jax: 0.10.0
libtpu: 0.0.40
codegen_flags: <defaults>
</compile_context>

<pallas_src>
import functools
import math

import jax
import jax.numpy as jnp
from jax.experimental import pallas as pl
from jax.experimental.pallas import tpu as pltpu


def _round_up(x, m):
    return (x + m - 1) // m * m


def _embedding_kernel(ids_ref, table_hbm, out_ref, sem, *,
                      tokens_per_block, scale):
    """Gather `tokens_per_block` embedding rows into out_ref and scale.

    ids_ref   : SMEM (n_total,) int32            token ids (scalar-prefetched)
    table_hbm : HBM  (vocab, d_model)            embedding table (manual DMA only)
    out_ref   : VMEM (tokens_per_block, d_model) output block (DMA landing + store)
    sem       : shared DMA semaphore for all row copies of this block
    """
    base = pl.program_id(0) * tokens_per_block

    # Issue every row-gather DMA up front so they are all in flight together.
    # Static unroll keeps the scalar core / LLO scheduler fully aware of the
    # descriptor chain.
    for j in range(tokens_per_block):
        tok = ids_ref[base + j]
        pltpu.make_async_copy(table_hbm.at[tok], out_ref.at[j], sem).start()

    # Wait for each row on the shared semaphore. Constant source index and
    # static destination index => zero SMEM reads after the first .wait()
    # (only the shape/dst/sem of a wait descriptor matter).
    for j in range(tokens_per_block):
        pltpu.make_async_copy(table_hbm.at[0], out_ref.at[j], sem).wait()

    # One dense VPU pass: scale in f32, cast once, lane-dense store.
    out_ref[...] = (out_ref[...].astype(jnp.float32)
                    * jnp.float32(scale)).astype(out_ref.dtype)


def embeddings_pallas(ids, table, *, tokens_per_block=128):
    """Pallas equivalent of `Embeddings.forward`: table[ids] * sqrt(d_model)."""
    orig_shape = tuple(ids.shape)
    vocab, d_model = table.shape
    itemsize = jnp.dtype(table.dtype).itemsize

    # Sublane packing: f32 -> 8 rows, bf16 -> 16, int8/fp8 -> 32.
    row_align = 8 * max(1, 4 // itemsize)

    n_tok = int(math.prod(orig_shape))
    flat_ids = ids.reshape(n_tok).astype(jnp.int32)

    # Block size: as large as requested, aligned to sublane packing, never
    # (much) larger than the padded token stream.
    t = min(tokens_per_block, _round_up(n_tok, row_align))
    t = max(row_align, _round_up(t, row_align))

    # Pad the token stream so the grid tiles it evenly. Padded slots gather
    # row 0 (always in-bounds) and are sliced off afterwards.
    n_pad = (-n_tok) % t
    if n_pad:
        flat_ids = jnp.concatenate(
            [flat_ids, jnp.zeros((n_pad,), jnp.int32)], axis=0)
    n_total = n_tok + n_pad
    grid = (n_total // t,)

    kernel = functools.partial(
        _embedding_kernel,
        tokens_per_block=t,
        scale=float(math.sqrt(d_model)),
    )

    cost = pl.CostEstimate(
        flops=n_total * d_model,                       # one mul per element
        transcendentals=0,
        bytes_accessed=2 * n_total * d_model * itemsize + 4 * n_total,
    )

    out_flat = pl.pallas_call(
        kernel,
        out_shape=jax.ShapeDtypeStruct((n_total, d_model), table.dtype),
        grid_spec=pltpu.PrefetchScalarGridSpec(
            num_scalar_prefetch=1,                       # flat_ids -> SMEM
            grid=grid,
            in_specs=[pl.BlockSpec(memory_space=pl.ANY)],  # table stays in HBM
            out_specs=pl.BlockSpec((t, d_model), lambda i, ids: (i, 0)),
            scratch_shapes=[pltpu.SemaphoreType.DMA(())],
        ),
        compiler_params=pltpu.CompilerParams(
            dimension_semantics=("parallel",)),
        cost_estimate=cost,
    )(flat_ids, table)

    return out_flat[:n_tok].reshape(*orig_shape, d_model)


def embeddings_ref(ids, table):
    """Pure-JAX reference mirroring the PyTorch forward."""
    d_model = table.shape[1]
    return jnp.take(table, ids, axis=0) * math.sqrt(d_model)


if __name__ == "__main__":
    B, S = 4, 64                  # batch, sequence of token ids
    VOCAB, D_MODEL = 1024, 128    # (8, 128)-tile friendly, 2 grid steps

    key = jax.random.PRNGKey(0)
    k_ids, k_tab = jax.random.split(key)
    ids = jax.random.randint(k_ids, (B, S), 0, VOCAB, dtype=jnp.int32)
    table = jax.random.normal(k_tab, (VOCAB, D_MODEL), jnp.float32)

    out = jax.block_until_ready(embeddings_pallas(ids, table))
    ref = embeddings_ref(ids, table)

    assert out.shape == (B, S, D_MODEL)
    assert jnp.allclose(out, ref, atol=1e-5, rtol=1e-5), \
        f"max abs diff {jnp.max(jnp.abs(out - ref))}"

    print("KERNEL_OK")
</pallas_src>

<mosaic_0001>
module attributes {stable_mosaic.version = 11 : i64} {
  func.func @_embedding_kernel(%arg0: i32, %arg1: memref<256xi32, #tpu.memory_space<smem>>, %arg2: memref<1024x128xf32, #tpu.memory_space<any>>, %arg3: memref<128x128xf32, #tpu.memory_space<vmem>>, %arg4: memref<!tpu.dma_semaphore, #tpu.memory_space<semaphore_mem>>) attributes {dimension_semantics = [#tpu.dimension_semantics<parallel>], iteration_bounds = array<i64: 2>, scalar_prefetch = 1 : i64, scratch_operands = 1 : i64, tpu.core_type = #tpu.core_type<tc>, window_params = [{}, {transform_indices = @transform_1, window_bounds = array<i64: 128, 128>}]} {
    %c128_i32 = arith.constant 128 : i32
    %0 = arith.muli %arg0, %c128_i32 : i32
    %c0_i32 = arith.constant 0 : i32
    %1 = arith.addi %0, %c0_i32 : i32
    %2 = arith.index_cast %1 : i32 to index
    %3 = memref.load %arg1[%2] : memref<256xi32, #tpu.memory_space<smem>>
    %c0_i32_0 = arith.constant 0 : i32
    %c0_i32_1 = arith.constant 0 : i32
    %4 = tpu.memref_slice %arg2[%3, %c0_i32_1] : memref<1024x128xf32, #tpu.memory_space<any>> -> memref<1x128xf32, #tpu.memory_space<any>>
    %5 = tpu.memref_squeeze %4 : memref<1x128xf32, #tpu.memory_space<any>> -> memref<128xf32, #tpu.memory_space<any>>
    %c0_i32_2 = arith.constant 0 : i32
    %6 = tpu.memref_slice %arg3[%c0_i32_0, %c0_i32_2] : memref<128x128xf32, #tpu.memory_space<vmem>> -> memref<1x128xf32, #tpu.memory_space<vmem>>
    %7 = tpu.memref_squeeze %6 : memref<1x128xf32, #tpu.memory_space<vmem>> -> memref<128xf32, #tpu.memory_space<vmem>>
    tpu.enqueue_dma source(%5 : memref<128xf32, #tpu.memory_space<any>>) target(%7 : memref<128xf32, #tpu.memory_space<vmem>>) target_semaphore(%arg4 : memref<!tpu.dma_semaphore, #tpu.memory_space<semaphore_mem>>)
    %c1_i32 = arith.constant 1 : i32
    %8 = arith.addi %0, %c1_i32 : i32
    %9 = arith.index_cast %8 : i32 to index
    %10 = memref.load %arg1[%9] : memref<256xi32, #tpu.memory_space<smem>>
    %c1_i32_3 = arith.constant 1 : i32
    %c0_i32_4 = arith.constant 0 : i32
    %11 = tpu.memref_slice %arg2[%10, %c0_i32_4] : memref<1024x128xf32, #tpu.memory_space<any>> -> memref<1x128xf32, #tpu.memory_space<any>>
    %12 = tpu.memref_squeeze %11 : memref<1x128xf32, #tpu.memory_space<any>> -> memref<128xf32, #tpu.memory_space<any>>
    %c0_i32_5 = arith.constant 0 : i32
    %13 = tpu.memref_slice %arg3[%c1_i32_3, %c0_i32_5] : memref<128x128xf32, #tpu.memory_space<vmem>> -> memref<1x128xf32, #tpu.memory_space<vmem>>
    %14 = tpu.memref_squeeze %13 : memref<1x128xf32, #tpu.memory_space<vmem>> -> memref<128xf32, #tpu.memory_space<vmem>>
    tpu.enqueue_dma source(%12 : memref<128xf32, #tpu.memory_space<any>>) target(%14 : memref<128xf32, #tpu.memory_space<vmem>>) target_semaphore(%arg4 : memref<!tpu.dma_semaphore, #tpu.memory_space<semaphore_mem>>)
    %c2_i32 = arith.constant 2 : i32
    %15 = arith.addi %0, %c2_i32 : i32
    %16 = arith.index_cast %15 : i32 to index
    %17 = memref.load %arg1[%16] : memref<256xi32, #tpu.memory_space<smem>>
    %c2_i32_6 = arith.constant 2 : i32
    %c0_i32_7 = arith.constant 0 : i32
    %18 = tpu.memref_slice %arg2[%17, %c0_i32_7] : memref<1024x128xf32, #tpu.memory_space<any>> -> memref<1x128xf32, #tpu.memory_space<any>>
    %19 = tpu.memref_squeeze %18 : memref<1x128xf32, #tpu.memory_space<any>> -> memref<128xf32, #tpu.memory_space<any>>
    %c0_i32_8 = arith.constant 0 : i32
    %20 = tpu.memref_slice %arg3[%c2_i32_6, %c0_i32_8] : memref<128x128xf32, #tpu.memory_space<vmem>> -> memref<1x128xf32, #tpu.memory_space<vmem>>
    %21 = tpu.memref_squeeze %20 : memref<1x128xf32, #tpu.memory_space<vmem>> -> memref<128xf32, #tpu.memory_space<vmem>>
    tpu.enqueue_dma source(%19 : memref<128xf32, #tpu.memory_space<any>>) target(%21 : memref<128xf32, #tpu.memory_space<vmem>>) target_semaphore(%arg4 : memref<!tpu.dma_semaphore, #tpu.memory_space<semaphore_mem>>)
    %c3_i32 = arith.constant 3 : i32
    %22 = arith.addi %0, %c3_i32 : i32
    %23 = arith.index_cast %22 : i32 to index
    %24 = memref.load %arg1[%23] : memref<256xi32, #tpu.memory_space<smem>>
    %c3_i32_9 = arith.constant 3 : i32
    %c0_i32_10 = arith.constant 0 : i32
    %25 = tpu.memref_slice %arg2[%24, %c0_i32_10] : memref<1024x128xf32, #tpu.memory_space<any>> -> memref<1x128xf32, #tpu.memory_space<any>>
    %26 = tpu.memref_squeeze %25 : memref<1x128xf32, #tpu.memory_space<any>> -> memref<128xf32, #tpu.memory_space<any>>
    %c0_i32_11 = arith.constant 0 : i32
    %27 = tpu.memref_slice %arg3[%c3_i32_9, %c0_i32_11] : memref<128x128xf32, #tpu.memory_space<vmem>> -> memref<1x128xf32, #tpu.memory_space<vmem>>
    %28 = tpu.memref_squeeze %27 : memref<1x128xf32, #tpu.memory_space<vmem>> -> memref<128xf32, #tpu.memory_space<vmem>>
    tpu.enqueue_dma source(%26 : memref<128xf32, #tpu.memory_space<any>>) target(%28 : memref<128xf32, #tpu.memory_space<vmem>>) target_semaphore(%arg4 : memref<!tpu.dma_semaphore, #tpu.memory_space<semaphore_mem>>)
    %c4_i32 = arith.constant 4 : i32
    %29 = arith.addi %0, %c4_i32 : i32
    %30 = arith.index_cast %29 : i32 to index
    %31 = memref.load %arg1[%30] : memref<256xi32, #tpu.memory_space<smem>>
    %c4_i32_12 = arith.constant 4 : i32
    %c0_i32_13 = arith.constant 0 : i32
    %32 = tpu.memref_slice %arg2[%31, %c0_i32_13] : memref<1024x128xf32, #tpu.memory_space<any>> -> memref<1x128xf32, #tpu.memory_space<any>>
    %33 = tpu.memref_squeeze %32 : memref<1x128xf32, #tpu.memory_space<any>> -> memref<128xf32, #tpu.memory_space<any>>
    %c0_i32_14 = arith.constant 0 : i32
    %34 = tpu.memref_slice %arg3[%c4_i32_12, %c0_i32_14] : memref<128x128xf32, #tpu.memory_space<vmem>> -> memref<1x128xf32, #tpu.memory_space<vmem>>
    %35 = tpu.memref_squeeze %34 : memref<1x128xf32, #tpu.memory_space<vmem>> -> memref<128xf32, #tpu.memory_space<vmem>>
    tpu.enqueue_dma source(%33 : memref<128xf32, #tpu.memory_space<any>>) target(%35 : memref<128xf32, #tpu.memory_space<vmem>>) target_semaphore(%arg4 : memref<!tpu.dma_semaphore, #tpu.memory_space<semaphore_mem>>)
    %c5_i32 = arith.constant 5 : i32
    %36 = arith.addi %0, %c5_i32 : i32
    %37 = arith.index_cast %36 : i32 to index
    %38 = memref.load %arg1[%37] : memref<256xi32, #tpu.memory_space<smem>>
    %c5_i32_15 = arith.constant 5 : i32
    %c0_i32_16 = arith.constant 0 : i32
    %39 = tpu.memref_slice %arg2[%38, %c0_i32_16] : memref<1024x128xf32, #tpu.memory_space<any>> -> memref<1x128xf32, #tpu.memory_space<any>>
    %40 = tpu.memref_squeeze %39 : memref<1x128xf32, #tpu.memory_space<any>> -> memref<128xf32, #tpu.memory_space<any>>
    %c0_i32_17 = arith.constant 0 : i32
    %41 = tpu.memref_slice %arg3[%c5_i32_15, %c0_i32_17] : memref<128x128xf32, #tpu.memory_space<vmem>> -> memref<1x128xf32, #tpu.memory_space<vmem>>
    %42 = tpu.memref_squeeze %41 : memref<1x128xf32, #tpu.memory_space<vmem>> -> memref<128xf32, #tpu.memory_space<vmem>>
    tpu.enqueue_dma source(%40 : memref<128xf32, #tpu.memory_space<any>>) target(%42 : memref<128xf32, #tpu.memory_space<vmem>>) target_semaphore(%arg4 : memref<!tpu.dma_semaphore, #tpu.memory_space<semaphore_mem>>)
    %c6_i32 = arith.constant 6 : i32
    %43 = arith.addi %0, %c6_i32 : i32
    %44 = arith.index_cast %43 : i32 to index
    %45 = memref.load %arg1[%44] : memref<256xi32, #tpu.memory_space<smem>>
    %c6_i32_18 = arith.constant 6 : i32
    %c0_i32_19 = arith.constant 0 : i32
    %46 = tpu.memref_slice %arg2[%45, %c0_i32_19] : memref<1024x128xf32, #tpu.memory_space<any>> -> memref<1x128xf32, #tpu.memory_space<any>>
    %47 = tpu.memref_squeeze %46 : memref<1x128xf32, #tpu.memory_space<any>> -> memref<128xf32, #tpu.memory_space<any>>
    %c0_i32_20 = arith.constant 0 : i32
    %48 = tpu.memref_slice %arg3[%c6_i32_18, %c0_i32_20] : memref<128x128xf32, #tpu.memory_space<vmem>> -> memref<1x128xf32, #tpu.memory_space<vmem>>
    %49 = tpu.memref_squeeze %48 : memref<1x128xf32, #tpu.memory_space<vmem>> -> memref<128xf32, #tpu.memory_space<vmem>>
    tpu.enqueue_dma source(%47 : memref<128xf32, #tpu.memory_space<any>>) target(%49 : memref<128xf32, #tpu.memory_space<vmem>>) target_semaphore(%arg4 : memref<!tpu.dma_semaphore, #tpu.memory_space<semaphore_mem>>)
    %c7_i32 = arith.constant 7 : i32
    %50 = arith.addi %0, %c7_i32 : i32
    %51 = arith.index_cast %50 : i32 to index
    %52 = memref.load %arg1[%51] : memref<256xi32, #tpu.memory_space<smem>>
    %c7_i32_21 = arith.constant 7 : i32
    %c0_i32_22 = arith.constant 0 : i32
    %53 = tpu.memref_slice %arg2[%52, %c0_i32_22] : memref<1024x128xf32, #tpu.memory_space<any>> -> memref<1x128xf32, #tpu.memory_space<any>>
    %54 = tpu.memref_squeeze %53 : memref<1x128xf32, #tpu.memory_space<any>> -> memref<128xf32, #tpu.memory_space<any>>
    %c0_i32_23 = arith.constant 0 : i32
    %55 = tpu.memref_slice %arg3[%c7_i32_21, %c0_i32_23] : memref<128x128xf32, #tpu.memory_space<vmem>> -> memref<1x128xf32, #tpu.memory_space<vmem>>
    %56 = tpu.memref_squeeze %55 : memref<1x128xf32, #tpu.memory_space<vmem>> -> memref<128xf32, #tpu.memory_space<vmem>>
    tpu.enqueue_dma source(%54 : memref<128xf32, #tpu.memory_space<any>>) target(%56 : memref<128xf32, #tpu.memory_space<vmem>>) target_semaphore(%arg4 : memref<!tpu.dma_semaphore, #tpu.memory_space<semaphore_mem>>)
    %c8_i32 = arith.constant 8 : i32
    %57 = arith.addi %0, %c8_i32 : i32
    %58 = arith.index_cast %57 : i32 to index
    %59 = memref.load %arg1[%58] : memref<256xi32, #tpu.memory_space<smem>>
    %c8_i32_24 = arith.constant 8 : i32
    %c0_i32_25 = arith.constant 0 : i32
    %60 = tpu.memref_slice %arg2[%59, %c0_i32_25] : memref<1024x128xf32, #tpu.memory_space<any>> -> memref<1x128xf32, #tpu.memory_space<any>>
    %61 = tpu.memref_squeeze %60 : memref<1x128xf32, #tpu.memory_space<any>> -> memref<128xf32, #tpu.memory_space<any>>
    %c0_i32_26 = arith.constant 0 : i32
    %62 = tpu.memref_slice %arg3[%c8_i32_24, %c0_i32_26] : memref<128x128xf32, #tpu.memory_space<vmem>> -> memref<1x128xf32, #tpu.memory_space<vmem>>
    %63 = tpu.memref_squeeze %62 : memref<1x128xf32, #tpu.memory_space<vmem>> -> memref<128xf32, #tpu.memory_space<vmem>>
    tpu.enqueue_dma source(%61 : memref<128xf32, #tpu.memory_space<any>>) target(%63 : memref<128xf32, #tpu.memory_space<vmem>>) target_semaphore(%arg4 : memref<!tpu.dma_semaphore, #tpu.memory_space<semaphore_mem>>)
    %c9_i32 = arith.constant 9 : i32
    %64 = arith.addi %0, %c9_i32 : i32
    %65 = arith.index_cast %64 : i32 to index
    %66 = memref.load %arg1[%65] : memref<256xi32, #tpu.memory_space<smem>>
    %c9_i32_27 = arith.constant 9 : i32
    %c0_i32_28 = arith.constant 0 : i32
    %67 = tpu.memref_slice %arg2[%66, %c0_i32_28] : memref<1024x128xf32, #tpu.memory_space<any>> -> memref<1x128xf32, #tpu.memory_space<any>>
    %68 = tpu.memref_squeeze %67 : memref<1x128xf32, #tpu.memory_space<any>> -> memref<128xf32, #tpu.memory_space<any>>
    %c0_i32_29 = arith.constant 0 : i32
    %69 = tpu.memref_slice %arg3[%c9_i32_27, %c0_i32_29] : memref<128x128xf32, #tpu.memory_space<vmem>> -> memref<1x128xf32, #tpu.memory_space<vmem>>
    %70 = tpu.memref_squeeze %69 : memref<1x128xf32, #tpu.memory_space<vmem>> -> memref<128xf32, #tpu.memory_space<vmem>>
    tpu.enqueue_dma source(%68 : memref<128xf32, #tpu.memory_space<any>>) target(%70 : memref<128xf32, #tpu.memory_space<vmem>>) target_semaphore(%arg4 : memref<!tpu.dma_semaphore, #tpu.memory_space<semaphore_mem>>)
    %c10_i32 = arith.constant 10 : i32
    %71 = arith.addi %0, %c10_i32 : i32
    %72 = arith.index_cast %71 : i32 to index
    %73 = memref.load %arg1[%72] : memref<256xi32, #tpu.memory_space<smem>>
    %c10_i32_30 = arith.constant 10 : i32
    %c0_i32_31 = arith.constant 0 : i32
    %74 = tpu.memref_slice %arg2[%73, %c0_i32_31] : memref<1024x128xf32, #tpu.memory_space<any>> -> memref<1x128xf32, #tpu.memory_space<any>>
    %75 = tpu.memref_squeeze %74 : memref<1x128xf32, #tpu.memory_space<any>> -> memref<128xf32, #tpu.memory_space<any>>
    %c0_i32_32 = arith.constant 0 : i32
    %76 = tpu.memref_slice %arg3[%c10_i32_30, %c0_i32_32] : memref<128x128xf32, #tpu.memory_space<vmem>> -> memref<1x128xf32, #tpu.memory_space<vmem>>
    %77 = tpu.memref_squeeze %76 : memref<1x128xf32, #tpu.memory_space<vmem>> -> memref<128xf32, #tpu.memory_space<vmem>>
    tpu.enqueue_dma source(%75 : memref<128xf32, #tpu.memory_space<any>>) target(%77 : memref<128xf32, #tpu.memory_space<vmem>>) target_semaphore(%arg4 : memref<!tpu.dma_semaphore, #tpu.memory_space<semaphore_mem>>)
    %c11_i32 = arith.constant 11 : i32
    %78 = arith.addi %0, %c11_i32 : i32
    %79 = arith.index_cast %78 : i32 to index
    %80 = memref.load %arg1[%79] : memref<256xi32, #tpu.memory_space<smem>>
    %c11_i32_33 = arith.constant 11 : i32
    %c0_i32_34 = arith.constant 0 : i32
    %81 = tpu.memref_slice %arg2[%80, %c0_i32_34] : memref<1024x128xf32, #tpu.memory_space<any>> -> memref<1x128xf32, #tpu.memory_space<any>>
    %82 = tpu.memref_squeeze %81 : memref<1x128xf32, #tpu.memory_space<any>> -> memref<128xf32, #tpu.memory_space<any>>
    %c0_i32_35 = arith.constant 0 : i32
    %83 = tpu.memref_slice %arg3[%c11_i32_33, %c0_i32_35] : memref<128x128xf32, #tpu.memory_space<vmem>> -> memref<1x128xf32, #tpu.memory_space<vmem>>
    %84 = tpu.memref_squeeze %83 : memref<1x128xf32, #tpu.memory_space<vmem>> -> memref<128xf32, #tpu.memory_space<vmem>>
    tpu.enqueue_dma source(%82 : memref<128xf32, #tpu.memory_space<any>>) target(%84 : memref<128xf32, #tpu.memory_space<vmem>>) target_semaphore(%arg4 : memref<!tpu.dma_semaphore, #tpu.memory_space<semaphore_mem>>)
    %c12_i32 = arith.constant 12 : i32
    %85 = arith.addi %0, %c12_i32 : i32
    %86 = arith.index_cast %85 : i32 to index
    %87 = memref.load %arg1[%86] : memref<256xi32, #tpu.memory_space<smem>>
    %c12_i32_36 = arith.constant 12 : i32
    %c0_i32_37 = arith.constant 0 : i32
    %88 = tpu.memref_slice %arg2[%87, %c0_i32_37] : memref<1024x128xf32, #tpu.memory_space<any>> -> memref<1x128xf32, #tpu.memory_space<any>>
    %89 = tpu.memref_squeeze %88 : memref<1x128xf32, #tpu.memory_space<any>> -> memref<128xf32, #tpu.memory_space<any>>
    %c0_i32_38 = arith.constant 0 : i32
    %90 = tpu.memref_slice %arg3[%c12_i32_36, %c0_i32_38] : memref<128x128xf32, #tpu.memory_space<vmem>> -> memref<1x128xf32, #tpu.memory_space<vmem>>
    %91 = tpu.memref_squeeze %90 : memref<1x128xf32, #tpu.memory_space<vmem>> -> memref<128xf32, #tpu.memory_space<vmem>>
    tpu.enqueue_dma source(%89 : memref<128xf32, #tpu.memory_space<any>>) target(%91 : memref<128xf32, #tpu.memory_space<vmem>>) target_semaphore(%arg4 : memref<!tpu.dma_semaphore, #tpu.memory_space<semaphore_mem>>)
    %c13_i32 = arith.constant 13 : i32
    %92 = arith.addi %0, %c13_i32 : i32
    %93 = arith.index_cast %92 : i32 to index
    %94 = memref.load %arg1[%93] : memref<256xi32, #tpu.memory_space<smem>>
    %c13_i32_39 = arith.constant 13 : i32
    %c0_i32_40 = arith.constant 0 : i32
    %95 = tpu.memref_slice %arg2[%94, %c0_i32_40] : memref<1024x128xf32, #tpu.memory_space<any>> -> memref<1x128xf32, #tpu.memory_space<any>>
    %96 = tpu.memref_squeeze %95 : memref<1x128xf32, #tpu.memory_space<any>> -> memref<128xf32, #tpu.memory_space<any>>
    %c0_i32_41 = arith.constant 0 : i32
    %97 = tpu.memref_slice %arg3[%c13_i32_39, %c0_i32_41] : memref<128x128xf32, #tpu.memory_space<vmem>> -> memref<1x128xf32, #tpu.memory_space<vmem>>
    %98 = tpu.memref_squeeze %97 : memref<1x128xf32, #tpu.memory_space<vmem>> -> memref<128xf32, #tpu.memory_space<vmem>>
    tpu.enqueue_dma source(%96 : memref<128xf32, #tpu.memory_space<any>>) target(%98 : memref<128xf32, #tpu.memory_space<vmem>>) target_semaphore(%arg4 : memref<!tpu.dma_semaphore, #tpu.memory_space<semaphore_mem>>)
    %c14_i32 = arith.constant 14 : i32
    %99 = arith.addi %0, %c14_i32 : i32
    %100 = arith.index_cast %99 : i32 to index
    %101 = memref.load %arg1[%100] : memref<256xi32, #tpu.memory_space<smem>>
    %c14_i32_42 = arith.constant 14 : i32
    %c0_i32_43 = arith.constant 0 : i32
    %102 = tpu.memref_slice %arg2[%101, %c0_i32_43] : memref<1024x128xf32, #tpu.memory_space<any>> -> memref<1x128xf32, #tpu.memory_space<any>>
    %103 = tpu.memref_squeeze %102 : memref<1x128xf32, #tpu.memory_space<any>> -> memref<128xf32, #tpu.memory_space<any>>
    %c0_i32_44 = arith.constant 0 : i32
    %104 = tpu.memref_slice %arg3[%c14_i32_42, %c0_i32_44] : memref<128x128xf32, #tpu.memory_space<vmem>> -> memref<1x128xf32, #tpu.memory_space<vmem>>
    %105 = tpu.memref_squeeze %104 : memref<1x128xf32, #tpu.memory_space<vmem>> -> memref<128xf32, #tpu.memory_space<vmem>>
    tpu.enqueue_dma source(%103 : memref<128xf32, #tpu.memory_space<any>>) target(%105 : memref<128xf32, #tpu.memory_space<vmem>>) target_semaphore(%arg4 : memref<!tpu.dma_semaphore, #tpu.memory_space<semaphore_mem>>)
    %c15_i32 = arith.constant 15 : i32
    %106 = arith.addi %0, %c15_i32 : i32
    %107 = arith.index_cast %106 : i32 to index
    %108 = memref.load %arg1[%107] : memref<256xi32, #tpu.memory_space<smem>>
    %c15_i32_45 = arith.constant 15 : i32
    %c0_i32_46 = arith.constant 0 : i32
    %109 = tpu.memref_slice %arg2[%108, %c0_i32_46] : memref<1024x128xf32, #tpu.memory_space<any>> -> memref<1x128xf32, #tpu.memory_space<any>>
    %110 = tpu.memref_squeeze %109 : memref<1x128xf32, #tpu.memory_space<any>> -> memref<128xf32, #tpu.memory_space<any>>
    %c0_i32_47 = arith.constant 0 : i32
    %111 = tpu.memref_slice %arg3[%c15_i32_45, %c0_i32_47] : memref<128x128xf32, #tpu.memory_space<vmem>> -> memref<1x128xf32, #tpu.memory_space<vmem>>
    %112 = tpu.memref_squeeze %111 : memref<1x128xf32, #tpu.memory_space<vmem>> -> memref<128xf32, #tpu.memory_space<vmem>>
    tpu.enqueue_dma source(%110 : memref<128xf32, #tpu.memory_space<any>>) target(%112 : memref<128xf32, #tpu.memory_space<vmem>>) target_semaphore(%arg4 : memref<!tpu.dma_semaphore, #tpu.memory_space<semaphore_mem>>)
    %c16_i32 = arith.constant 16 : i32
    %113 = arith.addi %0, %c16_i32 : i32
    %114 = arith.index_cast %113 : i32 to index
    %115 = memref.load %arg1[%114] : memref<256xi32, #tpu.memory_space<smem>>
    %c16_i32_48 = arith.constant 16 : i32
    %c0_i32_49 = arith.constant 0 : i32
    %116 = tpu.memref_slice %arg2[%115, %c0_i32_49] : memref<1024x128xf32, #tpu.memory_space<any>> -> memref<1x128xf32, #tpu.memory_space<any>>
    %117 = tpu.memref_squeeze %116 : memref<1x128xf32, #tpu.memory_space<any>> -> memref<128xf32, #tpu.memory_space<any>>
    %c0_i32_50 = arith.constant 0 : i32
    %118 = tpu.memref_slice %arg3[%c16_i32_48, %c0_i32_50] : memref<128x128xf32, #tpu.memory_space<vmem>> -> memref<1x128xf32, #tpu.memory_space<vmem>>
    %119 = tpu.memref_squeeze %118 : memref<1x128xf32, #tpu.memory_space<vmem>> -> memref<128xf32, #tpu.memory_space<vmem>>
    tpu.enqueue_dma source(%117 : memref<128xf32, #tpu.memory_space<any>>) target(%119 : memref<128xf32, #tpu.memory_space<vmem>>) target_semaphore(%arg4 : memref<!tpu.dma_semaphore, #tpu.memory_space<semaphore_mem>>)
    %c17_i32 = arith.constant 17 : i32
    %120 = arith.addi %0, %c17_i32 : i32
    %121 = arith.index_cast %120 : i32 to index
    %122 = memref.load %arg1[%121] : memref<256xi32, #tpu.memory_space<smem>>
    %c17_i32_51 = arith.constant 17 : i32
    %c0_i32_52 = arith.constant 0 : i32
    %123 = tpu.memref_slice %arg2[%122, %c0_i32_52] : memref<1024x128xf32, #tpu.memory_space<any>> -> memref<1x128xf32, #tpu.memory_space<any>>
    %124 = tpu.memref_squeeze %123 : memref<1x128xf32, #tpu.memory_space<any>> -> memref<128xf32, #tpu.memory_space<any>>
    %c0_i32_53 = arith.constant 0 : i32
    %125 = tpu.memref_slice %arg3[%c17_i32_51, %c0_i32_53] : memref<128x128xf32, #tpu.memory_space<vmem>> -> memref<1x128xf32, #tpu.memory_space<vmem>>
    %126 = tpu.memref_squeeze %125 : memref<1x128xf32, #tpu.memory_space<vmem>> -> memref<128xf32, #tpu.memory_space<vmem>>
    tpu.enqueue_dma source(%124 : memref<128xf32, #tpu.memory_space<any>>) target(%126 : memref<128xf32, #tpu.memory_space<vmem>>) target_semaphore(%arg4 : memref<!tpu.dma_semaphore, #tpu.memory_space<semaphore_mem>>)
    %c18_i32 = arith.constant 18 : i32
    %127 = arith.addi %0, %c18_i32 : i32
    %128 = arith.index_cast %127 : i32 to index
    %129 = memref.load %arg1[%128] : memref<256xi32, #tpu.memory_space<smem>>
    %c18_i32_54 = arith.constant 18 : i32
    %c0_i32_55 = arith.constant 0 : i32
    %130 = tpu.memref_slice %arg2[%129, %c0_i32_55] : memref<1024x128xf32, #tpu.memory_space<any>> -> memref<1x128xf32, #tpu.memory_space<any>>
    %131 = tpu.memref_squeeze %130 : memref<1x128xf32, #tpu.memory_space<any>> -> memref<128xf32, #tpu.memory_space<any>>
    %c0_i32_56 = arith.constant 0 : i32
    %132 = tpu.memref_slice %arg3[%c18_i32_54, %c0_i32_56] : memref<128x128xf32, #tpu.memory_space<vmem>> -> memref<1x128xf32, #tpu.memory_space<vmem>>
    %133 = tpu.memref_squeeze %132 : memref<1x128xf32, #tpu.memory_space<vmem>> -> memref<128xf32, #tpu.memory_space<vmem>>
    tpu.enqueue_dma source(%131 : memref<128xf32, #tpu.memory_space<any>>) target(%133 : memref<128xf32, #tpu.memory_space<vmem>>) target_semaphore(%arg4 : memref<!tpu.dma_semaphore, #tpu.memory_space<semaphore_mem>>)
    %c19_i32 = arith.constant 19 : i32
    %134 = arith.addi %0, %c19_i32 : i32
    %135 = arith.index_cast %134 : i32 to index
    %136 = memref.load %arg1[%135] : memref<256xi32, #tpu.memory_space<smem>>
    %c19_i32_57 = arith.constant 19 : i32
    %c0_i32_58 = arith.constant 0 : i32
    %137 = tpu.memref_slice %arg2[%136, %c0_i32_58] : memref<1024x128xf32, #tpu.memory_space<any>> -> memref<1x128xf32, #tpu.memory_space<any>>
    %138 = tpu.memref_squeeze %137 : memref<1x128xf32, #tpu.memory_space<any>> -> memref<128xf32, #tpu.memory_space<any>>
    %c0_i32_59 = arith.constant 0 : i32
    %139 = tpu.memref_slice %arg3[%c19_i32_57, %c0_i32_59] : memref<128x128xf32, #tpu.memory_space<vmem>> -> memref<1x128xf32, #tpu.memory_space<vmem>>
    %140 = tpu.memref_squeeze %139 : memref<1x128xf32, #tpu.memory_space<vmem>> -> memref<128xf32, #tpu.memory_space<vmem>>
    tpu.enqueue_dma source(%138 : memref<128xf32, #tpu.memory_space<any>>) target(%140 : memref<128xf32, #tpu.memory_space<vmem>>) target_semaphore(%arg4 : memref<!tpu.dma_semaphore, #tpu.memory_space<semaphore_mem>>)
    %c20_i32 = arith.constant 20 : i32
    %141 = arith.addi %0, %c20_i32 : i32
    %142 = arith.index_cast %141 : i32 to index
    %143 = memref.load %arg1[%142] : memref<256xi32, #tpu.memory_space<smem>>
    %c20_i32_60 = arith.constant 20 : i32
    %c0_i32_61 = arith.constant 0 : i32
    %144 = tpu.memref_slice %arg2[%143, %c0_i32_61] : memref<1024x128xf32, #tpu.memory_space<any>> -> memref<1x128xf32, #tpu.memory_space<any>>
    %145 = tpu.memref_squeeze %144 : memref<1x128xf32, #tpu.memory_space<any>> -> memref<128xf32, #tpu.memory_space<any>>
    %c0_i32_62 = arith.constant 0 : i32
    %146 = tpu.memref_slice %arg3[%c20_i32_60, %c0_i32_62] : memref<128x128xf32, #tpu.memory_space<vmem>> -> memref<1x128xf32, #tpu.memory_space<vmem>>
    %147 = tpu.memref_squeeze %146 : memref<1x128xf32, #tpu.memory_space<vmem>> -> memref<128xf32, #tpu.memory_space<vmem>>
    tpu.enqueue_dma source(%145 : memref<128xf32, #tpu.memory_space<any>>) target(%147 : memref<128xf32, #tpu.memory_space<vmem>>) target_semaphore(%arg4 : memref<!tpu.dma_semaphore, #tpu.memory_space<semaphore_mem>>)
    %c21_i32 = arith.constant 21 : i32
    %148 = arith.addi %0, %c21_i32 : i32
    %149 = arith.index_cast %148 : i32 to index
    %150 = memref.load %arg1[%149] : memref<256xi32, #tpu.memory_space<smem>>
    %c21_i32_63 = arith.constant 21 : i32
    %c0_i32_64 = arith.constant 0 : i32
    %151 = tpu.memref_slice %arg2[%150, %c0_i32_64] : memref<1024x128xf32, #tpu.memory_space<any>> -> memref<1x128xf32, #tpu.memory_space<any>>
    %152 = tpu.memref_squeeze %151 : memref<1x128xf32, #tpu.memory_space<any>> -> memref<128xf32, #tpu.memory_space<any>>
    %c0_i32_65 = arith.constant 0 : i32
    %153 = tpu.memref_slice %arg3[%c21_i32_63, %c0_i32_65] : memref<128x128xf32, #tpu.memory_space<vmem>> -> memref<1x128xf32, #tpu.memory_space<vmem>>
    %154 = tpu.memref_squeeze %153 : memref<1x128xf32, #tpu.memory_space<vmem>> -> memref<128xf32, #tpu.memory_space<vmem>>
    tpu.enqueue_dma source(%152 : memref<128xf32, #tpu.memory_space<any>>) target(%154 : memref<128xf32, #tpu.memory_space<vmem>>) target_semaphore(%arg4 : memref<!tpu.dma_semaphore, #tpu.memory_space<semaphore_mem>>)
    %c22_i32 = arith.constant 22 : i32
    %155 = arith.addi %0, %c22_i32 : i32
    %156 = arith.index_cast %155 : i32 to index
    %157 = memref.load %arg1[%156] : memref<256xi32, #tpu.memory_space<smem>>
    %c22_i32_66 = arith.constant 22 : i32
    %c0_i32_67 = arith.constant 0 : i32
    %158 = tpu.memref_slice %arg2[%157, %c0_i32_67] : memref<1024x128xf32, #tpu.memory_space<any>> -> memref<1x128xf32, #tpu.memory_space<any>>
    %159 = tpu.memref_squeeze %158 : memref<1x128xf32, #tpu.memory_space<any>> -> memref<128xf32, #tpu.memory_space<any>>
    %c0_i32_68 = arith.constant 0 : i32
    %160 = tpu.memref_slice %arg3[%c22_i32_66, %c0_i32_68] : memref<128x128xf32, #tpu.memory_space<vmem>> -> memref<1x128xf32, #tpu.memory_space<vmem>>
    %161 = tpu.memref_squeeze %160 : memref<1x128xf32, #tpu.memory_space<vmem>> -> memref<128xf32, #tpu.memory_space<vmem>>
    tpu.enqueue_dma source(%159 : memref<128xf32, #tpu.memory_space<any>>) target(%161 : memref<128xf32, #tpu.memory_space<vmem>>) target_semaphore(%arg4 : memref<!tpu.dma_semaphore, #tpu.memory_space<semaphore_mem>>)
    %c23_i32 = arith.constant 23 : i32
    %162 = arith.addi %0, %c23_i32 : i32
    %163 = arith.index_cast %162 : i32 to index
    %164 = memref.load %arg1[%163] : memref<256xi32, #tpu.memory_space<smem>>
    %c23_i32_69 = arith.constant 23 : i32
    %c0_i32_70 = arith.constant 0 : i32
    %165 = tpu.memref_slice %arg2[%164, %c0_i32_70] : memref<1024x128xf32, #tpu.memory_space<any>> -> memref<1x128xf32, #tpu.memory_space<any>>
    %166 = tpu.memref_squeeze %165 : memref<1x128xf32, #tpu.memory_space<any>> -> memref<128xf32, #tpu.memory_space<any>>
    %c0_i32_71 = arith.constant 0 : i32
    %167 = tpu.memref_slice %arg3[%c23_i32_69, %c0_i32_71] : memref<128x128xf32, #tpu.memory_space<vmem>> -> memref<1x128xf32, #tpu.memory_space<vmem>>
    %168 = tpu.memref_squeeze %167 : memref<1x128xf32, #tpu.memory_space<vmem>> -> memref<128xf32, #tpu.memory_space<vmem>>
    tpu.enqueue_dma source(%166 : memref<128xf32, #tpu.memory_space<any>>) target(%168 : memref<128xf32, #tpu.memory_space<vmem>>) target_semaphore(%arg4 : memref<!tpu.dma_semaphore, #tpu.memory_space<semaphore_mem>>)
    %c24_i32 = arith.constant 24 : i32
    %169 = arith.addi %0, %c24_i32 : i32
    %170 = arith.index_cast %169 : i32 to index
    %171 = memref.load %arg1[%170] : memref<256xi32, #tpu.memory_space<smem>>
    %c24_i32_72 = arith.constant 24 : i32
    %c0_i32_73 = arith.constant 0 : i32
    %172 = tpu.memref_slice %arg2[%171, %c0_i32_73] : memref<1024x128xf32, #tpu.memory_space<any>> -> memref<1x128xf32, #tpu.memory_space<any>>
    %173 = tpu.memref_squeeze %172 : memref<1x128xf32, #tpu.memory_space<any>> -> memref<128xf32, #tpu.memory_space<any>>
    %c0_i32_74 = arith.constant 0 : i32
    %174 = tpu.memref_slice %arg3[%c24_i32_72, %c0_i32_74] : memref<128x128xf32, #tpu.memory_space<vmem>> -> memref<1x128xf32, #tpu.memory_space<vmem>>
    %175 = tpu.memref_squeeze %174 : memref<1x128xf32, #tpu.memory_space<vmem>> -> memref<128xf32, #tpu.memory_space<vmem>>
    tpu.enqueue_dma source(%173 : memref<128xf32, #tpu.memory_space<any>>) target(%175 : memref<128xf32, #tpu.memory_space<vmem>>) target_semaphore(%arg4 : memref<!tpu.dma_semaphore, #tpu.memory_space<semaphore_mem>>)
    %c25_i32 = arith.constant 25 : i32
    %176 = arith.addi %0, %c25_i32 : i32
    %177 = arith.index_cast %176 : i32 to index
    %178 = memref.load %arg1[%177] : memref<256xi32, #tpu.memory_space<smem>>
    %c25_i32_75 = arith.constant 25 : i32
    %c0_i32_76 = arith.constant 0 : i32
    %179 = tpu.memref_slice %arg2[%178, %c0_i32_76] : memref<1024x128xf32, #tpu.memory_space<any>> -> memref<1x128xf32, #tpu.memory_space<any>>
    %180 = tpu.memref_squeeze %179 : memref<1x128xf32, #tpu.memory_space<any>> -> memref<128xf32, #tpu.memory_space<any>>
    %c0_i32_77 = arith.constant 0 : i32
    %181 = tpu.memref_slice %arg3[%c25_i32_75, %c0_i32_77] : memref<128x128xf32, #tpu.memory_space<vmem>> -> memref<1x128xf32, #tpu.memory_space<vmem>>
    %182 = tpu.memref_squeeze %181 : memref<1x128xf32, #tpu.memory_space<vmem>> -> memref<128xf32, #tpu.memory_space<vmem>>
    tpu.enqueue_dma source(%180 : memref<128xf32, #tpu.memory_space<any>>) target(%182 : memref<128xf32, #tpu.memory_space<vmem>>) target_semaphore(%arg4 : memref<!tpu.dma_semaphore, #tpu.memory_space<semaphore_mem>>)
    %c26_i32 = arith.constant 26 : i32
    %183 = arith.addi %0, %c26_i32 : i32
    %184 = arith.index_cast %183 : i32 to index
    %185 = memref.load %arg1[%184] : memref<256xi32, #tpu.memory_space<smem>>
    %c26_i32_78 = arith.constant 26 : i32
    %c0_i32_79 = arith.constant 0 : i32
    %186 = tpu.memref_slice %arg2[%185, %c0_i32_79] : memref<1024x128xf32, #tpu.memory_space<any>> -> memref<1x128xf32, #tpu.memory_space<any>>
    %187 = tpu.memref_squeeze %186 : memref<1x128xf32, #tpu.memory_space<any>> -> memref<128xf32, #tpu.memory_space<any>>
    %c0_i32_80 = arith.constant 0 : i32
    %188 = tpu.memref_slice %arg3[%c26_i32_78, %c0_i32_80] : memref<128x128xf32, #tpu.memory_space<vmem>> -> memref<1x128xf32, #tpu.memory_space<vmem>>
    %189 = tpu.memref_squeeze %188 : memref<1x128xf32, #tpu.memory_space<vmem>> -> memref<128xf32, #tpu.memory_space<vmem>>
    tpu.enqueue_dma source(%187 : memref<128xf32, #tpu.memory_space<any>>) target(%189 : memref<128xf32, #tpu.memory_space<vmem>>) target_semaphore(%arg4 : memref<!tpu.dma_semaphore, #tpu.memory_space<semaphore_mem>>)
    %c27_i32 = arith.constant 27 : i32
    %190 = arith.addi %0, %c27_i32 : i32
    %191 = arith.index_cast %190 : i32 to index
    %192 = memref.load %arg1[%191] : memref<256xi32, #tpu.memory_space<smem>>
    %c27_i32_81 = arith.constant 27 : i32
    %c0_i32_82 = arith.constant 0 : i32
    %193 = tpu.memref_slice %arg2[%192, %c0_i32_82] : memref<1024x128xf32, #tpu.memory_space<any>> -> memref<1x128xf32, #tpu.memory_space<any>>
    %194 = tpu.memref_squeeze %193 : memref<1x128xf32, #tpu.memory_space<any>> -> memref<128xf32, #tpu.memory_space<any>>
    %c0_i32_83 = arith.constant 0 : i32
    %195 = tpu.memref_slice %arg3[%c27_i32_81, %c0_i32_83] : memref<128x128xf32, #tpu.memory_space<vmem>> -> memref<1x128xf32, #tpu.memory_space<vmem>>
    %196 = tpu.memref_squeeze %195 : memref<1x128xf32, #tpu.memory_space<vmem>> -> memref<128xf32, #tpu.memory_space<vmem>>
    tpu.enqueue_dma source(%194 : memref<128xf32, #tpu.memory_space<any>>) target(%196 : memref<128xf32, #tpu.memory_space<vmem>>) target_semaphore(%arg4 : memref<!tpu.dma_semaphore, #tpu.memory_space<semaphore_mem>>)
    %c28_i32 = arith.constant 28 : i32
    %197 = arith.addi %0, %c28_i32 : i32
    %198 = arith.index_cast %197 : i32 to index
    %199 = memref.load %arg1[%198] : memref<256xi32, #tpu.memory_space<smem>>
    %c28_i32_84 = arith.constant 28 : i32
    %c0_i32_85 = arith.constant 0 : i32
    %200 = tpu.memref_slice %arg2[%199, %c0_i32_85] : memref<1024x128xf32, #tpu.memory_space<any>> -> memref<1x128xf32, #tpu.memory_space<any>>
    %201 = tpu.memref_squeeze %200 : memref<1x128xf32, #tpu.memory_space<any>> -> memref<128xf32, #tpu.memory_space<any>>
    %c0_i32_86 = arith.constant 0 : i32
    %202 = tpu.memref_slice %arg3[%c28_i32_84, %c0_i32_86] : memref<128x128xf32, #tpu.memory_space<vmem>> -> memref<1x128xf32, #tpu.memory_space<vmem>>
    %203 = tpu.memref_squeeze %202 : memref<1x128xf32, #tpu.memory_space<vmem>> -> memref<128xf32, #tpu.memory_space<vmem>>
    tpu.enqueue_dma source(%201 : memref<128xf32, #tpu.memory_space<any>>) target(%203 : memref<128xf32, #tpu.memory_space<vmem>>) target_semaphore(%arg4 : memref<!tpu.dma_semaphore, #tpu.memory_space<semaphore_mem>>)
    %c29_i32 = arith.constant 29 : i32
    %204 = arith.addi %0, %c29_i32 : i32
    %205 = arith.index_cast %204 : i32 to index
    %206 = memref.load %arg1[%205] : memref<256xi32, #tpu.memory_space<smem>>
    %c29_i32_87 = arith.constant 29 : i32
    %c0_i32_88 = arith.constant 0 : i32
    %207 = tpu.memref_slice %arg2[%206, %c0_i32_88] : memref<1024x128xf32, #tpu.memory_space<any>> -> memref<1x128xf32, #tpu.memory_space<any>>
    %208 = tpu.memref_squeeze %207 : memref<1x128xf32, #tpu.memory_space<any>> -> memref<128xf32, #tpu.memory_space<any>>
    %c0_i32_89 = arith.constant 0 : i32
    %209 = tpu.memref_slice %arg3[%c29_i32_87, %c0_i32_89] : memref<128x128xf32, #tpu.memory_space<vmem>> -> memref<1x128xf32, #tpu.memory_space<vmem>>
    %210 = tpu.memref_squeeze %209 : memref<1x128xf32, #tpu.memory_space<vmem>> -> memref<128xf32, #tpu.memory_space<vmem>>
    tpu.enqueue_dma source(%208 : memref<128xf32, #tpu.memory_space<any>>) target(%210 : memref<128xf32, #tpu.memory_space<vmem>>) target_semaphore(%arg4 : memref<!tpu.dma_semaphore, #tpu.memory_space<semaphore_mem>>)
    %c30_i32 = arith.constant 30 : i32
    %211 = arith.addi %0, %c30_i32 : i32
    %212 = arith.index_cast %211 : i32 to index
    %213 = memref.load %arg1[%212] : memref<256xi32, #tpu.memory_space<smem>>
    %c30_i32_90 = arith.constant 30 : i32
    %c0_i32_91 = arith.constant 0 : i32
    %214 = tpu.memref_slice %arg2[%213, %c0_i32_91] : memref<1024x128xf32, #tpu.memory_space<any>> -> memref<1x128xf32, #tpu.memory_space<any>>
    %215 = tpu.memref_squeeze %214 : memref<1x128xf32, #tpu.memory_space<any>> -> memref<128xf32, #tpu.memory_space<any>>
    %c0_i32_92 = arith.constant 0 : i32
    %216 = tpu.memref_slice %arg3[%c30_i32_90, %c0_i32_92] : memref<128x128xf32, #tpu.memory_space<vmem>> -> memref<1x128xf32, #tpu.memory_space<vmem>>
    %217 = tpu.memref_squeeze %216 : memref<1x128xf32, #tpu.memory_space<vmem>> -> memref<128xf32, #tpu.memory_space<vmem>>
    tpu.enqueue_dma source(%215 : memref<128xf32, #tpu.memory_space<any>>) target(%217 : memref<128xf32, #tpu.memory_space<vmem>>) target_semaphore(%arg4 : memref<!tpu.dma_semaphore, #tpu.memory_space<semaphore_mem>>)
    %c31_i32 = arith.constant 31 : i32
    %218 = arith.addi %0, %c31_i32 : i32
    %219 = arith.index_cast %218 : i32 to index
    %220 = memref.load %arg1[%219] : memref<256xi32, #tpu.memory_space<smem>>
    %c31_i32_93 = arith.constant 31 : i32
    %c0_i32_94 = arith.constant 0 : i32
    %221 = tpu.memref_slice %arg2[%220, %c0_i32_94] : memref<1024x128xf32, #tpu.memory_space<any>> -> memref<1x128xf32, #tpu.memory_space<any>>
    %222 = tpu.memref_squeeze %221 : memref<1x128xf32, #tpu.memory_space<any>> -> memref<128xf32, #tpu.memory_space<any>>
    %c0_i32_95 = arith.constant 0 : i32
    %223 = tpu.memref_slice %arg3[%c31_i32_93, %c0_i32_95] : memref<128x128xf32, #tpu.memory_space<vmem>> -> memref<1x128xf32, #tpu.memory_space<vmem>>
    %224 = tpu.memref_squeeze %223 : memref<1x128xf32, #tpu.memory_space<vmem>> -> memref<128xf32, #tpu.memory_space<vmem>>
    tpu.enqueue_dma source(%222 : memref<128xf32, #tpu.memory_space<any>>) target(%224 : memref<128xf32, #tpu.memory_space<vmem>>) target_semaphore(%arg4 : memref<!tpu.dma_semaphore, #tpu.memory_space<semaphore_mem>>)
    %c32_i32 = arith.constant 32 : i32
    %225 = arith.addi %0, %c32_i32 : i32
    %226 = arith.index_cast %225 : i32 to index
    %227 = memref.load %arg1[%226] : memref<256xi32, #tpu.memory_space<smem>>
    %c32_i32_96 = arith.constant 32 : i32
    %c0_i32_97 = arith.constant 0 : i32
    %228 = tpu.memref_slice %arg2[%227, %c0_i32_97] : memref<1024x128xf32, #tpu.memory_space<any>> -> memref<1x128xf32, #tpu.memory_space<any>>
    %229 = tpu.memref_squeeze %228 : memref<1x128xf32, #tpu.memory_space<any>> -> memref<128xf32, #tpu.memory_space<any>>
    %c0_i32_98 = arith.constant 0 : i32
    %230 = tpu.memref_slice %arg3[%c32_i32_96, %c0_i32_98] : memref<128x128xf32, #tpu.memory_space<vmem>> -> memref<1x128xf32, #tpu.memory_space<vmem>>
    %231 = tpu.memref_squeeze %230 : memref<1x128xf32, #tpu.memory_space<vmem>> -> memref<128xf32, #tpu.memory_space<vmem>>
    tpu.enqueue_dma source(%229 : memref<128xf32, #tpu.memory_space<any>>) target(%231 : memref<128xf32, #tpu.memory_space<vmem>>) target_semaphore(%arg4 : memref<!tpu.dma_semaphore, #tpu.memory_space<semaphore_mem>>)
    %c33_i32 = arith.constant 33 : i32
    %232 = arith.addi %0, %c33_i32 : i32
    %233 = arith.index_cast %232 : i32 to index
    %234 = memref.load %arg1[%233] : memref<256xi32, #tpu.memory_space<smem>>
    %c33_i32_99 = arith.constant 33 : i32
    %c0_i32_100 = arith.constant 0 : i32
    %235 = tpu.memref_slice %arg2[%234, %c0_i32_100] : memref<1024x128xf32, #tpu.memory_space<any>> -> memref<1x128xf32, #tpu.memory_space<any>>
    %236 = tpu.memref_squeeze %235 : memref<1x128xf32, #tpu.memory_space<any>> -> memref<128xf32, #tpu.memory_space<any>>
    %c0_i32_101 = arith.constant 0 : i32
    %237 = tpu.memref_slice %arg3[%c33_i32_99, %c0_i32_101] : memref<128x128xf32, #tpu.memory_space<vmem>> -> memref<1x128xf32, #tpu.memory_space<vmem>>
    %238 = tpu.memref_squeeze %237 : memref<1x128xf32, #tpu.memory_space<vmem>> -> memref<128xf32, #tpu.memory_space<vmem>>
    tpu.enqueue_dma source(%236 : memref<128xf32, #tpu.memory_space<any>>) target(%238 : memref<128xf32, #tpu.memory_space<vmem>>) target_semaphore(%arg4 : memref<!tpu.dma_semaphore, #tpu.memory_space<semaphore_mem>>)
    %c34_i32 = arith.constant 34 : i32
    %239 = arith.addi %0, %c34_i32 : i32
    %240 = arith.index_cast %239 : i32 to index
    %241 = memref.load %arg1[%240] : memref<256xi32, #tpu.memory_space<smem>>
    %c34_i32_102 = arith.constant 34 : i32
    %c0_i32_103 = arith.constant 0 : i32
    %242 = tpu.memref_slice %arg2[%241, %c0_i32_103] : memref<1024x128xf32, #tpu.memory_space<any>> -> memref<1x128xf32, #tpu.memory_space<any>>
    %243 = tpu.memref_squeeze %242 : memref<1x128xf32, #tpu.memory_space<any>> -> memref<128xf32, #tpu.memory_space<any>>
    %c0_i32_104 = arith.constant 0 : i32
    %244 = tpu.memref_slice %arg3[%c34_i32_102, %c0_i32_104] : memref<128x128xf32, #tpu.memory_space<vmem>> -> memref<1x128xf32, #tpu.memory_space<vmem>>
    %245 = tpu.memref_squeeze %244 : memref<1x128xf32, #tpu.memory_space<vmem>> -> memref<128xf32, #tpu.memory_space<vmem>>
    tpu.enqueue_dma source(%243 : memref<128xf32, #tpu.memory_space<any>>) target(%245 : memref<128xf32, #tpu.memory_space<vmem>>) target_semaphore(%arg4 : memref<!tpu.dma_semaphore, #tpu.memory_space<semaphore_mem>>)
    %c35_i32 = arith.constant 35 : i32
    %246 = arith.addi %0, %c35_i32 : i32
    %247 = arith.index_cast %246 : i32 to index
    %248 = memref.load %arg1[%247] : memref<256xi32, #tpu.memory_space<smem>>
    %c35_i32_105 = arith.constant 35 : i32
    %c0_i32_106 = arith.constant 0 : i32
    %249 = tpu.memref_slice %arg2[%248, %c0_i32_106] : memref<1024x128xf32, #tpu.memory_space<any>> -> memref<1x128xf32, #tpu.memory_space<any>>
    %250 = tpu.memref_squeeze %249 : memref<1x128xf32, #tpu.memory_space<any>> -> memref<128xf32, #tpu.memory_space<any>>
    %c0_i32_107 = arith.constant 0 : i32
    %251 = tpu.memref_slice %arg3[%c35_i32_105, %c0_i32_107] : memref<128x128xf32, #tpu.memory_space<vmem>> -> memref<1x128xf32, #tpu.memory_space<vmem>>
    %252 = tpu.memref_squeeze %251 : memref<1x128xf32, #tpu.memory_space<vmem>> -> memref<128xf32, #tpu.memory_space<vmem>>
    tpu.enqueue_dma source(%250 : memref<128xf32, #tpu.memory_space<any>>) target(%252 : memref<128xf32, #tpu.memory_space<vmem>>) target_semaphore(%arg4 : memref<!tpu.dma_semaphore, #tpu.memory_space<semaphore_mem>>)
    %c36_i32 = arith.constant 36 : i32
    %253 = arith.addi %0, %c36_i32 : i32
    %254 = arith.index_cast %253 : i32 to index
    %255 = memref.load %arg1[%254] : memref<256xi32, #tpu.memory_space<smem>>
    %c36_i32_108 = arith.constant 36 : i32
    %c0_i32_109 = arith.constant 0 : i32
    %256 = tpu.memref_slice %arg2[%255, %c0_i32_109] : memref<1024x128xf32, #tpu.memory_space<any>> -> memref<1x128xf32, #tpu.memory_space<any>>
    %257 = tpu.memref_squeeze %256 : memref<1x128xf32, #tpu.memory_space<any>> -> memref<128xf32, #tpu.memory_space<any>>
    %c0_i32_110 = arith.constant 0 : i32
    %258 = tpu.memref_slice %arg3[%c36_i32_108, %c0_i32_110] : memref<128x128xf32, #tpu.memory_space<vmem>> -> memref<1x128xf32, #tpu.memory_space<vmem>>
    %259 = tpu.memref_squeeze %258 : memref<1x128xf32, #tpu.memory_space<vmem>> -> memref<128xf32, #tpu.memory_space<vmem>>
    tpu.enqueue_dma source(%257 : memref<128xf32, #tpu.memory_space<any>>) target(%259 : memref<128xf32, #tpu.memory_space<vmem>>) target_semaphore(%arg4 : memref<!tpu.dma_semaphore, #tpu.memory_space<semaphore_mem>>)
    %c37_i32 = arith.constant 37 : i32
    %260 = arith.addi %0, %c37_i32 : i32
    %261 = arith.index_cast %260 : i32 to index
    %262 = memref.load %arg1[%261] : memref<256xi32, #tpu.memory_space<smem>>
    %c37_i32_111 = arith.constant 37 : i32
    %c0_i32_112 = arith.constant 0 : i32
    %263 = tpu.memref_slice %arg2[%262, %c0_i32_112] : memref<1024x128xf32, #tpu.memory_space<any>> -> memref<1x128xf32, #tpu.memory_space<any>>
    %264 = tpu.memref_squeeze %263 : memref<1x128xf32, #tpu.memory_space<any>> -> memref<128xf32, #tpu.memory_space<any>>
    %c0_i32_113 = arith.constant 0 : i32
    %265 = tpu.memref_slice %arg3[%c37_i32_111, %c0_i32_113] : memref<128x128xf32, #tpu.memory_space<vmem>> -> memref<1x128xf32, #tpu.memory_space<vmem>>
    %266 = tpu.memref_squeeze %265 : memref<1x128xf32, #tpu.memory_space<vmem>> -> memref<128xf32, #tpu.memory_space<vmem>>
    tpu.enqueue_dma source(%264 : memref<128xf32, #tpu.memory_space<any>>) target(%266 : memref<128xf32, #tpu.memory_space<vmem>>) target_semaphore(%arg4 : memref<!tpu.dma_semaphore, #tpu.memory_space<semaphore_mem>>)
    %c38_i32 = arith.constant 38 : i32
    %267 = arith.addi %0, %c38_i32 : i32
    %268 = arith.index_cast %267 : i32 to index
    %269 = memref.load %arg1[%268] : memref<256xi32, #tpu.memory_space<smem>>
    %c38_i32_114 = arith.constant 38 : i32
    %c0_i32_115 = arith.constant 0 : i32
    %270 = tpu.memref_slice %arg2[%269, %c0_i32_115] : memref<1024x128xf32, #tpu.memory_space<any>> -> memref<1x128xf32, #tpu.memory_space<any>>
    %271 = tpu.memref_squeeze %270 : memref<1x128xf32, #tpu.memory_space<any>> -> memref<128xf32, #tpu.memory_space<any>>
    %c0_i32_116 = arith.constant 0 : i32
    %272 = tpu.memref_slice %arg3[%c38_i32_114, %c0_i32_116] : memref<128x128xf32, #tpu.memory_space<vmem>> -> memref<1x128xf32, #tpu.memory_space<vmem>>
    %273 = tpu.memref_squeeze %272 : memref<1x128xf32, #tpu.memory_space<vmem>> -> memref<128xf32, #tpu.memory_space<vmem>>
    tpu.enqueue_dma source(%271 : memref<128xf32, #tpu.memory_space<any>>) target(%273 : memref<128xf32, #tpu.memory_space<vmem>>) target_semaphore(%arg4 : memref<!tpu.dma_semaphore, #tpu.memory_space<semaphore_mem>>)
    %c39_i32 = arith.constant 39 : i32
    %274 = arith.addi %0, %c39_i32 : i32
    %275 = arith.index_cast %274 : i32 to index
    %276 = memref.load %arg1[%275] : memref<256xi32, #tpu.memory_space<smem>>
    %c39_i32_117 = arith.constant 39 : i32
    %c0_i32_118 = arith.constant 0 : i32
    %277 = tpu.memref_slice %arg2[%276, %c0_i32_118] : memref<1024x128xf32, #tpu.memory_space<any>> -> memref<1x128xf32, #tpu.memory_space<any>>
    %278 = tpu.memref_squeeze %277 : memref<1x128xf32, #tpu.memory_space<any>> -> memref<128xf32, #tpu.memory_space<any>>
    %c0_i32_119 = arith.constant 0 : i32
    %279 = tpu.memref_slice %arg3[%c39_i32_117, %c0_i32_119] : memref<128x128xf32, #tpu.memory_space<vmem>> -> memref<1x128xf32, #tpu.memory_space<vmem>>
    %280 = tpu.memref_squeeze %279 : memref<1x128xf32, #tpu.memory_space<vmem>> -> memref<128xf32, #tpu.memory_space<vmem>>
    tpu.enqueue_dma source(%278 : memref<128xf32, #tpu.memory_space<any>>) target(%280 : memref<128xf32, #tpu.memory_space<vmem>>) target_semaphore(%arg4 : memref<!tpu.dma_semaphore, #tpu.memory_space<semaphore_mem>>)
    %c40_i32 = arith.constant 40 : i32
    %281 = arith.addi %0, %c40_i32 : i32
    %282 = arith.index_cast %281 : i32 to index
    %283 = memref.load %arg1[%282] : memref<256xi32, #tpu.memory_space<smem>>
    %c40_i32_120 = arith.constant 40 : i32
    %c0_i32_121 = arith.constant 0 : i32
    %284 = tpu.memref_slice %arg2[%283, %c0_i32_121] : memref<1024x128xf32, #tpu.memory_space<any>> -> memref<1x128xf32, #tpu.memory_space<any>>
    %285 = tpu.memref_squeeze %284 : memref<1x128xf32, #tpu.memory_space<any>> -> memref<128xf32, #tpu.memory_space<any>>
    %c0_i32_122 = arith.constant 0 : i32
    %286 = tpu.memref_slice %arg3[%c40_i32_120, %c0_i32_122] : memref<128x128xf32, #tpu.memory_space<vmem>> -> memref<1x128xf32, #tpu.memory_space<vmem>>
    %287 = tpu.memref_squeeze %286 : memref<1x128xf32, #tpu.memory_space<vmem>> -> memref<128xf32, #tpu.memory_space<vmem>>
    tpu.enqueue_dma source(%285 : memref<128xf32, #tpu.memory_space<any>>) target(%287 : memref<128xf32, #tpu.memory_space<vmem>>) target_semaphore(%arg4 : memref<!tpu.dma_semaphore, #tpu.memory_space<semaphore_mem>>)
    %c41_i32 = arith.constant 41 : i32
    %288 = arith.addi %0, %c41_i32 : i32
    %289 = arith.index_cast %288 : i32 to index
    %290 = memref.load %arg1[%289] : memref<256xi32, #tpu.memory_space<smem>>
    %c41_i32_123 = arith.constant 41 : i32
    %c0_i32_124 = arith.constant 0 : i32
    %291 = tpu.memref_slice %arg2[%290, %c0_i32_124] : memref<1024x128xf32, #tpu.memory_space<any>> -> memref<1x128xf32, #tpu.memory_space<any>>
    %292 = tpu.memref_squeeze %291 : memref<1x128xf32, #tpu.memory_space<any>> -> memref<128xf32, #tpu.memory_space<any>>
    %c0_i32_125 = arith.constant 0 : i32
    %293 = tpu.memref_slice %arg3[%c41_i32_123, %c0_i32_125] : memref<128x128xf32, #tpu.memory_space<vmem>> -> memref<1x128xf32, #tpu.memory_space<vmem>>
    %294 = tpu.memref_squeeze %293 : memref<1x128xf32, #tpu.memory_space<vmem>> -> memref<128xf32, #tpu.memory_space<vmem>>
    tpu.enqueue_dma source(%292 : memref<128xf32, #tpu.memory_space<any>>) target(%294 : memref<128xf32, #tpu.memory_space<vmem>>) target_semaphore(%arg4 : memref<!tpu.dma_semaphore, #tpu.memory_space<semaphore_mem>>)
    %c42_i32 = arith.constant 42 : i32
    %295 = arith.addi %0, %c42_i32 : i32
    %296 = arith.index_cast %295 : i32 to index
    %297 = memref.load %arg1[%296] : memref<256xi32, #tpu.memory_space<smem>>
    %c42_i32_126 = arith.constant 42 : i32
    %c0_i32_127 = arith.constant 0 : i32
    %298 = tpu.memref_slice %arg2[%297, %c0_i32_127] : memref<1024x128xf32, #tpu.memory_space<any>> -> memref<1x128xf32, #tpu.memory_space<any>>
    %299 = tpu.memref_squeeze %298 : memref<1x128xf32, #tpu.memory_space<any>> -> memref<128xf32, #tpu.memory_space<any>>
    %c0_i32_128 = arith.constant 0 : i32
    %300 = tpu.memref_slice %arg3[%c42_i32_126, %c0_i32_128] : memref<128x128xf32, #tpu.memory_space<vmem>> -> memref<1x128xf32, #tpu.memory_space<vmem>>
    %301 = tpu.memref_squeeze %300 : memref<1x128xf32, #tpu.memory_space<vmem>> -> memref<128xf32, #tpu.memory_space<vmem>>
    tpu.enqueue_dma source(%299 : memref<128xf32, #tpu.memory_space<any>>) target(%301 : memref<128xf32, #tpu.memory_space<vmem>>) target_semaphore(%arg4 : memref<!tpu.dma_semaphore, #tpu.memory_space<semaphore_mem>>)
    %c43_i32 = arith.constant 43 : i32
    %302 = arith.addi %0, %c43_i32 : i32
    %303 = arith.index_cast %302 : i32 to index
    %304 = memref.load %arg1[%303] : memref<256xi32, #tpu.memory_space<smem>>
    %c43_i32_129 = arith.constant 43 : i32
    %c0_i32_130 = arith.constant 0 : i32
    %305 = tpu.memref_slice %arg2[%304, %c0_i32_130] : memref<1024x128xf32, #tpu.memory_space<any>> -> memref<1x128xf32, #tpu.memory_space<any>>
    %306 = tpu.memref_squeeze %305 : memref<1x128xf32, #tpu.memory_space<any>> -> memref<128xf32, #tpu.memory_space<any>>
    %c0_i32_131 = arith.constant 0 : i32
    %307 = tpu.memref_slice %arg3[%c43_i32_129, %c0_i32_131] : memref<128x128xf32, #tpu.memory_space<vmem>> -> memref<1x128xf32, #tpu.memory_space<vmem>>
    %308 = tpu.memref_squeeze %307 : memref<1x128xf32, #tpu.memory_space<vmem>> -> memref<128xf32, #tpu.memory_space<vmem>>
    tpu.enqueue_dma source(%306 : memref<128xf32, #tpu.memory_space<any>>) target(%308 : memref<128xf32, #tpu.memory_space<vmem>>) target_semaphore(%arg4 : memref<!tpu.dma_semaphore, #tpu.memory_space<semaphore_mem>>)
    %c44_i32 = arith.constant 44 : i32
    %309 = arith.addi %0, %c44_i32 : i32
    %310 = arith.index_cast %309 : i32 to index
    %311 = memref.load %arg1[%310] : memref<256xi32, #tpu.memory_space<smem>>
    %c44_i32_132 = arith.constant 44 : i32
    %c0_i32_133 = arith.constant 0 : i32
    %312 = tpu.memref_slice %arg2[%311, %c0_i32_133] : memref<1024x128xf32, #tpu.memory_space<any>> -> memref<1x128xf32, #tpu.memory_space<any>>
    %313 = tpu.memref_squeeze %312 : memref<1x128xf32, #tpu.memory_space<any>> -> memref<128xf32, #tpu.memory_space<any>>
    %c0_i32_134 = arith.constant 0 : i32
    %314 = tpu.memref_slice %arg3[%c44_i32_132, %c0_i32_134] : memref<128x128xf32, #tpu.memory_space<vmem>> -> memref<1x128xf32, #tpu.memory_space<vmem>>
    %315 = tpu.memref_squeeze %314 : memref<1x128xf32, #tpu.memory_space<vmem>> -> memref<128xf32, #tpu.memory_space<vmem>>
    tpu.enqueue_dma source(%313 : memref<128xf32, #tpu.memory_space<any>>) target(%315 : memref<128xf32, #tpu.memory_space<vmem>>) target_semaphore(%arg4 : memref<!tpu.dma_semaphore, #tpu.memory_space<semaphore_mem>>)
    %c45_i32 = arith.constant 45 : i32
    %316 = arith.addi %0, %c45_i32 : i32
    %317 = arith.index_cast %316 : i32 to index
    %318 = memref.load %arg1[%317] : memref<256xi32, #tpu.memory_space<smem>>
    %c45_i32_135 = arith.constant 45 : i32
    %c0_i32_136 = arith.constant 0 : i32
    %319 = tpu.memref_slice %arg2[%318, %c0_i32_136] : memref<1024x128xf32, #tpu.memory_space<any>> -> memref<1x128xf32, #tpu.memory_space<any>>
    %320 = tpu.memref_squeeze %319 : memref<1x128xf32, #tpu.memory_space<any>> -> memref<128xf32, #tpu.memory_space<any>>
    %c0_i32_137 = arith.constant 0 : i32
    %321 = tpu.memref_slice %arg3[%c45_i32_135, %c0_i32_137] : memref<128x128xf32, #tpu.memory_space<vmem>> -> memref<1x128xf32, #tpu.memory_space<vmem>>
    %322 = tpu.memref_squeeze %321 : memref<1x128xf32, #tpu.memory_space<vmem>> -> memref<128xf32, #tpu.memory_space<vmem>>
    tpu.enqueue_dma source(%320 : memref<128xf32, #tpu.memory_space<any>>) target(%322 : memref<128xf32, #tpu.memory_space<vmem>>) target_semaphore(%arg4 : memref<!tpu.dma_semaphore, #tpu.memory_space<semaphore_mem>>)
    %c46_i32 = arith.constant 46 : i32
    %323 = arith.addi %0, %c46_i32 : i32
    %324 = arith.index_cast %323 : i32 to index
    %325 = memref.load %arg1[%324] : memref<256xi32, #tpu.memory_space<smem>>
    %c46_i32_138 = arith.constant 46 : i32
    %c0_i32_139 = arith.constant 0 : i32
    %326 = tpu.memref_slice %arg2[%325, %c0_i32_139] : memref<1024x128xf32, #tpu.memory_space<any>> -> memref<1x128xf32, #tpu.memory_space<any>>
    %327 = tpu.memref_squeeze %326 : memref<1x128xf32, #tpu.memory_space<any>> -> memref<128xf32, #tpu.memory_space<any>>
    %c0_i32_140 = arith.constant 0 : i32
    %328 = tpu.memref_slice %arg3[%c46_i32_138, %c0_i32_140] : memref<128x128xf32, #tpu.memory_space<vmem>> -> memref<1x128xf32, #tpu.memory_space<vmem>>
    %329 = tpu.memref_squeeze %328 : memref<1x128xf32, #tpu.memory_space<vmem>> -> memref<128xf32, #tpu.memory_space<vmem>>
    tpu.enqueue_dma source(%327 : memref<128xf32, #tpu.memory_space<any>>) target(%329 : memref<128xf32, #tpu.memory_space<vmem>>) target_semaphore(%arg4 : memref<!tpu.dma_semaphore, #tpu.memory_space<semaphore_mem>>)
    %c47_i32 = arith.constant 47 : i32
    %330 = arith.addi %0, %c47_i32 : i32
    %331 = arith.index_cast %330 : i32 to index
    %332 = memref.load %arg1[%331] : memref<256xi32, #tpu.memory_space<smem>>
    %c47_i32_141 = arith.constant 47 : i32
    %c0_i32_142 = arith.constant 0 : i32
    %333 = tpu.memref_slice %arg2[%332, %c0_i32_142] : memref<1024x128xf32, #tpu.memory_space<any>> -> memref<1x128xf32, #tpu.memory_space<any>>
    %334 = tpu.memref_squeeze %333 : memref<1x128xf32, #tpu.memory_space<any>> -> memref<128xf32, #tpu.memory_space<any>>
    %c0_i32_143 = arith.constant 0 : i32
    %335 = tpu.memref_slice %arg3[%c47_i32_141, %c0_i32_143] : memref<128x128xf32, #tpu.memory_space<vmem>> -> memref<1x128xf32, #tpu.memory_space<vmem>>
    %336 = tpu.memref_squeeze %335 : memref<1x128xf32, #tpu.memory_space<vmem>> -> memref<128xf32, #tpu.memory_space<vmem>>
    tpu.enqueue_dma source(%334 : memref<128xf32, #tpu.memory_space<any>>) target(%336 : memref<128xf32, #tpu.memory_space<vmem>>) target_semaphore(%arg4 : memref<!tpu.dma_semaphore, #tpu.memory_space<semaphore_mem>>)
    %c48_i32 = arith.constant 48 : i32
    %337 = arith.addi %0, %c48_i32 : i32
    %338 = arith.index_cast %337 : i32 to index
    %339 = memref.load %arg1[%338] : memref<256xi32, #tpu.memory_space<smem>>
    %c48_i32_144 = arith.constant 48 : i32
    %c0_i32_145 = arith.constant 0 : i32
    %340 = tpu.memref_slice %arg2[%339, %c0_i32_145] : memref<1024x128xf32, #tpu.memory_space<any>> -> memref<1x128xf32, #tpu.memory_space<any>>
    %341 = tpu.memref_squeeze %340 : memref<1x128xf32, #tpu.memory_space<any>> -> memref<128xf32, #tpu.memory_space<any>>
    %c0_i32_146 = arith.constant 0 : i32
    %342 = tpu.memref_slice %arg3[%c48_i32_144, %c0_i32_146] : memref<128x128xf32, #tpu.memory_space<vmem>> -> memref<1x128xf32, #tpu.memory_space<vmem>>
    %343 = tpu.memref_squeeze %342 : memref<1x128xf32, #tpu.memory_space<vmem>> -> memref<128xf32, #tpu.memory_space<vmem>>
    tpu.enqueue_dma source(%341 : memref<128xf32, #tpu.memory_space<any>>) target(%343 : memref<128xf32, #tpu.memory_space<vmem>>) target_semaphore(%arg4 : memref<!tpu.dma_semaphore, #tpu.memory_space<semaphore_mem>>)
    %c49_i32 = arith.constant 49 : i32
    %344 = arith.addi %0, %c49_i32 : i32
    %345 = arith.index_cast %344 : i32 to index
    %346 = memref.load %arg1[%345] : memref<256xi32, #tpu.memory_space<smem>>
    %c49_i32_147 = arith.constant 49 : i32
    %c0_i32_148 = arith.constant 0 : i32
    %347 = tpu.memref_slice %arg2[%346, %c0_i32_148] : memref<1024x128xf32, #tpu.memory_space<any>> -> memref<1x128xf32, #tpu.memory_space<any>>
    %348 = tpu.memref_squeeze %347 : memref<1x128xf32, #tpu.memory_space<any>> -> memref<128xf32, #tpu.memory_space<any>>
    %c0_i32_149 = arith.constant 0 : i32
    %349 = tpu.memref_slice %arg3[%c49_i32_147, %c0_i32_149] : memref<128x128xf32, #tpu.memory_space<vmem>> -> memref<1x128xf32, #tpu.memory_space<vmem>>
    %350 = tpu.memref_squeeze %349 : memref<1x128xf32, #tpu.memory_space<vmem>> -> memref<128xf32, #tpu.memory_space<vmem>>
    tpu.enqueue_dma source(%348 : memref<128xf32, #tpu.memory_space<any>>) target(%350 : memref<128xf32, #tpu.memory_space<vmem>>) target_semaphore(%arg4 : memref<!tpu.dma_semaphore, #tpu.memory_space<semaphore_mem>>)
    %c50_i32 = arith.constant 50 : i32
    %351 = arith.addi %0, %c50_i32 : i32
    %352 = arith.index_cast %351 : i32 to index
    %353 = memref.load %arg1[%352] : memref<256xi32, #tpu.memory_space<smem>>
    %c50_i32_150 = arith.constant 50 : i32
    %c0_i32_151 = arith.constant 0 : i32
    %354 = tpu.memref_slice %arg2[%353, %c0_i32_151] : memref<1024x128xf32, #tpu.memory_space<any>> -> memref<1x128xf32, #tpu.memory_space<any>>
    %355 = tpu.memref_squeeze %354 : memref<1x128xf32, #tpu.memory_space<any>> -> memref<128xf32, #tpu.memory_space<any>>
    %c0_i32_152 = arith.constant 0 : i32
    %356 = tpu.memref_slice %arg3[%c50_i32_150, %c0_i32_152] : memref<128x128xf32, #tpu.memory_space<vmem>> -> memref<1x128xf32, #tpu.memory_space<vmem>>
    %357 = tpu.memref_squeeze %356 : memref<1x128xf32, #tpu.memory_space<vmem>> -> memref<128xf32, #tpu.memory_space<vmem>>
    tpu.enqueue_dma source(%355 : memref<128xf32, #tpu.memory_space<any>>) target(%357 : memref<128xf32, #tpu.memory_space<vmem>>) target_semaphore(%arg4 : memref<!tpu.dma_semaphore, #tpu.memory_space<semaphore_mem>>)
    %c51_i32 = arith.constant 51 : i32
    %358 = arith.addi %0, %c51_i32 : i32
    %359 = arith.index_cast %358 : i32 to index
    %360 = memref.load %arg1[%359] : memref<256xi32, #tpu.memory_space<smem>>
    %c51_i32_153 = arith.constant 51 : i32
    %c0_i32_154 = arith.constant 0 : i32
    %361 = tpu.memref_slice %arg2[%360, %c0_i32_154] : memref<1024x128xf32, #tpu.memory_space<any>> -> memref<1x128xf32, #tpu.memory_space<any>>
    %362 = tpu.memref_squeeze %361 : memref<1x128xf32, #tpu.memory_space<any>> -> memref<128xf32, #tpu.memory_space<any>>
    %c0_i32_155 = arith.constant 0 : i32
    %363 = tpu.memref_slice %arg3[%c51_i32_153, %c0_i32_155] : memref<128x128xf32, #tpu.memory_space<vmem>> -> memref<1x128xf32, #tpu.memory_space<vmem>>
    %364 = tpu.memref_squeeze %363 : memref<1x128xf32, #tpu.memory_space<vmem>> -> memref<128xf32, #tpu.memory_space<vmem>>
    tpu.enqueue_dma source(%362 : memref<128xf32, #tpu.memory_space<any>>) target(%364 : memref<128xf32, #tpu.memory_space<vmem>>) target_semaphore(%arg4 : memref<!tpu.dma_semaphore, #tpu.memory_space<semaphore_mem>>)
    %c52_i32 = arith.constant 52 : i32
    %365 = arith.addi %0, %c52_i32 : i32
    %366 = arith.index_cast %365 : i32 to index
    %367 = memref.load %arg1[%366] : memref<256xi32, #tpu.memory_space<smem>>
    %c52_i32_156 = arith.constant 52 : i32
    %c0_i32_157 = arith.constant 0 : i32
    %368 = tpu.memref_slice %arg2[%367, %c0_i32_157] : memref<1024x128xf32, #tpu.memory_space<any>> -> memref<1x128xf32, #tpu.memory_space<any>>
    %369 = tpu.memref_squeeze %368 : memref<1x128xf32, #tpu.memory_space<any>> -> memref<128xf32, #tpu.memory_space<any>>
    %c0_i32_158 = arith.constant 0 : i32
    %370 = tpu.memref_slice %arg3[%c52_i32_156, %c0_i32_158] : memref<128x128xf32, #tpu.memory_space<vmem>> -> memref<1x128xf32, #tpu.memory_space<vmem>>
    %371 = tpu.memref_squeeze %370 : memref<1x128xf32, #tpu.memory_space<vmem>> -> memref<128xf32, #tpu.memory_space<vmem>>
    tpu.enqueue_dma source(%369 : memref<128xf32, #tpu.memory_space<any>>) target(%371 : memref<128xf32, #tpu.memory_space<vmem>>) target_semaphore(%arg4 : memref<!tpu.dma_semaphore, #tpu.memory_space<semaphore_mem>>)
    %c53_i32 = arith.constant 53 : i32
    %372 = arith.addi %0, %c53_i32 : i32
    %373 = arith.index_cast %372 : i32 to index
    %374 = memref.load %arg1[%373] : memref<256xi32, #tpu.memory_space<smem>>
    %c53_i32_159 = arith.constant 53 : i32
    %c0_i32_160 = arith.constant 0 : i32
    %375 = tpu.memref_slice %arg2[%374, %c0_i32_160] : memref<1024x128xf32, #tpu.memory_space<any>> -> memref<1x128xf32, #tpu.memory_space<any>>
    %376 = tpu.memref_squeeze %375 : memref<1x128xf32, #tpu.memory_space<any>> -> memref<128xf32, #tpu.memory_space<any>>
    %c0_i32_161 = arith.constant 0 : i32
    %377 = tpu.memref_slice %arg3[%c53_i32_159, %c0_i32_161] : memref<128x128xf32, #tpu.memory_space<vmem>> -> memref<1x128xf32, #tpu.memory_space<vmem>>
    %378 = tpu.memref_squeeze %377 : memref<1x128xf32, #tpu.memory_space<vmem>> -> memref<128xf32, #tpu.memory_space<vmem>>
    tpu.enqueue_dma source(%376 : memref<128xf32, #tpu.memory_space<any>>) target(%378 : memref<128xf32, #tpu.memory_space<vmem>>) target_semaphore(%arg4 : memref<!tpu.dma_semaphore, #tpu.memory_space<semaphore_mem>>)
    %c54_i32 = arith.constant 54 : i32
    %379 = arith.addi %0, %c54_i32 : i32
    %380 = arith.index_cast %379 : i32 to index
    %381 = memref.load %arg1[%380] : memref<256xi32, #tpu.memory_space<smem>>
    %c54_i32_162 = arith.constant 54 : i32
    %c0_i32_163 = arith.constant 0 : i32
    %382 = tpu.memref_slice %arg2[%381, %c0_i32_163] : memref<1024x128xf32, #tpu.memory_space<any>> -> memref<1x128xf32, #tpu.memory_space<any>>
    %383 = tpu.memref_squeeze %382 : memref<1x128xf32, #tpu.memory_space<any>> -> memref<128xf32, #tpu.memory_space<any>>
    %c0_i32_164 = arith.constant 0 : i32
    %384 = tpu.memref_slice %arg3[%c54_i32_162, %c0_i32_164] : memref<128x128xf32, #tpu.memory_space<vmem>> -> memref<1x128xf32, #tpu.memory_space<vmem>>
    %385 = tpu.memref_squeeze %384 : memref<1x128xf32, #tpu.memory_space<vmem>> -> memref<128xf32, #tpu.memory_space<vmem>>
    tpu.enqueue_dma source(%383 : memref<128xf32, #tpu.memory_space<any>>) target(%385 : memref<128xf32, #tpu.memory_space<vmem>>) target_semaphore(%arg4 : memref<!tpu.dma_semaphore, #tpu.memory_space<semaphore_mem>>)
    %c55_i32 = arith.constant 55 : i32
    %386 = arith.addi %0, %c55_i32 : i32
    %387 = arith.index_cast %386 : i32 to index
    %388 = memref.load %arg1[%387] : memref<256xi32, #tpu.memory_space<smem>>
    %c55_i32_165 = arith.constant 55 : i32
    %c0_i32_166 = arith.constant 0 : i32
    %389 = tpu.memref_slice %arg2[%388, %c0_i32_166] : memref<1024x128xf32, #tpu.memory_space<any>> -> memref<1x128xf32, #tpu.memory_space<any>>
    %390 = tpu.memref_squeeze %389 : memref<1x128xf32, #tpu.memory_space<any>> -> memref<128xf32, #tpu.memory_space<any>>
    %c0_i32_167 = arith.constant 0 : i32
    %391 = tpu.memref_slice %arg3[%c55_i32_165, %c0_i32_167] : memref<128x128xf32, #tpu.memory_space<vmem>> -> memref<1x128xf32, #tpu.memory_space<vmem>>
    %392 = tpu.memref_squeeze %391 : memref<1x128xf32, #tpu.memory_space<vmem>> -> memref<128xf32, #tpu.memory_space<vmem>>
    tpu.enqueue_dma source(%390 : memref<128xf32, #tpu.memory_space<any>>) target(%392 : memref<128xf32, #tpu.memory_space<vmem>>) target_semaphore(%arg4 : memref<!tpu.dma_semaphore, #tpu.memory_space<semaphore_mem>>)
    %c56_i32 = arith.constant 56 : i32
    %393 = arith.addi %0, %c56_i32 : i32
    %394 = arith.index_cast %393 : i32 to index
    %395 = memref.load %arg1[%394] : memref<256xi32, #tpu.memory_space<smem>>
    %c56_i32_168 = arith.constant 56 : i32
    %c0_i32_169 = arith.constant 0 : i32
    %396 = tpu.memref_slice %arg2[%395, %c0_i32_169] : memref<1024x128xf32, #tpu.memory_space<any>> -> memref<1x128xf32, #tpu.memory_space<any>>
    %397 = tpu.memref_squeeze %396 : memref<1x128xf32, #tpu.memory_space<any>> -> memref<128xf32, #tpu.memory_space<any>>
    %c0_i32_170 = arith.constant 0 : i32
    %398 = tpu.memref_slice %arg3[%c56_i32_168, %c0_i32_170] : memref<128x128xf32, #tpu.memory_space<vmem>> -> memref<1x128xf32, #tpu.memory_space<vmem>>
    %399 = tpu.memref_squeeze %398 : memref<1x128xf32, #tpu.memory_space<vmem>> -> memref<128xf32, #tpu.memory_space<vmem>>
    tpu.enqueue_dma source(%397 : memref<128xf32, #tpu.memory_space<any>>) target(%399 : memref<128xf32, #tpu.memory_space<vmem>>) target_semaphore(%arg4 : memref<!tpu.dma_semaphore, #tpu.memory_space<semaphore_mem>>)
    %c57_i32 = arith.constant 57 : i32
    %400 = arith.addi %0, %c57_i32 : i32
    %401 = arith.index_cast %400 : i32 to index
    %402 = memref.load %arg1[%401] : memref<256xi32, #tpu.memory_space<smem>>
    %c57_i32_171 = arith.constant 57 : i32
    %c0_i32_172 = arith.constant 0 : i32
    %403 = tpu.memref_slice %arg2[%402, %c0_i32_172] : memref<1024x128xf32, #tpu.memory_space<any>> -> memref<1x128xf32, #tpu.memory_space<any>>
    %404 = tpu.memref_squeeze %403 : memref<1x128xf32, #tpu.memory_space<any>> -> memref<128xf32, #tpu.memory_space<any>>
    %c0_i32_173 = arith.constant 0 : i32
    %405 = tpu.memref_slice %arg3[%c57_i32_171, %c0_i32_173] : memref<128x128xf32, #tpu.memory_space<vmem>> -> memref<1x128xf32, #tpu.memory_space<vmem>>
    %406 = tpu.memref_squeeze %405 : memref<1x128xf32, #tpu.memory_space<vmem>> -> memref<128xf32, #tpu.memory_space<vmem>>
    tpu.enqueue_dma source(%404 : memref<128xf32, #tpu.memory_space<any>>) target(%406 : memref<128xf32, #tpu.memory_space<vmem>>) target_semaphore(%arg4 : memref<!tpu.dma_semaphore, #tpu.memory_space<semaphore_mem>>)
    %c58_i32 = arith.constant 58 : i32
    %407 = arith.addi %0, %c58_i32 : i32
    %408 = arith.index_cast %407 : i32 to index
    %409 = memref.load %arg1[%408] : memref<256xi32, #tpu.memory_space<smem>>
    %c58_i32_174 = arith.constant 58 : i32
    %c0_i32_175 = arith.constant 0 : i32
    %410 = tpu.memref_slice %arg2[%409, %c0_i32_175] : memref<1024x128xf32, #tpu.memory_space<any>> -> memref<1x128xf32, #tpu.memory_space<any>>
    %411 = tpu.memref_squeeze %410 : memref<1x128xf32, #tpu.memory_space<any>> -> memref<128xf32, #tpu.memory_space<any>>
    %c0_i32_176 = arith.constant 0 : i32
    %412 = tpu.memref_slice %arg3[%c58_i32_174, %c0_i32_176] : memref<128x128xf32, #tpu.memory_space<vmem>> -> memref<1x128xf32, #tpu.memory_space<vmem>>
    %413 = tpu.memref_squeeze %412 : memref<1x128xf32, #tpu.memory_space<vmem>> -> memref<128xf32, #tpu.memory_space<vmem>>
    tpu.enqueue_dma source(%411 : memref<128xf32, #tpu.memory_space<any>>) target(%413 : memref<128xf32, #tpu.memory_space<vmem>>) target_semaphore(%arg4 : memref<!tpu.dma_semaphore, #tpu.memory_space<semaphore_mem>>)
    %c59_i32 = arith.constant 59 : i32
    %414 = arith.addi %0, %c59_i32 : i32
    %415 = arith.index_cast %414 : i32 to index
    %416 = memref.load %arg1[%415] : memref<256xi32, #tpu.memory_space<smem>>
    %c59_i32_177 = arith.constant 59 : i32
    %c0_i32_178 = arith.constant 0 : i32
    %417 = tpu.memref_slice %arg2[%416, %c0_i32_178] : memref<1024x128xf32, #tpu.memory_space<any>> -> memref<1x128xf32, #tpu.memory_space<any>>
    %418 = tpu.memref_squeeze %417 : memref<1x128xf32, #tpu.memory_space<any>> -> memref<128xf32, #tpu.memory_space<any>>
    %c0_i32_179 = arith.constant 0 : i32
    %419 = tpu.memref_slice %arg3[%c59_i32_177, %c0_i32_179] : memref<128x128xf32, #tpu.memory_space<vmem>> -> memref<1x128xf32, #tpu.memory_space<vmem>>
    %420 = tpu.memref_squeeze %419 : memref<1x128xf32, #tpu.memory_space<vmem>> -> memref<128xf32, #tpu.memory_space<vmem>>
    tpu.enqueue_dma source(%418 : memref<128xf32, #tpu.memory_space<any>>) target(%420 : memref<128xf32, #tpu.memory_space<vmem>>) target_semaphore(%arg4 : memref<!tpu.dma_semaphore, #tpu.memory_space<semaphore_mem>>)
    %c60_i32 = arith.constant 60 : i32
    %421 = arith.addi %0, %c60_i32 : i32
    %422 = arith.index_cast %421 : i32 to index
    %423 = memref.load %arg1[%422] : memref<256xi32, #tpu.memory_space<smem>>
    %c60_i32_180 = arith.constant 60 : i32
    %c0_i32_181 = arith.constant 0 : i32
    %424 = tpu.memref_slice %arg2[%423, %c0_i32_181] : memref<1024x128xf32, #tpu.memory_space<any>> -> memref<1x128xf32, #tpu.memory_space<any>>
    %425 = tpu.memref_squeeze %424 : memref<1x128xf32, #tpu.memory_space<any>> -> memref<128xf32, #tpu.memory_space<any>>
    %c0_i32_182 = arith.constant 0 : i32
    %426 = tpu.memref_slice %arg3[%c60_i32_180, %c0_i32_182] : memref<128x128xf32, #tpu.memory_space<vmem>> -> memref<1x128xf32, #tpu.memory_space<vmem>>
    %427 = tpu.memref_squeeze %426 : memref<1x128xf32, #tpu.memory_space<vmem>> -> memref<128xf32, #tpu.memory_space<vmem>>
    tpu.enqueue_dma source(%425 : memref<128xf32, #tpu.memory_space<any>>) target(%427 : memref<128xf32, #tpu.memory_space<vmem>>) target_semaphore(%arg4 : memref<!tpu.dma_semaphore, #tpu.memory_space<semaphore_mem>>)
    %c61_i32 = arith.constant 61 : i32
    %428 = arith.addi %0, %c61_i32 : i32
    %429 = arith.index_cast %428 : i32 to index
    %430 = memref.load %arg1[%429] : memref<256xi32, #tpu.memory_space<smem>>
    %c61_i32_183 = arith.constant 61 : i32
    %c0_i32_184 = arith.constant 0 : i32
    %431 = tpu.memref_slice %arg2[%430, %c0_i32_184] : memref<1024x128xf32, #tpu.memory_space<any>> -> memref<1x128xf32, #tpu.memory_space<any>>
    %432 = tpu.memref_squeeze %431 : memref<1x128xf32, #tpu.memory_space<any>> -> memref<128xf32, #tpu.memory_space<any>>
    %c0_i32_185 = arith.constant 0 : i32
    %433 = tpu.memref_slice %arg3[%c61_i32_183, %c0_i32_185] : memref<128x128xf32, #tpu.memory_space<vmem>> -> memref<1x128xf32, #tpu.memory_space<vmem>>
    %434 = tpu.memref_squeeze %433 : memref<1x128xf32, #tpu.memory_space<vmem>> -> memref<128xf32, #tpu.memory_space<vmem>>
    tpu.enqueue_dma source(%432 : memref<128xf32, #tpu.memory_space<any>>) target(%434 : memref<128xf32, #tpu.memory_space<vmem>>) target_semaphore(%arg4 : memref<!tpu.dma_semaphore, #tpu.memory_space<semaphore_mem>>)
    %c62_i32 = arith.constant 62 : i32
    %435 = arith.addi %0, %c62_i32 : i32
    %436 = arith.index_cast %435 : i32 to index
    %437 = memref.load %arg1[%436] : memref<256xi32, #tpu.memory_space<smem>>
    %c62_i32_186 = arith.constant 62 : i32
    %c0_i32_187 = arith.constant 0 : i32
    %438 = tpu.memref_slice %arg2[%437, %c0_i32_187] : memref<1024x128xf32, #tpu.memory_space<any>> -> memref<1x128xf32, #tpu.memory_space<any>>
    %439 = tpu.memref_squeeze %438 : memref<1x128xf32, #tpu.memory_space<any>> -> memref<128xf32, #tpu.memory_space<any>>
    %c0_i32_188 = arith.constant 0 : i32
    %440 = tpu.memref_slice %arg3[%c62_i32_186, %c0_i32_188] : memref<128x128xf32, #tpu.memory_space<vmem>> -> memref<1x128xf32, #tpu.memory_space<vmem>>
    %441 = tpu.memref_squeeze %440 : memref<1x128xf32, #tpu.memory_space<vmem>> -> memref<128xf32, #tpu.memory_space<vmem>>
    tpu.enqueue_dma source(%439 : memref<128xf32, #tpu.memory_space<any>>) target(%441 : memref<128xf32, #tpu.memory_space<vmem>>) target_semaphore(%arg4 : memref<!tpu.dma_semaphore, #tpu.memory_space<semaphore_mem>>)
    %c63_i32 = arith.constant 63 : i32
    %442 = arith.addi %0, %c63_i32 : i32
    %443 = arith.index_cast %442 : i32 to index
    %444 = memref.load %arg1[%443] : memref<256xi32, #tpu.memory_space<smem>>
    %c63_i32_189 = arith.constant 63 : i32
    %c0_i32_190 = arith.constant 0 : i32
    %445 = tpu.memref_slice %arg2[%444, %c0_i32_190] : memref<1024x128xf32, #tpu.memory_space<any>> -> memref<1x128xf32, #tpu.memory_space<any>>
    %446 = tpu.memref_squeeze %445 : memref<1x128xf32, #tpu.memory_space<any>> -> memref<128xf32, #tpu.memory_space<any>>
    %c0_i32_191 = arith.constant 0 : i32
    %447 = tpu.memref_slice %arg3[%c63_i32_189, %c0_i32_191] : memref<128x128xf32, #tpu.memory_space<vmem>> -> memref<1x128xf32, #tpu.memory_space<vmem>>
    %448 = tpu.memref_squeeze %447 : memref<1x128xf32, #tpu.memory_space<vmem>> -> memref<128xf32, #tpu.memory_space<vmem>>
    tpu.enqueue_dma source(%446 : memref<128xf32, #tpu.memory_space<any>>) target(%448 : memref<128xf32, #tpu.memory_space<vmem>>) target_semaphore(%arg4 : memref<!tpu.dma_semaphore, #tpu.memory_space<semaphore_mem>>)
    %c64_i32 = arith.constant 64 : i32
    %449 = arith.addi %0, %c64_i32 : i32
    %450 = arith.index_cast %449 : i32 to index
    %451 = memref.load %arg1[%450] : memref<256xi32, #tpu.memory_space<smem>>
    %c64_i32_192 = arith.constant 64 : i32
    %c0_i32_193 = arith.constant 0 : i32
    %452 = tpu.memref_slice %arg2[%451, %c0_i32_193] : memref<1024x128xf32, #tpu.memory_space<any>> -> memref<1x128xf32, #tpu.memory_space<any>>
    %453 = tpu.memref_squeeze %452 : memref<1x128xf32, #tpu.memory_space<any>> -> memref<128xf32, #tpu.memory_space<any>>
    %c0_i32_194 = arith.constant 0 : i32
    %454 = tpu.memref_slice %arg3[%c64_i32_192, %c0_i32_194] : memref<128x128xf32, #tpu.memory_space<vmem>> -> memref<1x128xf32, #tpu.memory_space<vmem>>
    %455 = tpu.memref_squeeze %454 : memref<1x128xf32, #tpu.memory_space<vmem>> -> memref<128xf32, #tpu.memory_space<vmem>>
    tpu.enqueue_dma source(%453 : memref<128xf32, #tpu.memory_space<any>>) target(%455 : memref<128xf32, #tpu.memory_space<vmem>>) target_semaphore(%arg4 : memref<!tpu.dma_semaphore, #tpu.memory_space<semaphore_mem>>)
    %c65_i32 = arith.constant 65 : i32
    %456 = arith.addi %0, %c65_i32 : i32
    %457 = arith.index_cast %456 : i32 to index
    %458 = memref.load %arg1[%457] : memref<256xi32, #tpu.memory_space<smem>>
    %c65_i32_195 = arith.constant 65 : i32
    %c0_i32_196 = arith.constant 0 : i32
    %459 = tpu.memref_slice %arg2[%458, %c0_i32_196] : memref<1024x128xf32, #tpu.memory_space<any>> -> memref<1x128xf32, #tpu.memory_space<any>>
    %460 = tpu.memref_squeeze %459 : memref<1x128xf32, #tpu.memory_space<any>> -> memref<128xf32, #tpu.memory_space<any>>
    %c0_i32_197 = arith.constant 0 : i32
    %461 = tpu.memref_slice %arg3[%c65_i32_195, %c0_i32_197] : memref<128x128xf32, #tpu.memory_space<vmem>> -> memref<1x128xf32, #tpu.memory_space<vmem>>
    %462 = tpu.memref_squeeze %461 : memref<1x128xf32, #tpu.memory_space<vmem>> -> memref<128xf32, #tpu.memory_space<vmem>>
    tpu.enqueue_dma source(%460 : memref<128xf32, #tpu.memory_space<any>>) target(%462 : memref<128xf32, #tpu.memory_space<vmem>>) target_semaphore(%arg4 : memref<!tpu.dma_semaphore, #tpu.memory_space<semaphore_mem>>)
    %c66_i32 = arith.constant 66 : i32
    %463 = arith.addi %0, %c66_i32 : i32
    %464 = arith.index_cast %463 : i32 to index
    %465 = memref.load %arg1[%464] : memref<256xi32, #tpu.memory_space<smem>>
    %c66_i32_198 = arith.constant 66 : i32
    %c0_i32_199 = arith.constant 0 : i32
    %466 = tpu.memref_slice %arg2[%465, %c0_i32_199] : memref<1024x128xf32, #tpu.memory_space<any>> -> memref<1x128xf32, #tpu.memory_space<any>>
    %467 = tpu.memref_squeeze %466 : memref<1x128xf32, #tpu.memory_space<any>> -> memref<128xf32, #tpu.memory_space<any>>
    %c0_i32_200 = arith.constant 0 : i32
    %468 = tpu.memref_slice %arg3[%c66_i32_198, %c0_i32_200] : memref<128x128xf32, #tpu.memory_space<vmem>> -> memref<1x128xf32, #tpu.memory_space<vmem>>
    %469 = tpu.memref_squeeze %468 : memref<1x128xf32, #tpu.memory_space<vmem>> -> memref<128xf32, #tpu.memory_space<vmem>>
    tpu.enqueue_dma source(%467 : memref<128xf32, #tpu.memory_space<any>>) target(%469 : memref<128xf32, #tpu.memory_space<vmem>>) target_semaphore(%arg4 : memref<!tpu.dma_semaphore, #tpu.memory_space<semaphore_mem>>)
    %c67_i32 = arith.constant 67 : i32
    %470 = arith.addi %0, %c67_i32 : i32
    %471 = arith.index_cast %470 : i32 to index
    %472 = memref.load %arg1[%471] : memref<256xi32, #tpu.memory_space<smem>>
    %c67_i32_201 = arith.constant 67 : i32
    %c0_i32_202 = arith.constant 0 : i32
    %473 = tpu.memref_slice %arg2[%472, %c0_i32_202] : memref<1024x128xf32, #tpu.memory_space<any>> -> memref<1x128xf32, #tpu.memory_space<any>>
    %474 = tpu.memref_squeeze %473 : memref<1x128xf32, #tpu.memory_space<any>> -> memref<128xf32, #tpu.memory_space<any>>
    %c0_i32_203 = arith.constant 0 : i32
    %475 = tpu.memref_slice %arg3[%c67_i32_201, %c0_i32_203] : memref<128x128xf32, #tpu.memory_space<vmem>> -> memref<1x128xf32, #tpu.memory_space<vmem>>
    %476 = tpu.memref_squeeze %475 : memref<1x128xf32, #tpu.memory_space<vmem>> -> memref<128xf32, #tpu.memory_space<vmem>>
    tpu.enqueue_dma source(%474 : memref<128xf32, #tpu.memory_space<any>>) target(%476 : memref<128xf32, #tpu.memory_space<vmem>>) target_semaphore(%arg4 : memref<!tpu.dma_semaphore, #tpu.memory_space<semaphore_mem>>)
    %c68_i32 = arith.constant 68 : i32
    %477 = arith.addi %0, %c68_i32 : i32
    %478 = arith.index_cast %477 : i32 to index
    %479 = memref.load %arg1[%478] : memref<256xi32, #tpu.memory_space<smem>>
    %c68_i32_204 = arith.constant 68 : i32
    %c0_i32_205 = arith.constant 0 : i32
    %480 = tpu.memref_slice %arg2[%479, %c0_i32_205] : memref<1024x128xf32, #tpu.memory_space<any>> -> memref<1x128xf32, #tpu.memory_space<any>>
    %481 = tpu.memref_squeeze %480 : memref<1x128xf32, #tpu.memory_space<any>> -> memref<128xf32, #tpu.memory_space<any>>
    %c0_i32_206 = arith.constant 0 : i32
    %482 = tpu.memref_slice %arg3[%c68_i32_204, %c0_i32_206] : memref<128x128xf32, #tpu.memory_space<vmem>> -> memref<1x128xf32, #tpu.memory_space<vmem>>
    %483 = tpu.memref_squeeze %482 : memref<1x128xf32, #tpu.memory_space<vmem>> -> memref<128xf32, #tpu.memory_space<vmem>>
    tpu.enqueue_dma source(%481 : memref<128xf32, #tpu.memory_space<any>>) target(%483 : memref<128xf32, #tpu.memory_space<vmem>>) target_semaphore(%arg4 : memref<!tpu.dma_semaphore, #tpu.memory_space<semaphore_mem>>)
    %c69_i32 = arith.constant 69 : i32
    %484 = arith.addi %0, %c69_i32 : i32
    %485 = arith.index_cast %484 : i32 to index
    %486 = memref.load %arg1[%485] : memref<256xi32, #tpu.memory_space<smem>>
    %c69_i32_207 = arith.constant 69 : i32
    %c0_i32_208 = arith.constant 0 : i32
    %487 = tpu.memref_slice %arg2[%486, %c0_i32_208] : memref<1024x128xf32, #tpu.memory_space<any>> -> memref<1x128xf32, #tpu.memory_space<any>>
    %488 = tpu.memref_squeeze %487 : memref<1x128xf32, #tpu.memory_space<any>> -> memref<128xf32, #tpu.memory_space<any>>
    %c0_i32_209 = arith.constant 0 : i32
    %489 = tpu.memref_slice %arg3[%c69_i32_207, %c0_i32_209] : memref<128x128xf32, #tpu.memory_space<vmem>> -> memref<1x128xf32, #tpu.memory_space<vmem>>
    %490 = tpu.memref_squeeze %489 : memref<1x128xf32, #tpu.memory_space<vmem>> -> memref<128xf32, #tpu.memory_space<vmem>>
    tpu.enqueue_dma source(%488 : memref<128xf32, #tpu.memory_space<any>>) target(%490 : memref<128xf32, #tpu.memory_space<vmem>>) target_semaphore(%arg4 : memref<!tpu.dma_semaphore, #tpu.memory_space<semaphore_mem>>)
    %c70_i32 = arith.constant 70 : i32
    %491 = arith.addi %0, %c70_i32 : i32
    %492 = arith.index_cast %491 : i32 to index
    %493 = memref.load %arg1[%492] : memref<256xi32, #tpu.memory_space<smem>>
    %c70_i32_210 = arith.constant 70 : i32
    %c0_i32_211 = arith.constant 0 : i32
    %494 = tpu.memref_slice %arg2[%493, %c0_i32_211] : memref<1024x128xf32, #tpu.memory_space<any>> -> memref<1x128xf32, #tpu.memory_space<any>>
    %495 = tpu.memref_squeeze %494 : memref<1x128xf32, #tpu.memory_space<any>> -> memref<128xf32, #tpu.memory_space<any>>
    %c0_i32_212 = arith.constant 0 : i32
    %496 = tpu.memref_slice %arg3[%c70_i32_210, %c0_i32_212] : memref<128x128xf32, #tpu.memory_space<vmem>> -> memref<1x128xf32, #tpu.memory_space<vmem>>
    %497 = tpu.memref_squeeze %496 : memref<1x128xf32, #tpu.memory_space<vmem>> -> memref<128xf32, #tpu.memory_space<vmem>>
    tpu.enqueue_dma source(%495 : memref<128xf32, #tpu.memory_space<any>>) target(%497 : memref<128xf32, #tpu.memory_space<vmem>>) target_semaphore(%arg4 : memref<!tpu.dma_semaphore, #tpu.memory_space<semaphore_mem>>)
    %c71_i32 = arith.constant 71 : i32
    %498 = arith.addi %0, %c71_i32 : i32
    %499 = arith.index_cast %498 : i32 to index
    %500 = memref.load %arg1[%499] : memref<256xi32, #tpu.memory_space<smem>>
    %c71_i32_213 = arith.constant 71 : i32
    %c0_i32_214 = arith.constant 0 : i32
    %501 = tpu.memref_slice %arg2[%500, %c0_i32_214] : memref<1024x128xf32, #tpu.memory_space<any>> -> memref<1x128xf32, #tpu.memory_space<any>>
    %502 = tpu.memref_squeeze %501 : memref<1x128xf32, #tpu.memory_space<any>> -> memref<128xf32, #tpu.memory_space<any>>
    %c0_i32_215 = arith.constant 0 : i32
    %503 = tpu.memref_slice %arg3[%c71_i32_213, %c0_i32_215] : memref<128x128xf32, #tpu.memory_space<vmem>> -> memref<1x128xf32, #tpu.memory_space<vmem>>
    %504 = tpu.memref_squeeze %503 : memref<1x128xf32, #tpu.memory_space<vmem>> -> memref<128xf32, #tpu.memory_space<vmem>>
    tpu.enqueue_dma source(%502 : memref<128xf32, #tpu.memory_space<any>>) target(%504 : memref<128xf32, #tpu.memory_space<vmem>>) target_semaphore(%arg4 : memref<!tpu.dma_semaphore, #tpu.memory_space<semaphore_mem>>)
    %c72_i32 = arith.constant 72 : i32
    %505 = arith.addi %0, %c72_i32 : i32
    %506 = arith.index_cast %505 : i32 to index
    %507 = memref.load %arg1[%506] : memref<256xi32, #tpu.memory_space<smem>>
    %c72_i32_216 = arith.constant 72 : i32
    %c0_i32_217 = arith.constant 0 : i32
    %508 = tpu.memref_slice %arg2[%507, %c0_i32_217] : memref<1024x128xf32, #tpu.memory_space<any>> -> memref<1x128xf32, #tpu.memory_space<any>>
    %509 = tpu.memref_squeeze %508 : memref<1x128xf32, #tpu.memory_space<any>> -> memref<128xf32, #tpu.memory_space<any>>
    %c0_i32_218 = arith.constant 0 : i32
    %510 = tpu.memref_slice %arg3[%c72_i32_216, %c0_i32_218] : memref<128x128xf32, #tpu.memory_space<vmem>> -> memref<1x128xf32, #tpu.memory_space<vmem>>
    %511 = tpu.memref_squeeze %510 : memref<1x128xf32, #tpu.memory_space<vmem>> -> memref<128xf32, #tpu.memory_space<vmem>>
    tpu.enqueue_dma source(%509 : memref<128xf32, #tpu.memory_space<any>>) target(%511 : memref<128xf32, #tpu.memory_space<vmem>>) target_semaphore(%arg4 : memref<!tpu.dma_semaphore, #tpu.memory_space<semaphore_mem>>)
    %c73_i32 = arith.constant 73 : i32
    %512 = arith.addi %0, %c73_i32 : i32
    %513 = arith.index_cast %512 : i32 to index
    %514 = memref.load %arg1[%513] : memref<256xi32, #tpu.memory_space<smem>>
    %c73_i32_219 = arith.constant 73 : i32
    %c0_i32_220 = arith.constant 0 : i32
    %515 = tpu.memref_slice %arg2[%514, %c0_i32_220] : memref<1024x128xf32, #tpu.memory_space<any>> -> memref<1x128xf32, #tpu.memory_space<any>>
    %516 = tpu.memref_squeeze %515 : memref<1x128xf32, #tpu.memory_space<any>> -> memref<128xf32, #tpu.memory_space<any>>
    %c0_i32_221 = arith.constant 0 : i32
    %517 = tpu.memref_slice %arg3[%c73_i32_219, %c0_i32_221] : memref<128x128xf32, #tpu.memory_space<vmem>> -> memref<1x128xf32, #tpu.memory_space<vmem>>
    %518 = tpu.memref_squeeze %517 : memref<1x128xf32, #tpu.memory_space<vmem>> -> memref<128xf32, #tpu.memory_space<vmem>>
    tpu.enqueue_dma source(%516 : memref<128xf32, #tpu.memory_space<any>>) target(%518 : memref<128xf32, #tpu.memory_space<vmem>>) target_semaphore(%arg4 : memref<!tpu.dma_semaphore, #tpu.memory_space<semaphore_mem>>)
    %c74_i32 = arith.constant 74 : i32
    %519 = arith.addi %0, %c74_i32 : i32
    %520 = arith.index_cast %519 : i32 to index
    %521 = memref.load %arg1[%520] : memref<256xi32, #tpu.memory_space<smem>>
    %c74_i32_222 = arith.constant 74 : i32
    %c0_i32_223 = arith.constant 0 : i32
    %522 = tpu.memref_slice %arg2[%521, %c0_i32_223] : memref<1024x128xf32, #tpu.memory_space<any>> -> memref<1x128xf32, #tpu.memory_space<any>>
    %523 = tpu.memref_squeeze %522 : memref<1x128xf32, #tpu.memory_space<any>> -> memref<128xf32, #tpu.memory_space<any>>
    %c0_i32_224 = arith.constant 0 : i32
    %524 = tpu.memref_slice %arg3[%c74_i32_222, %c0_i32_224] : memref<128x128xf32, #tpu.memory_space<vmem>> -> memref<1x128xf32, #tpu.memory_space<vmem>>
    %525 = tpu.memref_squeeze %524 : memref<1x128xf32, #tpu.memory_space<vmem>> -> memref<128xf32, #tpu.memory_space<vmem>>
    tpu.enqueue_dma source(%523 : memref<128xf32, #tpu.memory_space<any>>) target(%525 : memref<128xf32, #tpu.memory_space<vmem>>) target_semaphore(%arg4 : memref<!tpu.dma_semaphore, #tpu.memory_space<semaphore_mem>>)
    %c75_i32 = arith.constant 75 : i32
    %526 = arith.addi %0, %c75_i32 : i32
    %527 = arith.index_cast %526 : i32 to index
    %528 = memref.load %arg1[%527] : memref<256xi32, #tpu.memory_space<smem>>
    %c75_i32_225 = arith.constant 75 : i32
    %c0_i32_226 = arith.constant 0 : i32
    %529 = tpu.memref_slice %arg2[%528, %c0_i32_226] : memref<1024x128xf32, #tpu.memory_space<any>> -> memref<1x128xf32, #tpu.memory_space<any>>
    %530 = tpu.memref_squeeze %529 : memref<1x128xf32, #tpu.memory_space<any>> -> memref<128xf32, #tpu.memory_space<any>>
    %c0_i32_227 = arith.constant 0 : i32
    %531 = tpu.memref_slice %arg3[%c75_i32_225, %c0_i32_227] : memref<128x128xf32, #tpu.memory_space<vmem>> -> memref<1x128xf32, #tpu.memory_space<vmem>>
    %532 = tpu.memref_squeeze %531 : memref<1x128xf32, #tpu.memory_space<vmem>> -> memref<128xf32, #tpu.memory_space<vmem>>
    tpu.enqueue_dma source(%530 : memref<128xf32, #tpu.memory_space<any>>) target(%532 : memref<128xf32, #tpu.memory_space<vmem>>) target_semaphore(%arg4 : memref<!tpu.dma_semaphore, #tpu.memory_space<semaphore_mem>>)
    %c76_i32 = arith.constant 76 : i32
    %533 = arith.addi %0, %c76_i32 : i32
    %534 = arith.index_cast %533 : i32 to index
    %535 = memref.load %arg1[%534] : memref<256xi32, #tpu.memory_space<smem>>
    %c76_i32_228 = arith.constant 76 : i32
    %c0_i32_229 = arith.constant 0 : i32
    %536 = tpu.memref_slice %arg2[%535, %c0_i32_229] : memref<1024x128xf32, #tpu.memory_space<any>> -> memref<1x128xf32, #tpu.memory_space<any>>
    %537 = tpu.memref_squeeze %536 : memref<1x128xf32, #tpu.memory_space<any>> -> memref<128xf32, #tpu.memory_space<any>>
    %c0_i32_230 = arith.constant 0 : i32
    %538 = tpu.memref_slice %arg3[%c76_i32_228, %c0_i32_230] : memref<128x128xf32, #tpu.memory_space<vmem>> -> memref<1x128xf32, #tpu.memory_space<vmem>>
    %539 = tpu.memref_squeeze %538 : memref<1x128xf32, #tpu.memory_space<vmem>> -> memref<128xf32, #tpu.memory_space<vmem>>
    tpu.enqueue_dma source(%537 : memref<128xf32, #tpu.memory_space<any>>) target(%539 : memref<128xf32, #tpu.memory_space<vmem>>) target_semaphore(%arg4 : memref<!tpu.dma_semaphore, #tpu.memory_space<semaphore_mem>>)
    %c77_i32 = arith.constant 77 : i32
    %540 = arith.addi %0, %c77_i32 : i32
    %541 = arith.index_cast %540 : i32 to index
    %542 = memref.load %arg1[%541] : memref<256xi32, #tpu.memory_space<smem>>
    %c77_i32_231 = arith.constant 77 : i32
    %c0_i32_232 = arith.constant 0 : i32
    %543 = tpu.memref_slice %arg2[%542, %c0_i32_232] : memref<1024x128xf32, #tpu.memory_space<any>> -> memref<1x128xf32, #tpu.memory_space<any>>
    %544 = tpu.memref_squeeze %543 : memref<1x128xf32, #tpu.memory_space<any>> -> memref<128xf32, #tpu.memory_space<any>>
    %c0_i32_233 = arith.constant 0 : i32
    %545 = tpu.memref_slice %arg3[%c77_i32_231, %c0_i32_233] : memref<128x128xf32, #tpu.memory_space<vmem>> -> memref<1x128xf32, #tpu.memory_space<vmem>>
    %546 = tpu.memref_squeeze %545 : memref<1x128xf32, #tpu.memory_space<vmem>> -> memref<128xf32, #tpu.memory_space<vmem>>
    tpu.enqueue_dma source(%544 : memref<128xf32, #tpu.memory_space<any>>) target(%546 : memref<128xf32, #tpu.memory_space<vmem>>) target_semaphore(%arg4 : memref<!tpu.dma_semaphore, #tpu.memory_space<semaphore_mem>>)
    %c78_i32 = arith.constant 78 : i32
    %547 = arith.addi %0, %c78_i32 : i32
    %548 = arith.index_cast %547 : i32 to index
    %549 = memref.load %arg1[%548] : memref<256xi32, #tpu.memory_space<smem>>
    %c78_i32_234 = arith.constant 78 : i32
    %c0_i32_235 = arith.constant 0 : i32
    %550 = tpu.memref_slice %arg2[%549, %c0_i32_235] : memref<1024x128xf32, #tpu.memory_space<any>> -> memref<1x128xf32, #tpu.memory_space<any>>
    %551 = tpu.memref_squeeze %550 : memref<1x128xf32, #tpu.memory_space<any>> -> memref<128xf32, #tpu.memory_space<any>>
    %c0_i32_236 = arith.constant 0 : i32
    %552 = tpu.memref_slice %arg3[%c78_i32_234, %c0_i32_236] : memref<128x128xf32, #tpu.memory_space<vmem>> -> memref<1x128xf32, #tpu.memory_space<vmem>>
    %553 = tpu.memref_squeeze %552 : memref<1x128xf32, #tpu.memory_space<vmem>> -> memref<128xf32, #tpu.memory_space<vmem>>
    tpu.enqueue_dma source(%551 : memref<128xf32, #tpu.memory_space<any>>) target(%553 : memref<128xf32, #tpu.memory_space<vmem>>) target_semaphore(%arg4 : memref<!tpu.dma_semaphore, #tpu.memory_space<semaphore_mem>>)
    %c79_i32 = arith.constant 79 : i32
    %554 = arith.addi %0, %c79_i32 : i32
    %555 = arith.index_cast %554 : i32 to index
    %556 = memref.load %arg1[%555] : memref<256xi32, #tpu.memory_space<smem>>
    %c79_i32_237 = arith.constant 79 : i32
    %c0_i32_238 = arith.constant 0 : i32
    %557 = tpu.memref_slice %arg2[%556, %c0_i32_238] : memref<1024x128xf32, #tpu.memory_space<any>> -> memref<1x128xf32, #tpu.memory_space<any>>
    %558 = tpu.memref_squeeze %557 : memref<1x128xf32, #tpu.memory_space<any>> -> memref<128xf32, #tpu.memory_space<any>>
    %c0_i32_239 = arith.constant 0 : i32
    %559 = tpu.memref_slice %arg3[%c79_i32_237, %c0_i32_239] : memref<128x128xf32, #tpu.memory_space<vmem>> -> memref<1x128xf32, #tpu.memory_space<vmem>>
    %560 = tpu.memref_squeeze %559 : memref<1x128xf32, #tpu.memory_space<vmem>> -> memref<128xf32, #tpu.memory_space<vmem>>
    tpu.enqueue_dma source(%558 : memref<128xf32, #tpu.memory_space<any>>) target(%560 : memref<128xf32, #tpu.memory_space<vmem>>) target_semaphore(%arg4 : memref<!tpu.dma_semaphore, #tpu.memory_space<semaphore_mem>>)
    %c80_i32 = arith.constant 80 : i32
    %561 = arith.addi %0, %c80_i32 : i32
    %562 = arith.index_cast %561 : i32 to index
    %563 = memref.load %arg1[%562] : memref<256xi32, #tpu.memory_space<smem>>
    %c80_i32_240 = arith.constant 80 : i32
    %c0_i32_241 = arith.constant 0 : i32
    %564 = tpu.memref_slice %arg2[%563, %c0_i32_241] : memref<1024x128xf32, #tpu.memory_space<any>> -> memref<1x128xf32, #tpu.memory_space<any>>
    %565 = tpu.memref_squeeze %564 : memref<1x128xf32, #tpu.memory_space<any>> -> memref<128xf32, #tpu.memory_space<any>>
    %c0_i32_242 = arith.constant 0 : i32
    %566 = tpu.memref_slice %arg3[%c80_i32_240, %c0_i32_242] : memref<128x128xf32, #tpu.memory_space<vmem>> -> memref<1x128xf32, #tpu.memory_space<vmem>>
    %567 = tpu.memref_squeeze %566 : memref<1x128xf32, #tpu.memory_space<vmem>> -> memref<128xf32, #tpu.memory_space<vmem>>
    tpu.enqueue_dma source(%565 : memref<128xf32, #tpu.memory_space<any>>) target(%567 : memref<128xf32, #tpu.memory_space<vmem>>) target_semaphore(%arg4 : memref<!tpu.dma_semaphore, #tpu.memory_space<semaphore_mem>>)
    %c81_i32 = arith.constant 81 : i32
    %568 = arith.addi %0, %c81_i32 : i32
    %569 = arith.index_cast %568 : i32 to index
    %570 = memref.load %arg1[%569] : memref<256xi32, #tpu.memory_space<smem>>
    %c81_i32_243 = arith.constant 81 : i32
    %c0_i32_244 = arith.constant 0 : i32
    %571 = tpu.memref_slice %arg2[%570, %c0_i32_244] : memref<1024x128xf32, #tpu.memory_space<any>> -> memref<1x128xf32, #tpu.memory_space<any>>
    %572 = tpu.memref_squeeze %571 : memref<1x128xf32, #tpu.memory_space<any>> -> memref<128xf32, #tpu.memory_space<any>>
    %c0_i32_245 = arith.constant 0 : i32
    %573 = tpu.memref_slice %arg3[%c81_i32_243, %c0_i32_245] : memref<128x128xf32, #tpu.memory_space<vmem>> -> memref<1x128xf32, #tpu.memory_space<vmem>>
    %574 = tpu.memref_squeeze %573 : memref<1x128xf32, #tpu.memory_space<vmem>> -> memref<128xf32, #tpu.memory_space<vmem>>
    tpu.enqueue_dma source(%572 : memref<128xf32, #tpu.memory_space<any>>) target(%574 : memref<128xf32, #tpu.memory_space<vmem>>) target_semaphore(%arg4 : memref<!tpu.dma_semaphore, #tpu.memory_space<semaphore_mem>>)
    %c82_i32 = arith.constant 82 : i32
    %575 = arith.addi %0, %c82_i32 : i32
    %576 = arith.index_cast %575 : i32 to index
    %577 = memref.load %arg1[%576] : memref<256xi32, #tpu.memory_space<smem>>
    %c82_i32_246 = arith.constant 82 : i32
    %c0_i32_247 = arith.constant 0 : i32
    %578 = tpu.memref_slice %arg2[%577, %c0_i32_247] : memref<1024x128xf32, #tpu.memory_space<any>> -> memref<1x128xf32, #tpu.memory_space<any>>
    %579 = tpu.memref_squeeze %578 : memref<1x128xf32, #tpu.memory_space<any>> -> memref<128xf32, #tpu.memory_space<any>>
    %c0_i32_248 = arith.constant 0 : i32
    %580 = tpu.memref_slice %arg3[%c82_i32_246, %c0_i32_248] : memref<128x128xf32, #tpu.memory_space<vmem>> -> memref<1x128xf32, #tpu.memory_space<vmem>>
    %581 = tpu.memref_squeeze %580 : memref<1x128xf32, #tpu.memory_space<vmem>> -> memref<128xf32, #tpu.memory_space<vmem>>
    tpu.enqueue_dma source(%579 : memref<128xf32, #tpu.memory_space<any>>) target(%581 : memref<128xf32, #tpu.memory_space<vmem>>) target_semaphore(%arg4 : memref<!tpu.dma_semaphore, #tpu.memory_space<semaphore_mem>>)
    %c83_i32 = arith.constant 83 : i32
    %582 = arith.addi %0, %c83_i32 : i32
    %583 = arith.index_cast %582 : i32 to index
    %584 = memref.load %arg1[%583] : memref<256xi32, #tpu.memory_space<smem>>
    %c83_i32_249 = arith.constant 83 : i32
    %c0_i32_250 = arith.constant 0 : i32
    %585 = tpu.memref_slice %arg2[%584, %c0_i32_250] : memref<1024x128xf32, #tpu.memory_space<any>> -> memref<1x128xf32, #tpu.memory_space<any>>
    %586 = tpu.memref_squeeze %585 : memref<1x128xf32, #tpu.memory_space<any>> -> memref<128xf32, #tpu.memory_space<any>>
    %c0_i32_251 = arith.constant 0 : i32
    %587 = tpu.memref_slice %arg3[%c83_i32_249, %c0_i32_251] : memref<128x128xf32, #tpu.memory_space<vmem>> -> memref<1x128xf32, #tpu.memory_space<vmem>>
    %588 = tpu.memref_squeeze %587 : memref<1x128xf32, #tpu.memory_space<vmem>> -> memref<128xf32, #tpu.memory_space<vmem>>
    tpu.enqueue_dma source(%586 : memref<128xf32, #tpu.memory_space<any>>) target(%588 : memref<128xf32, #tpu.memory_space<vmem>>) target_semaphore(%arg4 : memref<!tpu.dma_semaphore, #tpu.memory_space<semaphore_mem>>)
    %c84_i32 = arith.constant 84 : i32
    %589 = arith.addi %0, %c84_i32 : i32
    %590 = arith.index_cast %589 : i32 to index
    %591 = memref.load %arg1[%590] : memref<256xi32, #tpu.memory_space<smem>>
    %c84_i32_252 = arith.constant 84 : i32
    %c0_i32_253 = arith.constant 0 : i32
    %592 = tpu.memref_slice %arg2[%591, %c0_i32_253] : memref<1024x128xf32, #tpu.memory_space<any>> -> memref<1x128xf32, #tpu.memory_space<any>>
    %593 = tpu.memref_squeeze %592 : memref<1x128xf32, #tpu.memory_space<any>> -> memref<128xf32, #tpu.memory_space<any>>
    %c0_i32_254 = arith.constant 0 : i32
    %594 = tpu.memref_slice %arg3[%c84_i32_252, %c0_i32_254] : memref<128x128xf32, #tpu.memory_space<vmem>> -> memref<1x128xf32, #tpu.memory_space<vmem>>
    %595 = tpu.memref_squeeze %594 : memref<1x128xf32, #tpu.memory_space<vmem>> -> memref<128xf32, #tpu.memory_space<vmem>>
    tpu.enqueue_dma source(%593 : memref<128xf32, #tpu.memory_space<any>>) target(%595 : memref<128xf32, #tpu.memory_space<vmem>>) target_semaphore(%arg4 : memref<!tpu.dma_semaphore, #tpu.memory_space<semaphore_mem>>)
    %c85_i32 = arith.constant 85 : i32
    %596 = arith.addi %0, %c85_i32 : i32
    %597 = arith.index_cast %596 : i32 to index
    %598 = memref.load %arg1[%597] : memref<256xi32, #tpu.memory_space<smem>>
    %c85_i32_255 = arith.constant 85 : i32
    %c0_i32_256 = arith.constant 0 : i32
    %599 = tpu.memref_slice %arg2[%598, %c0_i32_256] : memref<1024x128xf32, #tpu.memory_space<any>> -> memref<1x128xf32, #tpu.memory_space<any>>
    %600 = tpu.memref_squeeze %599 : memref<1x128xf32, #tpu.memory_space<any>> -> memref<128xf32, #tpu.memory_space<any>>
    %c0_i32_257 = arith.constant 0 : i32
    %601 = tpu.memref_slice %arg3[%c85_i32_255, %c0_i32_257] : memref<128x128xf32, #tpu.memory_space<vmem>> -> memref<1x128xf32, #tpu.memory_space<vmem>>
    %602 = tpu.memref_squeeze %601 : memref<1x128xf32, #tpu.memory_space<vmem>> -> memref<128xf32, #tpu.memory_space<vmem>>
    tpu.enqueue_dma source(%600 : memref<128xf32, #tpu.memory_space<any>>) target(%602 : memref<128xf32, #tpu.memory_space<vmem>>) target_semaphore(%arg4 : memref<!tpu.dma_semaphore, #tpu.memory_space<semaphore_mem>>)
    %c86_i32 = arith.constant 86 : i32
    %603 = arith.addi %0, %c86_i32 : i32
    %604 = arith.index_cast %603 : i32 to index
    %605 = memref.load %arg1[%604] : memref<256xi32, #tpu.memory_space<smem>>
    %c86_i32_258 = arith.constant 86 : i32
    %c0_i32_259 = arith.constant 0 : i32
    %606 = tpu.memref_slice %arg2[%605, %c0_i32_259] : memref<1024x128xf32, #tpu.memory_space<any>> -> memref<1x128xf32, #tpu.memory_space<any>>
    %607 = tpu.memref_squeeze %606 : memref<1x128xf32, #tpu.memory_space<any>> -> memref<128xf32, #tpu.memory_space<any>>
    %c0_i32_260 = arith.constant 0 : i32
    %608 = tpu.memref_slice %arg3[%c86_i32_258, %c0_i32_260] : memref<128x128xf32, #tpu.memory_space<vmem>> -> memref<1x128xf32, #tpu.memory_space<vmem>>
    %609 = tpu.memref_squeeze %608 : memref<1x128xf32, #tpu.memory_space<vmem>> -> memref<128xf32, #tpu.memory_space<vmem>>
    tpu.enqueue_dma source(%607 : memref<128xf32, #tpu.memory_space<any>>) target(%609 : memref<128xf32, #tpu.memory_space<vmem>>) target_semaphore(%arg4 : memref<!tpu.dma_semaphore, #tpu.memory_space<semaphore_mem>>)
    %c87_i32 = arith.constant 87 : i32
    %610 = arith.addi %0, %c87_i32 : i32
    %611 = arith.index_cast %610 : i32 to index
    %612 = memref.load %arg1[%611] : memref<256xi32, #tpu.memory_space<smem>>
    %c87_i32_261 = arith.constant 87 : i32
    %c0_i32_262 = arith.constant 0 : i32
    %613 = tpu.memref_slice %arg2[%612, %c0_i32_262] : memref<1024x128xf32, #tpu.memory_space<any>> -> memref<1x128xf32, #tpu.memory_space<any>>
    %614 = tpu.memref_squeeze %613 : memref<1x128xf32, #tpu.memory_space<any>> -> memref<128xf32, #tpu.memory_space<any>>
    %c0_i32_263 = arith.constant 0 : i32
    %615 = tpu.memref_slice %arg3[%c87_i32_261, %c0_i32_263] : memref<128x128xf32, #tpu.memory_space<vmem>> -> memref<1x128xf32, #tpu.memory_space<vmem>>
    %616 = tpu.memref_squeeze %615 : memref<1x128xf32, #tpu.memory_space<vmem>> -> memref<128xf32, #tpu.memory_space<vmem>>
    tpu.enqueue_dma source(%614 : memref<128xf32, #tpu.memory_space<any>>) target(%616 : memref<128xf32, #tpu.memory_space<vmem>>) target_semaphore(%arg4 : memref<!tpu.dma_semaphore, #tpu.memory_space<semaphore_mem>>)
    %c88_i32 = arith.constant 88 : i32
    %617 = arith.addi %0, %c88_i32 : i32
    %618 = arith.index_cast %617 : i32 to index
    %619 = memref.load %arg1[%618] : memref<256xi32, #tpu.memory_space<smem>>
    %c88_i32_264 = arith.constant 88 : i32
    %c0_i32_265 = arith.constant 0 : i32
    %620 = tpu.memref_slice %arg2[%619, %c0_i32_265] : memref<1024x128xf32, #tpu.memory_space<any>> -> memref<1x128xf32, #tpu.memory_space<any>>
    %621 = tpu.memref_squeeze %620 : memref<1x128xf32, #tpu.memory_space<any>> -> memref<128xf32, #tpu.memory_space<any>>
    %c0_i32_266 = arith.constant 0 : i32
    %622 = tpu.memref_slice %arg3[%c88_i32_264, %c0_i32_266] : memref<128x128xf32, #tpu.memory_space<vmem>> -> memref<1x128xf32, #tpu.memory_space<vmem>>
    %623 = tpu.memref_squeeze %622 : memref<1x128xf32, #tpu.memory_space<vmem>> -> memref<128xf32, #tpu.memory_space<vmem>>
    tpu.enqueue_dma source(%621 : memref<128xf32, #tpu.memory_space<any>>) target(%623 : memref<128xf32, #tpu.memory_space<vmem>>) target_semaphore(%arg4 : memref<!tpu.dma_semaphore, #tpu.memory_space<semaphore_mem>>)
    %c89_i32 = arith.constant 89 : i32
    %624 = arith.addi %0, %c89_i32 : i32
    %625 = arith.index_cast %624 : i32 to index
    %626 = memref.load %arg1[%625] : memref<256xi32, #tpu.memory_space<smem>>
    %c89_i32_267 = arith.constant 89 : i32
    %c0_i32_268 = arith.constant 0 : i32
    %627 = tpu.memref_slice %arg2[%626, %c0_i32_268] : memref<1024x128xf32, #tpu.memory_space<any>> -> memref<1x128xf32, #tpu.memory_space<any>>
    %628 = tpu.memref_squeeze %627 : memref<1x128xf32, #tpu.memory_space<any>> -> memref<128xf32, #tpu.memory_space<any>>
    %c0_i32_269 = arith.constant 0 : i32
    %629 = tpu.memref_slice %arg3[%c89_i32_267, %c0_i32_269] : memref<128x128xf32, #tpu.memory_space<vmem>> -> memref<1x128xf32, #tpu.memory_space<vmem>>
    %630 = tpu.memref_squeeze %629 : memref<1x128xf32, #tpu.memory_space<vmem>> -> memref<128xf32, #tpu.memory_space<vmem>>
    tpu.enqueue_dma source(%628 : memref<128xf32, #tpu.memory_space<any>>) target(%630 : memref<128xf32, #tpu.memory_space<vmem>>) target_semaphore(%arg4 : memref<!tpu.dma_semaphore, #tpu.memory_space<semaphore_mem>>)
    %c90_i32 = arith.constant 90 : i32
    %631 = arith.addi %0, %c90_i32 : i32
    %632 = arith.index_cast %631 : i32 to index
    %633 = memref.load %arg1[%632] : memref<256xi32, #tpu.memory_space<smem>>
    %c90_i32_270 = arith.constant 90 : i32
    %c0_i32_271 = arith.constant 0 : i32
    %634 = tpu.memref_slice %arg2[%633, %c0_i32_271] : memref<1024x128xf32, #tpu.memory_space<any>> -> memref<1x128xf32, #tpu.memory_space<any>>
    %635 = tpu.memref_squeeze %634 : memref<1x128xf32, #tpu.memory_space<any>> -> memref<128xf32, #tpu.memory_space<any>>
    %c0_i32_272 = arith.constant 0 : i32
    %636 = tpu.memref_slice %arg3[%c90_i32_270, %c0_i32_272] : memref<128x128xf32, #tpu.memory_space<vmem>> -> memref<1x128xf32, #tpu.memory_space<vmem>>
    %637 = tpu.memref_squeeze %636 : memref<1x128xf32, #tpu.memory_space<vmem>> -> memref<128xf32, #tpu.memory_space<vmem>>
    tpu.enqueue_dma source(%635 : memref<128xf32, #tpu.memory_space<any>>) target(%637 : memref<128xf32, #tpu.memory_space<vmem>>) target_semaphore(%arg4 : memref<!tpu.dma_semaphore, #tpu.memory_space<semaphore_mem>>)
    %c91_i32 = arith.constant 91 : i32
    %638 = arith.addi %0, %c91_i32 : i32
    %639 = arith.index_cast %638 : i32 to index
    %640 = memref.load %arg1[%639] : memref<256xi32, #tpu.memory_space<smem>>
    %c91_i32_273 = arith.constant 91 : i32
    %c0_i32_274 = arith.constant 0 : i32
    %641 = tpu.memref_slice %arg2[%640, %c0_i32_274] : memref<1024x128xf32, #tpu.memory_space<any>> -> memref<1x128xf32, #tpu.memory_space<any>>
    %642 = tpu.memref_squeeze %641 : memref<1x128xf32, #tpu.memory_space<any>> -> memref<128xf32, #tpu.memory_space<any>>
    %c0_i32_275 = arith.constant 0 : i32
    %643 = tpu.memref_slice %arg3[%c91_i32_273, %c0_i32_275] : memref<128x128xf32, #tpu.memory_space<vmem>> -> memref<1x128xf32, #tpu.memory_space<vmem>>
    %644 = tpu.memref_squeeze %643 : memref<1x128xf32, #tpu.memory_space<vmem>> -> memref<128xf32, #tpu.memory_space<vmem>>
    tpu.enqueue_dma source(%642 : memref<128xf32, #tpu.memory_space<any>>) target(%644 : memref<128xf32, #tpu.memory_space<vmem>>) target_semaphore(%arg4 : memref<!tpu.dma_semaphore, #tpu.memory_space<semaphore_mem>>)
    %c92_i32 = arith.constant 92 : i32
    %645 = arith.addi %0, %c92_i32 : i32
    %646 = arith.index_cast %645 : i32 to index
    %647 = memref.load %arg1[%646] : memref<256xi32, #tpu.memory_space<smem>>
    %c92_i32_276 = arith.constant 92 : i32
    %c0_i32_277 = arith.constant 0 : i32
    %648 = tpu.memref_slice %arg2[%647, %c0_i32_277] : memref<1024x128xf32, #tpu.memory_space<any>> -> memref<1x128xf32, #tpu.memory_space<any>>
    %649 = tpu.memref_squeeze %648 : memref<1x128xf32, #tpu.memory_space<any>> -> memref<128xf32, #tpu.memory_space<any>>
    %c0_i32_278 = arith.constant 0 : i32
    %650 = tpu.memref_slice %arg3[%c92_i32_276, %c0_i32_278] : memref<128x128xf32, #tpu.memory_space<vmem>> -> memref<1x128xf32, #tpu.memory_space<vmem>>
    %651 = tpu.memref_squeeze %650 : memref<1x128xf32, #tpu.memory_space<vmem>> -> memref<128xf32, #tpu.memory_space<vmem>>
    tpu.enqueue_dma source(%649 : memref<128xf32, #tpu.memory_space<any>>) target(%651 : memref<128xf32, #tpu.memory_space<vmem>>) target_semaphore(%arg4 : memref<!tpu.dma_semaphore, #tpu.memory_space<semaphore_mem>>)
    %c93_i32 = arith.constant 93 : i32
    %652 = arith.addi %0, %c93_i32 : i32
    %653 = arith.index_cast %652 : i32 to index
    %654 = memref.load %arg1[%653] : memref<256xi32, #tpu.memory_space<smem>>
    %c93_i32_279 = arith.constant 93 : i32
    %c0_i32_280 = arith.constant 0 : i32
    %655 = tpu.memref_slice %arg2[%654, %c0_i32_280] : memref<1024x128xf32, #tpu.memory_space<any>> -> memref<1x128xf32, #tpu.memory_space<any>>
    %656 = tpu.memref_squeeze %655 : memref<1x128xf32, #tpu.memory_space<any>> -> memref<128xf32, #tpu.memory_space<any>>
    %c0_i32_281 = arith.constant 0 : i32
    %657 = tpu.memref_slice %arg3[%c93_i32_279, %c0_i32_281] : memref<128x128xf32, #tpu.memory_space<vmem>> -> memref<1x128xf32, #tpu.memory_space<vmem>>
    %658 = tpu.memref_squeeze %657 : memref<1x128xf32, #tpu.memory_space<vmem>> -> memref<128xf32, #tpu.memory_space<vmem>>
    tpu.enqueue_dma source(%656 : memref<128xf32, #tpu.memory_space<any>>) target(%658 : memref<128xf32, #tpu.memory_space<vmem>>) target_semaphore(%arg4 : memref<!tpu.dma_semaphore, #tpu.memory_space<semaphore_mem>>)
    %c94_i32 = arith.constant 94 : i32
    %659 = arith.addi %0, %c94_i32 : i32
    %660 = arith.index_cast %659 : i32 to index
    %661 = memref.load %arg1[%660] : memref<256xi32, #tpu.memory_space<smem>>
    %c94_i32_282 = arith.constant 94 : i32
    %c0_i32_283 = arith.constant 0 : i32
    %662 = tpu.memref_slice %arg2[%661, %c0_i32_283] : memref<1024x128xf32, #tpu.memory_space<any>> -> memref<1x128xf32, #tpu.memory_space<any>>
    %663 = tpu.memref_squeeze %662 : memref<1x128xf32, #tpu.memory_space<any>> -> memref<128xf32, #tpu.memory_space<any>>
    %c0_i32_284 = arith.constant 0 : i32
    %664 = tpu.memref_slice %arg3[%c94_i32_282, %c0_i32_284] : memref<128x128xf32, #tpu.memory_space<vmem>> -> memref<1x128xf32, #tpu.memory_space<vmem>>
    %665 = tpu.memref_squeeze %664 : memref<1x128xf32, #tpu.memory_space<vmem>> -> memref<128xf32, #tpu.memory_space<vmem>>
    tpu.enqueue_dma source(%663 : memref<128xf32, #tpu.memory_space<any>>) target(%665 : memref<128xf32, #tpu.memory_space<vmem>>) target_semaphore(%arg4 : memref<!tpu.dma_semaphore, #tpu.memory_space<semaphore_mem>>)
    %c95_i32 = arith.constant 95 : i32
    %666 = arith.addi %0, %c95_i32 : i32
    %667 = arith.index_cast %666 : i32 to index
    %668 = memref.load %arg1[%667] : memref<256xi32, #tpu.memory_space<smem>>
    %c95_i32_285 = arith.constant 95 : i32
    %c0_i32_286 = arith.constant 0 : i32
    %669 = tpu.memref_slice %arg2[%668, %c0_i32_286] : memref<1024x128xf32, #tpu.memory_space<any>> -> memref<1x128xf32, #tpu.memory_space<any>>
    %670 = tpu.memref_squeeze %669 : memref<1x128xf32, #tpu.memory_space<any>> -> memref<128xf32, #tpu.memory_space<any>>
    %c0_i32_287 = arith.constant 0 : i32
    %671 = tpu.memref_slice %arg3[%c95_i32_285, %c0_i32_287] : memref<128x128xf32, #tpu.memory_space<vmem>> -> memref<1x128xf32, #tpu.memory_space<vmem>>
    %672 = tpu.memref_squeeze %671 : memref<1x128xf32, #tpu.memory_space<vmem>> -> memref<128xf32, #tpu.memory_space<vmem>>
    tpu.enqueue_dma source(%670 : memref<128xf32, #tpu.memory_space<any>>) target(%672 : memref<128xf32, #tpu.memory_space<vmem>>) target_semaphore(%arg4 : memref<!tpu.dma_semaphore, #tpu.memory_space<semaphore_mem>>)
    %c96_i32 = arith.constant 96 : i32
    %673 = arith.addi %0, %c96_i32 : i32
    %674 = arith.index_cast %673 : i32 to index
    %675 = memref.load %arg1[%674] : memref<256xi32, #tpu.memory_space<smem>>
    %c96_i32_288 = arith.constant 96 : i32
    %c0_i32_289 = arith.constant 0 : i32
    %676 = tpu.memref_slice %arg2[%675, %c0_i32_289] : memref<1024x128xf32, #tpu.memory_space<any>> -> memref<1x128xf32, #tpu.memory_space<any>>
    %677 = tpu.memref_squeeze %676 : memref<1x128xf32, #tpu.memory_space<any>> -> memref<128xf32, #tpu.memory_space<any>>
    %c0_i32_290 = arith.constant 0 : i32
    %678 = tpu.memref_slice %arg3[%c96_i32_288, %c0_i32_290] : memref<128x128xf32, #tpu.memory_space<vmem>> -> memref<1x128xf32, #tpu.memory_space<vmem>>
    %679 = tpu.memref_squeeze %678 : memref<1x128xf32, #tpu.memory_space<vmem>> -> memref<128xf32, #tpu.memory_space<vmem>>
    tpu.enqueue_dma source(%677 : memref<128xf32, #tpu.memory_space<any>>) target(%679 : memref<128xf32, #tpu.memory_space<vmem>>) target_semaphore(%arg4 : memref<!tpu.dma_semaphore, #tpu.memory_space<semaphore_mem>>)
    %c97_i32 = arith.constant 97 : i32
    %680 = arith.addi %0, %c97_i32 : i32
    %681 = arith.index_cast %680 : i32 to index
    %682 = memref.load %arg1[%681] : memref<256xi32, #tpu.memory_space<smem>>
    %c97_i32_291 = arith.constant 97 : i32
    %c0_i32_292 = arith.constant 0 : i32
    %683 = tpu.memref_slice %arg2[%682, %c0_i32_292] : memref<1024x128xf32, #tpu.memory_space<any>> -> memref<1x128xf32, #tpu.memory_space<any>>
    %684 = tpu.memref_squeeze %683 : memref<1x128xf32, #tpu.memory_space<any>> -> memref<128xf32, #tpu.memory_space<any>>
    %c0_i32_293 = arith.constant 0 : i32
    %685 = tpu.memref_slice %arg3[%c97_i32_291, %c0_i32_293] : memref<128x128xf32, #tpu.memory_space<vmem>> -> memref<1x128xf32, #tpu.memory_space<vmem>>
    %686 = tpu.memref_squeeze %685 : memref<1x128xf32, #tpu.memory_space<vmem>> -> memref<128xf32, #tpu.memory_space<vmem>>
    tpu.enqueue_dma source(%684 : memref<128xf32, #tpu.memory_space<any>>) target(%686 : memref<128xf32, #tpu.memory_space<vmem>>) target_semaphore(%arg4 : memref<!tpu.dma_semaphore, #tpu.memory_space<semaphore_mem>>)
    %c98_i32 = arith.constant 98 : i32
    %687 = arith.addi %0, %c98_i32 : i32
    %688 = arith.index_cast %687 : i32 to index
    %689 = memref.load %arg1[%688] : memref<256xi32, #tpu.memory_space<smem>>
    %c98_i32_294 = arith.constant 98 : i32
    %c0_i32_295 = arith.constant 0 : i32
    %690 = tpu.memref_slice %arg2[%689, %c0_i32_295] : memref<1024x128xf32, #tpu.memory_space<any>> -> memref<1x128xf32, #tpu.memory_space<any>>
    %691 = tpu.memref_squeeze %690 : memref<1x128xf32, #tpu.memory_space<any>> -> memref<128xf32, #tpu.memory_space<any>>
    %c0_i32_296 = arith.constant 0 : i32
    %692 = tpu.memref_slice %arg3[%c98_i32_294, %c0_i32_296] : memref<128x128xf32, #tpu.memory_space<vmem>> -> memref<1x128xf32, #tpu.memory_space<vmem>>
    %693 = tpu.memref_squeeze %692 : memref<1x128xf32, #tpu.memory_space<vmem>> -> memref<128xf32, #tpu.memory_space<vmem>>
    tpu.enqueue_dma source(%691 : memref<128xf32, #tpu.memory_space<any>>) target(%693 : memref<128xf32, #tpu.memory_space<vmem>>) target_semaphore(%arg4 : memref<!tpu.dma_semaphore, #tpu.memory_space<semaphore_mem>>)
    %c99_i32 = arith.constant 99 : i32
    %694 = arith.addi %0, %c99_i32 : i32
    %695 = arith.index_cast %694 : i32 to index
    %696 = memref.load %arg1[%695] : memref<256xi32, #tpu.memory_space<smem>>
    %c99_i32_297 = arith.constant 99 : i32
    %c0_i32_298 = arith.constant 0 : i32
    %697 = tpu.memref_slice %arg2[%696, %c0_i32_298] : memref<1024x128xf32, #tpu.memory_space<any>> -> memref<1x128xf32, #tpu.memory_space<any>>
    %698 = tpu.memref_squeeze %697 : memref<1x128xf32, #tpu.memory_space<any>> -> memref<128xf32, #tpu.memory_space<any>>
    %c0_i32_299 = arith.constant 0 : i32
    %699 = tpu.memref_slice %arg3[%c99_i32_297, %c0_i32_299] : memref<128x128xf32, #tpu.memory_space<vmem>> -> memref<1x128xf32, #tpu.memory_space<vmem>>
    %700 = tpu.memref_squeeze %699 : memref<1x128xf32, #tpu.memory_space<vmem>> -> memref<128xf32, #tpu.memory_space<vmem>>
    tpu.enqueue_dma source(%698 : memref<128xf32, #tpu.memory_space<any>>) target(%700 : memref<128xf32, #tpu.memory_space<vmem>>) target_semaphore(%arg4 : memref<!tpu.dma_semaphore, #tpu.memory_space<semaphore_mem>>)
    %c100_i32 = arith.constant 100 : i32
    %701 = arith.addi %0, %c100_i32 : i32
    %702 = arith.index_cast %701 : i32 to index
    %703 = memref.load %arg1[%702] : memref<256xi32, #tpu.memory_space<smem>>
    %c100_i32_300 = arith.constant 100 : i32
    %c0_i32_301 = arith.constant 0 : i32
    %704 = tpu.memref_slice %arg2[%703, %c0_i32_301] : memref<1024x128xf32, #tpu.memory_space<any>> -> memref<1x128xf32, #tpu.memory_space<any>>
    %705 = tpu.memref_squeeze %704 : memref<1x128xf32, #tpu.memory_space<any>> -> memref<128xf32, #tpu.memory_space<any>>
    %c0_i32_302 = arith.constant 0 : i32
    %706 = tpu.memref_slice %arg3[%c100_i32_300, %c0_i32_302] : memref<128x128xf32, #tpu.memory_space<vmem>> -> memref<1x128xf32, #tpu.memory_space<vmem>>
    %707 = tpu.memref_squeeze %706 : memref<1x128xf32, #tpu.memory_space<vmem>> -> memref<128xf32, #tpu.memory_space<vmem>>
    tpu.enqueue_dma source(%705 : memref<128xf32, #tpu.memory_space<any>>) target(%707 : memref<128xf32, #tpu.memory_space<vmem>>) target_semaphore(%arg4 : memref<!tpu.dma_semaphore, #tpu.memory_space<semaphore_mem>>)
    %c101_i32 = arith.constant 101 : i32
    %708 = arith.addi %0, %c101_i32 : i32
    %709 = arith.index_cast %708 : i32 to index
    %710 = memref.load %arg1[%709] : memref<256xi32, #tpu.memory_space<smem>>
    %c101_i32_303 = arith.constant 101 : i32
    %c0_i32_304 = arith.constant 0 : i32
    %711 = tpu.memref_slice %arg2[%710, %c0_i32_304] : memref<1024x128xf32, #tpu.memory_space<any>> -> memref<1x128xf32, #tpu.memory_space<any>>
    %712 = tpu.memref_squeeze %711 : memref<1x128xf32, #tpu.memory_space<any>> -> memref<128xf32, #tpu.memory_space<any>>
    %c0_i32_305 = arith.constant 0 : i32
    %713 = tpu.memref_slice %arg3[%c101_i32_303, %c0_i32_305] : memref<128x128xf32, #tpu.memory_space<vmem>> -> memref<1x128xf32, #tpu.memory_space<vmem>>
    %714 = tpu.memref_squeeze %713 : memref<1x128xf32, #tpu.memory_space<vmem>> -> memref<128xf32, #tpu.memory_space<vmem>>
    tpu.enqueue_dma source(%712 : memref<128xf32, #tpu.memory_space<any>>) target(%714 : memref<128xf32, #tpu.memory_space<vmem>>) target_semaphore(%arg4 : memref<!tpu.dma_semaphore, #tpu.memory_space<semaphore_mem>>)
    %c102_i32 = arith.constant 102 : i32
    %715 = arith.addi %0, %c102_i32 : i32
    %716 = arith.index_cast %715 : i32 to index
    %717 = memref.load %arg1[%716] : memref<256xi32, #tpu.memory_space<smem>>
    %c102_i32_306 = arith.constant 102 : i32
    %c0_i32_307 = arith.constant 0 : i32
    %718 = tpu.memref_slice %arg2[%717, %c0_i32_307] : memref<1024x128xf32, #tpu.memory_space<any>> -> memref<1x128xf32, #tpu.memory_space<any>>
    %719 = tpu.memref_squeeze %718 : memref<1x128xf32, #tpu.memory_space<any>> -> memref<128xf32, #tpu.memory_space<any>>
    %c0_i32_308 = arith.constant 0 : i32
    %720 = tpu.memref_slice %arg3[%c102_i32_306, %c0_i32_308] : memref<128x128xf32, #tpu.memory_space<vmem>> -> memref<1x128xf32, #tpu.memory_space<vmem>>
    %721 = tpu.memref_squeeze %720 : memref<1x128xf32, #tpu.memory_space<vmem>> -> memref<128xf32, #tpu.memory_space<vmem>>
    tpu.enqueue_dma source(%719 : memref<128xf32, #tpu.memory_space<any>>) target(%721 : memref<128xf32, #tpu.memory_space<vmem>>) target_semaphore(%arg4 : memref<!tpu.dma_semaphore, #tpu.memory_space<semaphore_mem>>)
    %c103_i32 = arith.constant 103 : i32
    %722 = arith.addi %0, %c103_i32 : i32
    %723 = arith.index_cast %722 : i32 to index
    %724 = memref.load %arg1[%723] : memref<256xi32, #tpu.memory_space<smem>>
    %c103_i32_309 = arith.constant 103 : i32
    %c0_i32_310 = arith.constant 0 : i32
    %725 = tpu.memref_slice %arg2[%724, %c0_i32_310] : memref<1024x128xf32, #tpu.memory_space<any>> -> memref<1x128xf32, #tpu.memory_space<any>>
    %726 = tpu.memref_squeeze %725 : memref<1x128xf32, #tpu.memory_space<any>> -> memref<128xf32, #tpu.memory_space<any>>
    %c0_i32_311 = arith.constant 0 : i32
    %727 = tpu.memref_slice %arg3[%c103_i32_309, %c0_i32_311] : memref<128x128xf32, #tpu.memory_space<vmem>> -> memref<1x128xf32, #tpu.memory_space<vmem>>
    %728 = tpu.memref_squeeze %727 : memref<1x128xf32, #tpu.memory_space<vmem>> -> memref<128xf32, #tpu.memory_space<vmem>>
    tpu.enqueue_dma source(%726 : memref<128xf32, #tpu.memory_space<any>>) target(%728 : memref<128xf32, #tpu.memory_space<vmem>>) target_semaphore(%arg4 : memref<!tpu.dma_semaphore, #tpu.memory_space<semaphore_mem>>)
    %c104_i32 = arith.constant 104 : i32
    %729 = arith.addi %0, %c104_i32 : i32
    %730 = arith.index_cast %729 : i32 to index
    %731 = memref.load %arg1[%730] : memref<256xi32, #tpu.memory_space<smem>>
    %c104_i32_312 = arith.constant 104 : i32
    %c0_i32_313 = arith.constant 0 : i32
    %732 = tpu.memref_slice %arg2[%731, %c0_i32_313] : memref<1024x128xf32, #tpu.memory_space<any>> -> memref<1x128xf32, #tpu.memory_space<any>>
    %733 = tpu.memref_squeeze %732 : memref<1x128xf32, #tpu.memory_space<any>> -> memref<128xf32, #tpu.memory_space<any>>
    %c0_i32_314 = arith.constant 0 : i32
    %734 = tpu.memref_slice %arg3[%c104_i32_312, %c0_i32_314] : memref<128x128xf32, #tpu.memory_space<vmem>> -> memref<1x128xf32, #tpu.memory_space<vmem>>
    %735 = tpu.memref_squeeze %734 : memref<1x128xf32, #tpu.memory_space<vmem>> -> memref<128xf32, #tpu.memory_space<vmem>>
    tpu.enqueue_dma source(%733 : memref<128xf32, #tpu.memory_space<any>>) target(%735 : memref<128xf32, #tpu.memory_space<vmem>>) target_semaphore(%arg4 : memref<!tpu.dma_semaphore, #tpu.memory_space<semaphore_mem>>)
    %c105_i32 = arith.constant 105 : i32
    %736 = arith.addi %0, %c105_i32 : i32
    %737 = arith.index_cast %736 : i32 to index
    %738 = memref.load %arg1[%737] : memref<256xi32, #tpu.memory_space<smem>>
    %c105_i32_315 = arith.constant 105 : i32
    %c0_i32_316 = arith.constant 0 : i32
    %739 = tpu.memref_slice %arg2[%738, %c0_i32_316] : memref<1024x128xf32, #tpu.memory_space<any>> -> memref<1x128xf32, #tpu.memory_space<any>>
    %740 = tpu.memref_squeeze %739 : memref<1x128xf32, #tpu.memory_space<any>> -> memref<128xf32, #tpu.memory_space<any>>
    %c0_i32_317 = arith.constant 0 : i32
    %741 = tpu.memref_slice %arg3[%c105_i32_315, %c0_i32_317] : memref<128x128xf32, #tpu.memory_space<vmem>> -> memref<1x128xf32, #tpu.memory_space<vmem>>
    %742 = tpu.memref_squeeze %741 : memref<1x128xf32, #tpu.memory_space<vmem>> -> memref<128xf32, #tpu.memory_space<vmem>>
    tpu.enqueue_dma source(%740 : memref<128xf32, #tpu.memory_space<any>>) target(%742 : memref<128xf32, #tpu.memory_space<vmem>>) target_semaphore(%arg4 : memref<!tpu.dma_semaphore, #tpu.memory_space<semaphore_mem>>)
    %c106_i32 = arith.constant 106 : i32
    %743 = arith.addi %0, %c106_i32 : i32
    %744 = arith.index_cast %743 : i32 to index
    %745 = memref.load %arg1[%744] : memref<256xi32, #tpu.memory_space<smem>>
    %c106_i32_318 = arith.constant 106 : i32
    %c0_i32_319 = arith.constant 0 : i32
    %746 = tpu.memref_slice %arg2[%745, %c0_i32_319] : memref<1024x128xf32, #tpu.memory_space<any>> -> memref<1x128xf32, #tpu.memory_space<any>>
    %747 = tpu.memref_squeeze %746 : memref<1x128xf32, #tpu.memory_space<any>> -> memref<128xf32, #tpu.memory_space<any>>
    %c0_i32_320 = arith.constant 0 : i32
    %748 = tpu.memref_slice %arg3[%c106_i32_318, %c0_i32_320] : memref<128x128xf32, #tpu.memory_space<vmem>> -> memref<1x128xf32, #tpu.memory_space<vmem>>
    %749 = tpu.memref_squeeze %748 : memref<1x128xf32, #tpu.memory_space<vmem>> -> memref<128xf32, #tpu.memory_space<vmem>>
    tpu.enqueue_dma source(%747 : memref<128xf32, #tpu.memory_space<any>>) target(%749 : memref<128xf32, #tpu.memory_space<vmem>>) target_semaphore(%arg4 : memref<!tpu.dma_semaphore, #tpu.memory_space<semaphore_mem>>)
    %c107_i32 = arith.constant 107 : i32
    %750 = arith.addi %0, %c107_i32 : i32
    %751 = arith.index_cast %750 : i32 to index
    %752 = memref.load %arg1[%751] : memref<256xi32, #tpu.memory_space<smem>>
    %c107_i32_321 = arith.constant 107 : i32
    %c0_i32_322 = arith.constant 0 : i32
    %753 = tpu.memref_slice %arg2[%752, %c0_i32_322] : memref<1024x128xf32, #tpu.memory_space<any>> -> memref<1x128xf32, #tpu.memory_space<any>>
    %754 = tpu.memref_squeeze %753 : memref<1x128xf32, #tpu.memory_space<any>> -> memref<128xf32, #tpu.memory_space<any>>
    %c0_i32_323 = arith.constant 0 : i32
    %755 = tpu.memref_slice %arg3[%c107_i32_321, %c0_i32_323] : memref<128x128xf32, #tpu.memory_space<vmem>> -> memref<1x128xf32, #tpu.memory_space<vmem>>
    %756 = tpu.memref_squeeze %755 : memref<1x128xf32, #tpu.memory_space<vmem>> -> memref<128xf32, #tpu.memory_space<vmem>>
    tpu.enqueue_dma source(%754 : memref<128xf32, #tpu.memory_space<any>>) target(%756 : memref<128xf32, #tpu.memory_space<vmem>>) target_semaphore(%arg4 : memref<!tpu.dma_semaphore, #tpu.memory_space<semaphore_mem>>)
    %c108_i32 = arith.constant 108 : i32
    %757 = arith.addi %0, %c108_i32 : i32
    %758 = arith.index_cast %757 : i32 to index
    %759 = memref.load %arg1[%758] : memref<256xi32, #tpu.memory_space<smem>>
    %c108_i32_324 = arith.constant 108 : i32
    %c0_i32_325 = arith.constant 0 : i32
    %760 = tpu.memref_slice %arg2[%759, %c0_i32_325] : memref<1024x128xf32, #tpu.memory_space<any>> -> memref<1x128xf32, #tpu.memory_space<any>>
    %761 = tpu.memref_squeeze %760 : memref<1x128xf32, #tpu.memory_space<any>> -> memref<128xf32, #tpu.memory_space<any>>
    %c0_i32_326 = arith.constant 0 : i32
    %762 = tpu.memref_slice %arg3[%c108_i32_324, %c0_i32_326] : memref<128x128xf32, #tpu.memory_space<vmem>> -> memref<1x128xf32, #tpu.memory_space<vmem>>
    %763 = tpu.memref_squeeze %762 : memref<1x128xf32, #tpu.memory_space<vmem>> -> memref<128xf32, #tpu.memory_space<vmem>>
    tpu.enqueue_dma source(%761 : memref<128xf32, #tpu.memory_space<any>>) target(%763 : memref<128xf32, #tpu.memory_space<vmem>>) target_semaphore(%arg4 : memref<!tpu.dma_semaphore, #tpu.memory_space<semaphore_mem>>)
    %c109_i32 = arith.constant 109 : i32
    %764 = arith.addi %0, %c109_i32 : i32
    %765 = arith.index_cast %764 : i32 to index
    %766 = memref.load %arg1[%765] : memref<256xi32, #tpu.memory_space<smem>>
    %c109_i32_327 = arith.constant 109 : i32
    %c0_i32_328 = arith.constant 0 : i32
    %767 = tpu.memref_slice %arg2[%766, %c0_i32_328] : memref<1024x128xf32, #tpu.memory_space<any>> -> memref<1x128xf32, #tpu.memory_space<any>>
    %768 = tpu.memref_squeeze %767 : memref<1x128xf32, #tpu.memory_space<any>> -> memref<128xf32, #tpu.memory_space<any>>
    %c0_i32_329 = arith.constant 0 : i32
    %769 = tpu.memref_slice %arg3[%c109_i32_327, %c0_i32_329] : memref<128x128xf32, #tpu.memory_space<vmem>> -> memref<1x128xf32, #tpu.memory_space<vmem>>
    %770 = tpu.memref_squeeze %769 : memref<1x128xf32, #tpu.memory_space<vmem>> -> memref<128xf32, #tpu.memory_space<vmem>>
    tpu.enqueue_dma source(%768 : memref<128xf32, #tpu.memory_space<any>>) target(%770 : memref<128xf32, #tpu.memory_space<vmem>>) target_semaphore(%arg4 : memref<!tpu.dma_semaphore, #tpu.memory_space<semaphore_mem>>)
    %c110_i32 = arith.constant 110 : i32
    %771 = arith.addi %0, %c110_i32 : i32
    %772 = arith.index_cast %771 : i32 to index
    %773 = memref.load %arg1[%772] : memref<256xi32, #tpu.memory_space<smem>>
    %c110_i32_330 = arith.constant 110 : i32
    %c0_i32_331 = arith.constant 0 : i32
    %774 = tpu.memref_slice %arg2[%773, %c0_i32_331] : memref<1024x128xf32, #tpu.memory_space<any>> -> memref<1x128xf32, #tpu.memory_space<any>>
    %775 = tpu.memref_squeeze %774 : memref<1x128xf32, #tpu.memory_space<any>> -> memref<128xf32, #tpu.memory_space<any>>
    %c0_i32_332 = arith.constant 0 : i32
    %776 = tpu.memref_slice %arg3[%c110_i32_330, %c0_i32_332] : memref<128x128xf32, #tpu.memory_space<vmem>> -> memref<1x128xf32, #tpu.memory_space<vmem>>
    %777 = tpu.memref_squeeze %776 : memref<1x128xf32, #tpu.memory_space<vmem>> -> memref<128xf32, #tpu.memory_space<vmem>>
    tpu.enqueue_dma source(%775 : memref<128xf32, #tpu.memory_space<any>>) target(%777 : memref<128xf32, #tpu.memory_space<vmem>>) target_semaphore(%arg4 : memref<!tpu.dma_semaphore, #tpu.memory_space<semaphore_mem>>)
    %c111_i32 = arith.constant 111 : i32
    %778 = arith.addi %0, %c111_i32 : i32
    %779 = arith.index_cast %778 : i32 to index
    %780 = memref.load %arg1[%779] : memref<256xi32, #tpu.memory_space<smem>>
    %c111_i32_333 = arith.constant 111 : i32
    %c0_i32_334 = arith.constant 0 : i32
    %781 = tpu.memref_slice %arg2[%780, %c0_i32_334] : memref<1024x128xf32, #tpu.memory_space<any>> -> memref<1x128xf32, #tpu.memory_space<any>>
    %782 = tpu.memref_squeeze %781 : memref<1x128xf32, #tpu.memory_space<any>> -> memref<128xf32, #tpu.memory_space<any>>
    %c0_i32_335 = arith.constant 0 : i32
    %783 = tpu.memref_slice %arg3[%c111_i32_333, %c0_i32_335] : memref<128x128xf32, #tpu.memory_space<vmem>> -> memref<1x128xf32, #tpu.memory_space<vmem>>
    %784 = tpu.memref_squeeze %783 : memref<1x128xf32, #tpu.memory_space<vmem>> -> memref<128xf32, #tpu.memory_space<vmem>>
    tpu.enqueue_dma source(%782 : memref<128xf32, #tpu.memory_space<any>>) target(%784 : memref<128xf32, #tpu.memory_space<vmem>>) target_semaphore(%arg4 : memref<!tpu.dma_semaphore, #tpu.memory_space<semaphore_mem>>)
    %c112_i32 = arith.constant 112 : i32
    %785 = arith.addi %0, %c112_i32 : i32
    %786 = arith.index_cast %785 : i32 to index
    %787 = memref.load %arg1[%786] : memref<256xi32, #tpu.memory_space<smem>>
    %c112_i32_336 = arith.constant 112 : i32
    %c0_i32_337 = arith.constant 0 : i32
    %788 = tpu.memref_slice %arg2[%787, %c0_i32_337] : memref<1024x128xf32, #tpu.memory_space<any>> -> memref<1x128xf32, #tpu.memory_space<any>>
    %789 = tpu.memref_squeeze %788 : memref<1x128xf32, #tpu.memory_space<any>> -> memref<128xf32, #tpu.memory_space<any>>
    %c0_i32_338 = arith.constant 0 : i32
    %790 = tpu.memref_slice %arg3[%c112_i32_336, %c0_i32_338] : memref<128x128xf32, #tpu.memory_space<vmem>> -> memref<1x128xf32, #tpu.memory_space<vmem>>
    %791 = tpu.memref_squeeze %790 : memref<1x128xf32, #tpu.memory_space<vmem>> -> memref<128xf32, #tpu.memory_space<vmem>>
    tpu.enqueue_dma source(%789 : memref<128xf32, #tpu.memory_space<any>>) target(%791 : memref<128xf32, #tpu.memory_space<vmem>>) target_semaphore(%arg4 : memref<!tpu.dma_semaphore, #tpu.memory_space<semaphore_mem>>)
    %c113_i32 = arith.constant 113 : i32
    %792 = arith.addi %0, %c113_i32 : i32
    %793 = arith.index_cast %792 : i32 to index
    %794 = memref.load %arg1[%793] : memref<256xi32, #tpu.memory_space<smem>>
    %c113_i32_339 = arith.constant 113 : i32
    %c0_i32_340 = arith.constant 0 : i32
    %795 = tpu.memref_slice %arg2[%794, %c0_i32_340] : memref<1024x128xf32, #tpu.memory_space<any>> -> memref<1x128xf32, #tpu.memory_space<any>>
    %796 = tpu.memref_squeeze %795 : memref<1x128xf32, #tpu.memory_space<any>> -> memref<128xf32, #tpu.memory_space<any>>
    %c0_i32_341 = arith.constant 0 : i32
    %797 = tpu.memref_slice %arg3[%c113_i32_339, %c0_i32_341] : memref<128x128xf32, #tpu.memory_space<vmem>> -> memref<1x128xf32, #tpu.memory_space<vmem>>
    %798 = tpu.memref_squeeze %797 : memref<1x128xf32, #tpu.memory_space<vmem>> -> memref<128xf32, #tpu.memory_space<vmem>>
    tpu.enqueue_dma source(%796 : memref<128xf32, #tpu.memory_space<any>>) target(%798 : memref<128xf32, #tpu.memory_space<vmem>>) target_semaphore(%arg4 : memref<!tpu.dma_semaphore, #tpu.memory_space<semaphore_mem>>)
    %c114_i32 = arith.constant 114 : i32
    %799 = arith.addi %0, %c114_i32 : i32
    %800 = arith.index_cast %799 : i32 to index
    %801 = memref.load %arg1[%800] : memref<256xi32, #tpu.memory_space<smem>>
    %c114_i32_342 = arith.constant 114 : i32
    %c0_i32_343 = arith.constant 0 : i32
    %802 = tpu.memref_slice %arg2[%801, %c0_i32_343] : memref<1024x128xf32, #tpu.memory_space<any>> -> memref<1x128xf32, #tpu.memory_space<any>>
    %803 = tpu.memref_squeeze %802 : memref<1x128xf32, #tpu.memory_space<any>> -> memref<128xf32, #tpu.memory_space<any>>
    %c0_i32_344 = arith.constant 0 : i32
    %804 = tpu.memref_slice %arg3[%c114_i32_342, %c0_i32_344] : memref<128x128xf32, #tpu.memory_space<vmem>> -> memref<1x128xf32, #tpu.memory_space<vmem>>
    %805 = tpu.memref_squeeze %804 : memref<1x128xf32, #tpu.memory_space<vmem>> -> memref<128xf32, #tpu.memory_space<vmem>>
    tpu.enqueue_dma source(%803 : memref<128xf32, #tpu.memory_space<any>>) target(%805 : memref<128xf32, #tpu.memory_space<vmem>>) target_semaphore(%arg4 : memref<!tpu.dma_semaphore, #tpu.memory_space<semaphore_mem>>)
    %c115_i32 = arith.constant 115 : i32
    %806 = arith.addi %0, %c115_i32 : i32
    %807 = arith.index_cast %806 : i32 to index
    %808 = memref.load %arg1[%807] : memref<256xi32, #tpu.memory_space<smem>>
    %c115_i32_345 = arith.constant 115 : i32
    %c0_i32_346 = arith.constant 0 : i32
    %809 = tpu.memref_slice %arg2[%808, %c0_i32_346] : memref<1024x128xf32, #tpu.memory_space<any>> -> memref<1x128xf32, #tpu.memory_space<any>>
    %810 = tpu.memref_squeeze %809 : memref<1x128xf32, #tpu.memory_space<any>> -> memref<128xf32, #tpu.memory_space<any>>
    %c0_i32_347 = arith.constant 0 : i32
    %811 = tpu.memref_slice %arg3[%c115_i32_345, %c0_i32_347] : memref<128x128xf32, #tpu.memory_space<vmem>> -> memref<1x128xf32, #tpu.memory_space<vmem>>
    %812 = tpu.memref_squeeze %811 : memref<1x128xf32, #tpu.memory_space<vmem>> -> memref<128xf32, #tpu.memory_space<vmem>>
    tpu.enqueue_dma source(%810 : memref<128xf32, #tpu.memory_space<any>>) target(%812 : memref<128xf32, #tpu.memory_space<vmem>>) target_semaphore(%arg4 : memref<!tpu.dma_semaphore, #tpu.memory_space<semaphore_mem>>)
    %c116_i32 = arith.constant 116 : i32
    %813 = arith.addi %0, %c116_i32 : i32
    %814 = arith.index_cast %813 : i32 to index
    %815 = memref.load %arg1[%814] : memref<256xi32, #tpu.memory_space<smem>>
    %c116_i32_348 = arith.constant 116 : i32
    %c0_i32_349 = arith.constant 0 : i32
    %816 = tpu.memref_slice %arg2[%815, %c0_i32_349] : memref<1024x128xf32, #tpu.memory_space<any>> -> memref<1x128xf32, #tpu.memory_space<any>>
    %817 = tpu.memref_squeeze %816 : memref<1x128xf32, #tpu.memory_space<any>> -> memref<128xf32, #tpu.memory_space<any>>
    %c0_i32_350 = arith.constant 0 : i32
    %818 = tpu.memref_slice %arg3[%c116_i32_348, %c0_i32_350] : memref<128x128xf32, #tpu.memory_space<vmem>> -> memref<1x128xf32, #tpu.memory_space<vmem>>
    %819 = tpu.memref_squeeze %818 : memref<1x128xf32, #tpu.memory_space<vmem>> -> memref<128xf32, #tpu.memory_space<vmem>>
    tpu.enqueue_dma source(%817 : memref<128xf32, #tpu.memory_space<any>>) target(%819 : memref<128xf32, #tpu.memory_space<vmem>>) target_semaphore(%arg4 : memref<!tpu.dma_semaphore, #tpu.memory_space<semaphore_mem>>)
    %c117_i32 = arith.constant 117 : i32
    %820 = arith.addi %0, %c117_i32 : i32
    %821 = arith.index_cast %820 : i32 to index
    %822 = memref.load %arg1[%821] : memref<256xi32, #tpu.memory_space<smem>>
    %c117_i32_351 = arith.constant 117 : i32
    %c0_i32_352 = arith.constant 0 : i32
    %823 = tpu.memref_slice %arg2[%822, %c0_i32_352] : memref<1024x128xf32, #tpu.memory_space<any>> -> memref<1x128xf32, #tpu.memory_space<any>>
    %824 = tpu.memref_squeeze %823 : memref<1x128xf32, #tpu.memory_space<any>> -> memref<128xf32, #tpu.memory_space<any>>
    %c0_i32_353 = arith.constant 0 : i32
    %825 = tpu.memref_slice %arg3[%c117_i32_351, %c0_i32_353] : memref<128x128xf32, #tpu.memory_space<vmem>> -> memref<1x128xf32, #tpu.memory_space<vmem>>
    %826 = tpu.memref_squeeze %825 : memref<1x128xf32, #tpu.memory_space<vmem>> -> memref<128xf32, #tpu.memory_space<vmem>>
    tpu.enqueue_dma source(%824 : memref<128xf32, #tpu.memory_space<any>>) target(%826 : memref<128xf32, #tpu.memory_space<vmem>>) target_semaphore(%arg4 : memref<!tpu.dma_semaphore, #tpu.memory_space<semaphore_mem>>)
    %c118_i32 = arith.constant 118 : i32
    %827 = arith.addi %0, %c118_i32 : i32
    %828 = arith.index_cast %827 : i32 to index
    %829 = memref.load %arg1[%828] : memref<256xi32, #tpu.memory_space<smem>>
    %c118_i32_354 = arith.constant 118 : i32
    %c0_i32_355 = arith.constant 0 : i32
    %830 = tpu.memref_slice %arg2[%829, %c0_i32_355] : memref<1024x128xf32, #tpu.memory_space<any>> -> memref<1x128xf32, #tpu.memory_space<any>>
    %831 = tpu.memref_squeeze %830 : memref<1x128xf32, #tpu.memory_space<any>> -> memref<128xf32, #tpu.memory_space<any>>
    %c0_i32_356 = arith.constant 0 : i32
    %832 = tpu.memref_slice %arg3[%c118_i32_354, %c0_i32_356] : memref<128x128xf32, #tpu.memory_space<vmem>> -> memref<1x128xf32, #tpu.memory_space<vmem>>
    %833 = tpu.memref_squeeze %832 : memref<1x128xf32, #tpu.memory_space<vmem>> -> memref<128xf32, #tpu.memory_space<vmem>>
    tpu.enqueue_dma source(%831 : memref<128xf32, #tpu.memory_space<any>>) target(%833 : memref<128xf32, #tpu.memory_space<vmem>>) target_semaphore(%arg4 : memref<!tpu.dma_semaphore, #tpu.memory_space<semaphore_mem>>)
    %c119_i32 = arith.constant 119 : i32
    %834 = arith.addi %0, %c119_i32 : i32
    %835 = arith.index_cast %834 : i32 to index
    %836 = memref.load %arg1[%835] : memref<256xi32, #tpu.memory_space<smem>>
    %c119_i32_357 = arith.constant 119 : i32
    %c0_i32_358 = arith.constant 0 : i32
    %837 = tpu.memref_slice %arg2[%836, %c0_i32_358] : memref<1024x128xf32, #tpu.memory_space<any>> -> memref<1x128xf32, #tpu.memory_space<any>>
    %838 = tpu.memref_squeeze %837 : memref<1x128xf32, #tpu.memory_space<any>> -> memref<128xf32, #tpu.memory_space<any>>
    %c0_i32_359 = arith.constant 0 : i32
    %839 = tpu.memref_slice %arg3[%c119_i32_357, %c0_i32_359] : memref<128x128xf32, #tpu.memory_space<vmem>> -> memref<1x128xf32, #tpu.memory_space<vmem>>
    %840 = tpu.memref_squeeze %839 : memref<1x128xf32, #tpu.memory_space<vmem>> -> memref<128xf32, #tpu.memory_space<vmem>>
    tpu.enqueue_dma source(%838 : memref<128xf32, #tpu.memory_space<any>>) target(%840 : memref<128xf32, #tpu.memory_space<vmem>>) target_semaphore(%arg4 : memref<!tpu.dma_semaphore, #tpu.memory_space<semaphore_mem>>)
    %c120_i32 = arith.constant 120 : i32
    %841 = arith.addi %0, %c120_i32 : i32
    %842 = arith.index_cast %841 : i32 to index
    %843 = memref.load %arg1[%842] : memref<256xi32, #tpu.memory_space<smem>>
    %c120_i32_360 = arith.constant 120 : i32
    %c0_i32_361 = arith.constant 0 : i32
    %844 = tpu.memref_slice %arg2[%843, %c0_i32_361] : memref<1024x128xf32, #tpu.memory_space<any>> -> memref<1x128xf32, #tpu.memory_space<any>>
    %845 = tpu.memref_squeeze %844 : memref<1x128xf32, #tpu.memory_space<any>> -> memref<128xf32, #tpu.memory_space<any>>
    %c0_i32_362 = arith.constant 0 : i32
    %846 = tpu.memref_slice %arg3[%c120_i32_360, %c0_i32_362] : memref<128x128xf32, #tpu.memory_space<vmem>> -> memref<1x128xf32, #tpu.memory_space<vmem>>
    %847 = tpu.memref_squeeze %846 : memref<1x128xf32, #tpu.memory_space<vmem>> -> memref<128xf32, #tpu.memory_space<vmem>>
    tpu.enqueue_dma source(%845 : memref<128xf32, #tpu.memory_space<any>>) target(%847 : memref<128xf32, #tpu.memory_space<vmem>>) target_semaphore(%arg4 : memref<!tpu.dma_semaphore, #tpu.memory_space<semaphore_mem>>)
    %c121_i32 = arith.constant 121 : i32
    %848 = arith.addi %0, %c121_i32 : i32
    %849 = arith.index_cast %848 : i32 to index
    %850 = memref.load %arg1[%849] : memref<256xi32, #tpu.memory_space<smem>>
    %c121_i32_363 = arith.constant 121 : i32
    %c0_i32_364 = arith.constant 0 : i32
    %851 = tpu.memref_slice %arg2[%850, %c0_i32_364] : memref<1024x128xf32, #tpu.memory_space<any>> -> memref<1x128xf32, #tpu.memory_space<any>>
    %852 = tpu.memref_squeeze %851 : memref<1x128xf32, #tpu.memory_space<any>> -> memref<128xf32, #tpu.memory_space<any>>
    %c0_i32_365 = arith.constant 0 : i32
    %853 = tpu.memref_slice %arg3[%c121_i32_363, %c0_i32_365] : memref<128x128xf32, #tpu.memory_space<vmem>> -> memref<1x128xf32, #tpu.memory_space<vmem>>
    %854 = tpu.memref_squeeze %853 : memref<1x128xf32, #tpu.memory_space<vmem>> -> memref<128xf32, #tpu.memory_space<vmem>>
    tpu.enqueue_dma source(%852 : memref<128xf32, #tpu.memory_space<any>>) target(%854 : memref<128xf32, #tpu.memory_space<vmem>>) target_semaphore(%arg4 : memref<!tpu.dma_semaphore, #tpu.memory_space<semaphore_mem>>)
    %c122_i32 = arith.constant 122 : i32
    %855 = arith.addi %0, %c122_i32 : i32
    %856 = arith.index_cast %855 : i32 to index
    %857 = memref.load %arg1[%856] : memref<256xi32, #tpu.memory_space<smem>>
    %c122_i32_366 = arith.constant 122 : i32
    %c0_i32_367 = arith.constant 0 : i32
    %858 = tpu.memref_slice %arg2[%857, %c0_i32_367] : memref<1024x128xf32, #tpu.memory_space<any>> -> memref<1x128xf32, #tpu.memory_space<any>>
    %859 = tpu.memref_squeeze %858 : memref<1x128xf32, #tpu.memory_space<any>> -> memref<128xf32, #tpu.memory_space<any>>
    %c0_i32_368 = arith.constant 0 : i32
    %860 = tpu.memref_slice %arg3[%c122_i32_366, %c0_i32_368] : memref<128x128xf32, #tpu.memory_space<vmem>> -> memref<1x128xf32, #tpu.memory_space<vmem>>
    %861 = tpu.memref_squeeze %860 : memref<1x128xf32, #tpu.memory_space<vmem>> -> memref<128xf32, #tpu.memory_space<vmem>>
    tpu.enqueue_dma source(%859 : memref<128xf32, #tpu.memory_space<any>>) target(%861 : memref<128xf32, #tpu.memory_space<vmem>>) target_semaphore(%arg4 : memref<!tpu.dma_semaphore, #tpu.memory_space<semaphore_mem>>)
    %c123_i32 = arith.constant 123 : i32
    %862 = arith.addi %0, %c123_i32 : i32
    %863 = arith.index_cast %862 : i32 to index
    %864 = memref.load %arg1[%863] : memref<256xi32, #tpu.memory_space<smem>>
    %c123_i32_369 = arith.constant 123 : i32
    %c0_i32_370 = arith.constant 0 : i32
    %865 = tpu.memref_slice %arg2[%864, %c0_i32_370] : memref<1024x128xf32, #tpu.memory_space<any>> -> memref<1x128xf32, #tpu.memory_space<any>>
    %866 = tpu.memref_squeeze %865 : memref<1x128xf32, #tpu.memory_space<any>> -> memref<128xf32, #tpu.memory_space<any>>
    %c0_i32_371 = arith.constant 0 : i32
    %867 = tpu.memref_slice %arg3[%c123_i32_369, %c0_i32_371] : memref<128x128xf32, #tpu.memory_space<vmem>> -> memref<1x128xf32, #tpu.memory_space<vmem>>
    %868 = tpu.memref_squeeze %867 : memref<1x128xf32, #tpu.memory_space<vmem>> -> memref<128xf32, #tpu.memory_space<vmem>>
    tpu.enqueue_dma source(%866 : memref<128xf32, #tpu.memory_space<any>>) target(%868 : memref<128xf32, #tpu.memory_space<vmem>>) target_semaphore(%arg4 : memref<!tpu.dma_semaphore, #tpu.memory_space<semaphore_mem>>)
    %c124_i32 = arith.constant 124 : i32
    %869 = arith.addi %0, %c124_i32 : i32
    %870 = arith.index_cast %869 : i32 to index
    %871 = memref.load %arg1[%870] : memref<256xi32, #tpu.memory_space<smem>>
    %c124_i32_372 = arith.constant 124 : i32
    %c0_i32_373 = arith.constant 0 : i32
    %872 = tpu.memref_slice %arg2[%871, %c0_i32_373] : memref<1024x128xf32, #tpu.memory_space<any>> -> memref<1x128xf32, #tpu.memory_space<any>>
    %873 = tpu.memref_squeeze %872 : memref<1x128xf32, #tpu.memory_space<any>> -> memref<128xf32, #tpu.memory_space<any>>
    %c0_i32_374 = arith.constant 0 : i32
    %874 = tpu.memref_slice %arg3[%c124_i32_372, %c0_i32_374] : memref<128x128xf32, #tpu.memory_space<vmem>> -> memref<1x128xf32, #tpu.memory_space<vmem>>
    %875 = tpu.memref_squeeze %874 : memref<1x128xf32, #tpu.memory_space<vmem>> -> memref<128xf32, #tpu.memory_space<vmem>>
    tpu.enqueue_dma source(%873 : memref<128xf32, #tpu.memory_space<any>>) target(%875 : memref<128xf32, #tpu.memory_space<vmem>>) target_semaphore(%arg4 : memref<!tpu.dma_semaphore, #tpu.memory_space<semaphore_mem>>)
    %c125_i32 = arith.constant 125 : i32
    %876 = arith.addi %0, %c125_i32 : i32
    %877 = arith.index_cast %876 : i32 to index
    %878 = memref.load %arg1[%877] : memref<256xi32, #tpu.memory_space<smem>>
    %c125_i32_375 = arith.constant 125 : i32
    %c0_i32_376 = arith.constant 0 : i32
    %879 = tpu.memref_slice %arg2[%878, %c0_i32_376] : memref<1024x128xf32, #tpu.memory_space<any>> -> memref<1x128xf32, #tpu.memory_space<any>>
    %880 = tpu.memref_squeeze %879 : memref<1x128xf32, #tpu.memory_space<any>> -> memref<128xf32, #tpu.memory_space<any>>
    %c0_i32_377 = arith.constant 0 : i32
    %881 = tpu.memref_slice %arg3[%c125_i32_375, %c0_i32_377] : memref<128x128xf32, #tpu.memory_space<vmem>> -> memref<1x128xf32, #tpu.memory_space<vmem>>
    %882 = tpu.memref_squeeze %881 : memref<1x128xf32, #tpu.memory_space<vmem>> -> memref<128xf32, #tpu.memory_space<vmem>>
    tpu.enqueue_dma source(%880 : memref<128xf32, #tpu.memory_space<any>>) target(%882 : memref<128xf32, #tpu.memory_space<vmem>>) target_semaphore(%arg4 : memref<!tpu.dma_semaphore, #tpu.memory_space<semaphore_mem>>)
    %c126_i32 = arith.constant 126 : i32
    %883 = arith.addi %0, %c126_i32 : i32
    %884 = arith.index_cast %883 : i32 to index
    %885 = memref.load %arg1[%884] : memref<256xi32, #tpu.memory_space<smem>>
    %c126_i32_378 = arith.constant 126 : i32
    %c0_i32_379 = arith.constant 0 : i32
    %886 = tpu.memref_slice %arg2[%885, %c0_i32_379] : memref<1024x128xf32, #tpu.memory_space<any>> -> memref<1x128xf32, #tpu.memory_space<any>>
    %887 = tpu.memref_squeeze %886 : memref<1x128xf32, #tpu.memory_space<any>> -> memref<128xf32, #tpu.memory_space<any>>
    %c0_i32_380 = arith.constant 0 : i32
    %888 = tpu.memref_slice %arg3[%c126_i32_378, %c0_i32_380] : memref<128x128xf32, #tpu.memory_space<vmem>> -> memref<1x128xf32, #tpu.memory_space<vmem>>
    %889 = tpu.memref_squeeze %888 : memref<1x128xf32, #tpu.memory_space<vmem>> -> memref<128xf32, #tpu.memory_space<vmem>>
    tpu.enqueue_dma source(%887 : memref<128xf32, #tpu.memory_space<any>>) target(%889 : memref<128xf32, #tpu.memory_space<vmem>>) target_semaphore(%arg4 : memref<!tpu.dma_semaphore, #tpu.memory_space<semaphore_mem>>)
    %c127_i32 = arith.constant 127 : i32
    %890 = arith.addi %0, %c127_i32 : i32
    %891 = arith.index_cast %890 : i32 to index
    %892 = memref.load %arg1[%891] : memref<256xi32, #tpu.memory_space<smem>>
    %c127_i32_381 = arith.constant 127 : i32
    %c0_i32_382 = arith.constant 0 : i32
    %893 = tpu.memref_slice %arg2[%892, %c0_i32_382] : memref<1024x128xf32, #tpu.memory_space<any>> -> memref<1x128xf32, #tpu.memory_space<any>>
    %894 = tpu.memref_squeeze %893 : memref<1x128xf32, #tpu.memory_space<any>> -> memref<128xf32, #tpu.memory_space<any>>
    %c0_i32_383 = arith.constant 0 : i32
    %895 = tpu.memref_slice %arg3[%c127_i32_381, %c0_i32_383] : memref<128x128xf32, #tpu.memory_space<vmem>> -> memref<1x128xf32, #tpu.memory_space<vmem>>
    %896 = tpu.memref_squeeze %895 : memref<1x128xf32, #tpu.memory_space<vmem>> -> memref<128xf32, #tpu.memory_space<vmem>>
    tpu.enqueue_dma source(%894 : memref<128xf32, #tpu.memory_space<any>>) target(%896 : memref<128xf32, #tpu.memory_space<vmem>>) target_semaphore(%arg4 : memref<!tpu.dma_semaphore, #tpu.memory_space<semaphore_mem>>)
    %c0_i32_384 = arith.constant 0 : i32
    %c0_i32_385 = arith.constant 0 : i32
    %c0_i32_386 = arith.constant 0 : i32
    %897 = tpu.memref_slice %arg2[%c0_i32_384, %c0_i32_386] : memref<1024x128xf32, #tpu.memory_space<any>> -> memref<1x128xf32, #tpu.memory_space<any>>
    %898 = tpu.memref_squeeze %897 : memref<1x128xf32, #tpu.memory_space<any>> -> memref<128xf32, #tpu.memory_space<any>>
    %c0_i32_387 = arith.constant 0 : i32
    %899 = tpu.memref_slice %arg3[%c0_i32_385, %c0_i32_387] : memref<128x128xf32, #tpu.memory_space<vmem>> -> memref<1x128xf32, #tpu.memory_space<vmem>>
    %900 = tpu.memref_squeeze %899 : memref<1x128xf32, #tpu.memory_space<vmem>> -> memref<128xf32, #tpu.memory_space<vmem>>
    tpu.wait_dma2 semaphore(%arg4 : memref<!tpu.dma_semaphore, #tpu.memory_space<semaphore_mem>>) src(%898 : memref<128xf32, #tpu.memory_space<any>>) dst(%900 : memref<128xf32, #tpu.memory_space<vmem>>)
    %c0_i32_388 = arith.constant 0 : i32
    %c1_i32_389 = arith.constant 1 : i32
    %c0_i32_390 = arith.constant 0 : i32
    %901 = tpu.memref_slice %arg2[%c0_i32_388, %c0_i32_390] : memref<1024x128xf32, #tpu.memory_space<any>> -> memref<1x128xf32, #tpu.memory_space<any>>
    %902 = tpu.memref_squeeze %901 : memref<1x128xf32, #tpu.memory_space<any>> -> memref<128xf32, #tpu.memory_space<any>>
    %c0_i32_391 = arith.constant 0 : i32
    %903 = tpu.memref_slice %arg3[%c1_i32_389, %c0_i32_391] : memref<128x128xf32, #tpu.memory_space<vmem>> -> memref<1x128xf32, #tpu.memory_space<vmem>>
    %904 = tpu.memref_squeeze %903 : memref<1x128xf32, #tpu.memory_space<vmem>> -> memref<128xf32, #tpu.memory_space<vmem>>
    tpu.wait_dma2 semaphore(%arg4 : memref<!tpu.dma_semaphore, #tpu.memory_space<semaphore_mem>>) src(%902 : memref<128xf32, #tpu.memory_space<any>>) dst(%904 : memref<128xf32, #tpu.memory_space<vmem>>)
    %c0_i32_392 = arith.constant 0 : i32
    %c2_i32_393 = arith.constant 2 : i32
    %c0_i32_394 = arith.constant 0 : i32
    %905 = tpu.memref_slice %arg2[%c0_i32_392, %c0_i32_394] : memref<1024x128xf32, #tpu.memory_space<any>> -> memref<1x128xf32, #tpu.memory_space<any>>
    %906 = tpu.memref_squeeze %905 : memref<1x128xf32, #tpu.memory_space<any>> -> memref<128xf32, #tpu.memory_space<any>>
    %c0_i32_395 = arith.constant 0 : i32
    %907 = tpu.memref_slice %arg3[%c2_i32_393, %c0_i32_395] : memref<128x128xf32, #tpu.memory_space<vmem>> -> memref<1x128xf32, #tpu.memory_space<vmem>>
    %908 = tpu.memref_squeeze %907 : memref<1x128xf32, #tpu.memory_space<vmem>> -> memref<128xf32, #tpu.memory_space<vmem>>
    tpu.wait_dma2 semaphore(%arg4 : memref<!tpu.dma_semaphore, #tpu.memory_space<semaphore_mem>>) src(%906 : memref<128xf32, #tpu.memory_space<any>>) dst(%908 : memref<128xf32, #tpu.memory_space<vmem>>)
    %c0_i32_396 = arith.constant 0 : i32
    %c3_i32_397 = arith.constant 3 : i32
    %c0_i32_398 = arith.constant 0 : i32
    %909 = tpu.memref_slice %arg2[%c0_i32_396, %c0_i32_398] : memref<1024x128xf32, #tpu.memory_space<any>> -> memref<1x128xf32, #tpu.memory_space<any>>
    %910 = tpu.memref_squeeze %909 : memref<1x128xf32, #tpu.memory_space<any>> -> memref<128xf32, #tpu.memory_space<any>>
    %c0_i32_399 = arith.constant 0 : i32
    %911 = tpu.memref_slice %arg3[%c3_i32_397, %c0_i32_399] : memref<128x128xf32, #tpu.memory_space<vmem>> -> memref<1x128xf32, #tpu.memory_space<vmem>>
    %912 = tpu.memref_squeeze %911 : memref<1x128xf32, #tpu.memory_space<vmem>> -> memref<128xf32, #tpu.memory_space<vmem>>
    tpu.wait_dma2 semaphore(%arg4 : memref<!tpu.dma_semaphore, #tpu.memory_space<semaphore_mem>>) src(%910 : memref<128xf32, #tpu.memory_space<any>>) dst(%912 : memref<128xf32, #tpu.memory_space<vmem>>)
    %c0_i32_400 = arith.constant 0 : i32
    %c4_i32_401 = arith.constant 4 : i32
    %c0_i32_402 = arith.constant 0 : i32
    %913 = tpu.memref_slice %arg2[%c0_i32_400, %c0_i32_402] : memref<1024x128xf32, #tpu.memory_space<any>> -> memref<1x128xf32, #tpu.memory_space<any>>
    %914 = tpu.memref_squeeze %913 : memref<1x128xf32, #tpu.memory_space<any>> -> memref<128xf32, #tpu.memory_space<any>>
    %c0_i32_403 = arith.constant 0 : i32
    %915 = tpu.memref_slice %arg3[%c4_i32_401, %c0_i32_403] : memref<128x128xf32, #tpu.memory_space<vmem>> -> memref<1x128xf32, #tpu.memory_space<vmem>>
    %916 = tpu.memref_squeeze %915 : memref<1x128xf32, #tpu.memory_space<vmem>> -> memref<128xf32, #tpu.memory_space<vmem>>
    tpu.wait_dma2 semaphore(%arg4 : memref<!tpu.dma_semaphore, #tpu.memory_space<semaphore_mem>>) src(%914 : memref<128xf32, #tpu.memory_space<any>>) dst(%916 : memref<128xf32, #tpu.memory_space<vmem>>)
    %c0_i32_404 = arith.constant 0 : i32
    %c5_i32_405 = arith.constant 5 : i32
    %c0_i32_406 = arith.constant 0 : i32
    %917 = tpu.memref_slice %arg2[%c0_i32_404, %c0_i32_406] : memref<1024x128xf32, #tpu.memory_space<any>> -> memref<1x128xf32, #tpu.memory_space<any>>
    %918 = tpu.memref_squeeze %917 : memref<1x128xf32, #tpu.memory_space<any>> -> memref<128xf32, #tpu.memory_space<any>>
    %c0_i32_407 = arith.constant 0 : i32
    %919 = tpu.memref_slice %arg3[%c5_i32_405, %c0_i32_407] : memref<128x128xf32, #tpu.memory_space<vmem>> -> memref<1x128xf32, #tpu.memory_space<vmem>>
    %920 = tpu.memref_squeeze %919 : memref<1x128xf32, #tpu.memory_space<vmem>> -> memref<128xf32, #tpu.memory_space<vmem>>
    tpu.wait_dma2 semaphore(%arg4 : memref<!tpu.dma_semaphore, #tpu.memory_space<semaphore_mem>>) src(%918 : memref<128xf32, #tpu.memory_space<any>>) dst(%920 : memref<128xf32, #tpu.memory_space<vmem>>)
    %c0_i32_408 = arith.constant 0 : i32
    %c6_i32_409 = arith.constant 6 : i32
    %c0_i32_410 = arith.constant 0 : i32
    %921 = tpu.memref_slice %arg2[%c0_i32_408, %c0_i32_410] : memref<1024x128xf32, #tpu.memory_space<any>> -> memref<1x128xf32, #tpu.memory_space<any>>
    %922 = tpu.memref_squeeze %921 : memref<1x128xf32, #tpu.memory_space<any>> -> memref<128xf32, #tpu.memory_space<any>>
    %c0_i32_411 = arith.constant 0 : i32
    %923 = tpu.memref_slice %arg3[%c6_i32_409, %c0_i32_411] : memref<128x128xf32, #tpu.memory_space<vmem>> -> memref<1x128xf32, #tpu.memory_space<vmem>>
    %924 = tpu.memref_squeeze %923 : memref<1x128xf32, #tpu.memory_space<vmem>> -> memref<128xf32, #tpu.memory_space<vmem>>
    tpu.wait_dma2 semaphore(%arg4 : memref<!tpu.dma_semaphore, #tpu.memory_space<semaphore_mem>>) src(%922 : memref<128xf32, #tpu.memory_space<any>>) dst(%924 : memref<128xf32, #tpu.memory_space<vmem>>)
    %c0_i32_412 = arith.constant 0 : i32
    %c7_i32_413 = arith.constant 7 : i32
    %c0_i32_414 = arith.constant 0 : i32
    %925 = tpu.memref_slice %arg2[%c0_i32_412, %c0_i32_414] : memref<1024x128xf32, #tpu.memory_space<any>> -> memref<1x128xf32, #tpu.memory_space<any>>
    %926 = tpu.memref_squeeze %925 : memref<1x128xf32, #tpu.memory_space<any>> -> memref<128xf32, #tpu.memory_space<any>>
    %c0_i32_415 = arith.constant 0 : i32
    %927 = tpu.memref_slice %arg3[%c7_i32_413, %c0_i32_415] : memref<128x128xf32, #tpu.memory_space<vmem>> -> memref<1x128xf32, #tpu.memory_space<vmem>>
    %928 = tpu.memref_squeeze %927 : memref<1x128xf32, #tpu.memory_space<vmem>> -> memref<128xf32, #tpu.memory_space<vmem>>
    tpu.wait_dma2 semaphore(%arg4 : memref<!tpu.dma_semaphore, #tpu.memory_space<semaphore_mem>>) src(%926 : memref<128xf32, #tpu.memory_space<any>>) dst(%928 : memref<128xf32, #tpu.memory_space<vmem>>)
    %c0_i32_416 = arith.constant 0 : i32
    %c8_i32_417 = arith.constant 8 : i32
    %c0_i32_418 = arith.constant 0 : i32
    %929 = tpu.memref_slice %arg2[%c0_i32_416, %c0_i32_418] : memref<1024x128xf32, #tpu.memory_space<any>> -> memref<1x128xf32, #tpu.memory_space<any>>
    %930 = tpu.memref_squeeze %929 : memref<1x128xf32, #tpu.memory_space<any>> -> memref<128xf32, #tpu.memory_space<any>>
    %c0_i32_419 = arith.constant 0 : i32
    %931 = tpu.memref_slice %arg3[%c8_i32_417, %c0_i32_419] : memref<128x128xf32, #tpu.memory_space<vmem>> -> memref<1x128xf32, #tpu.memory_space<vmem>>
    %932 = tpu.memref_squeeze %931 : memref<1x128xf32, #tpu.memory_space<vmem>> -> memref<128xf32, #tpu.memory_space<vmem>>
    tpu.wait_dma2 semaphore(%arg4 : memref<!tpu.dma_semaphore, #tpu.memory_space<semaphore_mem>>) src(%930 : memref<128xf32, #tpu.memory_space<any>>) dst(%932 : memref<128xf32, #tpu.memory_space<vmem>>)
    %c0_i32_420 = arith.constant 0 : i32
    %c9_i32_421 = arith.constant 9 : i32
    %c0_i32_422 = arith.constant 0 : i32
    %933 = tpu.memref_slice %arg2[%c0_i32_420, %c0_i32_422] : memref<1024x128xf32, #tpu.memory_space<any>> -> memref<1x128xf32, #tpu.memory_space<any>>
    %934 = tpu.memref_squeeze %933 : memref<1x128xf32, #tpu.memory_space<any>> -> memref<128xf32, #tpu.memory_space<any>>
    %c0_i32_423 = arith.constant 0 : i32
    %935 = tpu.memref_slice %arg3[%c9_i32_421, %c0_i32_423] : memref<128x128xf32, #tpu.memory_space<vmem>> -> memref<1x128xf32, #tpu.memory_space<vmem>>
    %936 = tpu.memref_squeeze %935 : memref<1x128xf32, #tpu.memory_space<vmem>> -> memref<128xf32, #tpu.memory_space<vmem>>
    tpu.wait_dma2 semaphore(%arg4 : memref<!tpu.dma_semaphore, #tpu.memory_space<semaphore_mem>>) src(%934 : memref<128xf32, #tpu.memory_space<any>>) dst(%936 : memref<128xf32, #tpu.memory_space<vmem>>)
    %c0_i32_424 = arith.constant 0 : i32
    %c10_i32_425 = arith.constant 10 : i32
    %c0_i32_426 = arith.constant 0 : i32
    %937 = tpu.memref_slice %arg2[%c0_i32_424, %c0_i32_426] : memref<1024x128xf32, #tpu.memory_space<any>> -> memref<1x128xf32, #tpu.memory_space<any>>
    %938 = tpu.memref_squeeze %937 : memref<1x128xf32, #tpu.memory_space<any>> -> memref<128xf32, #tpu.memory_space<any>>
    %c0_i32_427 = arith.constant 0 : i32
    %939 = tpu.memref_slice %arg3[%c10_i32_425, %c0_i32_427] : memref<128x128xf32, #tpu.memory_space<vmem>> -> memref<1x128xf32, #tpu.memory_space<vmem>>
    %940 = tpu.memref_squeeze %939 : memref<1x128xf32, #tpu.memory_space<vmem>> -> memref<128xf32, #tpu.memory_space<vmem>>
    tpu.wait_dma2 semaphore(%arg4 : memref<!tpu.dma_semaphore, #tpu.memory_space<semaphore_mem>>) src(%938 : memref<128xf32, #tpu.memory_space<any>>) dst(%940 : memref<128xf32, #tpu.memory_space<vmem>>)
    %c0_i32_428 = arith.constant 0 : i32
    %c11_i32_429 = arith.constant 11 : i32
    %c0_i32_430 = arith.constant 0 : i32
    %941 = tpu.memref_slice %arg2[%c0_i32_428, %c0_i32_430] : memref<1024x128xf32, #tpu.memory_space<any>> -> memref<1x128xf32, #tpu.memory_space<any>>
    %942 = tpu.memref_squeeze %941 : memref<1x128xf32, #tpu.memory_space<any>> -> memref<128xf32, #tpu.memory_space<any>>
    %c0_i32_431 = arith.constant 0 : i32
    %943 = tpu.memref_slice %arg3[%c11_i32_429, %c0_i32_431] : memref<128x128xf32, #tpu.memory_space<vmem>> -> memref<1x128xf32, #tpu.memory_space<vmem>>
    %944 = tpu.memref_squeeze %943 : memref<1x128xf32, #tpu.memory_space<vmem>> -> memref<128xf32, #tpu.memory_space<vmem>>
    tpu.wait_dma2 semaphore(%arg4 : memref<!tpu.dma_semaphore, #tpu.memory_space<semaphore_mem>>) src(%942 : memref<128xf32, #tpu.memory_space<any>>) dst(%944 : memref<128xf32, #tpu.memory_space<vmem>>)
    %c0_i32_432 = arith.constant 0 : i32
    %c12_i32_433 = arith.constant 12 : i32
    %c0_i32_434 = arith.constant 0 : i32
    %945 = tpu.memref_slice %arg2[%c0_i32_432, %c0_i32_434] : memref<1024x128xf32, #tpu.memory_space<any>> -> memref<1x128xf32, #tpu.memory_space<any>>
    %946 = tpu.memref_squeeze %945 : memref<1x128xf32, #tpu.memory_space<any>> -> memref<128xf32, #tpu.memory_space<any>>
    %c0_i32_435 = arith.constant 0 : i32
    %947 = tpu.memref_slice %arg3[%c12_i32_433, %c0_i32_435] : memref<128x128xf32, #tpu.memory_space<vmem>> -> memref<1x128xf32, #tpu.memory_space<vmem>>
    %948 = tpu.memref_squeeze %947 : memref<1x128xf32, #tpu.memory_space<vmem>> -> memref<128xf32, #tpu.memory_space<vmem>>
    tpu.wait_dma2 semaphore(%arg4 : memref<!tpu.dma_semaphore, #tpu.memory_space<semaphore_mem>>) src(%946 : memref<128xf32, #tpu.memory_space<any>>) dst(%948 : memref<128xf32, #tpu.memory_space<vmem>>)
    %c0_i32_436 = arith.constant 0 : i32
    %c13_i32_437 = arith.constant 13 : i32
    %c0_i32_438 = arith.constant 0 : i32
    %949 = tpu.memref_slice %arg2[%c0_i32_436, %c0_i32_438] : memref<1024x128xf32, #tpu.memory_space<any>> -> memref<1x128xf32, #tpu.memory_space<any>>
    %950 = tpu.memref_squeeze %949 : memref<1x128xf32, #tpu.memory_space<any>> -> memref<128xf32, #tpu.memory_space<any>>
    %c0_i32_439 = arith.constant 0 : i32
    %951 = tpu.memref_slice %arg3[%c13_i32_437, %c0_i32_439] : memref<128x128xf32, #tpu.memory_space<vmem>> -> memref<1x128xf32, #tpu.memory_space<vmem>>
    %952 = tpu.memref_squeeze %951 : memref<1x128xf32, #tpu.memory_space<vmem>> -> memref<128xf32, #tpu.memory_space<vmem>>
    tpu.wait_dma2 semaphore(%arg4 : memref<!tpu.dma_semaphore, #tpu.memory_space<semaphore_mem>>) src(%950 : memref<128xf32, #tpu.memory_space<any>>) dst(%952 : memref<128xf32, #tpu.memory_space<vmem>>)
    %c0_i32_440 = arith.constant 0 : i32
    %c14_i32_441 = arith.constant 14 : i32
    %c0_i32_442 = arith.constant 0 : i32
    %953 = tpu.memref_slice %arg2[%c0_i32_440, %c0_i32_442] : memref<1024x128xf32, #tpu.memory_space<any>> -> memref<1x128xf32, #tpu.memory_space<any>>
    %954 = tpu.memref_squeeze %953 : memref<1x128xf32, #tpu.memory_space<any>> -> memref<128xf32, #tpu.memory_space<any>>
    %c0_i32_443 = arith.constant 0 : i32
    %955 = tpu.memref_slice %arg3[%c14_i32_441, %c0_i32_443] : memref<128x128xf32, #tpu.memory_space<vmem>> -> memref<1x128xf32, #tpu.memory_space<vmem>>
    %956 = tpu.memref_squeeze %955 : memref<1x128xf32, #tpu.memory_space<vmem>> -> memref<128xf32, #tpu.memory_space<vmem>>
    tpu.wait_dma2 semaphore(%arg4 : memref<!tpu.dma_semaphore, #tpu.memory_space<semaphore_mem>>) src(%954 : memref<128xf32, #tpu.memory_space<any>>) dst(%956 : memref<128xf32, #tpu.memory_space<vmem>>)
    %c0_i32_444 = arith.constant 0 : i32
    %c15_i32_445 = arith.constant 15 : i32
    %c0_i32_446 = arith.constant 0 : i32
    %957 = tpu.memref_slice %arg2[%c0_i32_444, %c0_i32_446] : memref<1024x128xf32, #tpu.memory_space<any>> -> memref<1x128xf32, #tpu.memory_space<any>>
    %958 = tpu.memref_squeeze %957 : memref<1x128xf32, #tpu.memory_space<any>> -> memref<128xf32, #tpu.memory_space<any>>
    %c0_i32_447 = arith.constant 0 : i32
    %959 = tpu.memref_slice %arg3[%c15_i32_445, %c0_i32_447] : memref<128x128xf32, #tpu.memory_space<vmem>> -> memref<1x128xf32, #tpu.memory_space<vmem>>
    %960 = tpu.memref_squeeze %959 : memref<1x128xf32, #tpu.memory_space<vmem>> -> memref<128xf32, #tpu.memory_space<vmem>>
    tpu.wait_dma2 semaphore(%arg4 : memref<!tpu.dma_semaphore, #tpu.memory_space<semaphore_mem>>) src(%958 : memref<128xf32, #tpu.memory_space<any>>) dst(%960 : memref<128xf32, #tpu.memory_space<vmem>>)
    %c0_i32_448 = arith.constant 0 : i32
    %c16_i32_449 = arith.constant 16 : i32
    %c0_i32_450 = arith.constant 0 : i32
    %961 = tpu.memref_slice %arg2[%c0_i32_448, %c0_i32_450] : memref<1024x128xf32, #tpu.memory_space<any>> -> memref<1x128xf32, #tpu.memory_space<any>>
    %962 = tpu.memref_squeeze %961 : memref<1x128xf32, #tpu.memory_space<any>> -> memref<128xf32, #tpu.memory_space<any>>
    %c0_i32_451 = arith.constant 0 : i32
    %963 = tpu.memref_slice %arg3[%c16_i32_449, %c0_i32_451] : memref<128x128xf32, #tpu.memory_space<vmem>> -> memref<1x128xf32, #tpu.memory_space<vmem>>
    %964 = tpu.memref_squeeze %963 : memref<1x128xf32, #tpu.memory_space<vmem>> -> memref<128xf32, #tpu.memory_space<vmem>>
    tpu.wait_dma2 semaphore(%arg4 : memref<!tpu.dma_semaphore, #tpu.memory_space<semaphore_mem>>) src(%962 : memref<128xf32, #tpu.memory_space<any>>) dst(%964 : memref<128xf32, #tpu.memory_space<vmem>>)
    %c0_i32_452 = arith.constant 0 : i32
    %c17_i32_453 = arith.constant 17 : i32
    %c0_i32_454 = arith.constant 0 : i32
    %965 = tpu.memref_slice %arg2[%c0_i32_452, %c0_i32_454] : memref<1024x128xf32, #tpu.memory_space<any>> -> memref<1x128xf32, #tpu.memory_space<any>>
    %966 = tpu.memref_squeeze %965 : memref<1x128xf32, #tpu.memory_space<any>> -> memref<128xf32, #tpu.memory_space<any>>
    %c0_i32_455 = arith.constant 0 : i32
    %967 = tpu.memref_slice %arg3[%c17_i32_453, %c0_i32_455] : memref<128x128xf32, #tpu.memory_space<vmem>> -> memref<1x128xf32, #tpu.memory_space<vmem>>
    %968 = tpu.memref_squeeze %967 : memref<1x128xf32, #tpu.memory_space<vmem>> -> memref<128xf32, #tpu.memory_space<vmem>>
    tpu.wait_dma2 semaphore(%arg4 : memref<!tpu.dma_semaphore, #tpu.memory_space<semaphore_mem>>) src(%966 : memref<128xf32, #tpu.memory_space<any>>) dst(%968 : memref<128xf32, #tpu.memory_space<vmem>>)
    %c0_i32_456 = arith.constant 0 : i32
    %c18_i32_457 = arith.constant 18 : i32
    %c0_i32_458 = arith.constant 0 : i32
    %969 = tpu.memref_slice %arg2[%c0_i32_456, %c0_i32_458] : memref<1024x128xf32, #tpu.memory_space<any>> -> memref<1x128xf32, #tpu.memory_space<any>>
    %970 = tpu.memref_squeeze %969 : memref<1x128xf32, #tpu.memory_space<any>> -> memref<128xf32, #tpu.memory_space<any>>
    %c0_i32_459 = arith.constant 0 : i32
    %971 = tpu.memref_slice %arg3[%c18_i32_457, %c0_i32_459] : memref<128x128xf32, #tpu.memory_space<vmem>> -> memref<1x128xf32, #tpu.memory_space<vmem>>
    %972 = tpu.memref_squeeze %971 : memref<1x128xf32, #tpu.memory_space<vmem>> -> memref<128xf32, #tpu.memory_space<vmem>>
    tpu.wait_dma2 semaphore(%arg4 : memref<!tpu.dma_semaphore, #tpu.memory_space<semaphore_mem>>) src(%970 : memref<128xf32, #tpu.memory_space<any>>) dst(%972 : memref<128xf32, #tpu.memory_space<vmem>>)
    %c0_i32_460 = arith.constant 0 : i32
    %c19_i32_461 = arith.constant 19 : i32
    %c0_i32_462 = arith.constant 0 : i32
    %973 = tpu.memref_slice %arg2[%c0_i32_460, %c0_i32_462] : memref<1024x128xf32, #tpu.memory_space<any>> -> memref<1x128xf32, #tpu.memory_space<any>>
    %974 = tpu.memref_squeeze %973 : memref<1x128xf32, #tpu.memory_space<any>> -> memref<128xf32, #tpu.memory_space<any>>
    %c0_i32_463 = arith.constant 0 : i32
    %975 = tpu.memref_slice %arg3[%c19_i32_461, %c0_i32_463] : memref<128x128xf32, #tpu.memory_space<vmem>> -> memref<1x128xf32, #tpu.memory_space<vmem>>
    %976 = tpu.memref_squeeze %975 : memref<1x128xf32, #tpu.memory_space<vmem>> -> memref<128xf32, #tpu.memory_space<vmem>>
    tpu.wait_dma2 semaphore(%arg4 : memref<!tpu.dma_semaphore, #tpu.memory_space<semaphore_mem>>) src(%974 : memref<128xf32, #tpu.memory_space<any>>) dst(%976 : memref<128xf32, #tpu.memory_space<vmem>>)
    %c0_i32_464 = arith.constant 0 : i32
    %c20_i32_465 = arith.constant 20 : i32
    %c0_i32_466 = arith.constant 0 : i32
    %977 = tpu.memref_slice %arg2[%c0_i32_464, %c0_i32_466] : memref<1024x128xf32, #tpu.memory_space<any>> -> memref<1x128xf32, #tpu.memory_space<any>>
    %978 = tpu.memref_squeeze %977 : memref<1x128xf32, #tpu.memory_space<any>> -> memref<128xf32, #tpu.memory_space<any>>
    %c0_i32_467 = arith.constant 0 : i32
    %979 = tpu.memref_slice %arg3[%c20_i32_465, %c0_i32_467] : memref<128x128xf32, #tpu.memory_space<vmem>> -> memref<1x128xf32, #tpu.memory_space<vmem>>
    %980 = tpu.memref_squeeze %979 : memref<1x128xf32, #tpu.memory_space<vmem>> -> memref<128xf32, #tpu.memory_space<vmem>>
    tpu.wait_dma2 semaphore(%arg4 : memref<!tpu.dma_semaphore, #tpu.memory_space<semaphore_mem>>) src(%978 : memref<128xf32, #tpu.memory_space<any>>) dst(%980 : memref<128xf32, #tpu.memory_space<vmem>>)
    %c0_i32_468 = arith.constant 0 : i32
    %c21_i32_469 = arith.constant 21 : i32
    %c0_i32_470 = arith.constant 0 : i32
    %981 = tpu.memref_slice %arg2[%c0_i32_468, %c0_i32_470] : memref<1024x128xf32, #tpu.memory_space<any>> -> memref<1x128xf32, #tpu.memory_space<any>>
    %982 = tpu.memref_squeeze %981 : memref<1x128xf32, #tpu.memory_space<any>> -> memref<128xf32, #tpu.memory_space<any>>
    %c0_i32_471 = arith.constant 0 : i32
    %983 = tpu.memref_slice %arg3[%c21_i32_469, %c0_i32_471] : memref<128x128xf32, #tpu.memory_space<vmem>> -> memref<1x128xf32, #tpu.memory_space<vmem>>
    %984 = tpu.memref_squeeze %983 : memref<1x128xf32, #tpu.memory_space<vmem>> -> memref<128xf32, #tpu.memory_space<vmem>>
    tpu.wait_dma2 semaphore(%arg4 : memref<!tpu.dma_semaphore, #tpu.memory_space<semaphore_mem>>) src(%982 : memref<128xf32, #tpu.memory_space<any>>) dst(%984 : memref<128xf32, #tpu.memory_space<vmem>>)
    %c0_i32_472 = arith.constant 0 : i32
    %c22_i32_473 = arith.constant 22 : i32
    %c0_i32_474 = arith.constant 0 : i32
    %985 = tpu.memref_slice %arg2[%c0_i32_472, %c0_i32_474] : memref<1024x128xf32, #tpu.memory_space<any>> -> memref<1x128xf32, #tpu.memory_space<any>>
    %986 = tpu.memref_squeeze %985 : memref<1x128xf32, #tpu.memory_space<any>> -> memref<128xf32, #tpu.memory_space<any>>
    %c0_i32_475 = arith.constant 0 : i32
    %987 = tpu.memref_slice %arg3[%c22_i32_473, %c0_i32_475] : memref<128x128xf32, #tpu.memory_space<vmem>> -> memref<1x128xf32, #tpu.memory_space<vmem>>
    %988 = tpu.memref_squeeze %987 : memref<1x128xf32, #tpu.memory_space<vmem>> -> memref<128xf32, #tpu.memory_space<vmem>>
    tpu.wait_dma2 semaphore(%arg4 : memref<!tpu.dma_semaphore, #tpu.memory_space<semaphore_mem>>) src(%986 : memref<128xf32, #tpu.memory_space<any>>) dst(%988 : memref<128xf32, #tpu.memory_space<vmem>>)
    %c0_i32_476 = arith.constant 0 : i32
    %c23_i32_477 = arith.constant 23 : i32
    %c0_i32_478 = arith.constant 0 : i32
    %989 = tpu.memref_slice %arg2[%c0_i32_476, %c0_i32_478] : memref<1024x128xf32, #tpu.memory_space<any>> -> memref<1x128xf32, #tpu.memory_space<any>>
    %990 = tpu.memref_squeeze %989 : memref<1x128xf32, #tpu.memory_space<any>> -> memref<128xf32, #tpu.memory_space<any>>
    %c0_i32_479 = arith.constant 0 : i32
    %991 = tpu.memref_slice %arg3[%c23_i32_477, %c0_i32_479] : memref<128x128xf32, #tpu.memory_space<vmem>> -> memref<1x128xf32, #tpu.memory_space<vmem>>
    %992 = tpu.memref_squeeze %991 : memref<1x128xf32, #tpu.memory_space<vmem>> -> memref<128xf32, #tpu.memory_space<vmem>>
    tpu.wait_dma2 semaphore(%arg4 : memref<!tpu.dma_semaphore, #tpu.memory_space<semaphore_mem>>) src(%990 : memref<128xf32, #tpu.memory_space<any>>) dst(%992 : memref<128xf32, #tpu.memory_space<vmem>>)
    %c0_i32_480 = arith.constant 0 : i32
    %c24_i32_481 = arith.constant 24 : i32
    %c0_i32_482 = arith.constant 0 : i32
    %993 = tpu.memref_slice %arg2[%c0_i32_480, %c0_i32_482] : memref<1024x128xf32, #tpu.memory_space<any>> -> memref<1x128xf32, #tpu.memory_space<any>>
    %994 = tpu.memref_squeeze %993 : memref<1x128xf32, #tpu.memory_space<any>> -> memref<128xf32, #tpu.memory_space<any>>
    %c0_i32_483 = arith.constant 0 : i32
    %995 = tpu.memref_slice %arg3[%c24_i32_481, %c0_i32_483] : memref<128x128xf32, #tpu.memory_space<vmem>> -> memref<1x128xf32, #tpu.memory_space<vmem>>
    %996 = tpu.memref_squeeze %995 : memref<1x128xf32, #tpu.memory_space<vmem>> -> memref<128xf32, #tpu.memory_space<vmem>>
    tpu.wait_dma2 semaphore(%arg4 : memref<!tpu.dma_semaphore, #tpu.memory_space<semaphore_mem>>) src(%994 : memref<128xf32, #tpu.memory_space<any>>) dst(%996 : memref<128xf32, #tpu.memory_space<vmem>>)
    %c0_i32_484 = arith.constant 0 : i32
    %c25_i32_485 = arith.constant 25 : i32
    %c0_i32_486 = arith.constant 0 : i32
    %997 = tpu.memref_slice %arg2[%c0_i32_484, %c0_i32_486] : memref<1024x128xf32, #tpu.memory_space<any>> -> memref<1x128xf32, #tpu.memory_space<any>>
    %998 = tpu.memref_squeeze %997 : memref<1x128xf32, #tpu.memory_space<any>> -> memref<128xf32, #tpu.memory_space<any>>
    %c0_i32_487 = arith.constant 0 : i32
    %999 = tpu.memref_slice %arg3[%c25_i32_485, %c0_i32_487] : memref<128x128xf32, #tpu.memory_space<vmem>> -> memref<1x128xf32, #tpu.memory_space<vmem>>
    %1000 = tpu.memref_squeeze %999 : memref<1x128xf32, #tpu.memory_space<vmem>> -> memref<128xf32, #tpu.memory_space<vmem>>
    tpu.wait_dma2 semaphore(%arg4 : memref<!tpu.dma_semaphore, #tpu.memory_space<semaphore_mem>>) src(%998 : memref<128xf32, #tpu.memory_space<any>>) dst(%1000 : memref<128xf32, #tpu.memory_space<vmem>>)
    %c0_i32_488 = arith.constant 0 : i32
    %c26_i32_489 = arith.constant 26 : i32
    %c0_i32_490 = arith.constant 0 : i32
    %1001 = tpu.memref_slice %arg2[%c0_i32_488, %c0_i32_490] : memref<1024x128xf32, #tpu.memory_space<any>> -> memref<1x128xf32, #tpu.memory_space<any>>
    %1002 = tpu.memref_squeeze %1001 : memref<1x128xf32, #tpu.memory_space<any>> -> memref<128xf32, #tpu.memory_space<any>>
    %c0_i32_491 = arith.constant 0 : i32
    %1003 = tpu.memref_slice %arg3[%c26_i32_489, %c0_i32_491] : memref<128x128xf32, #tpu.memory_space<vmem>> -> memref<1x128xf32, #tpu.memory_space<vmem>>
    %1004 = tpu.memref_squeeze %1003 : memref<1x128xf32, #tpu.memory_space<vmem>> -> memref<128xf32, #tpu.memory_space<vmem>>
    tpu.wait_dma2 semaphore(%arg4 : memref<!tpu.dma_semaphore, #tpu.memory_space<semaphore_mem>>) src(%1002 : memref<128xf32, #tpu.memory_space<any>>) dst(%1004 : memref<128xf32, #tpu.memory_space<vmem>>)
    %c0_i32_492 = arith.constant 0 : i32
    %c27_i32_493 = arith.constant 27 : i32
    %c0_i32_494 = arith.constant 0 : i32
    %1005 = tpu.memref_slice %arg2[%c0_i32_492, %c0_i32_494] : memref<1024x128xf32, #tpu.memory_space<any>> -> memref<1x128xf32, #tpu.memory_space<any>>
    %1006 = tpu.memref_squeeze %1005 : memref<1x128xf32, #tpu.memory_space<any>> -> memref<128xf32, #tpu.memory_space<any>>
    %c0_i32_495 = arith.constant 0 : i32
    %1007 = tpu.memref_slice %arg3[%c27_i32_493, %c0_i32_495] : memref<128x128xf32, #tpu.memory_space<vmem>> -> memref<1x128xf32, #tpu.memory_space<vmem>>
    %1008 = tpu.memref_squeeze %1007 : memref<1x128xf32, #tpu.memory_space<vmem>> -> memref<128xf32, #tpu.memory_space<vmem>>
    tpu.wait_dma2 semaphore(%arg4 : memref<!tpu.dma_semaphore, #tpu.memory_space<semaphore_mem>>) src(%1006 : memref<128xf32, #tpu.memory_space<any>>) dst(%1008 : memref<128xf32, #tpu.memory_space<vmem>>)
    %c0_i32_496 = arith.constant 0 : i32
    %c28_i32_497 = arith.constant 28 : i32
    %c0_i32_498 = arith.constant 0 : i32
    %1009 = tpu.memref_slice %arg2[%c0_i32_496, %c0_i32_498] : memref<1024x128xf32, #tpu.memory_space<any>> -> memref<1x128xf32, #tpu.memory_space<any>>
    %1010 = tpu.memref_squeeze %1009 : memref<1x128xf32, #tpu.memory_space<any>> -> memref<128xf32, #tpu.memory_space<any>>
    %c0_i32_499 = arith.constant 0 : i32
    %1011 = tpu.memref_slice %arg3[%c28_i32_497, %c0_i32_499] : memref<128x128xf32, #tpu.memory_space<vmem>> -> memref<1x128xf32, #tpu.memory_space<vmem>>
    %1012 = tpu.memref_squeeze %1011 : memref<1x128xf32, #tpu.memory_space<vmem>> -> memref<128xf32, #tpu.memory_space<vmem>>
    tpu.wait_dma2 semaphore(%arg4 : memref<!tpu.dma_semaphore, #tpu.memory_space<semaphore_mem>>) src(%1010 : memref<128xf32, #tpu.memory_space<any>>) dst(%1012 : memref<128xf32, #tpu.memory_space<vmem>>)
    %c0_i32_500 = arith.constant 0 : i32
    %c29_i32_501 = arith.constant 29 : i32
    %c0_i32_502 = arith.constant 0 : i32
    %1013 = tpu.memref_slice %arg2[%c0_i32_500, %c0_i32_502] : memref<1024x128xf32, #tpu.memory_space<any>> -> memref<1x128xf32, #tpu.memory_space<any>>
    %1014 = tpu.memref_squeeze %1013 : memref<1x128xf32, #tpu.memory_space<any>> -> memref<128xf32, #tpu.memory_space<any>>
    %c0_i32_503 = arith.constant 0 : i32
    %1015 = tpu.memref_slice %arg3[%c29_i32_501, %c0_i32_503] : memref<128x128xf32, #tpu.memory_space<vmem>> -> memref<1x128xf32, #tpu.memory_space<vmem>>
    %1016 = tpu.memref_squeeze %1015 : memref<1x128xf32, #tpu.memory_space<vmem>> -> memref<128xf32, #tpu.memory_space<vmem>>
    tpu.wait_dma2 semaphore(%arg4 : memref<!tpu.dma_semaphore, #tpu.memory_space<semaphore_mem>>) src(%1014 : memref<128xf32, #tpu.memory_space<any>>) dst(%1016 : memref<128xf32, #tpu.memory_space<vmem>>)
    %c0_i32_504 = arith.constant 0 : i32
    %c30_i32_505 = arith.constant 30 : i32
    %c0_i32_506 = arith.constant 0 : i32
    %1017 = tpu.memref_slice %arg2[%c0_i32_504, %c0_i32_506] : memref<1024x128xf32, #tpu.memory_space<any>> -> memref<1x128xf32, #tpu.memory_space<any>>
    %1018 = tpu.memref_squeeze %1017 : memref<1x128xf32, #tpu.memory_space<any>> -> memref<128xf32, #tpu.memory_space<any>>
    %c0_i32_507 = arith.constant 0 : i32
    %1019 = tpu.memref_slice %arg3[%c30_i32_505, %c0_i32_507] : memref<128x128xf32, #tpu.memory_space<vmem>> -> memref<1x128xf32, #tpu.memory_space<vmem>>
    %1020 = tpu.memref_squeeze %1019 : memref<1x128xf32, #tpu.memory_space<vmem>> -> memref<128xf32, #tpu.memory_space<vmem>>
    tpu.wait_dma2 semaphore(%arg4 : memref<!tpu.dma_semaphore, #tpu.memory_space<semaphore_mem>>) src(%1018 : memref<128xf32, #tpu.memory_space<any>>) dst(%1020 : memref<128xf32, #tpu.memory_space<vmem>>)
    %c0_i32_508 = arith.constant 0 : i32
    %c31_i32_509 = arith.constant 31 : i32
    %c0_i32_510 = arith.constant 0 : i32
    %1021 = tpu.memref_slice %arg2[%c0_i32_508, %c0_i32_510] : memref<1024x128xf32, #tpu.memory_space<any>> -> memref<1x128xf32, #tpu.memory_space<any>>
    %1022 = tpu.memref_squeeze %1021 : memref<1x128xf32, #tpu.memory_space<any>> -> memref<128xf32, #tpu.memory_space<any>>
    %c0_i32_511 = arith.constant 0 : i32
    %1023 = tpu.memref_slice %arg3[%c31_i32_509, %c0_i32_511] : memref<128x128xf32, #tpu.memory_space<vmem>> -> memref<1x128xf32, #tpu.memory_space<vmem>>
    %1024 = tpu.memref_squeeze %1023 : memref<1x128xf32, #tpu.memory_space<vmem>> -> memref<128xf32, #tpu.memory_space<vmem>>
    tpu.wait_dma2 semaphore(%arg4 : memref<!tpu.dma_semaphore, #tpu.memory_space<semaphore_mem>>) src(%1022 : memref<128xf32, #tpu.memory_space<any>>) dst(%1024 : memref<128xf32, #tpu.memory_space<vmem>>)
    %c0_i32_512 = arith.constant 0 : i32
    %c32_i32_513 = arith.constant 32 : i32
    %c0_i32_514 = arith.constant 0 : i32
    %1025 = tpu.memref_slice %arg2[%c0_i32_512, %c0_i32_514] : memref<1024x128xf32, #tpu.memory_space<any>> -> memref<1x128xf32, #tpu.memory_space<any>>
    %1026 = tpu.memref_squeeze %1025 : memref<1x128xf32, #tpu.memory_space<any>> -> memref<128xf32, #tpu.memory_space<any>>
    %c0_i32_515 = arith.constant 0 : i32
    %1027 = tpu.memref_slice %arg3[%c32_i32_513, %c0_i32_515] : memref<128x128xf32, #tpu.memory_space<vmem>> -> memref<1x128xf32, #tpu.memory_space<vmem>>
    %1028 = tpu.memref_squeeze %1027 : memref<1x128xf32, #tpu.memory_space<vmem>> -> memref<128xf32, #tpu.memory_space<vmem>>
    tpu.wait_dma2 semaphore(%arg4 : memref<!tpu.dma_semaphore, #tpu.memory_space<semaphore_mem>>) src(%1026 : memref<128xf32, #tpu.memory_space<any>>) dst(%1028 : memref<128xf32, #tpu.memory_space<vmem>>)
    %c0_i32_516 = arith.constant 0 : i32
    %c33_i32_517 = arith.constant 33 : i32
    %c0_i32_518 = arith.constant 0 : i32
    %1029 = tpu.memref_slice %arg2[%c0_i32_516, %c0_i32_518] : memref<1024x128xf32, #tpu.memory_space<any>> -> memref<1x128xf32, #tpu.memory_space<any>>
    %1030 = tpu.memref_squeeze %1029 : memref<1x128xf32, #tpu.memory_space<any>> -> memref<128xf32, #tpu.memory_space<any>>
    %c0_i32_519 = arith.constant 0 : i32
    %1031 = tpu.memref_slice %arg3[%c33_i32_517, %c0_i32_519] : memref<128x128xf32, #tpu.memory_space<vmem>> -> memref<1x128xf32, #tpu.memory_space<vmem>>
    %1032 = tpu.memref_squeeze %1031 : memref<1x128xf32, #tpu.memory_space<vmem>> -> memref<128xf32, #tpu.memory_space<vmem>>
    tpu.wait_dma2 semaphore(%arg4 : memref<!tpu.dma_semaphore, #tpu.memory_space<semaphore_mem>>) src(%1030 : memref<128xf32, #tpu.memory_space<any>>) dst(%1032 : memref<128xf32, #tpu.memory_space<vmem>>)
    %c0_i32_520 = arith.constant 0 : i32
    %c34_i32_521 = arith.constant 34 : i32
    %c0_i32_522 = arith.constant 0 : i32
    %1033 = tpu.memref_slice %arg2[%c0_i32_520, %c0_i32_522] : memref<1024x128xf32, #tpu.memory_space<any>> -> memref<1x128xf32, #tpu.memory_space<any>>
    %1034 = tpu.memref_squeeze %1033 : memref<1x128xf32, #tpu.memory_space<any>> -> memref<128xf32, #tpu.memory_space<any>>
    %c0_i32_523 = arith.constant 0 : i32
    %1035 = tpu.memref_slice %arg3[%c34_i32_521, %c0_i32_523] : memref<128x128xf32, #tpu.memory_space<vmem>> -> memref<1x128xf32, #tpu.memory_space<vmem>>
    %1036 = tpu.memref_squeeze %1035 : memref<1x128xf32, #tpu.memory_space<vmem>> -> memref<128xf32, #tpu.memory_space<vmem>>
    tpu.wait_dma2 semaphore(%arg4 : memref<!tpu.dma_semaphore, #tpu.memory_space<semaphore_mem>>) src(%1034 : memref<128xf32, #tpu.memory_space<any>>) dst(%1036 : memref<128xf32, #tpu.memory_space<vmem>>)
    %c0_i32_524 = arith.constant 0 : i32
    %c35_i32_525 = arith.constant 35 : i32
    %c0_i32_526 = arith.constant 0 : i32
    %1037 = tpu.memref_slice %arg2[%c0_i32_524, %c0_i32_526] : memref<1024x128xf32, #tpu.memory_space<any>> -> memref<1x128xf32, #tpu.memory_space<any>>
    %1038 = tpu.memref_squeeze %1037 : memref<1x128xf32, #tpu.memory_space<any>> -> memref<128xf32, #tpu.memory_space<any>>
    %c0_i32_527 = arith.constant 0 : i32
    %1039 = tpu.memref_slice %arg3[%c35_i32_525, %c0_i32_527] : memref<128x128xf32, #tpu.memory_space<vmem>> -> memref<1x128xf32, #tpu.memory_space<vmem>>
    %1040 = tpu.memref_squeeze %1039 : memref<1x128xf32, #tpu.memory_space<vmem>> -> memref<128xf32, #tpu.memory_space<vmem>>
    tpu.wait_dma2 semaphore(%arg4 : memref<!tpu.dma_semaphore, #tpu.memory_space<semaphore_mem>>) src(%1038 : memref<128xf32, #tpu.memory_space<any>>) dst(%1040 : memref<128xf32, #tpu.memory_space<vmem>>)
    %c0_i32_528 = arith.constant 0 : i32
    %c36_i32_529 = arith.constant 36 : i32
    %c0_i32_530 = arith.constant 0 : i32
    %1041 = tpu.memref_slice %arg2[%c0_i32_528, %c0_i32_530] : memref<1024x128xf32, #tpu.memory_space<any>> -> memref<1x128xf32, #tpu.memory_space<any>>
    %1042 = tpu.memref_squeeze %1041 : memref<1x128xf32, #tpu.memory_space<any>> -> memref<128xf32, #tpu.memory_space<any>>
    %c0_i32_531 = arith.constant 0 : i32
    %1043 = tpu.memref_slice %arg3[%c36_i32_529, %c0_i32_531] : memref<128x128xf32, #tpu.memory_space<vmem>> -> memref<1x128xf32, #tpu.memory_space<vmem>>
    %1044 = tpu.memref_squeeze %1043 : memref<1x128xf32, #tpu.memory_space<vmem>> -> memref<128xf32, #tpu.memory_space<vmem>>
    tpu.wait_dma2 semaphore(%arg4 : memref<!tpu.dma_semaphore, #tpu.memory_space<semaphore_mem>>) src(%1042 : memref<128xf32, #tpu.memory_space<any>>) dst(%1044 : memref<128xf32, #tpu.memory_space<vmem>>)
    %c0_i32_532 = arith.constant 0 : i32
    %c37_i32_533 = arith.constant 37 : i32
    %c0_i32_534 = arith.constant 0 : i32
    %1045 = tpu.memref_slice %arg2[%c0_i32_532, %c0_i32_534] : memref<1024x128xf32, #tpu.memory_space<any>> -> memref<1x128xf32, #tpu.memory_space<any>>
    %1046 = tpu.memref_squeeze %1045 : memref<1x128xf32, #tpu.memory_space<any>> -> memref<128xf32, #tpu.memory_space<any>>
    %c0_i32_535 = arith.constant 0 : i32
    %1047 = tpu.memref_slice %arg3[%c37_i32_533, %c0_i32_535] : memref<128x128xf32, #tpu.memory_space<vmem>> -> memref<1x128xf32, #tpu.memory_space<vmem>>
    %1048 = tpu.memref_squeeze %1047 : memref<1x128xf32, #tpu.memory_space<vmem>> -> memref<128xf32, #tpu.memory_space<vmem>>
    tpu.wait_dma2 semaphore(%arg4 : memref<!tpu.dma_semaphore, #tpu.memory_space<semaphore_mem>>) src(%1046 : memref<128xf32, #tpu.memory_space<any>>) dst(%1048 : memref<128xf32, #tpu.memory_space<vmem>>)
    %c0_i32_536 = arith.constant 0 : i32
    %c38_i32_537 = arith.constant 38 : i32
    %c0_i32_538 = arith.constant 0 : i32
    %1049 = tpu.memref_slice %arg2[%c0_i32_536, %c0_i32_538] : memref<1024x128xf32, #tpu.memory_space<any>> -> memref<1x128xf32, #tpu.memory_space<any>>
    %1050 = tpu.memref_squeeze %1049 : memref<1x128xf32, #tpu.memory_space<any>> -> memref<128xf32, #tpu.memory_space<any>>
    %c0_i32_539 = arith.constant 0 : i32
    %1051 = tpu.memref_slice %arg3[%c38_i32_537, %c0_i32_539] : memref<128x128xf32, #tpu.memory_space<vmem>> -> memref<1x128xf32, #tpu.memory_space<vmem>>
    %1052 = tpu.memref_squeeze %1051 : memref<1x128xf32, #tpu.memory_space<vmem>> -> memref<128xf32, #tpu.memory_space<vmem>>
    tpu.wait_dma2 semaphore(%arg4 : memref<!tpu.dma_semaphore, #tpu.memory_space<semaphore_mem>>) src(%1050 : memref<128xf32, #tpu.memory_space<any>>) dst(%1052 : memref<128xf32, #tpu.memory_space<vmem>>)
    %c0_i32_540 = arith.constant 0 : i32
    %c39_i32_541 = arith.constant 39 : i32
    %c0_i32_542 = arith.constant 0 : i32
    %1053 = tpu.memref_slice %arg2[%c0_i32_540, %c0_i32_542] : memref<1024x128xf32, #tpu.memory_space<any>> -> memref<1x128xf32, #tpu.memory_space<any>>
    %1054 = tpu.memref_squeeze %1053 : memref<1x128xf32, #tpu.memory_space<any>> -> memref<128xf32, #tpu.memory_space<any>>
    %c0_i32_543 = arith.constant 0 : i32
    %1055 = tpu.memref_slice %arg3[%c39_i32_541, %c0_i32_543] : memref<128x128xf32, #tpu.memory_space<vmem>> -> memref<1x128xf32, #tpu.memory_space<vmem>>
    %1056 = tpu.memref_squeeze %1055 : memref<1x128xf32, #tpu.memory_space<vmem>> -> memref<128xf32, #tpu.memory_space<vmem>>
    tpu.wait_dma2 semaphore(%arg4 : memref<!tpu.dma_semaphore, #tpu.memory_space<semaphore_mem>>) src(%1054 : memref<128xf32, #tpu.memory_space<any>>) dst(%1056 : memref<128xf32, #tpu.memory_space<vmem>>)
    %c0_i32_544 = arith.constant 0 : i32
    %c40_i32_545 = arith.constant 40 : i32
    %c0_i32_546 = arith.constant 0 : i32
    %1057 = tpu.memref_slice %arg2[%c0_i32_544, %c0_i32_546] : memref<1024x128xf32, #tpu.memory_space<any>> -> memref<1x128xf32, #tpu.memory_space<any>>
    %1058 = tpu.memref_squeeze %1057 : memref<1x128xf32, #tpu.memory_space<any>> -> memref<128xf32, #tpu.memory_space<any>>
    %c0_i32_547 = arith.constant 0 : i32
    %1059 = tpu.memref_slice %arg3[%c40_i32_545, %c0_i32_547] : memref<128x128xf32, #tpu.memory_space<vmem>> -> memref<1x128xf32, #tpu.memory_space<vmem>>
    %1060 = tpu.memref_squeeze %1059 : memref<1x128xf32, #tpu.memory_space<vmem>> -> memref<128xf32, #tpu.memory_space<vmem>>
    tpu.wait_dma2 semaphore(%arg4 : memref<!tpu.dma_semaphore, #tpu.memory_space<semaphore_mem>>) src(%1058 : memref<128xf32, #tpu.memory_space<any>>) dst(%1060 : memref<128xf32, #tpu.memory_space<vmem>>)
    %c0_i32_548 = arith.constant 0 : i32
    %c41_i32_549 = arith.constant 41 : i32
    %c0_i32_550 = arith.constant 0 : i32
    %1061 = tpu.memref_slice %arg2[%c0_i32_548, %c0_i32_550] : memref<1024x128xf32, #tpu.memory_space<any>> -> memref<1x128xf32, #tpu.memory_space<any>>
    %1062 = tpu.memref_squeeze %1061 : memref<1x128xf32, #tpu.memory_space<any>> -> memref<128xf32, #tpu.memory_space<any>>
    %c0_i32_551 = arith.constant 0 : i32
    %1063 = tpu.memref_slice %arg3[%c41_i32_549, %c0_i32_551] : memref<128x128xf32, #tpu.memory_space<vmem>> -> memref<1x128xf32, #tpu.memory_space<vmem>>
    %1064 = tpu.memref_squeeze %1063 : memref<1x128xf32, #tpu.memory_space<vmem>> -> memref<128xf32, #tpu.memory_space<vmem>>
    tpu.wait_dma2 semaphore(%arg4 : memref<!tpu.dma_semaphore, #tpu.memory_space<semaphore_mem>>) src(%1062 : memref<128xf32, #tpu.memory_space<any>>) dst(%1064 : memref<128xf32, #tpu.memory_space<vmem>>)
    %c0_i32_552 = arith.constant 0 : i32
    %c42_i32_553 = arith.constant 42 : i32
    %c0_i32_554 = arith.constant 0 : i32
    %1065 = tpu.memref_slice %arg2[%c0_i32_552, %c0_i32_554] : memref<1024x128xf32, #tpu.memory_space<any>> -> memref<1x128xf32, #tpu.memory_space<any>>
    %1066 = tpu.memref_squeeze %1065 : memref<1x128xf32, #tpu.memory_space<any>> -> memref<128xf32, #tpu.memory_space<any>>
    %c0_i32_555 = arith.constant 0 : i32
    %1067 = tpu.memref_slice %arg3[%c42_i32_553, %c0_i32_555] : memref<128x128xf32, #tpu.memory_space<vmem>> -> memref<1x128xf32, #tpu.memory_space<vmem>>
    %1068 = tpu.memref_squeeze %1067 : memref<1x128xf32, #tpu.memory_space<vmem>> -> memref<128xf32, #tpu.memory_space<vmem>>
    tpu.wait_dma2 semaphore(%arg4 : memref<!tpu.dma_semaphore, #tpu.memory_space<semaphore_mem>>) src(%1066 : memref<128xf32, #tpu.memory_space<any>>) dst(%1068 : memref<128xf32, #tpu.memory_space<vmem>>)
    %c0_i32_556 = arith.constant 0 : i32
    %c43_i32_557 = arith.constant 43 : i32
    %c0_i32_558 = arith.constant 0 : i32
    %1069 = tpu.memref_slice %arg2[%c0_i32_556, %c0_i32_558] : memref<1024x128xf32, #tpu.memory_space<any>> -> memref<1x128xf32, #tpu.memory_space<any>>
    %1070 = tpu.memref_squeeze %1069 : memref<1x128xf32, #tpu.memory_space<any>> -> memref<128xf32, #tpu.memory_space<any>>
    %c0_i32_559 = arith.constant 0 : i32
    %1071 = tpu.memref_slice %arg3[%c43_i32_557, %c0_i32_559] : memref<128x128xf32, #tpu.memory_space<vmem>> -> memref<1x128xf32, #tpu.memory_space<vmem>>
    %1072 = tpu.memref_squeeze %1071 : memref<1x128xf32, #tpu.memory_space<vmem>> -> memref<128xf32, #tpu.memory_space<vmem>>
    tpu.wait_dma2 semaphore(%arg4 : memref<!tpu.dma_semaphore, #tpu.memory_space<semaphore_mem>>) src(%1070 : memref<128xf32, #tpu.memory_space<any>>) dst(%1072 : memref<128xf32, #tpu.memory_space<vmem>>)
    %c0_i32_560 = arith.constant 0 : i32
    %c44_i32_561 = arith.constant 44 : i32
    %c0_i32_562 = arith.constant 0 : i32
    %1073 = tpu.memref_slice %arg2[%c0_i32_560, %c0_i32_562] : memref<1024x128xf32, #tpu.memory_space<any>> -> memref<1x128xf32, #tpu.memory_space<any>>
    %1074 = tpu.memref_squeeze %1073 : memref<1x128xf32, #tpu.memory_space<any>> -> memref<128xf32, #tpu.memory_space<any>>
    %c0_i32_563 = arith.constant 0 : i32
    %1075 = tpu.memref_slice %arg3[%c44_i32_561, %c0_i32_563] : memref<128x128xf32, #tpu.memory_space<vmem>> -> memref<1x128xf32, #tpu.memory_space<vmem>>
    %1076 = tpu.memref_squeeze %1075 : memref<1x128xf32, #tpu.memory_space<vmem>> -> memref<128xf32, #tpu.memory_space<vmem>>
    tpu.wait_dma2 semaphore(%arg4 : memref<!tpu.dma_semaphore, #tpu.memory_space<semaphore_mem>>) src(%1074 : memref<128xf32, #tpu.memory_space<any>>) dst(%1076 : memref<128xf32, #tpu.memory_space<vmem>>)
    %c0_i32_564 = arith.constant 0 : i32
    %c45_i32_565 = arith.constant 45 : i32
    %c0_i32_566 = arith.constant 0 : i32
    %1077 = tpu.memref_slice %arg2[%c0_i32_564, %c0_i32_566] : memref<1024x128xf32, #tpu.memory_space<any>> -> memref<1x128xf32, #tpu.memory_space<any>>
    %1078 = tpu.memref_squeeze %1077 : memref<1x128xf32, #tpu.memory_space<any>> -> memref<128xf32, #tpu.memory_space<any>>
    %c0_i32_567 = arith.constant 0 : i32
    %1079 = tpu.memref_slice %arg3[%c45_i32_565, %c0_i32_567] : memref<128x128xf32, #tpu.memory_space<vmem>> -> memref<1x128xf32, #tpu.memory_space<vmem>>
    %1080 = tpu.memref_squeeze %1079 : memref<1x128xf32, #tpu.memory_space<vmem>> -> memref<128xf32, #tpu.memory_space<vmem>>
    tpu.wait_dma2 semaphore(%arg4 : memref<!tpu.dma_semaphore, #tpu.memory_space<semaphore_mem>>) src(%1078 : memref<128xf32, #tpu.memory_space<any>>) dst(%1080 : memref<128xf32, #tpu.memory_space<vmem>>)
    %c0_i32_568 = arith.constant 0 : i32
    %c46_i32_569 = arith.constant 46 : i32
    %c0_i32_570 = arith.constant 0 : i32
    %1081 = tpu.memref_slice %arg2[%c0_i32_568, %c0_i32_570] : memref<1024x128xf32, #tpu.memory_space<any>> -> memref<1x128xf32, #tpu.memory_space<any>>
    %1082 = tpu.memref_squeeze %1081 : memref<1x128xf32, #tpu.memory_space<any>> -> memref<128xf32, #tpu.memory_space<any>>
    %c0_i32_571 = arith.constant 0 : i32
    %1083 = tpu.memref_slice %arg3[%c46_i32_569, %c0_i32_571] : memref<128x128xf32, #tpu.memory_space<vmem>> -> memref<1x128xf32, #tpu.memory_space<vmem>>
    %1084 = tpu.memref_squeeze %1083 : memref<1x128xf32, #tpu.memory_space<vmem>> -> memref<128xf32, #tpu.memory_space<vmem>>
    tpu.wait_dma2 semaphore(%arg4 : memref<!tpu.dma_semaphore, #tpu.memory_space<semaphore_mem>>) src(%1082 : memref<128xf32, #tpu.memory_space<any>>) dst(%1084 : memref<128xf32, #tpu.memory_space<vmem>>)
    %c0_i32_572 = arith.constant 0 : i32
    %c47_i32_573 = arith.constant 47 : i32
    %c0_i32_574 = arith.constant 0 : i32
    %1085 = tpu.memref_slice %arg2[%c0_i32_572, %c0_i32_574] : memref<1024x128xf32, #tpu.memory_space<any>> -> memref<1x128xf32, #tpu.memory_space<any>>
    %1086 = tpu.memref_squeeze %1085 : memref<1x128xf32, #tpu.memory_space<any>> -> memref<128xf32, #tpu.memory_space<any>>
    %c0_i32_575 = arith.constant 0 : i32
    %1087 = tpu.memref_slice %arg3[%c47_i32_573, %c0_i32_575] : memref<128x128xf32, #tpu.memory_space<vmem>> -> memref<1x128xf32, #tpu.memory_space<vmem>>
    %1088 = tpu.memref_squeeze %1087 : memref<1x128xf32, #tpu.memory_space<vmem>> -> memref<128xf32, #tpu.memory_space<vmem>>
    tpu.wait_dma2 semaphore(%arg4 : memref<!tpu.dma_semaphore, #tpu.memory_space<semaphore_mem>>) src(%1086 : memref<128xf32, #tpu.memory_space<any>>) dst(%1088 : memref<128xf32, #tpu.memory_space<vmem>>)
    %c0_i32_576 = arith.constant 0 : i32
    %c48_i32_577 = arith.constant 48 : i32
    %c0_i32_578 = arith.constant 0 : i32
    %1089 = tpu.memref_slice %arg2[%c0_i32_576, %c0_i32_578] : memref<1024x128xf32, #tpu.memory_space<any>> -> memref<1x128xf32, #tpu.memory_space<any>>
    %1090 = tpu.memref_squeeze %1089 : memref<1x128xf32, #tpu.memory_space<any>> -> memref<128xf32, #tpu.memory_space<any>>
    %c0_i32_579 = arith.constant 0 : i32
    %1091 = tpu.memref_slice %arg3[%c48_i32_577, %c0_i32_579] : memref<128x128xf32, #tpu.memory_space<vmem>> -> memref<1x128xf32, #tpu.memory_space<vmem>>
    %1092 = tpu.memref_squeeze %1091 : memref<1x128xf32, #tpu.memory_space<vmem>> -> memref<128xf32, #tpu.memory_space<vmem>>
    tpu.wait_dma2 semaphore(%arg4 : memref<!tpu.dma_semaphore, #tpu.memory_space<semaphore_mem>>) src(%1090 : memref<128xf32, #tpu.memory_space<any>>) dst(%1092 : memref<128xf32, #tpu.memory_space<vmem>>)
    %c0_i32_580 = arith.constant 0 : i32
    %c49_i32_581 = arith.constant 49 : i32
    %c0_i32_582 = arith.constant 0 : i32
    %1093 = tpu.memref_slice %arg2[%c0_i32_580, %c0_i32_582] : memref<1024x128xf32, #tpu.memory_space<any>> -> memref<1x128xf32, #tpu.memory_space<any>>
    %1094 = tpu.memref_squeeze %1093 : memref<1x128xf32, #tpu.memory_space<any>> -> memref<128xf32, #tpu.memory_space<any>>
    %c0_i32_583 = arith.constant 0 : i32
    %1095 = tpu.memref_slice %arg3[%c49_i32_581, %c0_i32_583] : memref<128x128xf32, #tpu.memory_space<vmem>> -> memref<1x128xf32, #tpu.memory_space<vmem>>
    %1096 = tpu.memref_squeeze %1095 : memref<1x128xf32, #tpu.memory_space<vmem>> -> memref<128xf32, #tpu.memory_space<vmem>>
    tpu.wait_dma2 semaphore(%arg4 : memref<!tpu.dma_semaphore, #tpu.memory_space<semaphore_mem>>) src(%1094 : memref<128xf32, #tpu.memory_space<any>>) dst(%1096 : memref<128xf32, #tpu.memory_space<vmem>>)
    %c0_i32_584 = arith.constant 0 : i32
    %c50_i32_585 = arith.constant 50 : i32
    %c0_i32_586 = arith.constant 0 : i32
    %1097 = tpu.memref_slice %arg2[%c0_i32_584, %c0_i32_586] : memref<1024x128xf32, #tpu.memory_space<any>> -> memref<1x128xf32, #tpu.memory_space<any>>
    %1098 = tpu.memref_squeeze %1097 : memref<1x128xf32, #tpu.memory_space<any>> -> memref<128xf32, #tpu.memory_space<any>>
    %c0_i32_587 = arith.constant 0 : i32
    %1099 = tpu.memref_slice %arg3[%c50_i32_585, %c0_i32_587] : memref<128x128xf32, #tpu.memory_space<vmem>> -> memref<1x128xf32, #tpu.memory_space<vmem>>
    %1100 = tpu.memref_squeeze %1099 : memref<1x128xf32, #tpu.memory_space<vmem>> -> memref<128xf32, #tpu.memory_space<vmem>>
    tpu.wait_dma2 semaphore(%arg4 : memref<!tpu.dma_semaphore, #tpu.memory_space<semaphore_mem>>) src(%1098 : memref<128xf32, #tpu.memory_space<any>>) dst(%1100 : memref<128xf32, #tpu.memory_space<vmem>>)
    %c0_i32_588 = arith.constant 0 : i32
    %c51_i32_589 = arith.constant 51 : i32
    %c0_i32_590 = arith.constant 0 : i32
    %1101 = tpu.memref_slice %arg2[%c0_i32_588, %c0_i32_590] : memref<1024x128xf32, #tpu.memory_space<any>> -> memref<1x128xf32, #tpu.memory_space<any>>
    %1102 = tpu.memref_squeeze %1101 : memref<1x128xf32, #tpu.memory_space<any>> -> memref<128xf32, #tpu.memory_space<any>>
    %c0_i32_591 = arith.constant 0 : i32
    %1103 = tpu.memref_slice %arg3[%c51_i32_589, %c0_i32_591] : memref<128x128xf32, #tpu.memory_space<vmem>> -> memref<1x128xf32, #tpu.memory_space<vmem>>
    %1104 = tpu.memref_squeeze %1103 : memref<1x128xf32, #tpu.memory_space<vmem>> -> memref<128xf32, #tpu.memory_space<vmem>>
    tpu.wait_dma2 semaphore(%arg4 : memref<!tpu.dma_semaphore, #tpu.memory_space<semaphore_mem>>) src(%1102 : memref<128xf32, #tpu.memory_space<any>>) dst(%1104 : memref<128xf32, #tpu.memory_space<vmem>>)
    %c0_i32_592 = arith.constant 0 : i32
    %c52_i32_593 = arith.constant 52 : i32
    %c0_i32_594 = arith.constant 0 : i32
    %1105 = tpu.memref_slice %arg2[%c0_i32_592, %c0_i32_594] : memref<1024x128xf32, #tpu.memory_space<any>> -> memref<1x128xf32, #tpu.memory_space<any>>
    %1106 = tpu.memref_squeeze %1105 : memref<1x128xf32, #tpu.memory_space<any>> -> memref<128xf32, #tpu.memory_space<any>>
    %c0_i32_595 = arith.constant 0 : i32
    %1107 = tpu.memref_slice %arg3[%c52_i32_593, %c0_i32_595] : memref<128x128xf32, #tpu.memory_space<vmem>> -> memref<1x128xf32, #tpu.memory_space<vmem>>
    %1108 = tpu.memref_squeeze %1107 : memref<1x128xf32, #tpu.memory_space<vmem>> -> memref<128xf32, #tpu.memory_space<vmem>>
    tpu.wait_dma2 semaphore(%arg4 : memref<!tpu.dma_semaphore, #tpu.memory_space<semaphore_mem>>) src(%1106 : memref<128xf32, #tpu.memory_space<any>>) dst(%1108 : memref<128xf32, #tpu.memory_space<vmem>>)
    %c0_i32_596 = arith.constant 0 : i32
    %c53_i32_597 = arith.constant 53 : i32
    %c0_i32_598 = arith.constant 0 : i32
    %1109 = tpu.memref_slice %arg2[%c0_i32_596, %c0_i32_598] : memref<1024x128xf32, #tpu.memory_space<any>> -> memref<1x128xf32, #tpu.memory_space<any>>
    %1110 = tpu.memref_squeeze %1109 : memref<1x128xf32, #tpu.memory_space<any>> -> memref<128xf32, #tpu.memory_space<any>>
    %c0_i32_599 = arith.constant 0 : i32
    %1111 = tpu.memref_slice %arg3[%c53_i32_597, %c0_i32_599] : memref<128x128xf32, #tpu.memory_space<vmem>> -> memref<1x128xf32, #tpu.memory_space<vmem>>
    %1112 = tpu.memref_squeeze %1111 : memref<1x128xf32, #tpu.memory_space<vmem>> -> memref<128xf32, #tpu.memory_space<vmem>>
    tpu.wait_dma2 semaphore(%arg4 : memref<!tpu.dma_semaphore, #tpu.memory_space<semaphore_mem>>) src(%1110 : memref<128xf32, #tpu.memory_space<any>>) dst(%1112 : memref<128xf32, #tpu.memory_space<vmem>>)
    %c0_i32_600 = arith.constant 0 : i32
    %c54_i32_601 = arith.constant 54 : i32
    %c0_i32_602 = arith.constant 0 : i32
    %1113 = tpu.memref_slice %arg2[%c0_i32_600, %c0_i32_602] : memref<1024x128xf32, #tpu.memory_space<any>> -> memref<1x128xf32, #tpu.memory_space<any>>
    %1114 = tpu.memref_squeeze %1113 : memref<1x128xf32, #tpu.memory_space<any>> -> memref<128xf32, #tpu.memory_space<any>>
    %c0_i32_603 = arith.constant 0 : i32
    %1115 = tpu.memref_slice %arg3[%c54_i32_601, %c0_i32_603] : memref<128x128xf32, #tpu.memory_space<vmem>> -> memref<1x128xf32, #tpu.memory_space<vmem>>
    %1116 = tpu.memref_squeeze %1115 : memref<1x128xf32, #tpu.memory_space<vmem>> -> memref<128xf32, #tpu.memory_space<vmem>>
    tpu.wait_dma2 semaphore(%arg4 : memref<!tpu.dma_semaphore, #tpu.memory_space<semaphore_mem>>) src(%1114 : memref<128xf32, #tpu.memory_space<any>>) dst(%1116 : memref<128xf32, #tpu.memory_space<vmem>>)
    %c0_i32_604 = arith.constant 0 : i32
    %c55_i32_605 = arith.constant 55 : i32
    %c0_i32_606 = arith.constant 0 : i32
    %1117 = tpu.memref_slice %arg2[%c0_i32_604, %c0_i32_606] : memref<1024x128xf32, #tpu.memory_space<any>> -> memref<1x128xf32, #tpu.memory_space<any>>
    %1118 = tpu.memref_squeeze %1117 : memref<1x128xf32, #tpu.memory_space<any>> -> memref<128xf32, #tpu.memory_space<any>>
    %c0_i32_607 = arith.constant 0 : i32
    %1119 = tpu.memref_slice %arg3[%c55_i32_605, %c0_i32_607] : memref<128x128xf32, #tpu.memory_space<vmem>> -> memref<1x128xf32, #tpu.memory_space<vmem>>
    %1120 = tpu.memref_squeeze %1119 : memref<1x128xf32, #tpu.memory_space<vmem>> -> memref<128xf32, #tpu.memory_space<vmem>>
    tpu.wait_dma2 semaphore(%arg4 : memref<!tpu.dma_semaphore, #tpu.memory_space<semaphore_mem>>) src(%1118 : memref<128xf32, #tpu.memory_space<any>>) dst(%1120 : memref<128xf32, #tpu.memory_space<vmem>>)
    %c0_i32_608 = arith.constant 0 : i32
    %c56_i32_609 = arith.constant 56 : i32
    %c0_i32_610 = arith.constant 0 : i32
    %1121 = tpu.memref_slice %arg2[%c0_i32_608, %c0_i32_610] : memref<1024x128xf32, #tpu.memory_space<any>> -> memref<1x128xf32, #tpu.memory_space<any>>
    %1122 = tpu.memref_squeeze %1121 : memref<1x128xf32, #tpu.memory_space<any>> -> memref<128xf32, #tpu.memory_space<any>>
    %c0_i32_611 = arith.constant 0 : i32
    %1123 = tpu.memref_slice %arg3[%c56_i32_609, %c0_i32_611] : memref<128x128xf32, #tpu.memory_space<vmem>> -> memref<1x128xf32, #tpu.memory_space<vmem>>
    %1124 = tpu.memref_squeeze %1123 : memref<1x128xf32, #tpu.memory_space<vmem>> -> memref<128xf32, #tpu.memory_space<vmem>>
    tpu.wait_dma2 semaphore(%arg4 : memref<!tpu.dma_semaphore, #tpu.memory_space<semaphore_mem>>) src(%1122 : memref<128xf32, #tpu.memory_space<any>>) dst(%1124 : memref<128xf32, #tpu.memory_space<vmem>>)
    %c0_i32_612 = arith.constant 0 : i32
    %c57_i32_613 = arith.constant 57 : i32
    %c0_i32_614 = arith.constant 0 : i32
    %1125 = tpu.memref_slice %arg2[%c0_i32_612, %c0_i32_614] : memref<1024x128xf32, #tpu.memory_space<any>> -> memref<1x128xf32, #tpu.memory_space<any>>
    %1126 = tpu.memref_squeeze %1125 : memref<1x128xf32, #tpu.memory_space<any>> -> memref<128xf32, #tpu.memory_space<any>>
    %c0_i32_615 = arith.constant 0 : i32
    %1127 = tpu.memref_slice %arg3[%c57_i32_613, %c0_i32_615] : memref<128x128xf32, #tpu.memory_space<vmem>> -> memref<1x128xf32, #tpu.memory_space<vmem>>
    %1128 = tpu.memref_squeeze %1127 : memref<1x128xf32, #tpu.memory_space<vmem>> -> memref<128xf32, #tpu.memory_space<vmem>>
    tpu.wait_dma2 semaphore(%arg4 : memref<!tpu.dma_semaphore, #tpu.memory_space<semaphore_mem>>) src(%1126 : memref<128xf32, #tpu.memory_space<any>>) dst(%1128 : memref<128xf32, #tpu.memory_space<vmem>>)
    %c0_i32_616 = arith.constant 0 : i32
    %c58_i32_617 = arith.constant 58 : i32
    %c0_i32_618 = arith.constant 0 : i32
    %1129 = tpu.memref_slice %arg2[%c0_i32_616, %c0_i32_618] : memref<1024x128xf32, #tpu.memory_space<any>> -> memref<1x128xf32, #tpu.memory_space<any>>
    %1130 = tpu.memref_squeeze %1129 : memref<1x128xf32, #tpu.memory_space<any>> -> memref<128xf32, #tpu.memory_space<any>>
    %c0_i32_619 = arith.constant 0 : i32
    %1131 = tpu.memref_slice %arg3[%c58_i32_617, %c0_i32_619] : memref<128x128xf32, #tpu.memory_space<vmem>> -> memref<1x128xf32, #tpu.memory_space<vmem>>
    %1132 = tpu.memref_squeeze %1131 : memref<1x128xf32, #tpu.memory_space<vmem>> -> memref<128xf32, #tpu.memory_space<vmem>>
    tpu.wait_dma2 semaphore(%arg4 : memref<!tpu.dma_semaphore, #tpu.memory_space<semaphore_mem>>) src(%1130 : memref<128xf32, #tpu.memory_space<any>>) dst(%1132 : memref<128xf32, #tpu.memory_space<vmem>>)
    %c0_i32_620 = arith.constant 0 : i32
    %c59_i32_621 = arith.constant 59 : i32
    %c0_i32_622 = arith.constant 0 : i32
    %1133 = tpu.memref_slice %arg2[%c0_i32_620, %c0_i32_622] : memref<1024x128xf32, #tpu.memory_space<any>> -> memref<1x128xf32, #tpu.memory_space<any>>
    %1134 = tpu.memref_squeeze %1133 : memref<1x128xf32, #tpu.memory_space<any>> -> memref<128xf32, #tpu.memory_space<any>>
    %c0_i32_623 = arith.constant 0 : i32
    %1135 = tpu.memref_slice %arg3[%c59_i32_621, %c0_i32_623] : memref<128x128xf32, #tpu.memory_space<vmem>> -> memref<1x128xf32, #tpu.memory_space<vmem>>
    %1136 = tpu.memref_squeeze %1135 : memref<1x128xf32, #tpu.memory_space<vmem>> -> memref<128xf32, #tpu.memory_space<vmem>>
    tpu.wait_dma2 semaphore(%arg4 : memref<!tpu.dma_semaphore, #tpu.memory_space<semaphore_mem>>) src(%1134 : memref<128xf32, #tpu.memory_space<any>>) dst(%1136 : memref<128xf32, #tpu.memory_space<vmem>>)
    %c0_i32_624 = arith.constant 0 : i32
    %c60_i32_625 = arith.constant 60 : i32
    %c0_i32_626 = arith.constant 0 : i32
    %1137 = tpu.memref_slice %arg2[%c0_i32_624, %c0_i32_626] : memref<1024x128xf32, #tpu.memory_space<any>> -> memref<1x128xf32, #tpu.memory_space<any>>
    %1138 = tpu.memref_squeeze %1137 : memref<1x128xf32, #tpu.memory_space<any>> -> memref<128xf32, #tpu.memory_space<any>>
    %c0_i32_627 = arith.constant 0 : i32
    %1139 = tpu.memref_slice %arg3[%c60_i32_625, %c0_i32_627] : memref<128x128xf32, #tpu.memory_space<vmem>> -> memref<1x128xf32, #tpu.memory_space<vmem>>
    %1140 = tpu.memref_squeeze %1139 : memref<1x128xf32, #tpu.memory_space<vmem>> -> memref<128xf32, #tpu.memory_space<vmem>>
    tpu.wait_dma2 semaphore(%arg4 : memref<!tpu.dma_semaphore, #tpu.memory_space<semaphore_mem>>) src(%1138 : memref<128xf32, #tpu.memory_space<any>>) dst(%1140 : memref<128xf32, #tpu.memory_space<vmem>>)
    %c0_i32_628 = arith.constant 0 : i32
    %c61_i32_629 = arith.constant 61 : i32
    %c0_i32_630 = arith.constant 0 : i32
    %1141 = tpu.memref_slice %arg2[%c0_i32_628, %c0_i32_630] : memref<1024x128xf32, #tpu.memory_space<any>> -> memref<1x128xf32, #tpu.memory_space<any>>
    %1142 = tpu.memref_squeeze %1141 : memref<1x128xf32, #tpu.memory_space<any>> -> memref<128xf32, #tpu.memory_space<any>>
    %c0_i32_631 = arith.constant 0 : i32
    %1143 = tpu.memref_slice %arg3[%c61_i32_629, %c0_i32_631] : memref<128x128xf32, #tpu.memory_space<vmem>> -> memref<1x128xf32, #tpu.memory_space<vmem>>
    %1144 = tpu.memref_squeeze %1143 : memref<1x128xf32, #tpu.memory_space<vmem>> -> memref<128xf32, #tpu.memory_space<vmem>>
    tpu.wait_dma2 semaphore(%arg4 : memref<!tpu.dma_semaphore, #tpu.memory_space<semaphore_mem>>) src(%1142 : memref<128xf32, #tpu.memory_space<any>>) dst(%1144 : memref<128xf32, #tpu.memory_space<vmem>>)
    %c0_i32_632 = arith.constant 0 : i32
    %c62_i32_633 = arith.constant 62 : i32
    %c0_i32_634 = arith.constant 0 : i32
    %1145 = tpu.memref_slice %arg2[%c0_i32_632, %c0_i32_634] : memref<1024x128xf32, #tpu.memory_space<any>> -> memref<1x128xf32, #tpu.memory_space<any>>
    %1146 = tpu.memref_squeeze %1145 : memref<1x128xf32, #tpu.memory_space<any>> -> memref<128xf32, #tpu.memory_space<any>>
    %c0_i32_635 = arith.constant 0 : i32
    %1147 = tpu.memref_slice %arg3[%c62_i32_633, %c0_i32_635] : memref<128x128xf32, #tpu.memory_space<vmem>> -> memref<1x128xf32, #tpu.memory_space<vmem>>
    %1148 = tpu.memref_squeeze %1147 : memref<1x128xf32, #tpu.memory_space<vmem>> -> memref<128xf32, #tpu.memory_space<vmem>>
    tpu.wait_dma2 semaphore(%arg4 : memref<!tpu.dma_semaphore, #tpu.memory_space<semaphore_mem>>) src(%1146 : memref<128xf32, #tpu.memory_space<any>>) dst(%1148 : memref<128xf32, #tpu.memory_space<vmem>>)
    %c0_i32_636 = arith.constant 0 : i32
    %c63_i32_637 = arith.constant 63 : i32
    %c0_i32_638 = arith.constant 0 : i32
    %1149 = tpu.memref_slice %arg2[%c0_i32_636, %c0_i32_638] : memref<1024x128xf32, #tpu.memory_space<any>> -> memref<1x128xf32, #tpu.memory_space<any>>
    %1150 = tpu.memref_squeeze %1149 : memref<1x128xf32, #tpu.memory_space<any>> -> memref<128xf32, #tpu.memory_space<any>>
    %c0_i32_639 = arith.constant 0 : i32
    %1151 = tpu.memref_slice %arg3[%c63_i32_637, %c0_i32_639] : memref<128x128xf32, #tpu.memory_space<vmem>> -> memref<1x128xf32, #tpu.memory_space<vmem>>
    %1152 = tpu.memref_squeeze %1151 : memref<1x128xf32, #tpu.memory_space<vmem>> -> memref<128xf32, #tpu.memory_space<vmem>>
    tpu.wait_dma2 semaphore(%arg4 : memref<!tpu.dma_semaphore, #tpu.memory_space<semaphore_mem>>) src(%1150 : memref<128xf32, #tpu.memory_space<any>>) dst(%1152 : memref<128xf32, #tpu.memory_space<vmem>>)
    %c0_i32_640 = arith.constant 0 : i32
    %c64_i32_641 = arith.constant 64 : i32
    %c0_i32_642 = arith.constant 0 : i32
    %1153 = tpu.memref_slice %arg2[%c0_i32_640, %c0_i32_642] : memref<1024x128xf32, #tpu.memory_space<any>> -> memref<1x128xf32, #tpu.memory_space<any>>
    %1154 = tpu.memref_squeeze %1153 : memref<1x128xf32, #tpu.memory_space<any>> -> memref<128xf32, #tpu.memory_space<any>>
    %c0_i32_643 = arith.constant 0 : i32
    %1155 = tpu.memref_slice %arg3[%c64_i32_641, %c0_i32_643] : memref<128x128xf32, #tpu.memory_space<vmem>> -> memref<1x128xf32, #tpu.memory_space<vmem>>
    %1156 = tpu.memref_squeeze %1155 : memref<1x128xf32, #tpu.memory_space<vmem>> -> memref<128xf32, #tpu.memory_space<vmem>>
    tpu.wait_dma2 semaphore(%arg4 : memref<!tpu.dma_semaphore, #tpu.memory_space<semaphore_mem>>) src(%1154 : memref<128xf32, #tpu.memory_space<any>>) dst(%1156 : memref<128xf32, #tpu.memory_space<vmem>>)
    %c0_i32_644 = arith.constant 0 : i32
    %c65_i32_645 = arith.constant 65 : i32
    %c0_i32_646 = arith.constant 0 : i32
    %1157 = tpu.memref_slice %arg2[%c0_i32_644, %c0_i32_646] : memref<1024x128xf32, #tpu.memory_space<any>> -> memref<1x128xf32, #tpu.memory_space<any>>
    %1158 = tpu.memref_squeeze %1157 : memref<1x128xf32, #tpu.memory_space<any>> -> memref<128xf32, #tpu.memory_space<any>>
    %c0_i32_647 = arith.constant 0 : i32
    %1159 = tpu.memref_slice %arg3[%c65_i32_645, %c0_i32_647] : memref<128x128xf32, #tpu.memory_space<vmem>> -> memref<1x128xf32, #tpu.memory_space<vmem>>
    %1160 = tpu.memref_squeeze %1159 : memref<1x128xf32, #tpu.memory_space<vmem>> -> memref<128xf32, #tpu.memory_space<vmem>>
    tpu.wait_dma2 semaphore(%arg4 : memref<!tpu.dma_semaphore, #tpu.memory_space<semaphore_mem>>) src(%1158 : memref<128xf32, #tpu.memory_space<any>>) dst(%1160 : memref<128xf32, #tpu.memory_space<vmem>>)
    %c0_i32_648 = arith.constant 0 : i32
    %c66_i32_649 = arith.constant 66 : i32
    %c0_i32_650 = arith.constant 0 : i32
    %1161 = tpu.memref_slice %arg2[%c0_i32_648, %c0_i32_650] : memref<1024x128xf32, #tpu.memory_space<any>> -> memref<1x128xf32, #tpu.memory_space<any>>
    %1162 = tpu.memref_squeeze %1161 : memref<1x128xf32, #tpu.memory_space<any>> -> memref<128xf32, #tpu.memory_space<any>>
    %c0_i32_651 = arith.constant 0 : i32
    %1163 = tpu.memref_slice %arg3[%c66_i32_649, %c0_i32_651] : memref<128x128xf32, #tpu.memory_space<vmem>> -> memref<1x128xf32, #tpu.memory_space<vmem>>
    %1164 = tpu.memref_squeeze %1163 : memref<1x128xf32, #tpu.memory_space<vmem>> -> memref<128xf32, #tpu.memory_space<vmem>>
    tpu.wait_dma2 semaphore(%arg4 : memref<!tpu.dma_semaphore, #tpu.memory_space<semaphore_mem>>) src(%1162 : memref<128xf32, #tpu.memory_space<any>>) dst(%1164 : memref<128xf32, #tpu.memory_space<vmem>>)
    %c0_i32_652 = arith.constant 0 : i32
    %c67_i32_653 = arith.constant 67 : i32
    %c0_i32_654 = arith.constant 0 : i32
    %1165 = tpu.memref_slice %arg2[%c0_i32_652, %c0_i32_654] : memref<1024x128xf32, #tpu.memory_space<any>> -> memref<1x128xf32, #tpu.memory_space<any>>
    %1166 = tpu.memref_squeeze %1165 : memref<1x128xf32, #tpu.memory_space<any>> -> memref<128xf32, #tpu.memory_space<any>>
    %c0_i32_655 = arith.constant 0 : i32
    %1167 = tpu.memref_slice %arg3[%c67_i32_653, %c0_i32_655] : memref<128x128xf32, #tpu.memory_space<vmem>> -> memref<1x128xf32, #tpu.memory_space<vmem>>
    %1168 = tpu.memref_squeeze %1167 : memref<1x128xf32, #tpu.memory_space<vmem>> -> memref<128xf32, #tpu.memory_space<vmem>>
    tpu.wait_dma2 semaphore(%arg4 : memref<!tpu.dma_semaphore, #tpu.memory_space<semaphore_mem>>) src(%1166 : memref<128xf32, #tpu.memory_space<any>>) dst(%1168 : memref<128xf32, #tpu.memory_space<vmem>>)
    %c0_i32_656 = arith.constant 0 : i32
    %c68_i32_657 = arith.constant 68 : i32
    %c0_i32_658 = arith.constant 0 : i32
    %1169 = tpu.memref_slice %arg2[%c0_i32_656, %c0_i32_658] : memref<1024x128xf32, #tpu.memory_space<any>> -> memref<1x128xf32, #tpu.memory_space<any>>
    %1170 = tpu.memref_squeeze %1169 : memref<1x128xf32, #tpu.memory_space<any>> -> memref<128xf32, #tpu.memory_space<any>>
    %c0_i32_659 = arith.constant 0 : i32
    %1171 = tpu.memref_slice %arg3[%c68_i32_657, %c0_i32_659] : memref<128x128xf32, #tpu.memory_space<vmem>> -> memref<1x128xf32, #tpu.memory_space<vmem>>
    %1172 = tpu.memref_squeeze %1171 : memref<1x128xf32, #tpu.memory_space<vmem>> -> memref<128xf32, #tpu.memory_space<vmem>>
    tpu.wait_dma2 semaphore(%arg4 : memref<!tpu.dma_semaphore, #tpu.memory_space<semaphore_mem>>) src(%1170 : memref<128xf32, #tpu.memory_space<any>>) dst(%1172 : memref<128xf32, #tpu.memory_space<vmem>>)
    %c0_i32_660 = arith.constant 0 : i32
    %c69_i32_661 = arith.constant 69 : i32
    %c0_i32_662 = arith.constant 0 : i32
    %1173 = tpu.memref_slice %arg2[%c0_i32_660, %c0_i32_662] : memref<1024x128xf32, #tpu.memory_space<any>> -> memref<1x128xf32, #tpu.memory_space<any>>
    %1174 = tpu.memref_squeeze %1173 : memref<1x128xf32, #tpu.memory_space<any>> -> memref<128xf32, #tpu.memory_space<any>>
    %c0_i32_663 = arith.constant 0 : i32
    %1175 = tpu.memref_slice %arg3[%c69_i32_661, %c0_i32_663] : memref<128x128xf32, #tpu.memory_space<vmem>> -> memref<1x128xf32, #tpu.memory_space<vmem>>
    %1176 = tpu.memref_squeeze %1175 : memref<1x128xf32, #tpu.memory_space<vmem>> -> memref<128xf32, #tpu.memory_space<vmem>>
    tpu.wait_dma2 semaphore(%arg4 : memref<!tpu.dma_semaphore, #tpu.memory_space<semaphore_mem>>) src(%1174 : memref<128xf32, #tpu.memory_space<any>>) dst(%1176 : memref<128xf32, #tpu.memory_space<vmem>>)
    %c0_i32_664 = arith.constant 0 : i32
    %c70_i32_665 = arith.constant 70 : i32
    %c0_i32_666 = arith.constant 0 : i32
    %1177 = tpu.memref_slice %arg2[%c0_i32_664, %c0_i32_666] : memref<1024x128xf32, #tpu.memory_space<any>> -> memref<1x128xf32, #tpu.memory_space<any>>
    %1178 = tpu.memref_squeeze %1177 : memref<1x128xf32, #tpu.memory_space<any>> -> memref<128xf32, #tpu.memory_space<any>>
    %c0_i32_667 = arith.constant 0 : i32
    %1179 = tpu.memref_slice %arg3[%c70_i32_665, %c0_i32_667] : memref<128x128xf32, #tpu.memory_space<vmem>> -> memref<1x128xf32, #tpu.memory_space<vmem>>
    %1180 = tpu.memref_squeeze %1179 : memref<1x128xf32, #tpu.memory_space<vmem>> -> memref<128xf32, #tpu.memory_space<vmem>>
    tpu.wait_dma2 semaphore(%arg4 : memref<!tpu.dma_semaphore, #tpu.memory_space<semaphore_mem>>) src(%1178 : memref<128xf32, #tpu.memory_space<any>>) dst(%1180 : memref<128xf32, #tpu.memory_space<vmem>>)
    %c0_i32_668 = arith.constant 0 : i32
    %c71_i32_669 = arith.constant 71 : i32
    %c0_i32_670 = arith.constant 0 : i32
    %1181 = tpu.memref_slice %arg2[%c0_i32_668, %c0_i32_670] : memref<1024x128xf32, #tpu.memory_space<any>> -> memref<1x128xf32, #tpu.memory_space<any>>
    %1182 = tpu.memref_squeeze %1181 : memref<1x128xf32, #tpu.memory_space<any>> -> memref<128xf32, #tpu.memory_space<any>>
    %c0_i32_671 = arith.constant 0 : i32
    %1183 = tpu.memref_slice %arg3[%c71_i32_669, %c0_i32_671] : memref<128x128xf32, #tpu.memory_space<vmem>> -> memref<1x128xf32, #tpu.memory_space<vmem>>
    %1184 = tpu.memref_squeeze %1183 : memref<1x128xf32, #tpu.memory_space<vmem>> -> memref<128xf32, #tpu.memory_space<vmem>>
    tpu.wait_dma2 semaphore(%arg4 : memref<!tpu.dma_semaphore, #tpu.memory_space<semaphore_mem>>) src(%1182 : memref<128xf32, #tpu.memory_space<any>>) dst(%1184 : memref<128xf32, #tpu.memory_space<vmem>>)
    %c0_i32_672 = arith.constant 0 : i32
    %c72_i32_673 = arith.constant 72 : i32
    %c0_i32_674 = arith.constant 0 : i32
    %1185 = tpu.memref_slice %arg2[%c0_i32_672, %c0_i32_674] : memref<1024x128xf32, #tpu.memory_space<any>> -> memref<1x128xf32, #tpu.memory_space<any>>
    %1186 = tpu.memref_squeeze %1185 : memref<1x128xf32, #tpu.memory_space<any>> -> memref<128xf32, #tpu.memory_space<any>>
    %c0_i32_675 = arith.constant 0 : i32
    %1187 = tpu.memref_slice %arg3[%c72_i32_673, %c0_i32_675] : memref<128x128xf32, #tpu.memory_space<vmem>> -> memref<1x128xf32, #tpu.memory_space<vmem>>
    %1188 = tpu.memref_squeeze %1187 : memref<1x128xf32, #tpu.memory_space<vmem>> -> memref<128xf32, #tpu.memory_space<vmem>>
    tpu.wait_dma2 semaphore(%arg4 : memref<!tpu.dma_semaphore, #tpu.memory_space<semaphore_mem>>) src(%1186 : memref<128xf32, #tpu.memory_space<any>>) dst(%1188 : memref<128xf32, #tpu.memory_space<vmem>>)
    %c0_i32_676 = arith.constant 0 : i32
    %c73_i32_677 = arith.constant 73 : i32
    %c0_i32_678 = arith.constant 0 : i32
    %1189 = tpu.memref_slice %arg2[%c0_i32_676, %c0_i32_678] : memref<1024x128xf32, #tpu.memory_space<any>> -> memref<1x128xf32, #tpu.memory_space<any>>
    %1190 = tpu.memref_squeeze %1189 : memref<1x128xf32, #tpu.memory_space<any>> -> memref<128xf32, #tpu.memory_space<any>>
    %c0_i32_679 = arith.constant 0 : i32
    %1191 = tpu.memref_slice %arg3[%c73_i32_677, %c0_i32_679] : memref<128x128xf32, #tpu.memory_space<vmem>> -> memref<1x128xf32, #tpu.memory_space<vmem>>
    %1192 = tpu.memref_squeeze %1191 : memref<1x128xf32, #tpu.memory_space<vmem>> -> memref<128xf32, #tpu.memory_space<vmem>>
    tpu.wait_dma2 semaphore(%arg4 : memref<!tpu.dma_semaphore, #tpu.memory_space<semaphore_mem>>) src(%1190 : memref<128xf32, #tpu.memory_space<any>>) dst(%1192 : memref<128xf32, #tpu.memory_space<vmem>>)
    %c0_i32_680 = arith.constant 0 : i32
    %c74_i32_681 = arith.constant 74 : i32
    %c0_i32_682 = arith.constant 0 : i32
    %1193 = tpu.memref_slice %arg2[%c0_i32_680, %c0_i32_682] : memref<1024x128xf32, #tpu.memory_space<any>> -> memref<1x128xf32, #tpu.memory_space<any>>
    %1194 = tpu.memref_squeeze %1193 : memref<1x128xf32, #tpu.memory_space<any>> -> memref<128xf32, #tpu.memory_space<any>>
    %c0_i32_683 = arith.constant 0 : i32
    %1195 = tpu.memref_slice %arg3[%c74_i32_681, %c0_i32_683] : memref<128x128xf32, #tpu.memory_space<vmem>> -> memref<1x128xf32, #tpu.memory_space<vmem>>
    %1196 = tpu.memref_squeeze %1195 : memref<1x128xf32, #tpu.memory_space<vmem>> -> memref<128xf32, #tpu.memory_space<vmem>>
    tpu.wait_dma2 semaphore(%arg4 : memref<!tpu.dma_semaphore, #tpu.memory_space<semaphore_mem>>) src(%1194 : memref<128xf32, #tpu.memory_space<any>>) dst(%1196 : memref<128xf32, #tpu.memory_space<vmem>>)
    %c0_i32_684 = arith.constant 0 : i32
    %c75_i32_685 = arith.constant 75 : i32
    %c0_i32_686 = arith.constant 0 : i32
    %1197 = tpu.memref_slice %arg2[%c0_i32_684, %c0_i32_686] : memref<1024x128xf32, #tpu.memory_space<any>> -> memref<1x128xf32, #tpu.memory_space<any>>
    %1198 = tpu.memref_squeeze %1197 : memref<1x128xf32, #tpu.memory_space<any>> -> memref<128xf32, #tpu.memory_space<any>>
    %c0_i32_687 = arith.constant 0 : i32
    %1199 = tpu.memref_slice %arg3[%c75_i32_685, %c0_i32_687] : memref<128x128xf32, #tpu.memory_space<vmem>> -> memref<1x128xf32, #tpu.memory_space<vmem>>
    %1200 = tpu.memref_squeeze %1199 : memref<1x128xf32, #tpu.memory_space<vmem>> -> memref<128xf32, #tpu.memory_space<vmem>>
    tpu.wait_dma2 semaphore(%arg4 : memref<!tpu.dma_semaphore, #tpu.memory_space<semaphore_mem>>) src(%1198 : memref<128xf32, #tpu.memory_space<any>>) dst(%1200 : memref<128xf32, #tpu.memory_space<vmem>>)
    %c0_i32_688 = arith.constant 0 : i32
    %c76_i32_689 = arith.constant 76 : i32
    %c0_i32_690 = arith.constant 0 : i32
    %1201 = tpu.memref_slice %arg2[%c0_i32_688, %c0_i32_690] : memref<1024x128xf32, #tpu.memory_space<any>> -> memref<1x128xf32, #tpu.memory_space<any>>
    %1202 = tpu.memref_squeeze %1201 : memref<1x128xf32, #tpu.memory_space<any>> -> memref<128xf32, #tpu.memory_space<any>>
    %c0_i32_691 = arith.constant 0 : i32
    %1203 = tpu.memref_slice %arg3[%c76_i32_689, %c0_i32_691] : memref<128x128xf32, #tpu.memory_space<vmem>> -> memref<1x128xf32, #tpu.memory_space<vmem>>
    %1204 = tpu.memref_squeeze %1203 : memref<1x128xf32, #tpu.memory_space<vmem>> -> memref<128xf32, #tpu.memory_space<vmem>>
    tpu.wait_dma2 semaphore(%arg4 : memref<!tpu.dma_semaphore, #tpu.memory_space<semaphore_mem>>) src(%1202 : memref<128xf32, #tpu.memory_space<any>>) dst(%1204 : memref<128xf32, #tpu.memory_space<vmem>>)
    %c0_i32_692 = arith.constant 0 : i32
    %c77_i32_693 = arith.constant 77 : i32
    %c0_i32_694 = arith.constant 0 : i32
    %1205 = tpu.memref_slice %arg2[%c0_i32_692, %c0_i32_694] : memref<1024x128xf32, #tpu.memory_space<any>> -> memref<1x128xf32, #tpu.memory_space<any>>
    %1206 = tpu.memref_squeeze %1205 : memref<1x128xf32, #tpu.memory_space<any>> -> memref<128xf32, #tpu.memory_space<any>>
    %c0_i32_695 = arith.constant 0 : i32
    %1207 = tpu.memref_slice %arg3[%c77_i32_693, %c0_i32_695] : memref<128x128xf32, #tpu.memory_space<vmem>> -> memref<1x128xf32, #tpu.memory_space<vmem>>
    %1208 = tpu.memref_squeeze %1207 : memref<1x128xf32, #tpu.memory_space<vmem>> -> memref<128xf32, #tpu.memory_space<vmem>>
    tpu.wait_dma2 semaphore(%arg4 : memref<!tpu.dma_semaphore, #tpu.memory_space<semaphore_mem>>) src(%1206 : memref<128xf32, #tpu.memory_space<any>>) dst(%1208 : memref<128xf32, #tpu.memory_space<vmem>>)
    %c0_i32_696 = arith.constant 0 : i32
    %c78_i32_697 = arith.constant 78 : i32
    %c0_i32_698 = arith.constant 0 : i32
    %1209 = tpu.memref_slice %arg2[%c0_i32_696, %c0_i32_698] : memref<1024x128xf32, #tpu.memory_space<any>> -> memref<1x128xf32, #tpu.memory_space<any>>
    %1210 = tpu.memref_squeeze %1209 : memref<1x128xf32, #tpu.memory_space<any>> -> memref<128xf32, #tpu.memory_space<any>>
    %c0_i32_699 = arith.constant 0 : i32
    %1211 = tpu.memref_slice %arg3[%c78_i32_697, %c0_i32_699] : memref<128x128xf32, #tpu.memory_space<vmem>> -> memref<1x128xf32, #tpu.memory_space<vmem>>
    %1212 = tpu.memref_squeeze %1211 : memref<1x128xf32, #tpu.memory_space<vmem>> -> memref<128xf32, #tpu.memory_space<vmem>>
    tpu.wait_dma2 semaphore(%arg4 : memref<!tpu.dma_semaphore, #tpu.memory_space<semaphore_mem>>) src(%1210 : memref<128xf32, #tpu.memory_space<any>>) dst(%1212 : memref<128xf32, #tpu.memory_space<vmem>>)
    %c0_i32_700 = arith.constant 0 : i32
    %c79_i32_701 = arith.constant 79 : i32
    %c0_i32_702 = arith.constant 0 : i32
    %1213 = tpu.memref_slice %arg2[%c0_i32_700, %c0_i32_702] : memref<1024x128xf32, #tpu.memory_space<any>> -> memref<1x128xf32, #tpu.memory_space<any>>
    %1214 = tpu.memref_squeeze %1213 : memref<1x128xf32, #tpu.memory_space<any>> -> memref<128xf32, #tpu.memory_space<any>>
    %c0_i32_703 = arith.constant 0 : i32
    %1215 = tpu.memref_slice %arg3[%c79_i32_701, %c0_i32_703] : memref<128x128xf32, #tpu.memory_space<vmem>> -> memref<1x128xf32, #tpu.memory_space<vmem>>
    %1216 = tpu.memref_squeeze %1215 : memref<1x128xf32, #tpu.memory_space<vmem>> -> memref<128xf32, #tpu.memory_space<vmem>>
    tpu.wait_dma2 semaphore(%arg4 : memref<!tpu.dma_semaphore, #tpu.memory_space<semaphore_mem>>) src(%1214 : memref<128xf32, #tpu.memory_space<any>>) dst(%1216 : memref<128xf32, #tpu.memory_space<vmem>>)
    %c0_i32_704 = arith.constant 0 : i32
    %c80_i32_705 = arith.constant 80 : i32
    %c0_i32_706 = arith.constant 0 : i32
    %1217 = tpu.memref_slice %arg2[%c0_i32_704, %c0_i32_706] : memref<1024x128xf32, #tpu.memory_space<any>> -> memref<1x128xf32, #tpu.memory_space<any>>
    %1218 = tpu.memref_squeeze %1217 : memref<1x128xf32, #tpu.memory_space<any>> -> memref<128xf32, #tpu.memory_space<any>>
    %c0_i32_707 = arith.constant 0 : i32
    %1219 = tpu.memref_slice %arg3[%c80_i32_705, %c0_i32_707] : memref<128x128xf32, #tpu.memory_space<vmem>> -> memref<1x128xf32, #tpu.memory_space<vmem>>
    %1220 = tpu.memref_squeeze %1219 : memref<1x128xf32, #tpu.memory_space<vmem>> -> memref<128xf32, #tpu.memory_space<vmem>>
    tpu.wait_dma2 semaphore(%arg4 : memref<!tpu.dma_semaphore, #tpu.memory_space<semaphore_mem>>) src(%1218 : memref<128xf32, #tpu.memory_space<any>>) dst(%1220 : memref<128xf32, #tpu.memory_space<vmem>>)
    %c0_i32_708 = arith.constant 0 : i32
    %c81_i32_709 = arith.constant 81 : i32
    %c0_i32_710 = arith.constant 0 : i32
    %1221 = tpu.memref_slice %arg2[%c0_i32_708, %c0_i32_710] : memref<1024x128xf32, #tpu.memory_space<any>> -> memref<1x128xf32, #tpu.memory_space<any>>
    %1222 = tpu.memref_squeeze %1221 : memref<1x128xf32, #tpu.memory_space<any>> -> memref<128xf32, #tpu.memory_space<any>>
    %c0_i32_711 = arith.constant 0 : i32
    %1223 = tpu.memref_slice %arg3[%c81_i32_709, %c0_i32_711] : memref<128x128xf32, #tpu.memory_space<vmem>> -> memref<1x128xf32, #tpu.memory_space<vmem>>
    %1224 = tpu.memref_squeeze %1223 : memref<1x128xf32, #tpu.memory_space<vmem>> -> memref<128xf32, #tpu.memory_space<vmem>>
    tpu.wait_dma2 semaphore(%arg4 : memref<!tpu.dma_semaphore, #tpu.memory_space<semaphore_mem>>) src(%1222 : memref<128xf32, #tpu.memory_space<any>>) dst(%1224 : memref<128xf32, #tpu.memory_space<vmem>>)
    %c0_i32_712 = arith.constant 0 : i32
    %c82_i32_713 = arith.constant 82 : i32
    %c0_i32_714 = arith.constant 0 : i32
    %1225 = tpu.memref_slice %arg2[%c0_i32_712, %c0_i32_714] : memref<1024x128xf32, #tpu.memory_space<any>> -> memref<1x128xf32, #tpu.memory_space<any>>
    %1226 = tpu.memref_squeeze %1225 : memref<1x128xf32, #tpu.memory_space<any>> -> memref<128xf32, #tpu.memory_space<any>>
    %c0_i32_715 = arith.constant 0 : i32
    %1227 = tpu.memref_slice %arg3[%c82_i32_713, %c0_i32_715] : memref<128x128xf32, #tpu.memory_space<vmem>> -> memref<1x128xf32, #tpu.memory_space<vmem>>
    %1228 = tpu.memref_squeeze %1227 : memref<1x128xf32, #tpu.memory_space<vmem>> -> memref<128xf32, #tpu.memory_space<vmem>>
    tpu.wait_dma2 semaphore(%arg4 : memref<!tpu.dma_semaphore, #tpu.memory_space<semaphore_mem>>) src(%1226 : memref<128xf32, #tpu.memory_space<any>>) dst(%1228 : memref<128xf32, #tpu.memory_space<vmem>>)
    %c0_i32_716 = arith.constant 0 : i32
    %c83_i32_717 = arith.constant 83 : i32
    %c0_i32_718 = arith.constant 0 : i32
    %1229 = tpu.memref_slice %arg2[%c0_i32_716, %c0_i32_718] : memref<1024x128xf32, #tpu.memory_space<any>> -> memref<1x128xf32, #tpu.memory_space<any>>
    %1230 = tpu.memref_squeeze %1229 : memref<1x128xf32, #tpu.memory_space<any>> -> memref<128xf32, #tpu.memory_space<any>>
    %c0_i32_719 = arith.constant 0 : i32
    %1231 = tpu.memref_slice %arg3[%c83_i32_717, %c0_i32_719] : memref<128x128xf32, #tpu.memory_space<vmem>> -> memref<1x128xf32, #tpu.memory_space<vmem>>
    %1232 = tpu.memref_squeeze %1231 : memref<1x128xf32, #tpu.memory_space<vmem>> -> memref<128xf32, #tpu.memory_space<vmem>>
    tpu.wait_dma2 semaphore(%arg4 : memref<!tpu.dma_semaphore, #tpu.memory_space<semaphore_mem>>) src(%1230 : memref<128xf32, #tpu.memory_space<any>>) dst(%1232 : memref<128xf32, #tpu.memory_space<vmem>>)
    %c0_i32_720 = arith.constant 0 : i32
    %c84_i32_721 = arith.constant 84 : i32
    %c0_i32_722 = arith.constant 0 : i32
    %1233 = tpu.memref_slice %arg2[%c0_i32_720, %c0_i32_722] : memref<1024x128xf32, #tpu.memory_space<any>> -> memref<1x128xf32, #tpu.memory_space<any>>
    %1234 = tpu.memref_squeeze %1233 : memref<1x128xf32, #tpu.memory_space<any>> -> memref<128xf32, #tpu.memory_space<any>>
    %c0_i32_723 = arith.constant 0 : i32
    %1235 = tpu.memref_slice %arg3[%c84_i32_721, %c0_i32_723] : memref<128x128xf32, #tpu.memory_space<vmem>> -> memref<1x128xf32, #tpu.memory_space<vmem>>
    %1236 = tpu.memref_squeeze %1235 : memref<1x128xf32, #tpu.memory_space<vmem>> -> memref<128xf32, #tpu.memory_space<vmem>>
    tpu.wait_dma2 semaphore(%arg4 : memref<!tpu.dma_semaphore, #tpu.memory_space<semaphore_mem>>) src(%1234 : memref<128xf32, #tpu.memory_space<any>>) dst(%1236 : memref<128xf32, #tpu.memory_space<vmem>>)
    %c0_i32_724 = arith.constant 0 : i32
    %c85_i32_725 = arith.constant 85 : i32
    %c0_i32_726 = arith.constant 0 : i32
    %1237 = tpu.memref_slice %arg2[%c0_i32_724, %c0_i32_726] : memref<1024x128xf32, #tpu.memory_space<any>> -> memref<1x128xf32, #tpu.memory_space<any>>
    %1238 = tpu.memref_squeeze %1237 : memref<1x128xf32, #tpu.memory_space<any>> -> memref<128xf32, #tpu.memory_space<any>>
    %c0_i32_727 = arith.constant 0 : i32
    %1239 = tpu.memref_slice %arg3[%c85_i32_725, %c0_i32_727] : memref<128x128xf32, #tpu.memory_space<vmem>> -> memref<1x128xf32, #tpu.memory_space<vmem>>
    %1240 = tpu.memref_squeeze %1239 : memref<1x128xf32, #tpu.memory_space<vmem>> -> memref<128xf32, #tpu.memory_space<vmem>>
    tpu.wait_dma2 semaphore(%arg4 : memref<!tpu.dma_semaphore, #tpu.memory_space<semaphore_mem>>) src(%1238 : memref<128xf32, #tpu.memory_space<any>>) dst(%1240 : memref<128xf32, #tpu.memory_space<vmem>>)
    %c0_i32_728 = arith.constant 0 : i32
    %c86_i32_729 = arith.constant 86 : i32
    %c0_i32_730 = arith.constant 0 : i32
    %1241 = tpu.memref_slice %arg2[%c0_i32_728, %c0_i32_730] : memref<1024x128xf32, #tpu.memory_space<any>> -> memref<1x128xf32, #tpu.memory_space<any>>
    %1242 = tpu.memref_squeeze %1241 : memref<1x128xf32, #tpu.memory_space<any>> -> memref<128xf32, #tpu.memory_space<any>>
    %c0_i32_731 = arith.constant 0 : i32
    %1243 = tpu.memref_slice %arg3[%c86_i32_729, %c0_i32_731] : memref<128x128xf32, #tpu.memory_space<vmem>> -> memref<1x128xf32, #tpu.memory_space<vmem>>
    %1244 = tpu.memref_squeeze %1243 : memref<1x128xf32, #tpu.memory_space<vmem>> -> memref<128xf32, #tpu.memory_space<vmem>>
    tpu.wait_dma2 semaphore(%arg4 : memref<!tpu.dma_semaphore, #tpu.memory_space<semaphore_mem>>) src(%1242 : memref<128xf32, #tpu.memory_space<any>>) dst(%1244 : memref<128xf32, #tpu.memory_space<vmem>>)
    %c0_i32_732 = arith.constant 0 : i32
    %c87_i32_733 = arith.constant 87 : i32
    %c0_i32_734 = arith.constant 0 : i32
    %1245 = tpu.memref_slice %arg2[%c0_i32_732, %c0_i32_734] : memref<1024x128xf32, #tpu.memory_space<any>> -> memref<1x128xf32, #tpu.memory_space<any>>
    %1246 = tpu.memref_squeeze %1245 : memref<1x128xf32, #tpu.memory_space<any>> -> memref<128xf32, #tpu.memory_space<any>>
    %c0_i32_735 = arith.constant 0 : i32
    %1247 = tpu.memref_slice %arg3[%c87_i32_733, %c0_i32_735] : memref<128x128xf32, #tpu.memory_space<vmem>> -> memref<1x128xf32, #tpu.memory_space<vmem>>
    %1248 = tpu.memref_squeeze %1247 : memref<1x128xf32, #tpu.memory_space<vmem>> -> memref<128xf32, #tpu.memory_space<vmem>>
    tpu.wait_dma2 semaphore(%arg4 : memref<!tpu.dma_semaphore, #tpu.memory_space<semaphore_mem>>) src(%1246 : memref<128xf32, #tpu.memory_space<any>>) dst(%1248 : memref<128xf32, #tpu.memory_space<vmem>>)
    %c0_i32_736 = arith.constant 0 : i32
    %c88_i32_737 = arith.constant 88 : i32
    %c0_i32_738 = arith.constant 0 : i32
    %1249 = tpu.memref_slice %arg2[%c0_i32_736, %c0_i32_738] : memref<1024x128xf32, #tpu.memory_space<any>> -> memref<1x128xf32, #tpu.memory_space<any>>
    %1250 = tpu.memref_squeeze %1249 : memref<1x128xf32, #tpu.memory_space<any>> -> memref<128xf32, #tpu.memory_space<any>>
    %c0_i32_739 = arith.constant 0 : i32
    %1251 = tpu.memref_slice %arg3[%c88_i32_737, %c0_i32_739] : memref<128x128xf32, #tpu.memory_space<vmem>> -> memref<1x128xf32, #tpu.memory_space<vmem>>
    %1252 = tpu.memref_squeeze %1251 : memref<1x128xf32, #tpu.memory_space<vmem>> -> memref<128xf32, #tpu.memory_space<vmem>>
    tpu.wait_dma2 semaphore(%arg4 : memref<!tpu.dma_semaphore, #tpu.memory_space<semaphore_mem>>) src(%1250 : memref<128xf32, #tpu.memory_space<any>>) dst(%1252 : memref<128xf32, #tpu.memory_space<vmem>>)
    %c0_i32_740 = arith.constant 0 : i32
    %c89_i32_741 = arith.constant 89 : i32
    %c0_i32_742 = arith.constant 0 : i32
    %1253 = tpu.memref_slice %arg2[%c0_i32_740, %c0_i32_742] : memref<1024x128xf32, #tpu.memory_space<any>> -> memref<1x128xf32, #tpu.memory_space<any>>
    %1254 = tpu.memref_squeeze %1253 : memref<1x128xf32, #tpu.memory_space<any>> -> memref<128xf32, #tpu.memory_space<any>>
    %c0_i32_743 = arith.constant 0 : i32
    %1255 = tpu.memref_slice %arg3[%c89_i32_741, %c0_i32_743] : memref<128x128xf32, #tpu.memory_space<vmem>> -> memref<1x128xf32, #tpu.memory_space<vmem>>
    %1256 = tpu.memref_squeeze %1255 : memref<1x128xf32, #tpu.memory_space<vmem>> -> memref<128xf32, #tpu.memory_space<vmem>>
    tpu.wait_dma2 semaphore(%arg4 : memref<!tpu.dma_semaphore, #tpu.memory_space<semaphore_mem>>) src(%1254 : memref<128xf32, #tpu.memory_space<any>>) dst(%1256 : memref<128xf32, #tpu.memory_space<vmem>>)
    %c0_i32_744 = arith.constant 0 : i32
    %c90_i32_745 = arith.constant 90 : i32
    %c0_i32_746 = arith.constant 0 : i32
    %1257 = tpu.memref_slice %arg2[%c0_i32_744, %c0_i32_746] : memref<1024x128xf32, #tpu.memory_space<any>> -> memref<1x128xf32, #tpu.memory_space<any>>
    %1258 = tpu.memref_squeeze %1257 : memref<1x128xf32, #tpu.memory_space<any>> -> memref<128xf32, #tpu.memory_space<any>>
    %c0_i32_747 = arith.constant 0 : i32
    %1259 = tpu.memref_slice %arg3[%c90_i32_745, %c0_i32_747] : memref<128x128xf32, #tpu.memory_space<vmem>> -> memref<1x128xf32, #tpu.memory_space<vmem>>
    %1260 = tpu.memref_squeeze %1259 : memref<1x128xf32, #tpu.memory_space<vmem>> -> memref<128xf32, #tpu.memory_space<vmem>>
    tpu.wait_dma2 semaphore(%arg4 : memref<!tpu.dma_semaphore, #tpu.memory_space<semaphore_mem>>) src(%1258 : memref<128xf32, #tpu.memory_space<any>>) dst(%1260 : memref<128xf32, #tpu.memory_space<vmem>>)
    %c0_i32_748 = arith.constant 0 : i32
    %c91_i32_749 = arith.constant 91 : i32
    %c0_i32_750 = arith.constant 0 : i32
    %1261 = tpu.memref_slice %arg2[%c0_i32_748, %c0_i32_750] : memref<1024x128xf32, #tpu.memory_space<any>> -> memref<1x128xf32, #tpu.memory_space<any>>
    %1262 = tpu.memref_squeeze %1261 : memref<1x128xf32, #tpu.memory_space<any>> -> memref<128xf32, #tpu.memory_space<any>>
    %c0_i32_751 = arith.constant 0 : i32
    %1263 = tpu.memref_slice %arg3[%c91_i32_749, %c0_i32_751] : memref<128x128xf32, #tpu.memory_space<vmem>> -> memref<1x128xf32, #tpu.memory_space<vmem>>
    %1264 = tpu.memref_squeeze %1263 : memref<1x128xf32, #tpu.memory_space<vmem>> -> memref<128xf32, #tpu.memory_space<vmem>>
    tpu.wait_dma2 semaphore(%arg4 : memref<!tpu.dma_semaphore, #tpu.memory_space<semaphore_mem>>) src(%1262 : memref<128xf32, #tpu.memory_space<any>>) dst(%1264 : memref<128xf32, #tpu.memory_space<vmem>>)
    %c0_i32_752 = arith.constant 0 : i32
    %c92_i32_753 = arith.constant 92 : i32
    %c0_i32_754 = arith.constant 0 : i32
    %1265 = tpu.memref_slice %arg2[%c0_i32_752, %c0_i32_754] : memref<1024x128xf32, #tpu.memory_space<any>> -> memref<1x128xf32, #tpu.memory_space<any>>
    %1266 = tpu.memref_squeeze %1265 : memref<1x128xf32, #tpu.memory_space<any>> -> memref<128xf32, #tpu.memory_space<any>>
    %c0_i32_755 = arith.constant 0 : i32
    %1267 = tpu.memref_slice %arg3[%c92_i32_753, %c0_i32_755] : memref<128x128xf32, #tpu.memory_space<vmem>> -> memref<1x128xf32, #tpu.memory_space<vmem>>
    %1268 = tpu.memref_squeeze %1267 : memref<1x128xf32, #tpu.memory_space<vmem>> -> memref<128xf32, #tpu.memory_space<vmem>>
    tpu.wait_dma2 semaphore(%arg4 : memref<!tpu.dma_semaphore, #tpu.memory_space<semaphore_mem>>) src(%1266 : memref<128xf32, #tpu.memory_space<any>>) dst(%1268 : memref<128xf32, #tpu.memory_space<vmem>>)
    %c0_i32_756 = arith.constant 0 : i32
    %c93_i32_757 = arith.constant 93 : i32
    %c0_i32_758 = arith.constant 0 : i32
    %1269 = tpu.memref_slice %arg2[%c0_i32_756, %c0_i32_758] : memref<1024x128xf32, #tpu.memory_space<any>> -> memref<1x128xf32, #tpu.memory_space<any>>
    %1270 = tpu.memref_squeeze %1269 : memref<1x128xf32, #tpu.memory_space<any>> -> memref<128xf32, #tpu.memory_space<any>>
    %c0_i32_759 = arith.constant 0 : i32
    %1271 = tpu.memref_slice %arg3[%c93_i32_757, %c0_i32_759] : memref<128x128xf32, #tpu.memory_space<vmem>> -> memref<1x128xf32, #tpu.memory_space<vmem>>
    %1272 = tpu.memref_squeeze %1271 : memref<1x128xf32, #tpu.memory_space<vmem>> -> memref<128xf32, #tpu.memory_space<vmem>>
    tpu.wait_dma2 semaphore(%arg4 : memref<!tpu.dma_semaphore, #tpu.memory_space<semaphore_mem>>) src(%1270 : memref<128xf32, #tpu.memory_space<any>>) dst(%1272 : memref<128xf32, #tpu.memory_space<vmem>>)
    %c0_i32_760 = arith.constant 0 : i32
    %c94_i32_761 = arith.constant 94 : i32
    %c0_i32_762 = arith.constant 0 : i32
    %1273 = tpu.memref_slice %arg2[%c0_i32_760, %c0_i32_762] : memref<1024x128xf32, #tpu.memory_space<any>> -> memref<1x128xf32, #tpu.memory_space<any>>
    %1274 = tpu.memref_squeeze %1273 : memref<1x128xf32, #tpu.memory_space<any>> -> memref<128xf32, #tpu.memory_space<any>>
    %c0_i32_763 = arith.constant 0 : i32
    %1275 = tpu.memref_slice %arg3[%c94_i32_761, %c0_i32_763] : memref<128x128xf32, #tpu.memory_space<vmem>> -> memref<1x128xf32, #tpu.memory_space<vmem>>
    %1276 = tpu.memref_squeeze %1275 : memref<1x128xf32, #tpu.memory_space<vmem>> -> memref<128xf32, #tpu.memory_space<vmem>>
    tpu.wait_dma2 semaphore(%arg4 : memref<!tpu.dma_semaphore, #tpu.memory_space<semaphore_mem>>) src(%1274 : memref<128xf32, #tpu.memory_space<any>>) dst(%1276 : memref<128xf32, #tpu.memory_space<vmem>>)
    %c0_i32_764 = arith.constant 0 : i32
    %c95_i32_765 = arith.constant 95 : i32
    %c0_i32_766 = arith.constant 0 : i32
    %1277 = tpu.memref_slice %arg2[%c0_i32_764, %c0_i32_766] : memref<1024x128xf32, #tpu.memory_space<any>> -> memref<1x128xf32, #tpu.memory_space<any>>
    %1278 = tpu.memref_squeeze %1277 : memref<1x128xf32, #tpu.memory_space<any>> -> memref<128xf32, #tpu.memory_space<any>>
    %c0_i32_767 = arith.constant 0 : i32
    %1279 = tpu.memref_slice %arg3[%c95_i32_765, %c0_i32_767] : memref<128x128xf32, #tpu.memory_space<vmem>> -> memref<1x128xf32, #tpu.memory_space<vmem>>
    %1280 = tpu.memref_squeeze %1279 : memref<1x128xf32, #tpu.memory_space<vmem>> -> memref<128xf32, #tpu.memory_space<vmem>>
    tpu.wait_dma2 semaphore(%arg4 : memref<!tpu.dma_semaphore, #tpu.memory_space<semaphore_mem>>) src(%1278 : memref<128xf32, #tpu.memory_space<any>>) dst(%1280 : memref<128xf32, #tpu.memory_space<vmem>>)
    %c0_i32_768 = arith.constant 0 : i32
    %c96_i32_769 = arith.constant 96 : i32
    %c0_i32_770 = arith.constant 0 : i32
    %1281 = tpu.memref_slice %arg2[%c0_i32_768, %c0_i32_770] : memref<1024x128xf32, #tpu.memory_space<any>> -> memref<1x128xf32, #tpu.memory_space<any>>
    %1282 = tpu.memref_squeeze %1281 : memref<1x128xf32, #tpu.memory_space<any>> -> memref<128xf32, #tpu.memory_space<any>>
    %c0_i32_771 = arith.constant 0 : i32
    %1283 = tpu.memref_slice %arg3[%c96_i32_769, %c0_i32_771] : memref<128x128xf32, #tpu.memory_space<vmem>> -> memref<1x128xf32, #tpu.memory_space<vmem>>
    %1284 = tpu.memref_squeeze %1283 : memref<1x128xf32, #tpu.memory_space<vmem>> -> memref<128xf32, #tpu.memory_space<vmem>>
    tpu.wait_dma2 semaphore(%arg4 : memref<!tpu.dma_semaphore, #tpu.memory_space<semaphore_mem>>) src(%1282 : memref<128xf32, #tpu.memory_space<any>>) dst(%1284 : memref<128xf32, #tpu.memory_space<vmem>>)
    %c0_i32_772 = arith.constant 0 : i32
    %c97_i32_773 = arith.constant 97 : i32
    %c0_i32_774 = arith.constant 0 : i32
    %1285 = tpu.memref_slice %arg2[%c0_i32_772, %c0_i32_774] : memref<1024x128xf32, #tpu.memory_space<any>> -> memref<1x128xf32, #tpu.memory_space<any>>
    %1286 = tpu.memref_squeeze %1285 : memref<1x128xf32, #tpu.memory_space<any>> -> memref<128xf32, #tpu.memory_space<any>>
    %c0_i32_775 = arith.constant 0 : i32
    %1287 = tpu.memref_slice %arg3[%c97_i32_773, %c0_i32_775] : memref<128x128xf32, #tpu.memory_space<vmem>> -> memref<1x128xf32, #tpu.memory_space<vmem>>
    %1288 = tpu.memref_squeeze %1287 : memref<1x128xf32, #tpu.memory_space<vmem>> -> memref<128xf32, #tpu.memory_space<vmem>>
    tpu.wait_dma2 semaphore(%arg4 : memref<!tpu.dma_semaphore, #tpu.memory_space<semaphore_mem>>) src(%1286 : memref<128xf32, #tpu.memory_space<any>>) dst(%1288 : memref<128xf32, #tpu.memory_space<vmem>>)
    %c0_i32_776 = arith.constant 0 : i32
    %c98_i32_777 = arith.constant 98 : i32
    %c0_i32_778 = arith.constant 0 : i32
    %1289 = tpu.memref_slice %arg2[%c0_i32_776, %c0_i32_778] : memref<1024x128xf32, #tpu.memory_space<any>> -> memref<1x128xf32, #tpu.memory_space<any>>
    %1290 = tpu.memref_squeeze %1289 : memref<1x128xf32, #tpu.memory_space<any>> -> memref<128xf32, #tpu.memory_space<any>>
    %c0_i32_779 = arith.constant 0 : i32
    %1291 = tpu.memref_slice %arg3[%c98_i32_777, %c0_i32_779] : memref<128x128xf32, #tpu.memory_space<vmem>> -> memref<1x128xf32, #tpu.memory_space<vmem>>
    %1292 = tpu.memref_squeeze %1291 : memref<1x128xf32, #tpu.memory_space<vmem>> -> memref<128xf32, #tpu.memory_space<vmem>>
    tpu.wait_dma2 semaphore(%arg4 : memref<!tpu.dma_semaphore, #tpu.memory_space<semaphore_mem>>) src(%1290 : memref<128xf32, #tpu.memory_space<any>>) dst(%1292 : memref<128xf32, #tpu.memory_space<vmem>>)
    %c0_i32_780 = arith.constant 0 : i32
    %c99_i32_781 = arith.constant 99 : i32
    %c0_i32_782 = arith.constant 0 : i32
    %1293 = tpu.memref_slice %arg2[%c0_i32_780, %c0_i32_782] : memref<1024x128xf32, #tpu.memory_space<any>> -> memref<1x128xf32, #tpu.memory_space<any>>
    %1294 = tpu.memref_squeeze %1293 : memref<1x128xf32, #tpu.memory_space<any>> -> memref<128xf32, #tpu.memory_space<any>>
    %c0_i32_783 = arith.constant 0 : i32
    %1295 = tpu.memref_slice %arg3[%c99_i32_781, %c0_i32_783] : memref<128x128xf32, #tpu.memory_space<vmem>> -> memref<1x128xf32, #tpu.memory_space<vmem>>
    %1296 = tpu.memref_squeeze %1295 : memref<1x128xf32, #tpu.memory_space<vmem>> -> memref<128xf32, #tpu.memory_space<vmem>>
    tpu.wait_dma2 semaphore(%arg4 : memref<!tpu.dma_semaphore, #tpu.memory_space<semaphore_mem>>) src(%1294 : memref<128xf32, #tpu.memory_space<any>>) dst(%1296 : memref<128xf32, #tpu.memory_space<vmem>>)
    %c0_i32_784 = arith.constant 0 : i32
    %c100_i32_785 = arith.constant 100 : i32
    %c0_i32_786 = arith.constant 0 : i32
    %1297 = tpu.memref_slice %arg2[%c0_i32_784, %c0_i32_786] : memref<1024x128xf32, #tpu.memory_space<any>> -> memref<1x128xf32, #tpu.memory_space<any>>
    %1298 = tpu.memref_squeeze %1297 : memref<1x128xf32, #tpu.memory_space<any>> -> memref<128xf32, #tpu.memory_space<any>>
    %c0_i32_787 = arith.constant 0 : i32
    %1299 = tpu.memref_slice %arg3[%c100_i32_785, %c0_i32_787] : memref<128x128xf32, #tpu.memory_space<vmem>> -> memref<1x128xf32, #tpu.memory_space<vmem>>
    %1300 = tpu.memref_squeeze %1299 : memref<1x128xf32, #tpu.memory_space<vmem>> -> memref<128xf32, #tpu.memory_space<vmem>>
    tpu.wait_dma2 semaphore(%arg4 : memref<!tpu.dma_semaphore, #tpu.memory_space<semaphore_mem>>) src(%1298 : memref<128xf32, #tpu.memory_space<any>>) dst(%1300 : memref<128xf32, #tpu.memory_space<vmem>>)
    %c0_i32_788 = arith.constant 0 : i32
    %c101_i32_789 = arith.constant 101 : i32
    %c0_i32_790 = arith.constant 0 : i32
    %1301 = tpu.memref_slice %arg2[%c0_i32_788, %c0_i32_790] : memref<1024x128xf32, #tpu.memory_space<any>> -> memref<1x128xf32, #tpu.memory_space<any>>
    %1302 = tpu.memref_squeeze %1301 : memref<1x128xf32, #tpu.memory_space<any>> -> memref<128xf32, #tpu.memory_space<any>>
    %c0_i32_791 = arith.constant 0 : i32
    %1303 = tpu.memref_slice %arg3[%c101_i32_789, %c0_i32_791] : memref<128x128xf32, #tpu.memory_space<vmem>> -> memref<1x128xf32, #tpu.memory_space<vmem>>
    %1304 = tpu.memref_squeeze %1303 : memref<1x128xf32, #tpu.memory_space<vmem>> -> memref<128xf32, #tpu.memory_space<vmem>>
    tpu.wait_dma2 semaphore(%arg4 : memref<!tpu.dma_semaphore, #tpu.memory_space<semaphore_mem>>) src(%1302 : memref<128xf32, #tpu.memory_space<any>>) dst(%1304 : memref<128xf32, #tpu.memory_space<vmem>>)
    %c0_i32_792 = arith.constant 0 : i32
    %c102_i32_793 = arith.constant 102 : i32
    %c0_i32_794 = arith.constant 0 : i32
    %1305 = tpu.memref_slice %arg2[%c0_i32_792, %c0_i32_794] : memref<1024x128xf32, #tpu.memory_space<any>> -> memref<1x128xf32, #tpu.memory_space<any>>
    %1306 = tpu.memref_squeeze %1305 : memref<1x128xf32, #tpu.memory_space<any>> -> memref<128xf32, #tpu.memory_space<any>>
    %c0_i32_795 = arith.constant 0 : i32
    %1307 = tpu.memref_slice %arg3[%c102_i32_793, %c0_i32_795] : memref<128x128xf32, #tpu.memory_space<vmem>> -> memref<1x128xf32, #tpu.memory_space<vmem>>
    %1308 = tpu.memref_squeeze %1307 : memref<1x128xf32, #tpu.memory_space<vmem>> -> memref<128xf32, #tpu.memory_space<vmem>>
    tpu.wait_dma2 semaphore(%arg4 : memref<!tpu.dma_semaphore, #tpu.memory_space<semaphore_mem>>) src(%1306 : memref<128xf32, #tpu.memory_space<any>>) dst(%1308 : memref<128xf32, #tpu.memory_space<vmem>>)
    %c0_i32_796 = arith.constant 0 : i32
    %c103_i32_797 = arith.constant 103 : i32
    %c0_i32_798 = arith.constant 0 : i32
    %1309 = tpu.memref_slice %arg2[%c0_i32_796, %c0_i32_798] : memref<1024x128xf32, #tpu.memory_space<any>> -> memref<1x128xf32, #tpu.memory_space<any>>
    %1310 = tpu.memref_squeeze %1309 : memref<1x128xf32, #tpu.memory_space<any>> -> memref<128xf32, #tpu.memory_space<any>>
    %c0_i32_799 = arith.constant 0 : i32
    %1311 = tpu.memref_slice %arg3[%c103_i32_797, %c0_i32_799] : memref<128x128xf32, #tpu.memory_space<vmem>> -> memref<1x128xf32, #tpu.memory_space<vmem>>
    %1312 = tpu.memref_squeeze %1311 : memref<1x128xf32, #tpu.memory_space<vmem>> -> memref<128xf32, #tpu.memory_space<vmem>>
    tpu.wait_dma2 semaphore(%arg4 : memref<!tpu.dma_semaphore, #tpu.memory_space<semaphore_mem>>) src(%1310 : memref<128xf32, #tpu.memory_space<any>>) dst(%1312 : memref<128xf32, #tpu.memory_space<vmem>>)
    %c0_i32_800 = arith.constant 0 : i32
    %c104_i32_801 = arith.constant 104 : i32
    %c0_i32_802 = arith.constant 0 : i32
    %1313 = tpu.memref_slice %arg2[%c0_i32_800, %c0_i32_802] : memref<1024x128xf32, #tpu.memory_space<any>> -> memref<1x128xf32, #tpu.memory_space<any>>
    %1314 = tpu.memref_squeeze %1313 : memref<1x128xf32, #tpu.memory_space<any>> -> memref<128xf32, #tpu.memory_space<any>>
    %c0_i32_803 = arith.constant 0 : i32
    %1315 = tpu.memref_slice %arg3[%c104_i32_801, %c0_i32_803] : memref<128x128xf32, #tpu.memory_space<vmem>> -> memref<1x128xf32, #tpu.memory_space<vmem>>
    %1316 = tpu.memref_squeeze %1315 : memref<1x128xf32, #tpu.memory_space<vmem>> -> memref<128xf32, #tpu.memory_space<vmem>>
    tpu.wait_dma2 semaphore(%arg4 : memref<!tpu.dma_semaphore, #tpu.memory_space<semaphore_mem>>) src(%1314 : memref<128xf32, #tpu.memory_space<any>>) dst(%1316 : memref<128xf32, #tpu.memory_space<vmem>>)
    %c0_i32_804 = arith.constant 0 : i32
    %c105_i32_805 = arith.constant 105 : i32
    %c0_i32_806 = arith.constant 0 : i32
    %1317 = tpu.memref_slice %arg2[%c0_i32_804, %c0_i32_806] : memref<1024x128xf32, #tpu.memory_space<any>> -> memref<1x128xf32, #tpu.memory_space<any>>
    %1318 = tpu.memref_squeeze %1317 : memref<1x128xf32, #tpu.memory_space<any>> -> memref<128xf32, #tpu.memory_space<any>>
    %c0_i32_807 = arith.constant 0 : i32
    %1319 = tpu.memref_slice %arg3[%c105_i32_805, %c0_i32_807] : memref<128x128xf32, #tpu.memory_space<vmem>> -> memref<1x128xf32, #tpu.memory_space<vmem>>
    %1320 = tpu.memref_squeeze %1319 : memref<1x128xf32, #tpu.memory_space<vmem>> -> memref<128xf32, #tpu.memory_space<vmem>>
    tpu.wait_dma2 semaphore(%arg4 : memref<!tpu.dma_semaphore, #tpu.memory_space<semaphore_mem>>) src(%1318 : memref<128xf32, #tpu.memory_space<any>>) dst(%1320 : memref<128xf32, #tpu.memory_space<vmem>>)
    %c0_i32_808 = arith.constant 0 : i32
    %c106_i32_809 = arith.constant 106 : i32
    %c0_i32_810 = arith.constant 0 : i32
    %1321 = tpu.memref_slice %arg2[%c0_i32_808, %c0_i32_810] : memref<1024x128xf32, #tpu.memory_space<any>> -> memref<1x128xf32, #tpu.memory_space<any>>
    %1322 = tpu.memref_squeeze %1321 : memref<1x128xf32, #tpu.memory_space<any>> -> memref<128xf32, #tpu.memory_space<any>>
    %c0_i32_811 = arith.constant 0 : i32
    %1323 = tpu.memref_slice %arg3[%c106_i32_809, %c0_i32_811] : memref<128x128xf32, #tpu.memory_space<vmem>> -> memref<1x128xf32, #tpu.memory_space<vmem>>
    %1324 = tpu.memref_squeeze %1323 : memref<1x128xf32, #tpu.memory_space<vmem>> -> memref<128xf32, #tpu.memory_space<vmem>>
    tpu.wait_dma2 semaphore(%arg4 : memref<!tpu.dma_semaphore, #tpu.memory_space<semaphore_mem>>) src(%1322 : memref<128xf32, #tpu.memory_space<any>>) dst(%1324 : memref<128xf32, #tpu.memory_space<vmem>>)
    %c0_i32_812 = arith.constant 0 : i32
    %c107_i32_813 = arith.constant 107 : i32
    %c0_i32_814 = arith.constant 0 : i32
    %1325 = tpu.memref_slice %arg2[%c0_i32_812, %c0_i32_814] : memref<1024x128xf32, #tpu.memory_space<any>> -> memref<1x128xf32, #tpu.memory_space<any>>
    %1326 = tpu.memref_squeeze %1325 : memref<1x128xf32, #tpu.memory_space<any>> -> memref<128xf32, #tpu.memory_space<any>>
    %c0_i32_815 = arith.constant 0 : i32
    %1327 = tpu.memref_slice %arg3[%c107_i32_813, %c0_i32_815] : memref<128x128xf32, #tpu.memory_space<vmem>> -> memref<1x128xf32, #tpu.memory_space<vmem>>
    %1328 = tpu.memref_squeeze %1327 : memref<1x128xf32, #tpu.memory_space<vmem>> -> memref<128xf32, #tpu.memory_space<vmem>>
    tpu.wait_dma2 semaphore(%arg4 : memref<!tpu.dma_semaphore, #tpu.memory_space<semaphore_mem>>) src(%1326 : memref<128xf32, #tpu.memory_space<any>>) dst(%1328 : memref<128xf32, #tpu.memory_space<vmem>>)
    %c0_i32_816 = arith.constant 0 : i32
    %c108_i32_817 = arith.constant 108 : i32
    %c0_i32_818 = arith.constant 0 : i32
    %1329 = tpu.memref_slice %arg2[%c0_i32_816, %c0_i32_818] : memref<1024x128xf32, #tpu.memory_space<any>> -> memref<1x128xf32, #tpu.memory_space<any>>
    %1330 = tpu.memref_squeeze %1329 : memref<1x128xf32, #tpu.memory_space<any>> -> memref<128xf32, #tpu.memory_space<any>>
    %c0_i32_819 = arith.constant 0 : i32
    %1331 = tpu.memref_slice %arg3[%c108_i32_817, %c0_i32_819] : memref<128x128xf32, #tpu.memory_space<vmem>> -> memref<1x128xf32, #tpu.memory_space<vmem>>
    %1332 = tpu.memref_squeeze %1331 : memref<1x128xf32, #tpu.memory_space<vmem>> -> memref<128xf32, #tpu.memory_space<vmem>>
    tpu.wait_dma2 semaphore(%arg4 : memref<!tpu.dma_semaphore, #tpu.memory_space<semaphore_mem>>) src(%1330 : memref<128xf32, #tpu.memory_space<any>>) dst(%1332 : memref<128xf32, #tpu.memory_space<vmem>>)
    %c0_i32_820 = arith.constant 0 : i32
    %c109_i32_821 = arith.constant 109 : i32
    %c0_i32_822 = arith.constant 0 : i32
    %1333 = tpu.memref_slice %arg2[%c0_i32_820, %c0_i32_822] : memref<1024x128xf32, #tpu.memory_space<any>> -> memref<1x128xf32, #tpu.memory_space<any>>
    %1334 = tpu.memref_squeeze %1333 : memref<1x128xf32, #tpu.memory_space<any>> -> memref<128xf32, #tpu.memory_space<any>>
    %c0_i32_823 = arith.constant 0 : i32
    %1335 = tpu.memref_slice %arg3[%c109_i32_821, %c0_i32_823] : memref<128x128xf32, #tpu.memory_space<vmem>> -> memref<1x128xf32, #tpu.memory_space<vmem>>
    %1336 = tpu.memref_squeeze %1335 : memref<1x128xf32, #tpu.memory_space<vmem>> -> memref<128xf32, #tpu.memory_space<vmem>>
    tpu.wait_dma2 semaphore(%arg4 : memref<!tpu.dma_semaphore, #tpu.memory_space<semaphore_mem>>) src(%1334 : memref<128xf32, #tpu.memory_space<any>>) dst(%1336 : memref<128xf32, #tpu.memory_space<vmem>>)
    %c0_i32_824 = arith.constant 0 : i32
    %c110_i32_825 = arith.constant 110 : i32
    %c0_i32_826 = arith.constant 0 : i32
    %1337 = tpu.memref_slice %arg2[%c0_i32_824, %c0_i32_826] : memref<1024x128xf32, #tpu.memory_space<any>> -> memref<1x128xf32, #tpu.memory_space<any>>
    %1338 = tpu.memref_squeeze %1337 : memref<1x128xf32, #tpu.memory_space<any>> -> memref<128xf32, #tpu.memory_space<any>>
    %c0_i32_827 = arith.constant 0 : i32
    %1339 = tpu.memref_slice %arg3[%c110_i32_825, %c0_i32_827] : memref<128x128xf32, #tpu.memory_space<vmem>> -> memref<1x128xf32, #tpu.memory_space<vmem>>
    %1340 = tpu.memref_squeeze %1339 : memref<1x128xf32, #tpu.memory_space<vmem>> -> memref<128xf32, #tpu.memory_space<vmem>>
    tpu.wait_dma2 semaphore(%arg4 : memref<!tpu.dma_semaphore, #tpu.memory_space<semaphore_mem>>) src(%1338 : memref<128xf32, #tpu.memory_space<any>>) dst(%1340 : memref<128xf32, #tpu.memory_space<vmem>>)
    %c0_i32_828 = arith.constant 0 : i32
    %c111_i32_829 = arith.constant 111 : i32
    %c0_i32_830 = arith.constant 0 : i32
    %1341 = tpu.memref_slice %arg2[%c0_i32_828, %c0_i32_830] : memref<1024x128xf32, #tpu.memory_space<any>> -> memref<1x128xf32, #tpu.memory_space<any>>
    %1342 = tpu.memref_squeeze %1341 : memref<1x128xf32, #tpu.memory_space<any>> -> memref<128xf32, #tpu.memory_space<any>>
    %c0_i32_831 = arith.constant 0 : i32
    %1343 = tpu.memref_slice %arg3[%c111_i32_829, %c0_i32_831] : memref<128x128xf32, #tpu.memory_space<vmem>> -> memref<1x128xf32, #tpu.memory_space<vmem>>
    %1344 = tpu.memref_squeeze %1343 : memref<1x128xf32, #tpu.memory_space<vmem>> -> memref<128xf32, #tpu.memory_space<vmem>>
    tpu.wait_dma2 semaphore(%arg4 : memref<!tpu.dma_semaphore, #tpu.memory_space<semaphore_mem>>) src(%1342 : memref<128xf32, #tpu.memory_space<any>>) dst(%1344 : memref<128xf32, #tpu.memory_space<vmem>>)
    %c0_i32_832 = arith.constant 0 : i32
    %c112_i32_833 = arith.constant 112 : i32
    %c0_i32_834 = arith.constant 0 : i32
    %1345 = tpu.memref_slice %arg2[%c0_i32_832, %c0_i32_834] : memref<1024x128xf32, #tpu.memory_space<any>> -> memref<1x128xf32, #tpu.memory_space<any>>
    %1346 = tpu.memref_squeeze %1345 : memref<1x128xf32, #tpu.memory_space<any>> -> memref<128xf32, #tpu.memory_space<any>>
    %c0_i32_835 = arith.constant 0 : i32
    %1347 = tpu.memref_slice %arg3[%c112_i32_833, %c0_i32_835] : memref<128x128xf32, #tpu.memory_space<vmem>> -> memref<1x128xf32, #tpu.memory_space<vmem>>
    %1348 = tpu.memref_squeeze %1347 : memref<1x128xf32, #tpu.memory_space<vmem>> -> memref<128xf32, #tpu.memory_space<vmem>>
    tpu.wait_dma2 semaphore(%arg4 : memref<!tpu.dma_semaphore, #tpu.memory_space<semaphore_mem>>) src(%1346 : memref<128xf32, #tpu.memory_space<any>>) dst(%1348 : memref<128xf32, #tpu.memory_space<vmem>>)
    %c0_i32_836 = arith.constant 0 : i32
    %c113_i32_837 = arith.constant 113 : i32
    %c0_i32_838 = arith.constant 0 : i32
    %1349 = tpu.memref_slice %arg2[%c0_i32_836, %c0_i32_838] : memref<1024x128xf32, #tpu.memory_space<any>> -> memref<1x128xf32, #tpu.memory_space<any>>
    %1350 = tpu.memref_squeeze %1349 : memref<1x128xf32, #tpu.memory_space<any>> -> memref<128xf32, #tpu.memory_space<any>>
    %c0_i32_839 = arith.constant 0 : i32
    %1351 = tpu.memref_slice %arg3[%c113_i32_837, %c0_i32_839] : memref<128x128xf32, #tpu.memory_space<vmem>> -> memref<1x128xf32, #tpu.memory_space<vmem>>
    %1352 = tpu.memref_squeeze %1351 : memref<1x128xf32, #tpu.memory_space<vmem>> -> memref<128xf32, #tpu.memory_space<vmem>>
    tpu.wait_dma2 semaphore(%arg4 : memref<!tpu.dma_semaphore, #tpu.memory_space<semaphore_mem>>) src(%1350 : memref<128xf32, #tpu.memory_space<any>>) dst(%1352 : memref<128xf32, #tpu.memory_space<vmem>>)
    %c0_i32_840 = arith.constant 0 : i32
    %c114_i32_841 = arith.constant 114 : i32
    %c0_i32_842 = arith.constant 0 : i32
    %1353 = tpu.memref_slice %arg2[%c0_i32_840, %c0_i32_842] : memref<1024x128xf32, #tpu.memory_space<any>> -> memref<1x128xf32, #tpu.memory_space<any>>
    %1354 = tpu.memref_squeeze %1353 : memref<1x128xf32, #tpu.memory_space<any>> -> memref<128xf32, #tpu.memory_space<any>>
    %c0_i32_843 = arith.constant 0 : i32
    %1355 = tpu.memref_slice %arg3[%c114_i32_841, %c0_i32_843] : memref<128x128xf32, #tpu.memory_space<vmem>> -> memref<1x128xf32, #tpu.memory_space<vmem>>
    %1356 = tpu.memref_squeeze %1355 : memref<1x128xf32, #tpu.memory_space<vmem>> -> memref<128xf32, #tpu.memory_space<vmem>>
    tpu.wait_dma2 semaphore(%arg4 : memref<!tpu.dma_semaphore, #tpu.memory_space<semaphore_mem>>) src(%1354 : memref<128xf32, #tpu.memory_space<any>>) dst(%1356 : memref<128xf32, #tpu.memory_space<vmem>>)
    %c0_i32_844 = arith.constant 0 : i32
    %c115_i32_845 = arith.constant 115 : i32
    %c0_i32_846 = arith.constant 0 : i32
    %1357 = tpu.memref_slice %arg2[%c0_i32_844, %c0_i32_846] : memref<1024x128xf32, #tpu.memory_space<any>> -> memref<1x128xf32, #tpu.memory_space<any>>
    %1358 = tpu.memref_squeeze %1357 : memref<1x128xf32, #tpu.memory_space<any>> -> memref<128xf32, #tpu.memory_space<any>>
    %c0_i32_847 = arith.constant 0 : i32
    %1359 = tpu.memref_slice %arg3[%c115_i32_845, %c0_i32_847] : memref<128x128xf32, #tpu.memory_space<vmem>> -> memref<1x128xf32, #tpu.memory_space<vmem>>
    %1360 = tpu.memref_squeeze %1359 : memref<1x128xf32, #tpu.memory_space<vmem>> -> memref<128xf32, #tpu.memory_space<vmem>>
    tpu.wait_dma2 semaphore(%arg4 : memref<!tpu.dma_semaphore, #tpu.memory_space<semaphore_mem>>) src(%1358 : memref<128xf32, #tpu.memory_space<any>>) dst(%1360 : memref<128xf32, #tpu.memory_space<vmem>>)
    %c0_i32_848 = arith.constant 0 : i32
    %c116_i32_849 = arith.constant 116 : i32
    %c0_i32_850 = arith.constant 0 : i32
    %1361 = tpu.memref_slice %arg2[%c0_i32_848, %c0_i32_850] : memref<1024x128xf32, #tpu.memory_space<any>> -> memref<1x128xf32, #tpu.memory_space<any>>
    %1362 = tpu.memref_squeeze %1361 : memref<1x128xf32, #tpu.memory_space<any>> -> memref<128xf32, #tpu.memory_space<any>>
    %c0_i32_851 = arith.constant 0 : i32
    %1363 = tpu.memref_slice %arg3[%c116_i32_849, %c0_i32_851] : memref<128x128xf32, #tpu.memory_space<vmem>> -> memref<1x128xf32, #tpu.memory_space<vmem>>
    %1364 = tpu.memref_squeeze %1363 : memref<1x128xf32, #tpu.memory_space<vmem>> -> memref<128xf32, #tpu.memory_space<vmem>>
    tpu.wait_dma2 semaphore(%arg4 : memref<!tpu.dma_semaphore, #tpu.memory_space<semaphore_mem>>) src(%1362 : memref<128xf32, #tpu.memory_space<any>>) dst(%1364 : memref<128xf32, #tpu.memory_space<vmem>>)
    %c0_i32_852 = arith.constant 0 : i32
    %c117_i32_853 = arith.constant 117 : i32
    %c0_i32_854 = arith.constant 0 : i32
    %1365 = tpu.memref_slice %arg2[%c0_i32_852, %c0_i32_854] : memref<1024x128xf32, #tpu.memory_space<any>> -> memref<1x128xf32, #tpu.memory_space<any>>
    %1366 = tpu.memref_squeeze %1365 : memref<1x128xf32, #tpu.memory_space<any>> -> memref<128xf32, #tpu.memory_space<any>>
    %c0_i32_855 = arith.constant 0 : i32
    %1367 = tpu.memref_slice %arg3[%c117_i32_853, %c0_i32_855] : memref<128x128xf32, #tpu.memory_space<vmem>> -> memref<1x128xf32, #tpu.memory_space<vmem>>
    %1368 = tpu.memref_squeeze %1367 : memref<1x128xf32, #tpu.memory_space<vmem>> -> memref<128xf32, #tpu.memory_space<vmem>>
    tpu.wait_dma2 semaphore(%arg4 : memref<!tpu.dma_semaphore, #tpu.memory_space<semaphore_mem>>) src(%1366 : memref<128xf32, #tpu.memory_space<any>>) dst(%1368 : memref<128xf32, #tpu.memory_space<vmem>>)
    %c0_i32_856 = arith.constant 0 : i32
    %c118_i32_857 = arith.constant 118 : i32
    %c0_i32_858 = arith.constant 0 : i32
    %1369 = tpu.memref_slice %arg2[%c0_i32_856, %c0_i32_858] : memref<1024x128xf32, #tpu.memory_space<any>> -> memref<1x128xf32, #tpu.memory_space<any>>
    %1370 = tpu.memref_squeeze %1369 : memref<1x128xf32, #tpu.memory_space<any>> -> memref<128xf32, #tpu.memory_space<any>>
    %c0_i32_859 = arith.constant 0 : i32
    %1371 = tpu.memref_slice %arg3[%c118_i32_857, %c0_i32_859] : memref<128x128xf32, #tpu.memory_space<vmem>> -> memref<1x128xf32, #tpu.memory_space<vmem>>
    %1372 = tpu.memref_squeeze %1371 : memref<1x128xf32, #tpu.memory_space<vmem>> -> memref<128xf32, #tpu.memory_space<vmem>>
    tpu.wait_dma2 semaphore(%arg4 : memref<!tpu.dma_semaphore, #tpu.memory_space<semaphore_mem>>) src(%1370 : memref<128xf32, #tpu.memory_space<any>>) dst(%1372 : memref<128xf32, #tpu.memory_space<vmem>>)
    %c0_i32_860 = arith.constant 0 : i32
    %c119_i32_861 = arith.constant 119 : i32
    %c0_i32_862 = arith.constant 0 : i32
    %1373 = tpu.memref_slice %arg2[%c0_i32_860, %c0_i32_862] : memref<1024x128xf32, #tpu.memory_space<any>> -> memref<1x128xf32, #tpu.memory_space<any>>
    %1374 = tpu.memref_squeeze %1373 : memref<1x128xf32, #tpu.memory_space<any>> -> memref<128xf32, #tpu.memory_space<any>>
    %c0_i32_863 = arith.constant 0 : i32
    %1375 = tpu.memref_slice %arg3[%c119_i32_861, %c0_i32_863] : memref<128x128xf32, #tpu.memory_space<vmem>> -> memref<1x128xf32, #tpu.memory_space<vmem>>
    %1376 = tpu.memref_squeeze %1375 : memref<1x128xf32, #tpu.memory_space<vmem>> -> memref<128xf32, #tpu.memory_space<vmem>>
    tpu.wait_dma2 semaphore(%arg4 : memref<!tpu.dma_semaphore, #tpu.memory_space<semaphore_mem>>) src(%1374 : memref<128xf32, #tpu.memory_space<any>>) dst(%1376 : memref<128xf32, #tpu.memory_space<vmem>>)
    %c0_i32_864 = arith.constant 0 : i32
    %c120_i32_865 = arith.constant 120 : i32
    %c0_i32_866 = arith.constant 0 : i32
    %1377 = tpu.memref_slice %arg2[%c0_i32_864, %c0_i32_866] : memref<1024x128xf32, #tpu.memory_space<any>> -> memref<1x128xf32, #tpu.memory_space<any>>
    %1378 = tpu.memref_squeeze %1377 : memref<1x128xf32, #tpu.memory_space<any>> -> memref<128xf32, #tpu.memory_space<any>>
    %c0_i32_867 = arith.constant 0 : i32
    %1379 = tpu.memref_slice %arg3[%c120_i32_865, %c0_i32_867] : memref<128x128xf32, #tpu.memory_space<vmem>> -> memref<1x128xf32, #tpu.memory_space<vmem>>
    %1380 = tpu.memref_squeeze %1379 : memref<1x128xf32, #tpu.memory_space<vmem>> -> memref<128xf32, #tpu.memory_space<vmem>>
    tpu.wait_dma2 semaphore(%arg4 : memref<!tpu.dma_semaphore, #tpu.memory_space<semaphore_mem>>) src(%1378 : memref<128xf32, #tpu.memory_space<any>>) dst(%1380 : memref<128xf32, #tpu.memory_space<vmem>>)
    %c0_i32_868 = arith.constant 0 : i32
    %c121_i32_869 = arith.constant 121 : i32
    %c0_i32_870 = arith.constant 0 : i32
    %1381 = tpu.memref_slice %arg2[%c0_i32_868, %c0_i32_870] : memref<1024x128xf32, #tpu.memory_space<any>> -> memref<1x128xf32, #tpu.memory_space<any>>
    %1382 = tpu.memref_squeeze %1381 : memref<1x128xf32, #tpu.memory_space<any>> -> memref<128xf32, #tpu.memory_space<any>>
    %c0_i32_871 = arith.constant 0 : i32
    %1383 = tpu.memref_slice %arg3[%c121_i32_869, %c0_i32_871] : memref<128x128xf32, #tpu.memory_space<vmem>> -> memref<1x128xf32, #tpu.memory_space<vmem>>
    %1384 = tpu.memref_squeeze %1383 : memref<1x128xf32, #tpu.memory_space<vmem>> -> memref<128xf32, #tpu.memory_space<vmem>>
    tpu.wait_dma2 semaphore(%arg4 : memref<!tpu.dma_semaphore, #tpu.memory_space<semaphore_mem>>) src(%1382 : memref<128xf32, #tpu.memory_space<any>>) dst(%1384 : memref<128xf32, #tpu.memory_space<vmem>>)
    %c0_i32_872 = arith.constant 0 : i32
    %c122_i32_873 = arith.constant 122 : i32
    %c0_i32_874 = arith.constant 0 : i32
    %1385 = tpu.memref_slice %arg2[%c0_i32_872, %c0_i32_874] : memref<1024x128xf32, #tpu.memory_space<any>> -> memref<1x128xf32, #tpu.memory_space<any>>
    %1386 = tpu.memref_squeeze %1385 : memref<1x128xf32, #tpu.memory_space<any>> -> memref<128xf32, #tpu.memory_space<any>>
    %c0_i32_875 = arith.constant 0 : i32
    %1387 = tpu.memref_slice %arg3[%c122_i32_873, %c0_i32_875] : memref<128x128xf32, #tpu.memory_space<vmem>> -> memref<1x128xf32, #tpu.memory_space<vmem>>
    %1388 = tpu.memref_squeeze %1387 : memref<1x128xf32, #tpu.memory_space<vmem>> -> memref<128xf32, #tpu.memory_space<vmem>>
    tpu.wait_dma2 semaphore(%arg4 : memref<!tpu.dma_semaphore, #tpu.memory_space<semaphore_mem>>) src(%1386 : memref<128xf32, #tpu.memory_space<any>>) dst(%1388 : memref<128xf32, #tpu.memory_space<vmem>>)
    %c0_i32_876 = arith.constant 0 : i32
    %c123_i32_877 = arith.constant 123 : i32
    %c0_i32_878 = arith.constant 0 : i32
    %1389 = tpu.memref_slice %arg2[%c0_i32_876, %c0_i32_878] : memref<1024x128xf32, #tpu.memory_space<any>> -> memref<1x128xf32, #tpu.memory_space<any>>
    %1390 = tpu.memref_squeeze %1389 : memref<1x128xf32, #tpu.memory_space<any>> -> memref<128xf32, #tpu.memory_space<any>>
    %c0_i32_879 = arith.constant 0 : i32
    %1391 = tpu.memref_slice %arg3[%c123_i32_877, %c0_i32_879] : memref<128x128xf32, #tpu.memory_space<vmem>> -> memref<1x128xf32, #tpu.memory_space<vmem>>
    %1392 = tpu.memref_squeeze %1391 : memref<1x128xf32, #tpu.memory_space<vmem>> -> memref<128xf32, #tpu.memory_space<vmem>>
    tpu.wait_dma2 semaphore(%arg4 : memref<!tpu.dma_semaphore, #tpu.memory_space<semaphore_mem>>) src(%1390 : memref<128xf32, #tpu.memory_space<any>>) dst(%1392 : memref<128xf32, #tpu.memory_space<vmem>>)
    %c0_i32_880 = arith.constant 0 : i32
    %c124_i32_881 = arith.constant 124 : i32
    %c0_i32_882 = arith.constant 0 : i32
    %1393 = tpu.memref_slice %arg2[%c0_i32_880, %c0_i32_882] : memref<1024x128xf32, #tpu.memory_space<any>> -> memref<1x128xf32, #tpu.memory_space<any>>
    %1394 = tpu.memref_squeeze %1393 : memref<1x128xf32, #tpu.memory_space<any>> -> memref<128xf32, #tpu.memory_space<any>>
    %c0_i32_883 = arith.constant 0 : i32
    %1395 = tpu.memref_slice %arg3[%c124_i32_881, %c0_i32_883] : memref<128x128xf32, #tpu.memory_space<vmem>> -> memref<1x128xf32, #tpu.memory_space<vmem>>
    %1396 = tpu.memref_squeeze %1395 : memref<1x128xf32, #tpu.memory_space<vmem>> -> memref<128xf32, #tpu.memory_space<vmem>>
    tpu.wait_dma2 semaphore(%arg4 : memref<!tpu.dma_semaphore, #tpu.memory_space<semaphore_mem>>) src(%1394 : memref<128xf32, #tpu.memory_space<any>>) dst(%1396 : memref<128xf32, #tpu.memory_space<vmem>>)
    %c0_i32_884 = arith.constant 0 : i32
    %c125_i32_885 = arith.constant 125 : i32
    %c0_i32_886 = arith.constant 0 : i32
    %1397 = tpu.memref_slice %arg2[%c0_i32_884, %c0_i32_886] : memref<1024x128xf32, #tpu.memory_space<any>> -> memref<1x128xf32, #tpu.memory_space<any>>
    %1398 = tpu.memref_squeeze %1397 : memref<1x128xf32, #tpu.memory_space<any>> -> memref<128xf32, #tpu.memory_space<any>>
    %c0_i32_887 = arith.constant 0 : i32
    %1399 = tpu.memref_slice %arg3[%c125_i32_885, %c0_i32_887] : memref<128x128xf32, #tpu.memory_space<vmem>> -> memref<1x128xf32, #tpu.memory_space<vmem>>
    %1400 = tpu.memref_squeeze %1399 : memref<1x128xf32, #tpu.memory_space<vmem>> -> memref<128xf32, #tpu.memory_space<vmem>>
    tpu.wait_dma2 semaphore(%arg4 : memref<!tpu.dma_semaphore, #tpu.memory_space<semaphore_mem>>) src(%1398 : memref<128xf32, #tpu.memory_space<any>>) dst(%1400 : memref<128xf32, #tpu.memory_space<vmem>>)
    %c0_i32_888 = arith.constant 0 : i32
    %c126_i32_889 = arith.constant 126 : i32
    %c0_i32_890 = arith.constant 0 : i32
    %1401 = tpu.memref_slice %arg2[%c0_i32_888, %c0_i32_890] : memref<1024x128xf32, #tpu.memory_space<any>> -> memref<1x128xf32, #tpu.memory_space<any>>
    %1402 = tpu.memref_squeeze %1401 : memref<1x128xf32, #tpu.memory_space<any>> -> memref<128xf32, #tpu.memory_space<any>>
    %c0_i32_891 = arith.constant 0 : i32
    %1403 = tpu.memref_slice %arg3[%c126_i32_889, %c0_i32_891] : memref<128x128xf32, #tpu.memory_space<vmem>> -> memref<1x128xf32, #tpu.memory_space<vmem>>
    %1404 = tpu.memref_squeeze %1403 : memref<1x128xf32, #tpu.memory_space<vmem>> -> memref<128xf32, #tpu.memory_space<vmem>>
    tpu.wait_dma2 semaphore(%arg4 : memref<!tpu.dma_semaphore, #tpu.memory_space<semaphore_mem>>) src(%1402 : memref<128xf32, #tpu.memory_space<any>>) dst(%1404 : memref<128xf32, #tpu.memory_space<vmem>>)
    %c0_i32_892 = arith.constant 0 : i32
    %c127_i32_893 = arith.constant 127 : i32
    %c0_i32_894 = arith.constant 0 : i32
    %1405 = tpu.memref_slice %arg2[%c0_i32_892, %c0_i32_894] : memref<1024x128xf32, #tpu.memory_space<any>> -> memref<1x128xf32, #tpu.memory_space<any>>
    %1406 = tpu.memref_squeeze %1405 : memref<1x128xf32, #tpu.memory_space<any>> -> memref<128xf32, #tpu.memory_space<any>>
    %c0_i32_895 = arith.constant 0 : i32
    %1407 = tpu.memref_slice %arg3[%c127_i32_893, %c0_i32_895] : memref<128x128xf32, #tpu.memory_space<vmem>> -> memref<1x128xf32, #tpu.memory_space<vmem>>
    %1408 = tpu.memref_squeeze %1407 : memref<1x128xf32, #tpu.memory_space<vmem>> -> memref<128xf32, #tpu.memory_space<vmem>>
    tpu.wait_dma2 semaphore(%arg4 : memref<!tpu.dma_semaphore, #tpu.memory_space<semaphore_mem>>) src(%1406 : memref<128xf32, #tpu.memory_space<any>>) dst(%1408 : memref<128xf32, #tpu.memory_space<vmem>>)
    %c0 = arith.constant 0 : index
    %c0_896 = arith.constant 0 : index
    %1409 = vector.load %arg3[%c0, %c0_896] : memref<128x128xf32, #tpu.memory_space<vmem>>, vector<128x128xf32>
    %cst = arith.constant 11.3137083 : f32
    %1410 = vector.broadcast %cst : f32 to vector<128x128xf32>
    %1411 = arith.mulf %1409, %1410 : vector<128x128xf32>
    %c0_897 = arith.constant 0 : index
    %c0_898 = arith.constant 0 : index
    %1412 = vector.load %arg3[%c0_897, %c0_898] : memref<128x128xf32, #tpu.memory_space<vmem>>, vector<128x128xf32>
    tpu.vector_store %arg3[%c0_897, %c0_898], %1411 {strides = array<i32>} : memref<128x128xf32, #tpu.memory_space<vmem>>, vector<128x128xf32>,
    return
  }
  func.func @transform_1(%arg0: i32, %arg1: memref<256xi32, #tpu.memory_space<smem>>) -> (i32, i32) {
    %c0_i32 = arith.constant 0 : i32
    %c0_i32_0 = arith.constant 0 : i32
    return %arg0, %c0_i32 : i32, i32
  }
}

</mosaic_0001>

<llo_original>
// kernel: tpu_custom_call.1
$region0: #{tpu_custom_call.1}
  #allocation0 [shape = 'u32[]', space=smem, size = 0x4, offset = 0x4, fixed_abs, tag = 'smem constant byte address 0x4 - core index']
  #allocation1 [shape = 'u32[72,128]{1,0:T(1,128)}', space=vmem, size = 0x9000, scoped, tag = 'internal scratch']
  #allocation2 [shape = 's32[1]{0}', space=sflag, size = 0x4, scoped, tag = 'scratch operand']
  #allocation3 [shape = 's32[1]{0}', space=sflag, size = 0x4, scoped, tag = 'scoped memory for tpu_custom_call.1']
  #allocation4 [shape = 'u8[1024]{0}', space=smem, size = 0x400, scoped, tag = 'prefetched SMEM operand 0']
  #allocation7 [shape = 's32[]', space=sflag, size = 0x4, offset = 0, fixed_abs, tag = 'sflag constant byte address 0x0 - dummy sync flag']
  #allocation8 [shape = 's32[]', space=sflag, size = 0x4, offset = 0, fixed_abs, tag = 'sflag constant byte address 0x0 - dummy sync flag']
  #allocation9 [shape = 'u32[]', space=smem, size = 0x4, offset = 0x44, fixed_abs, tag = 'smem constant byte address 0x44 - assertion arg 0']
  #allocation10 [shape = 'u32[]', space=smem, size = 0x4, offset = 0x48, fixed_abs, tag = 'smem constant byte address 0x48 - assertion arg 1']
  #allocation11 [shape = 's32[]', space=sflag, size = 0x4, offset = 0, fixed_abs, tag = 'sflag constant byte address 0x0 - dummy sync flag']
  #allocation12 [shape = 's32[]', space=sflag, size = 0x4, offset = 0, fixed_abs, tag = 'sflag constant byte address 0x0 - dummy sync flag']
  #allocation13 [shape = 's32[]', space=sflag, size = 0x4, offset = 0, fixed_abs, tag = 'sflag constant byte address 0x0 - dummy sync flag']
  #allocation14 [shape = 's32[]', space=sflag, size = 0x4, offset = 0, fixed_abs, tag = 'sflag constant byte address 0x0 - dummy sync flag']
  #allocation15 [shape = 's32[]', space=sflag, size = 0x4, offset = 0, fixed_abs, tag = 'sflag constant byte address 0x0 - dummy sync flag']
  #allocation16 [shape = 's32[]', space=sflag, size = 0x4, offset = 0, fixed_abs, tag = 'sflag constant byte address 0x0 - dummy sync flag']
  #allocation17 [shape = 's32[]', space=sflag, size = 0x4, offset = 0, fixed_abs, tag = 'sflag constant byte address 0x0 - dummy sync flag']
  #allocation18 [shape = 's32[]', space=sflag, size = 0x4, offset = 0, fixed_abs, tag = 'sflag constant byte address 0x0 - dummy sync flag']
  #allocation19 [shape = 's32[]', space=sflag, size = 0x4, offset = 0, fixed_abs, tag = 'sflag constant byte address 0x0 - dummy sync flag']
  #allocation20 [shape = 's32[]', space=sflag, size = 0x4, offset = 0, fixed_abs, tag = 'sflag constant byte address 0x0 - dummy sync flag']
  #allocation21 [shape = 's32[]', space=sflag, size = 0x4, offset = 0, fixed_abs, tag = 'sflag constant byte address 0x0 - dummy sync flag']
  #allocation22 [shape = 's32[]', space=sflag, size = 0x4, offset = 0, fixed_abs, tag = 'sflag constant byte address 0x0 - dummy sync flag']
  #allocation23 [shape = 's32[]', space=sflag, size = 0x4, offset = 0, fixed_abs, tag = 'sflag constant byte address 0x0 - dummy sync flag']
  #allocation24 [shape = 's32[]', space=sflag, size = 0x4, offset = 0, fixed_abs, tag = 'sflag constant byte address 0x0 - dummy sync flag']
  #allocation25 [shape = 's32[]', space=sflag, size = 0x4, offset = 0, fixed_abs, tag = 'sflag constant byte address 0x0 - dummy sync flag']
  #allocation26 [shape = 's32[]', space=sflag, size = 0x4, offset = 0, fixed_abs, tag = 'sflag constant byte address 0x0 - dummy sync flag']
  #allocation27 [shape = 's32[]', space=sflag, size = 0x4, offset = 0, fixed_abs, tag = 'sflag constant byte address 0x0 - dummy sync flag']
  #allocation28 [shape = 's32[]', space=sflag, size = 0x4, offset = 0, fixed_abs, tag = 'sflag constant byte address 0x0 - dummy sync flag']
  #allocation29 [shape = 's32[]', space=sflag, size = 0x4, offset = 0, fixed_abs, tag = 'sflag constant byte address 0x0 - dummy sync flag']
  #allocation30 [shape = 's32[]', space=sflag, size = 0x4, offset = 0, fixed_abs, tag = 'sflag constant byte address 0x0 - dummy sync flag']
  #allocation31 [shape = 's32[]', space=sflag, size = 0x4, offset = 0, fixed_abs, tag = 'sflag constant byte address 0x0 - dummy sync flag']
  #allocation32 [shape = 's32[]', space=sflag, size = 0x4, offset = 0, fixed_abs, tag = 'sflag constant byte address 0x0 - dummy sync flag']
  #allocation33 [shape = 's32[]', space=sflag, size = 0x4, offset = 0, fixed_abs, tag = 'sflag constant byte address 0x0 - dummy sync flag']
  #allocation34 [shape = 's32[]', space=sflag, size = 0x4, offset = 0, fixed_abs, tag = 'sflag constant byte address 0x0 - dummy sync flag']
  #allocation35 [shape = 's32[]', space=sflag, size = 0x4, offset = 0, fixed_abs, tag = 'sflag constant byte address 0x0 - dummy sync flag']
  #allocation36 [shape = 's32[]', space=sflag, size = 0x4, offset = 0, fixed_abs, tag = 'sflag constant byte address 0x0 - dummy sync flag']
  #allocation37 [shape = 's32[]', space=sflag, size = 0x4, offset = 0, fixed_abs, tag = 'sflag constant byte address 0x0 - dummy sync flag']
  #allocation38 [shape = 's32[]', space=sflag, size = 0x4, offset = 0, fixed_abs, tag = 'sflag constant byte address 0x0 - dummy sync flag']
  #allocation39 [shape = 's32[]', space=sflag, size = 0x4, offset = 0, fixed_abs, tag = 'sflag constant byte address 0x0 - dummy sync flag']
  #allocation40 [shape = 's32[]', space=sflag, size = 0x4, offset = 0, fixed_abs, tag = 'sflag constant byte address 0x0 - dummy sync flag']
  #allocation41 [shape = 's32[]', space=sflag, size = 0x4, offset = 0, fixed_abs, tag = 'sflag constant byte address 0x0 - dummy sync flag']
  #allocation42 [shape = 's32[]', space=sflag, size = 0x4, offset = 0, fixed_abs, tag = 'sflag constant byte address 0x0 - dummy sync flag']
  #allocation43 [shape = 's32[]', space=sflag, size = 0x4, offset = 0, fixed_abs, tag = 'sflag constant byte address 0x0 - dummy sync flag']
  #allocation44 [shape = 's32[]', space=sflag, size = 0x4, offset = 0, fixed_abs, tag = 'sflag constant byte address 0x0 - dummy sync flag']
  #allocation45 [shape = 's32[]', space=sflag, size = 0x4, offset = 0, fixed_abs, tag = 'sflag constant byte address 0x0 - dummy sync flag']
  #allocation46 [shape = 's32[]', space=sflag, size = 0x4, offset = 0, fixed_abs, tag = 'sflag constant byte address 0x0 - dummy sync flag']
  #allocation47 [shape = 's32[]', space=sflag, size = 0x4, offset = 0, fixed_abs, tag = 'sflag constant byte address 0x0 - dummy sync flag']
  #allocation48 [shape = 's32[]', space=sflag, size = 0x4, offset = 0, fixed_abs, tag = 'sflag constant byte address 0x0 - dummy sync flag']
  #allocation49 [shape = 's32[]', space=sflag, size = 0x4, offset = 0, fixed_abs, tag = 'sflag constant byte address 0x0 - dummy sync flag']
  #allocation50 [shape = 's32[]', space=sflag, size = 0x4, offset = 0, fixed_abs, tag = 'sflag constant byte address 0x0 - dummy sync flag']
  #allocation51 [shape = 's32[]', space=sflag, size = 0x4, offset = 0, fixed_abs, tag = 'sflag constant byte address 0x0 - dummy sync flag']
  #allocation52 [shape = 's32[]', space=sflag, size = 0x4, offset = 0, fixed_abs, tag = 'sflag constant byte address 0x0 - dummy sync flag']
  #allocation53 [shape = 's32[]', space=sflag, size = 0x4, offset = 0, fixed_abs, tag = 'sflag constant byte address 0x0 - dummy sync flag']
  #allocation54 [shape = 's32[]', space=sflag, size = 0x4, offset = 0, fixed_abs, tag = 'sflag constant byte address 0x0 - dummy sync flag']
  #allocation55 [shape = 's32[]', space=sflag, size = 0x4, offset = 0, fixed_abs, tag = 'sflag constant byte address 0x0 - dummy sync flag']
  #allocation56 [shape = 's32[]', space=sflag, size = 0x4, offset = 0, fixed_abs, tag = 'sflag constant byte address 0x0 - dummy sync flag']
  #allocation57 [shape = 's32[]', space=sflag, size = 0x4, offset = 0, fixed_abs, tag = 'sflag constant byte address 0x0 - dummy sync flag']
  #allocation58 [shape = 's32[]', space=sflag, size = 0x4, offset = 0, fixed_abs, tag = 'sflag constant byte address 0x0 - dummy sync flag']
  #allocation59 [shape = 's32[]', space=sflag, size = 0x4, offset = 0, fixed_abs, tag = 'sflag constant byte address 0x0 - dummy sync flag']
  #allocation60 [shape = 's32[]', space=sflag, size = 0x4, offset = 0, fixed_abs, tag = 'sflag constant byte address 0x0 - dummy sync flag']
  #allocation61 [shape = 's32[]', space=sflag, size = 0x4, offset = 0, fixed_abs, tag = 'sflag constant byte address 0x0 - dummy sync flag']
  #allocation62 [shape = 's32[]', space=sflag, size = 0x4, offset = 0, fixed_abs, tag = 'sflag constant byte address 0x0 - dummy sync flag']
  #allocation63 [shape = 's32[]', space=sflag, size = 0x4, offset = 0, fixed_abs, tag = 'sflag constant byte address 0x0 - dummy sync flag']
  #allocation64 [shape = 's32[]', space=sflag, size = 0x4, offset = 0, fixed_abs, tag = 'sflag constant byte address 0x0 - dummy sync flag']
  #allocation65 [shape = 's32[]', space=sflag, size = 0x4, offset = 0, fixed_abs, tag = 'sflag constant byte address 0x0 - dummy sync flag']
  #allocation66 [shape = 's32[]', space=sflag, size = 0x4, offset = 0, fixed_abs, tag = 'sflag constant byte address 0x0 - dummy sync flag']
  #allocation67 [shape = 's32[]', space=sflag, size = 0x4, offset = 0, fixed_abs, tag = 'sflag constant byte address 0x0 - dummy sync flag']
  #allocation68 [shape = 's32[]', space=sflag, size = 0x4, offset = 0, fixed_abs, tag = 'sflag constant byte address 0x0 - dummy sync flag']
  #allocation69 [shape = 's32[]', space=sflag, size = 0x4, offset = 0, fixed_abs, tag = 'sflag constant byte address 0x0 - dummy sync flag']
  #allocation70 [shape = 's32[]', space=sflag, size = 0x4, offset = 0, fixed_abs, tag = 'sflag constant byte address 0x0 - dummy sync flag']
  #allocation71 [shape = 's32[]', space=sflag, size = 0x4, offset = 0, fixed_abs, tag = 'sflag constant byte address 0x0 - dummy sync flag']
  #allocation72 [shape = 's32[]', space=sflag, size = 0x4, offset = 0, fixed_abs, tag = 'sflag constant byte address 0x0 - dummy sync flag']
  #allocation73 [shape = 's32[]', space=sflag, size = 0x4, offset = 0, fixed_abs, tag = 'sflag constant byte address 0x0 - dummy sync flag']
  #allocation74 [shape = 's32[]', space=sflag, size = 0x4, offset = 0, fixed_abs, tag = 'sflag constant byte address 0x0 - dummy sync flag']
  #allocation75 [shape = 's32[]', space=sflag, size = 0x4, offset = 0, fixed_abs, tag = 'sflag constant byte address 0x0 - dummy sync flag']
  #allocation76 [shape = 's32[]', space=sflag, size = 0x4, offset = 0, fixed_abs, tag = 'sflag constant byte address 0x0 - dummy sync flag']
  #allocation77 [shape = 's32[]', space=sflag, size = 0x4, offset = 0, fixed_abs, tag = 'sflag constant byte address 0x0 - dummy sync flag']
  #allocation78 [shape = 's32[]', space=sflag, size = 0x4, offset = 0, fixed_abs, tag = 'sflag constant byte address 0x0 - dummy sync flag']
  #allocation79 [shape = 's32[]', space=sflag, size = 0x4, offset = 0, fixed_abs, tag = 'sflag constant byte address 0x0 - dummy sync flag']
  #allocation80 [shape = 's32[]', space=sflag, size = 0x4, offset = 0, fixed_abs, tag = 'sflag constant byte address 0x0 - dummy sync flag']
  #allocation81 [shape = 's32[]', space=sflag, size = 0x4, offset = 0, fixed_abs, tag = 'sflag constant byte address 0x0 - dummy sync flag']
  #allocation82 [shape = 's32[]', space=sflag, size = 0x4, offset = 0, fixed_abs, tag = 'sflag constant byte address 0x0 - dummy sync flag']
  #allocation83 [shape = 's32[]', space=sflag, size = 0x4, offset = 0, fixed_abs, tag = 'sflag constant byte address 0x0 - dummy sync flag']
  #allocation84 [shape = 's32[]', space=sflag, size = 0x4, offset = 0, fixed_abs, tag = 'sflag constant byte address 0x0 - dummy sync flag']
  #allocation85 [shape = 's32[]', space=sflag, size = 0x4, offset = 0, fixed_abs, tag = 'sflag constant byte address 0x0 - dummy sync flag']
  #allocation86 [shape = 's32[]', space=sflag, size = 0x4, offset = 0, fixed_abs, tag = 'sflag constant byte address 0x0 - dummy sync flag']
  #allocation87 [shape = 's32[]', space=sflag, size = 0x4, offset = 0, fixed_abs, tag = 'sflag constant byte address 0x0 - dummy sync flag']
  #allocation88 [shape = 's32[]', space=sflag, size = 0x4, offset = 0, fixed_abs, tag = 'sflag constant byte address 0x0 - dummy sync flag']
  #allocation89 [shape = 's32[]', space=sflag, size = 0x4, offset = 0, fixed_abs, tag = 'sflag constant byte address 0x0 - dummy sync flag']
  #allocation90 [shape = 's32[]', space=sflag, size = 0x4, offset = 0, fixed_abs, tag = 'sflag constant byte address 0x0 - dummy sync flag']
  #allocation91 [shape = 's32[]', space=sflag, size = 0x4, offset = 0, fixed_abs, tag = 'sflag constant byte address 0x0 - dummy sync flag']
  #allocation92 [shape = 's32[]', space=sflag, size = 0x4, offset = 0, fixed_abs, tag = 'sflag constant byte address 0x0 - dummy sync flag']
  #allocation93 [shape = 's32[]', space=sflag, size = 0x4, offset = 0, fixed_abs, tag = 'sflag constant byte address 0x0 - dummy sync flag']
  #allocation94 [shape = 's32[]', space=sflag, size = 0x4, offset = 0, fixed_abs, tag = 'sflag constant byte address 0x0 - dummy sync flag']
  #allocation95 [shape = 's32[]', space=sflag, size = 0x4, offset = 0, fixed_abs, tag = 'sflag constant byte address 0x0 - dummy sync flag']
  #allocation96 [shape = 's32[]', space=sflag, size = 0x4, offset = 0, fixed_abs, tag = 'sflag constant byte address 0x0 - dummy sync flag']
  #allocation97 [shape = 's32[]', space=sflag, size = 0x4, offset = 0, fixed_abs, tag = 'sflag constant byte address 0x0 - dummy sync flag']
  #allocation98 [shape = 's32[]', space=sflag, size = 0x4, offset = 0, fixed_abs, tag = 'sflag constant byte address 0x0 - dummy sync flag']
  #allocation99 [shape = 's32[]', space=sflag, size = 0x4, offset = 0, fixed_abs, tag = 'sflag constant byte address 0x0 - dummy sync flag']
  #allocation100 [shape = 's32[]', space=sflag, size = 0x4, offset = 0, fixed_abs, tag = 'sflag constant byte address 0x0 - dummy sync flag']
  #allocation101 [shape = 's32[]', space=sflag, size = 0x4, offset = 0, fixed_abs, tag = 'sflag constant byte address 0x0 - dummy sync flag']
  #allocation102 [shape = 's32[]', space=sflag, size = 0x4, offset = 0, fixed_abs, tag = 'sflag constant byte address 0x0 - dummy sync flag']
  #allocation103 [shape = 's32[]', space=sflag, size = 0x4, offset = 0, fixed_abs, tag = 'sflag constant byte address 0x0 - dummy sync flag']
  #allocation104 [shape = 's32[]', space=sflag, size = 0x4, offset = 0, fixed_abs, tag = 'sflag constant byte address 0x0 - dummy sync flag']
  #allocation105 [shape = 's32[]', space=sflag, size = 0x4, offset = 0, fixed_abs, tag = 'sflag constant byte address 0x0 - dummy sync flag']
  #allocation106 [shape = 's32[]', space=sflag, size = 0x4, offset = 0, fixed_abs, tag = 'sflag constant byte address 0x0 - dummy sync flag']
  #allocation107 [shape = 's32[]', space=sflag, size = 0x4, offset = 0, fixed_abs, tag = 'sflag constant byte address 0x0 - dummy sync flag']
  #allocation108 [shape = 's32[]', space=sflag, size = 0x4, offset = 0, fixed_abs, tag = 'sflag constant byte address 0x0 - dummy sync flag']
  #allocation109 [shape = 's32[]', space=sflag, size = 0x4, offset = 0, fixed_abs, tag = 'sflag constant byte address 0x0 - dummy sync flag']
  #allocation110 [shape = 's32[]', space=sflag, size = 0x4, offset = 0, fixed_abs, tag = 'sflag constant byte address 0x0 - dummy sync flag']
  #allocation111 [shape = 's32[]', space=sflag, size = 0x4, offset = 0, fixed_abs, tag = 'sflag constant byte address 0x0 - dummy sync flag']
  #allocation112 [shape = 's32[]', space=sflag, size = 0x4, offset = 0, fixed_abs, tag = 'sflag constant byte address 0x0 - dummy sync flag']
  #allocation113 [shape = 's32[]', space=sflag, size = 0x4, offset = 0, fixed_abs, tag = 'sflag constant byte address 0x0 - dummy sync flag']
  #allocation114 [shape = 's32[]', space=sflag, size = 0x4, offset = 0, fixed_abs, tag = 'sflag constant byte address 0x0 - dummy sync flag']
  #allocation115 [shape = 's32[]', space=sflag, size = 0x4, offset = 0, fixed_abs, tag = 'sflag constant byte address 0x0 - dummy sync flag']
  #allocation116 [shape = 's32[]', space=sflag, size = 0x4, offset = 0, fixed_abs, tag = 'sflag constant byte address 0x0 - dummy sync flag']
  #allocation117 [shape = 's32[]', space=sflag, size = 0x4, offset = 0, fixed_abs, tag = 'sflag constant byte address 0x0 - dummy sync flag']
  #allocation118 [shape = 's32[]', space=sflag, size = 0x4, offset = 0, fixed_abs, tag = 'sflag constant byte address 0x0 - dummy sync flag']
  #allocation119 [shape = 's32[]', space=sflag, size = 0x4, offset = 0, fixed_abs, tag = 'sflag constant byte address 0x0 - dummy sync flag']
  #allocation120 [shape = 's32[]', space=sflag, size = 0x4, offset = 0, fixed_abs, tag = 'sflag constant byte address 0x0 - dummy sync flag']
  #allocation121 [shape = 's32[]', space=sflag, size = 0x4, offset = 0, fixed_abs, tag = 'sflag constant byte address 0x0 - dummy sync flag']
  #allocation122 [shape = 's32[]', space=sflag, size = 0x4, offset = 0, fixed_abs, tag = 'sflag constant byte address 0x0 - dummy sync flag']
  #allocation123 [shape = 's32[]', space=sflag, size = 0x4, offset = 0, fixed_abs, tag = 'sflag constant byte address 0x0 - dummy sync flag']
  #allocation124 [shape = 's32[]', space=sflag, size = 0x4, offset = 0, fixed_abs, tag = 'sflag constant byte address 0x0 - dummy sync flag']
  #allocation125 [shape = 's32[]', space=sflag, size = 0x4, offset = 0, fixed_abs, tag = 'sflag constant byte address 0x0 - dummy sync flag']
  #allocation126 [shape = 's32[]', space=sflag, size = 0x4, offset = 0, fixed_abs, tag = 'sflag constant byte address 0x0 - dummy sync flag']
  #allocation127 [shape = 's32[]', space=sflag, size = 0x4, offset = 0, fixed_abs, tag = 'sflag constant byte address 0x0 - dummy sync flag']
  #allocation128 [shape = 's32[]', space=sflag, size = 0x4, offset = 0, fixed_abs, tag = 'sflag constant byte address 0x0 - dummy sync flag']
  #allocation129 [shape = 's32[]', space=sflag, size = 0x4, offset = 0, fixed_abs, tag = 'sflag constant byte address 0x0 - dummy sync flag']
  #allocation130 [shape = 's32[]', space=sflag, size = 0x4, offset = 0, fixed_abs, tag = 'sflag constant byte address 0x0 - dummy sync flag']
  #allocation131 [shape = 's32[]', space=sflag, size = 0x4, offset = 0, fixed_abs, tag = 'sflag constant byte address 0x0 - dummy sync flag']
  #allocation132 [shape = 's32[]', space=sflag, size = 0x4, offset = 0, fixed_abs, tag = 'sflag constant byte address 0x0 - dummy sync flag']
  #allocation133 [shape = 's32[]', space=sflag, size = 0x4, offset = 0, fixed_abs, tag = 'sflag constant byte address 0x0 - dummy sync flag']
  #allocation134 [shape = 's32[]', space=sflag, size = 0x4, offset = 0, fixed_abs, tag = 'sflag constant byte address 0x0 - dummy sync flag']
  #allocation135 [shape = 's32[]', space=sflag, size = 0x4, offset = 0, fixed_abs, tag = 'sflag constant byte address 0x0 - dummy sync flag']
  #allocation136 [shape = 's32[]', space=sflag, size = 0x4, offset = 0, fixed_abs, tag = 'sflag constant byte address 0x0 - dummy sync flag']
  #allocation137 [shape = 's32[]', space=sflag, size = 0x4, offset = 0, fixed_abs, tag = 'sflag constant byte address 0x0 - dummy sync flag']
  #allocation138 [shape = 's32[]', space=sflag, size = 0x4, offset = 0, fixed_abs, tag = 'sflag constant byte address 0x0 - dummy sync flag']
  #allocation139 [shape = 's32[]', space=sflag, size = 0x4, offset = 0, fixed_abs, tag = 'sflag constant byte address 0x0 - dummy sync flag']
  #allocation140 [shape = 's32[]', space=sflag, size = 0x4, offset = 0, fixed_abs, tag = 'sflag constant byte address 0x0 - dummy sync flag']
  #allocation141 [shape = 's32[]', space=sflag, size = 0x4, offset = 0, fixed_abs, tag = 'sflag constant byte address 0x0 - dummy sync flag']
  #allocation142 [shape = 's32[]', space=sflag, size = 0x4, offset = 0, fixed_abs, tag = 'sflag constant byte address 0x0 - dummy sync flag']
  #allocation143 [shape = 's32[]', space=sflag, size = 0x4, offset = 0, fixed_abs, tag = 'sflag constant byte address 0x0 - dummy sync flag']
  #allocation144 [shape = 's32[]', space=sflag, size = 0x4, offset = 0, fixed_abs, tag = 'sflag constant byte address 0x0 - dummy sync flag']
  #allocation145 [shape = 's32[]', space=sflag, size = 0x4, offset = 0, fixed_abs, tag = 'sflag constant byte address 0x0 - dummy sync flag']
  #allocation146 [shape = 's32[]', space=sflag, size = 0x4, offset = 0, fixed_abs, tag = 'sflag constant byte address 0x0 - dummy sync flag']
  #allocation147 [shape = 's32[]', space=sflag, size = 0x4, offset = 0, fixed_abs, tag = 'sflag constant byte address 0x0 - dummy sync flag']
  #allocation148 [shape = 's32[]', space=sflag, size = 0x4, offset = 0, fixed_abs, tag = 'sflag constant byte address 0x0 - dummy sync flag']
  #allocation149 [shape = 's32[]', space=sflag, size = 0x4, offset = 0, fixed_abs, tag = 'sflag constant byte address 0x0 - dummy sync flag']
  #allocation150 [shape = 's32[]', space=sflag, size = 0x4, offset = 0, fixed_abs, tag = 'sflag constant byte address 0x0 - dummy sync flag']
  #allocation151 [shape = 's32[]', space=sflag, size = 0x4, offset = 0, fixed_abs, tag = 'sflag constant byte address 0x0 - dummy sync flag']
  #allocation152 [shape = 's32[]', space=sflag, size = 0x4, offset = 0, fixed_abs, tag = 'sflag constant byte address 0x0 - dummy sync flag']
  #allocation153 [shape = 's32[]', space=sflag, size = 0x4, offset = 0, fixed_abs, tag = 'sflag constant byte address 0x0 - dummy sync flag']
  #allocation154 [shape = 's32[]', space=sflag, size = 0x4, offset = 0, fixed_abs, tag = 'sflag constant byte address 0x0 - dummy sync flag']
  #allocation155 [shape = 's32[]', space=sflag, size = 0x4, offset = 0, fixed_abs, tag = 'sflag constant byte address 0x0 - dummy sync flag']
  #allocation156 [shape = 's32[]', space=sflag, size = 0x4, offset = 0, fixed_abs, tag = 'sflag constant byte address 0x0 - dummy sync flag']
  #allocation157 [shape = 's32[]', space=sflag, size = 0x4, offset = 0, fixed_abs, tag = 'sflag constant byte address 0x0 - dummy sync flag']
  #allocation158 [shape = 's32[]', space=sflag, size = 0x4, offset = 0, fixed_abs, tag = 'sflag constant byte address 0x0 - dummy sync flag']
  #allocation159 [shape = 's32[]', space=sflag, size = 0x4, offset = 0, fixed_abs, tag = 'sflag constant byte address 0x0 - dummy sync flag']
  #allocation160 [shape = 's32[]', space=sflag, size = 0x4, offset = 0, fixed_abs, tag = 'sflag constant byte address 0x0 - dummy sync flag']
  #allocation161 [shape = 's32[]', space=sflag, size = 0x4, offset = 0, fixed_abs, tag = 'sflag constant byte address 0x0 - dummy sync flag']
  #allocation162 [shape = 's32[]', space=sflag, size = 0x4, offset = 0, fixed_abs, tag = 'sflag constant byte address 0x0 - dummy sync flag']
  #allocation163 [shape = 's32[]', space=sflag, size = 0x4, offset = 0, fixed_abs, tag = 'sflag constant byte address 0x0 - dummy sync flag']
  #allocation164 [shape = 's32[]', space=sflag, size = 0x4, offset = 0, fixed_abs, tag = 'sflag constant byte address 0x0 - dummy sync flag']
  #allocation165 [shape = 's32[]', space=sflag, size = 0x4, offset = 0, fixed_abs, tag = 'sflag constant byte address 0x0 - dummy sync flag']
  #allocation166 [shape = 's32[]', space=sflag, size = 0x4, offset = 0, fixed_abs, tag = 'sflag constant byte address 0x0 - dummy sync flag']
  #allocation167 [shape = 's32[]', space=sflag, size = 0x4, offset = 0, fixed_abs, tag = 'sflag constant byte address 0x0 - dummy sync flag']
  #allocation168 [shape = 's32[]', space=sflag, size = 0x4, offset = 0, fixed_abs, tag = 'sflag constant byte address 0x0 - dummy sync flag']
  #allocation169 [shape = 's32[]', space=sflag, size = 0x4, offset = 0, fixed_abs, tag = 'sflag constant byte address 0x0 - dummy sync flag']
  #allocation170 [shape = 's32[]', space=sflag, size = 0x4, offset = 0, fixed_abs, tag = 'sflag constant byte address 0x0 - dummy sync flag']
  #allocation171 [shape = 's32[]', space=sflag, size = 0x4, offset = 0, fixed_abs, tag = 'sflag constant byte address 0x0 - dummy sync flag']
  #allocation172 [shape = 's32[]', space=sflag, size = 0x4, offset = 0, fixed_abs, tag = 'sflag constant byte address 0x0 - dummy sync flag']
  #allocation173 [shape = 's32[]', space=sflag, size = 0x4, offset = 0, fixed_abs, tag = 'sflag constant byte address 0x0 - dummy sync flag']
  #allocation174 [shape = 's32[]', space=sflag, size = 0x4, offset = 0, fixed_abs, tag = 'sflag constant byte address 0x0 - dummy sync flag']
  #allocation175 [shape = 's32[]', space=sflag, size = 0x4, offset = 0, fixed_abs, tag = 'sflag constant byte address 0x0 - dummy sync flag']
  #allocation176 [shape = 's32[]', space=sflag, size = 0x4, offset = 0, fixed_abs, tag = 'sflag constant byte address 0x0 - dummy sync flag']
  #allocation177 [shape = 's32[]', space=sflag, size = 0x4, offset = 0, fixed_abs, tag = 'sflag constant byte address 0x0 - dummy sync flag']
  #allocation178 [shape = 's32[]', space=sflag, size = 0x4, offset = 0, fixed_abs, tag = 'sflag constant byte address 0x0 - dummy sync flag']
  #allocation179 [shape = 's32[]', space=sflag, size = 0x4, offset = 0, fixed_abs, tag = 'sflag constant byte address 0x0 - dummy sync flag']
  #allocation180 [shape = 's32[]', space=sflag, size = 0x4, offset = 0, fixed_abs, tag = 'sflag constant byte address 0x0 - dummy sync flag']
  #allocation181 [shape = 's32[]', space=sflag, size = 0x4, offset = 0, fixed_abs, tag = 'sflag constant byte address 0x0 - dummy sync flag']
  #allocation182 [shape = 's32[]', space=sflag, size = 0x4, offset = 0, fixed_abs, tag = 'sflag constant byte address 0x0 - dummy sync flag']
  #allocation183 [shape = 's32[]', space=sflag, size = 0x4, offset = 0, fixed_abs, tag = 'sflag constant byte address 0x0 - dummy sync flag']
  #allocation184 [shape = 's32[]', space=sflag, size = 0x4, offset = 0, fixed_abs, tag = 'sflag constant byte address 0x0 - dummy sync flag']
  #allocation185 [shape = 's32[]', space=sflag, size = 0x4, offset = 0, fixed_abs, tag = 'sflag constant byte address 0x0 - dummy sync flag']
  #allocation186 [shape = 's32[]', space=sflag, size = 0x4, offset = 0, fixed_abs, tag = 'sflag constant byte address 0x0 - dummy sync flag']
  #allocation187 [shape = 's32[]', space=sflag, size = 0x4, offset = 0, fixed_abs, tag = 'sflag constant byte address 0x0 - dummy sync flag']
  #allocation188 [shape = 's32[]', space=sflag, size = 0x4, offset = 0, fixed_abs, tag = 'sflag constant byte address 0x0 - dummy sync flag']
  #allocation189 [shape = 's32[]', space=sflag, size = 0x4, offset = 0, fixed_abs, tag = 'sflag constant byte address 0x0 - dummy sync flag']
  #allocation190 [shape = 's32[]', space=sflag, size = 0x4, offset = 0, fixed_abs, tag = 'sflag constant byte address 0x0 - dummy sync flag']
  #allocation191 [shape = 's32[]', space=sflag, size = 0x4, offset = 0, fixed_abs, tag = 'sflag constant byte address 0x0 - dummy sync flag']
  #allocation192 [shape = 's32[]', space=sflag, size = 0x4, offset = 0, fixed_abs, tag = 'sflag constant byte address 0x0 - dummy sync flag']
  #allocation193 [shape = 's32[]', space=sflag, size = 0x4, offset = 0, fixed_abs, tag = 'sflag constant byte address 0x0 - dummy sync flag']
  #allocation194 [shape = 's32[]', space=sflag, size = 0x4, offset = 0, fixed_abs, tag = 'sflag constant byte address 0x0 - dummy sync flag']
  #allocation195 [shape = 's32[]', space=sflag, size = 0x4, offset = 0, fixed_abs, tag = 'sflag constant byte address 0x0 - dummy sync flag']
  #allocation196 [shape = 's32[]', space=sflag, size = 0x4, offset = 0, fixed_abs, tag = 'sflag constant byte address 0x0 - dummy sync flag']
  #allocation197 [shape = 's32[]', space=sflag, size = 0x4, offset = 0, fixed_abs, tag = 'sflag constant byte address 0x0 - dummy sync flag']
  #allocation198 [shape = 's32[]', space=sflag, size = 0x4, offset = 0, fixed_abs, tag = 'sflag constant byte address 0x0 - dummy sync flag']
  #allocation199 [shape = 's32[]', space=sflag, size = 0x4, offset = 0, fixed_abs, tag = 'sflag constant byte address 0x0 - dummy sync flag']
  #allocation200 [shape = 's32[]', space=sflag, size = 0x4, offset = 0, fixed_abs, tag = 'sflag constant byte address 0x0 - dummy sync flag']
  #allocation201 [shape = 's32[]', space=sflag, size = 0x4, offset = 0, fixed_abs, tag = 'sflag constant byte address 0x0 - dummy sync flag']
  #allocation202 [shape = 's32[]', space=sflag, size = 0x4, offset = 0, fixed_abs, tag = 'sflag constant byte address 0x0 - dummy sync flag']
  #allocation203 [shape = 's32[]', space=sflag, size = 0x4, offset = 0, fixed_abs, tag = 'sflag constant byte address 0x0 - dummy sync flag']
  #allocation204 [shape = 's32[]', space=sflag, size = 0x4, offset = 0, fixed_abs, tag = 'sflag constant byte address 0x0 - dummy sync flag']
  #allocation205 [shape = 's32[]', space=sflag, size = 0x4, offset = 0, fixed_abs, tag = 'sflag constant byte address 0x0 - dummy sync flag']
  #allocation206 [shape = 's32[]', space=sflag, size = 0x4, offset = 0, fixed_abs, tag = 'sflag constant byte address 0x0 - dummy sync flag']
  #allocation207 [shape = 's32[]', space=sflag, size = 0x4, offset = 0, fixed_abs, tag = 'sflag constant byte address 0x0 - dummy sync flag']
  #allocation208 [shape = 's32[]', space=sflag, size = 0x4, offset = 0, fixed_abs, tag = 'sflag constant byte address 0x0 - dummy sync flag']
  #allocation209 [shape = 's32[]', space=sflag, size = 0x4, offset = 0, fixed_abs, tag = 'sflag constant byte address 0x0 - dummy sync flag']
  #allocation210 [shape = 's32[]', space=sflag, size = 0x4, offset = 0, fixed_abs, tag = 'sflag constant byte address 0x0 - dummy sync flag']
  #allocation211 [shape = 's32[]', space=sflag, size = 0x4, offset = 0, fixed_abs, tag = 'sflag constant byte address 0x0 - dummy sync flag']
  #allocation212 [shape = 's32[]', space=sflag, size = 0x4, offset = 0, fixed_abs, tag = 'sflag constant byte address 0x0 - dummy sync flag']
  #allocation213 [shape = 's32[]', space=sflag, size = 0x4, offset = 0, fixed_abs, tag = 'sflag constant byte address 0x0 - dummy sync flag']
  #allocation214 [shape = 's32[]', space=sflag, size = 0x4, offset = 0, fixed_abs, tag = 'sflag constant byte address 0x0 - dummy sync flag']
  #allocation215 [shape = 's32[]', space=sflag, size = 0x4, offset = 0, fixed_abs, tag = 'sflag constant byte address 0x0 - dummy sync flag']
  #allocation216 [shape = 's32[]', space=sflag, size = 0x4, offset = 0, fixed_abs, tag = 'sflag constant byte address 0x0 - dummy sync flag']
  #allocation217 [shape = 's32[]', space=sflag, size = 0x4, offset = 0, fixed_abs, tag = 'sflag constant byte address 0x0 - dummy sync flag']
  #allocation218 [shape = 's32[]', space=sflag, size = 0x4, offset = 0, fixed_abs, tag = 'sflag constant byte address 0x0 - dummy sync flag']
  #allocation219 [shape = 's32[]', space=sflag, size = 0x4, offset = 0, fixed_abs, tag = 'sflag constant byte address 0x0 - dummy sync flag']
  #allocation220 [shape = 's32[]', space=sflag, size = 0x4, offset = 0, fixed_abs, tag = 'sflag constant byte address 0x0 - dummy sync flag']
  #allocation221 [shape = 's32[]', space=sflag, size = 0x4, offset = 0, fixed_abs, tag = 'sflag constant byte address 0x0 - dummy sync flag']
  #allocation222 [shape = 's32[]', space=sflag, size = 0x4, offset = 0, fixed_abs, tag = 'sflag constant byte address 0x0 - dummy sync flag']
  #allocation223 [shape = 's32[]', space=sflag, size = 0x4, offset = 0, fixed_abs, tag = 'sflag constant byte address 0x0 - dummy sync flag']
  #allocation224 [shape = 's32[]', space=sflag, size = 0x4, offset = 0, fixed_abs, tag = 'sflag constant byte address 0x0 - dummy sync flag']
  #allocation225 [shape = 's32[]', space=sflag, size = 0x4, offset = 0, fixed_abs, tag = 'sflag constant byte address 0x0 - dummy sync flag']
  #allocation226 [shape = 's32[]', space=sflag, size = 0x4, offset = 0, fixed_abs, tag = 'sflag constant byte address 0x0 - dummy sync flag']
  #allocation227 [shape = 's32[]', space=sflag, size = 0x4, offset = 0, fixed_abs, tag = 'sflag constant byte address 0x0 - dummy sync flag']
  #allocation228 [shape = 's32[]', space=sflag, size = 0x4, offset = 0, fixed_abs, tag = 'sflag constant byte address 0x0 - dummy sync flag']
  #allocation229 [shape = 's32[]', space=sflag, size = 0x4, offset = 0, fixed_abs, tag = 'sflag constant byte address 0x0 - dummy sync flag']
  #allocation230 [shape = 's32[]', space=sflag, size = 0x4, offset = 0, fixed_abs, tag = 'sflag constant byte address 0x0 - dummy sync flag']
  #allocation231 [shape = 's32[]', space=sflag, size = 0x4, offset = 0, fixed_abs, tag = 'sflag constant byte address 0x0 - dummy sync flag']
  #allocation232 [shape = 's32[]', space=sflag, size = 0x4, offset = 0, fixed_abs, tag = 'sflag constant byte address 0x0 - dummy sync flag']
  #allocation233 [shape = 's32[]', space=sflag, size = 0x4, offset = 0, fixed_abs, tag = 'sflag constant byte address 0x0 - dummy sync flag']
  #allocation234 [shape = 's32[]', space=sflag, size = 0x4, offset = 0, fixed_abs, tag = 'sflag constant byte address 0x0 - dummy sync flag']
  #allocation235 [shape = 's32[]', space=sflag, size = 0x4, offset = 0, fixed_abs, tag = 'sflag constant byte address 0x0 - dummy sync flag']
  #allocation236 [shape = 's32[]', space=sflag, size = 0x4, offset = 0, fixed_abs, tag = 'sflag constant byte address 0x0 - dummy sync flag']
  #allocation237 [shape = 's32[]', space=sflag, size = 0x4, offset = 0, fixed_abs, tag = 'sflag constant byte address 0x0 - dummy sync flag']
  #allocation238 [shape = 's32[]', space=sflag, size = 0x4, offset = 0, fixed_abs, tag = 'sflag constant byte address 0x0 - dummy sync flag']
  #allocation239 [shape = 's32[]', space=sflag, size = 0x4, offset = 0, fixed_abs, tag = 'sflag constant byte address 0x0 - dummy sync flag']
  #allocation240 [shape = 's32[]', space=sflag, size = 0x4, offset = 0, fixed_abs, tag = 'sflag constant byte address 0x0 - dummy sync flag']
  #allocation241 [shape = 's32[]', space=sflag, size = 0x4, offset = 0, fixed_abs, tag = 'sflag constant byte address 0x0 - dummy sync flag']
  #allocation242 [shape = 's32[]', space=sflag, size = 0x4, offset = 0, fixed_abs, tag = 'sflag constant byte address 0x0 - dummy sync flag']
  #allocation243 [shape = 's32[]', space=sflag, size = 0x4, offset = 0, fixed_abs, tag = 'sflag constant byte address 0x0 - dummy sync flag']
  #allocation244 [shape = 's32[]', space=sflag, size = 0x4, offset = 0, fixed_abs, tag = 'sflag constant byte address 0x0 - dummy sync flag']
  #allocation245 [shape = 's32[]', space=sflag, size = 0x4, offset = 0, fixed_abs, tag = 'sflag constant byte address 0x0 - dummy sync flag']
  #allocation246 [shape = 's32[]', space=sflag, size = 0x4, offset = 0, fixed_abs, tag = 'sflag constant byte address 0x0 - dummy sync flag']
  #allocation247 [shape = 's32[]', space=sflag, size = 0x4, offset = 0, fixed_abs, tag = 'sflag constant byte address 0x0 - dummy sync flag']
  #allocation248 [shape = 's32[]', space=sflag, size = 0x4, offset = 0, fixed_abs, tag = 'sflag constant byte address 0x0 - dummy sync flag']
  #allocation249 [shape = 's32[]', space=sflag, size = 0x4, offset = 0, fixed_abs, tag = 'sflag constant byte address 0x0 - dummy sync flag']
  #allocation250 [shape = 's32[]', space=sflag, size = 0x4, offset = 0, fixed_abs, tag = 'sflag constant byte address 0x0 - dummy sync flag']
  #allocation251 [shape = 's32[]', space=sflag, size = 0x4, offset = 0, fixed_abs, tag = 'sflag constant byte address 0x0 - dummy sync flag']
  #allocation252 [shape = 's32[]', space=sflag, size = 0x4, offset = 0, fixed_abs, tag = 'sflag constant byte address 0x0 - dummy sync flag']
  #allocation253 [shape = 's32[]', space=sflag, size = 0x4, offset = 0, fixed_abs, tag = 'sflag constant byte address 0x0 - dummy sync flag']
  #allocation254 [shape = 's32[]', space=sflag, size = 0x4, offset = 0, fixed_abs, tag = 'sflag constant byte address 0x0 - dummy sync flag']
  #allocation255 [shape = 's32[]', space=sflag, size = 0x4, offset = 0, fixed_abs, tag = 'sflag constant byte address 0x0 - dummy sync flag']
  #allocation256 [shape = 's32[]', space=sflag, size = 0x4, offset = 0, fixed_abs, tag = 'sflag constant byte address 0x0 - dummy sync flag']
  #allocation257 [shape = 's32[]', space=sflag, size = 0x4, offset = 0, fixed_abs, tag = 'sflag constant byte address 0x0 - dummy sync flag']
  #allocation258 [shape = 's32[]', space=sflag, size = 0x4, offset = 0, fixed_abs, tag = 'sflag constant byte address 0x0 - dummy sync flag']
  #allocation259 [shape = 's32[]', space=sflag, size = 0x4, offset = 0, fixed_abs, tag = 'sflag constant byte address 0x0 - dummy sync flag']
  #allocation260 [shape = 's32[]', space=sflag, size = 0x4, offset = 0, fixed_abs, tag = 'sflag constant byte address 0x0 - dummy sync flag']
  #allocation261 [shape = 's32[]', space=sflag, size = 0x4, offset = 0, fixed_abs, tag = 'sflag constant byte address 0x0 - dummy sync flag']
  #allocation262 [shape = 's32[]', space=sflag, size = 0x4, offset = 0, fixed_abs, tag = 'sflag constant byte address 0x0 - dummy sync flag']
  #allocation263 [shape = 's32[]', space=sflag, size = 0x4, offset = 0, fixed_abs, tag = 'sflag constant byte address 0x0 - dummy sync flag']
  #allocation264 [shape = 's32[]', space=sflag, size = 0x4, offset = 0, fixed_abs, tag = 'sflag constant byte address 0x0 - dummy sync flag']
  %s0 = inlined_call_operand.hbm [shape: s32[256], index: 0, kind: input, shape index: {}]
  %s1 = inlined_call_operand.hbm [shape: f32[1024,128], index: 1, kind: input, shape index: {}]
  %s2 = inlined_call_operand.hbm [shape: f32[256,128], index: 2, kind: output, shape index: {}]
  %s3 = sld [smem:[#allocation0]]
  $region537: #{tpu_custom_call.1} parent=0
    _
  %s5 = ssub.s32 1, %s3
  %s6 = scalar_select 0, %s5, %s3
  %s8 = sshll.u32 %s0, 4
  %s9 = int_to_ptr.hbm [resolvable:$true] %s8
  %11 = dma.hbm_to_smem %s9, 32, [#allocation4], [#allocation3]
  %13 = dma.done [#allocation3], 32
  %14 = sfence
  $region1: #{tpu_custom_call.1} parent=0
    #allocation5 [shape = 'u8[131072]{0}', space=vmem, size = 0x20000, scoped, tag = 'output window, operand 0']
    #allocation6 [shape = 's32[2]{0}', space=sflag, size = 0x8, scoped, tag = 'scoped memory for tpu_custom_call.1']
    %15 = vsyncpa [#allocation6], 0
    %s16 = scalar_lea.sflag [#allocation6], 1
    %17 = vsyncpa %s16, 0
    loop: start=0, step=1, limit=3
    $region2: #{tpu_custom_call.1} parent=1 // loop_pre_header
      _
    $region3: #{tpu_custom_call.1} parent=1 // loop_header
      %s19 = sphi 0, %s23
      %p20 = scmp.ge.s32.totalorder %s19, 3
      %s28 = sphi 0, %s30
      %s31 = sphi 0, %s28
      %s41 = sphi 0, %s31
    $region4: #{tpu_custom_call.1} parent=1 // loop_header_branch
      %22 = sbr.rel (%p20) target = $region8
    $region5: #{tpu_custom_call.1} parent=1 // loop_body
      %s24 = ssub.s32 %s19, 1
      %s25 = sadd.s32 %s19, 1
      %s26 = ssub.s32 %s19, %s25
      %p27 = scmp.eq.s32.totalorder %s26, 0
      %s29 = sadd.s32 %s28, 1
      %s30 = scalar_select %p27, %s28, %s29
      %p32 = pneg %p27
      %p33 = scmp.eq.s32.totalorder %s19, 1
      %p34 = por %p32, %p33
      %p35 = scmp.ne.s32.totalorder %s28, %s31
      %p36 = scmp.eq.s32.totalorder %s19, 0
      %p37 = por %p35, %p36
      %p38 = scmp.ne.s32.totalorder %s28, %s31
      %p39 = scmp.eq.s32.totalorder %s24, 1
      %p40 = por %p38, %p39
      %p42 = scmp.ne.s32.totalorder %s31, %s41
      %p43 = scmp.eq.s32.totalorder %s24, 0
      %p44 = por %p42, %p43
      %p45 = scmp.lt.s32.totalorder %s19, 2
      // Predicated region
      $region9: #{tpu_custom_call.1} parent=5 // pred_check
        %p46 = pneg %p45
      $region10: #{tpu_custom_call.1} parent=5 // pred_check_branch
        %48 = sbr.rel (%p46) target = $region12
      $region11: #{tpu_custom_call.1} parent=5 // pred_region
        %p49 = pneg %p37
        %p50 = pneg %p34
        %s51 = sand.u32 %s28, 1
        %s52 = scalar_lea.sflag [#allocation6], %s51
        %s53 = sand.u32 %s28, 1
        %s54 = smul.addr %s53, 128
        %s55 = scalar_lea.vmem [#allocation5], %s54
        %s56 = smul.u32 16, %s19
        %s57 = smul.u32 %s19, 128
        %s58 = sld [smem:[#allocation4 + %s57]]
        %s59 = scalar_lea.hbm %s1, %s58
        // Predicated region
        $region13: #{tpu_custom_call.1} parent=11 // pred_check
          _
        $region14: #{tpu_custom_call.1} parent=11 // pred_check_branch
          %61 = sbr.rel target = $region16
        $region15: #{tpu_custom_call.1} parent=11 // pred_region
          %62 = sst [smem:[#allocation9]] [#allocation8]
          %63 = sst [smem:[#allocation10]] [#allocation7]
        $region16: #{tpu_custom_call.1} parent=11 // pred_fallthru
          _
        %65 = shalt.err (0)
        %s67 = sshll.u32 %s59, 4
        %s68 = int_to_ptr.hbm [resolvable:$true] %s67
        %s69 = sshll.u32 %s55, 4
        %s70 = int_to_ptr.vmem [resolvable:$true] %s69
        %72 = dma.hbm_to_vmem [thread:$0]  %s68, 16, %s70, [#allocation2]
        %s73 = sadd.s32 %s57, 1
        %s74 = sld [smem:[#allocation4 + %s73]]
        %s75 = scalar_lea.hbm %s1, %s74
        %s76 = scalar_lea.vmem %s55, 1 [#allocation5]
        // Predicated region
        $region17: #{tpu_custom_call.1} parent=11 // pred_check
          _
        $region18: #{tpu_custom_call.1} parent=11 // pred_check_branch
          %78 = sbr.rel target = $region20
        $region19: #{tpu_custom_call.1} parent=11 // pred_region
          %79 = sst [smem:[#allocation9]] [#allocation12]
          %80 = sst [smem:[#allocation10]] [#allocation11]
        $region20: #{tpu_custom_call.1} parent=11 // pred_fallthru
          _
        %82 = shalt.err (0)
        %s84 = sshll.u32 %s75, 4
        %s85 = int_to_ptr.hbm [resolvable:$true] %s84
        %s86 = sshll.u32 %s76, 4
        %s87 = int_to_ptr.vmem [resolvable:$true] %s86
        %89 = dma.hbm_to_vmem [thread:$0]  %s85, 16, %s87, [#allocation2]
        %s90 = sadd.s32 %s57, 2
        %s91 = sld [smem:[#allocation4 + %s90]]
        %s92 = scalar_lea.hbm %s1, %s91
        %s93 = scalar_lea.vmem %s55, 2 [#allocation5]
        // Predicated region
        $region21: #{tpu_custom_call.1} parent=11 // pred_check
          _
        $region22: #{tpu_custom_call.1} parent=11 // pred_check_branch
          %95 = sbr.rel target = $region24
        $region23: #{tpu_custom_call.1} parent=11 // pred_region
          %96 = sst [smem:[#allocation9]] [#allocation14]
          %97 = sst [smem:[#allocation10]] [#allocation13]
        $region24: #{tpu_custom_call.1} parent=11 // pred_fallthru
          _
        %99 = shalt.err (0)
        %s101 = sshll.u32 %s92, 4
        %s102 = int_to_ptr.hbm [resolvable:$true] %s101
        %s103 = sshll.u32 %s93, 4
        %s104 = int_to_ptr.vmem [resolvable:$true] %s103
        %106 = dma.hbm_to_vmem [thread:$0]  %s102, 16, %s104, [#allocation2]
        %s107 = sadd.s32 %s57, 3
        %s108 = sld [smem:[#allocation4 + %s107]]
        %s109 = scalar_lea.hbm %s1, %s108
        %s110 = scalar_lea.vmem %s55, 3 [#allocation5]
        // Predicated region
        $region25: #{tpu_custom_call.1} parent=11 // pred_check
          _
        $region26: #{tpu_custom_call.1} parent=11 // pred_check_branch
          %112 = sbr.rel target = $region28
        $region27: #{tpu_custom_call.1} parent=11 // pred_region
          %113 = sst [smem:[#allocation9]] [#allocation16]
          %114 = sst [smem:[#allocation10]] [#allocation15]
        $region28: #{tpu_custom_call.1} parent=11 // pred_fallthru
          _
        %116 = shalt.err (0)
        %s118 = sshll.u32 %s109, 4
        %s119 = int_to_ptr.hbm [resolvable:$true] %s118
        %s120 = sshll.u32 %s110, 4
        %s121 = int_to_ptr.vmem [resolvable:$true] %s120
        %123 = dma.hbm_to_vmem [thread:$0]  %s119, 16, %s121, [#allocation2]
        %s124 = sadd.s32 %s57, 4
        %s125 = sld [smem:[#allocation4 + %s124]]
        %s126 = scalar_lea.hbm %s1, %s125
        %s127 = scalar_lea.vmem %s55, 4 [#allocation5]
        // Predicated region
        $region29: #{tpu_custom_call.1} parent=11 // pred_check
          _
        $region30: #{tpu_custom_call.1} parent=11 // pred_check_branch
          %129 = sbr.rel target = $region32
        $region31: #{tpu_custom_call.1} parent=11 // pred_region
          %130 = sst [smem:[#allocation9]] [#allocation18]
          %131 = sst [smem:[#allocation10]] [#allocation17]
        $region32: #{tpu_custom_call.1} parent=11 // pred_fallthru
          _
        %133 = shalt.err (0)
        %s135 = sshll.u32 %s126, 4
        %s136 = int_to_ptr.hbm [resolvable:$true] %s135
        %s137 = sshll.u32 %s127, 4
        %s138 = int_to_ptr.vmem [resolvable:$true] %s137
        %140 = dma.hbm_to_vmem [thread:$0]  %s136, 16, %s138, [#allocation2]
        %s141 = sadd.s32 %s57, 5
        %s142 = sld [smem:[#allocation4 + %s141]]
        %s143 = scalar_lea.hbm %s1, %s142
        %s144 = scalar_lea.vmem %s55, 5 [#allocation5]
        // Predicated region
        $region33: #{tpu_custom_call.1} parent=11 // pred_check
          _
        $region34: #{tpu_custom_call.1} parent=11 // pred_check_branch
          %146 = sbr.rel target = $region36
        $region35: #{tpu_custom_call.1} parent=11 // pred_region
          %147 = sst [smem:[#allocation9]] [#allocation20]
          %148 = sst [smem:[#allocation10]] [#allocation19]
        $region36: #{tpu_custom_call.1} parent=11 // pred_fallthru
          _
        %150 = shalt.err (0)
        %s152 = sshll.u32 %s143, 4
        %s153 = int_to_ptr.hbm [resolvable:$true] %s152
        %s154 = sshll.u32 %s144, 4
        %s155 = int_to_ptr.vmem [resolvable:$true] %s154
        %157 = dma.hbm_to_vmem [thread:$0]  %s153, 16, %s155, [#allocation2]
        %s158 = sadd.s32 %s57, 6
        %s159 = sld [smem:[#allocation4 + %s158]]
        %s160 = scalar_lea.hbm %s1, %s159
        %s161 = scalar_lea.vmem %s55, 6 [#allocation5]
        // Predicated region
        $region37: #{tpu_custom_call.1} parent=11 // pred_check
          _
        $region38: #{tpu_custom_call.1} parent=11 // pred_check_branch
          %163 = sbr.rel target = $region40
        $region39: #{tpu_custom_call.1} parent=11 // pred_region
          %164 = sst [smem:[#allocation9]] [#allocation22]
          %165 = sst [smem:[#allocation10]] [#allocation21]
        $region40: #{tpu_custom_call.1} parent=11 // pred_fallthru
          _
        %167 = shalt.err (0)
        %s169 = sshll.u32 %s160, 4
        %s170 = int_to_ptr.hbm [resolvable:$true] %s169
        %s171 = sshll.u32 %s161, 4
        %s172 = int_to_ptr.vmem [resolvable:$true] %s171
        %174 = dma.hbm_to_vmem [thread:$0]  %s170, 16, %s172, [#allocation2]
        %s175 = sadd.s32 %s57, 7
        %s176 = sld [smem:[#allocation4 + %s175]]
        %s177 = scalar_lea.hbm %s1, %s176
        %s178 = scalar_lea.vmem %s55, 7 [#allocation5]
        // Predicated region
        $region41: #{tpu_custom_call.1} parent=11 // pred_check
          _
        $region42: #{tpu_custom_call.1} parent=11 // pred_check_branch
          %180 = sbr.rel target = $region44
        $region43: #{tpu_custom_call.1} parent=11 // pred_region
          %181 = sst [smem:[#allocation9]] [#allocation24]
          %182 = sst [smem:[#allocation10]] [#allocation23]
        $region44: #{tpu_custom_call.1} parent=11 // pred_fallthru
          _
        %184 = shalt.err (0)
        %s186 = sshll.u32 %s177, 4
        %s187 = int_to_ptr.hbm [resolvable:$true] %s186
        %s188 = sshll.u32 %s178, 4
        %s189 = int_to_ptr.vmem [resolvable:$true] %s188
        %191 = dma.hbm_to_vmem [thread:$0]  %s187, 16, %s189, [#allocation2]
        %s192 = sadd.s32 %s57, 8
        %s193 = sld [smem:[#allocation4 + %s192]]
        %s194 = scalar_lea.hbm %s1, %s193
        %s195 = scalar_lea.vmem %s55, 8 [#allocation5]
        // Predicated region
        $region45: #{tpu_custom_call.1} parent=11 // pred_check
          _
        $region46: #{tpu_custom_call.1} parent=11 // pred_check_branch
          %197 = sbr.rel target = $region48
        $region47: #{tpu_custom_call.1} parent=11 // pred_region
          %198 = sst [smem:[#allocation9]] [#allocation26]
          %199 = sst [smem:[#allocation10]] [#allocation25]
        $region48: #{tpu_custom_call.1} parent=11 // pred_fallthru
          _
        %201 = shalt.err (0)
        %s203 = sshll.u32 %s194, 4
        %s204 = int_to_ptr.hbm [resolvable:$true] %s203
        %s205 = sshll.u32 %s195, 4
        %s206 = int_to_ptr.vmem [resolvable:$true] %s205
        %208 = dma.hbm_to_vmem [thread:$0]  %s204, 16, %s206, [#allocation2]
        %s209 = sadd.s32 %s57, 9
        %s210 = sld [smem:[#allocation4 + %s209]]
        %s211 = scalar_lea.hbm %s1, %s210
        %s212 = scalar_lea.vmem %s55, 9 [#allocation5]
        // Predicated region
        $region49: #{tpu_custom_call.1} parent=11 // pred_check
          _
        $region50: #{tpu_custom_call.1} parent=11 // pred_check_branch
          %214 = sbr.rel target = $region52
        $region51: #{tpu_custom_call.1} parent=11 // pred_region
          %215 = sst [smem:[#allocation9]] [#allocation28]
          %216 = sst [smem:[#allocation10]] [#allocation27]
        $region52: #{tpu_custom_call.1} parent=11 // pred_fallthru
          _
        %218 = shalt.err (0)
        %s220 = sshll.u32 %s211, 4
        %s221 = int_to_ptr.hbm [resolvable:$true] %s220
        %s222 = sshll.u32 %s212, 4
        %s223 = int_to_ptr.vmem [resolvable:$true] %s222
        %225 = dma.hbm_to_vmem [thread:$0]  %s221, 16, %s223, [#allocation2]
        %s226 = sadd.s32 %s57, 10
        %s227 = sld [smem:[#allocation4 + %s226]]
        %s228 = scalar_lea.hbm %s1, %s227
        %s229 = scalar_lea.vmem %s55, 10 [#allocation5]
        // Predicated region
        $region53: #{tpu_custom_call.1} parent=11 // pred_check
          _
        $region54: #{tpu_custom_call.1} parent=11 // pred_check_branch
          %231 = sbr.rel target = $region56
        $region55: #{tpu_custom_call.1} parent=11 // pred_region
          %232 = sst [smem:[#allocation9]] [#allocation30]
          %233 = sst [smem:[#allocation10]] [#allocation29]
        $region56: #{tpu_custom_call.1} parent=11 // pred_fallthru
          _
        %235 = shalt.err (0)
        %s237 = sshll.u32 %s228, 4
        %s238 = int_to_ptr.hbm [resolvable:$true] %s237
        %s239 = sshll.u32 %s229, 4
        %s240 = int_to_ptr.vmem [resolvable:$true] %s239
        %242 = dma.hbm_to_vmem [thread:$0]  %s238, 16, %s240, [#allocation2]
        %s243 = sadd.s32 %s57, 11
        %s244 = sld [smem:[#allocation4 + %s243]]
        %s245 = scalar_lea.hbm %s1, %s244
        %s246 = scalar_lea.vmem %s55, 11 [#allocation5]
        // Predicated region
        $region57: #{tpu_custom_call.1} parent=11 // pred_check
          _
        $region58: #{tpu_custom_call.1} parent=11 // pred_check_branch
          %248 = sbr.rel target = $region60
        $region59: #{tpu_custom_call.1} parent=11 // pred_region
          %249 = sst [smem:[#allocation9]] [#allocation32]
          %250 = sst [smem:[#allocation10]] [#allocation31]
        $region60: #{tpu_custom_call.1} parent=11 // pred_fallthru
          _
        %252 = shalt.err (0)
        %s254 = sshll.u32 %s245, 4
        %s255 = int_to_ptr.hbm [resolvable:$true] %s254
        %s256 = sshll.u32 %s246, 4
        %s257 = int_to_ptr.vmem [resolvable:$true] %s256
        %259 = dma.hbm_to_vmem [thread:$0]  %s255, 16, %s257, [#allocation2]
        %s260 = sadd.s32 %s57, 12
        %s261 = sld [smem:[#allocation4 + %s260]]
        %s262 = scalar_lea.hbm %s1, %s261
        %s263 = scalar_lea.vmem %s55, 12 [#allocation5]
        // Predicated region
        $region61: #{tpu_custom_call.1} parent=11 // pred_check
          _
        $region62: #{tpu_custom_call.1} parent=11 // pred_check_branch
          %265 = sbr.rel target = $region64
        $region63: #{tpu_custom_call.1} parent=11 // pred_region
          %266 = sst [smem:[#allocation9]] [#allocation34]
          %267 = sst [smem:[#allocation10]] [#allocation33]
        $region64: #{tpu_custom_call.1} parent=11 // pred_fallthru
          _
        %269 = shalt.err (0)
        %s271 = sshll.u32 %s262, 4
        %s272 = int_to_ptr.hbm [resolvable:$true] %s271
        %s273 = sshll.u32 %s263, 4
        %s274 = int_to_ptr.vmem [resolvable:$true] %s273
        %276 = dma.hbm_to_vmem [thread:$0]  %s272, 16, %s274, [#allocation2]
        %s277 = sadd.s32 %s57, 13
        %s278 = sld [smem:[#allocation4 + %s277]]
        %s279 = scalar_lea.hbm %s1, %s278
        %s280 = scalar_lea.vmem %s55, 13 [#allocation5]
        // Predicated region
        $region65: #{tpu_custom_call.1} parent=11 // pred_check
          _
        $region66: #{tpu_custom_call.1} parent=11 // pred_check_branch
          %282 = sbr.rel target = $region68
        $region67: #{tpu_custom_call.1} parent=11 // pred_region
          %283 = sst [smem:[#allocation9]] [#allocation36]
          %284 = sst [smem:[#allocation10]] [#allocation35]
        $region68: #{tpu_custom_call.1} parent=11 // pred_fallthru
          _
        %286 = shalt.err (0)
        %s288 = sshll.u32 %s279, 4
        %s289 = int_to_ptr.hbm [resolvable:$true] %s288
        %s290 = sshll.u32 %s280, 4
        %s291 = int_to_ptr.vmem [resolvable:$true] %s290
        %293 = dma.hbm_to_vmem [thread:$0]  %s289, 16, %s291, [#allocation2]
        %s294 = sadd.s32 %s57, 14
        %s295 = sld [smem:[#allocation4 + %s294]]
        %s296 = scalar_lea.hbm %s1, %s295
        %s297 = scalar_lea.vmem %s55, 14 [#allocation5]
        // Predicated region
        $region69: #{tpu_custom_call.1} parent=11 // pred_check
          _
        $region70: #{tpu_custom_call.1} parent=11 // pred_check_branch
          %299 = sbr.rel target = $region72
        $region71: #{tpu_custom_call.1} parent=11 // pred_region
          %300 = sst [smem:[#allocation9]] [#allocation38]
          %301 = sst [smem:[#allocation10]] [#allocation37]
        $region72: #{tpu_custom_call.1} parent=11 // pred_fallthru
          _
        %303 = shalt.err (0)
        %s305 = sshll.u32 %s296, 4
        %s306 = int_to_ptr.hbm [resolvable:$true] %s305
        %s307 = sshll.u32 %s297, 4
        %s308 = int_to_ptr.vmem [resolvable:$true] %s307
        %310 = dma.hbm_to_vmem [thread:$0]  %s306, 16, %s308, [#allocation2]
        %s311 = sadd.s32 %s57, 15
        %s312 = sld [smem:[#allocation4 + %s311]]
        %s313 = scalar_lea.hbm %s1, %s312
        %s314 = scalar_lea.vmem %s55, 15 [#allocation5]
        // Predicated region
        $region73: #{tpu_custom_call.1} parent=11 // pred_check
          _
        $region74: #{tpu_custom_call.1} parent=11 // pred_check_branch
          %316 = sbr.rel target = $region76
        $region75: #{tpu_custom_call.1} parent=11 // pred_region
          %317 = sst [smem:[#allocation9]] [#allocation40]
          %318 = sst [smem:[#allocation10]] [#allocation39]
        $region76: #{tpu_custom_call.1} parent=11 // pred_fallthru
          _
        %320 = shalt.err (0)
        %s322 = sshll.u32 %s313, 4
        %s323 = int_to_ptr.hbm [resolvable:$true] %s322
        %s324 = sshll.u32 %s314, 4
        %s325 = int_to_ptr.vmem [resolvable:$true] %s324
        %327 = dma.hbm_to_vmem [thread:$0]  %s323, 16, %s325, [#allocation2]
        %s328 = sadd.s32 %s57, 16
        %s329 = sld [smem:[#allocation4 + %s328]]
        %s330 = scalar_lea.hbm %s1, %s329
        %s331 = scalar_lea.vmem %s55, 16 [#allocation5]
        // Predicated region
        $region77: #{tpu_custom_call.1} parent=11 // pred_check
          _
        $region78: #{tpu_custom_call.1} parent=11 // pred_check_branch
          %333 = sbr.rel target = $region80
        $region79: #{tpu_custom_call.1} parent=11 // pred_region
          %334 = sst [smem:[#allocation9]] [#allocation42]
          %335 = sst [smem:[#allocation10]] [#allocation41]
        $region80: #{tpu_custom_call.1} parent=11 // pred_fallthru
          _
        %337 = shalt.err (0)
        %s339 = sshll.u32 %s330, 4
        %s340 = int_to_ptr.hbm [resolvable:$true] %s339
        %s341 = sshll.u32 %s331, 4
        %s342 = int_to_ptr.vmem [resolvable:$true] %s341
        %344 = dma.hbm_to_vmem [thread:$0]  %s340, 16, %s342, [#allocation2]
        %s345 = sadd.s32 %s57, 17
        %s346 = sld [smem:[#allocation4 + %s345]]
        %s347 = scalar_lea.hbm %s1, %s346
        %s348 = scalar_lea.vmem %s55, 17 [#allocation5]
        // Predicated region
        $region81: #{tpu_custom_call.1} parent=11 // pred_check
          _
        $region82: #{tpu_custom_call.1} parent=11 // pred_check_branch
          %350 = sbr.rel target = $region84
        $region83: #{tpu_custom_call.1} parent=11 // pred_region
          %351 = sst [smem:[#allocation9]] [#allocation44]
          %352 = sst [smem:[#allocation10]] [#allocation43]
        $region84: #{tpu_custom_call.1} parent=11 // pred_fallthru
          _
        %354 = shalt.err (0)
        %s356 = sshll.u32 %s347, 4
        %s357 = int_to_ptr.hbm [resolvable:$true] %s356
        %s358 = sshll.u32 %s348, 4
        %s359 = int_to_ptr.vmem [resolvable:$true] %s358
        %361 = dma.hbm_to_vmem [thread:$0]  %s357, 16, %s359, [#allocation2]
        %s362 = sadd.s32 %s57, 18
        %s363 = sld [smem:[#allocation4 + %s362]]
        %s364 = scalar_lea.hbm %s1, %s363
        %s365 = scalar_lea.vmem %s55, 18 [#allocation5]
        // Predicated region
        $region85: #{tpu_custom_call.1} parent=11 // pred_check
          _
        $region86: #{tpu_custom_call.1} parent=11 // pred_check_branch
          %367 = sbr.rel target = $region88
        $region87: #{tpu_custom_call.1} parent=11 // pred_region
          %368 = sst [smem:[#allocation9]] [#allocation46]
          %369 = sst [smem:[#allocation10]] [#allocation45]
        $region88: #{tpu_custom_call.1} parent=11 // pred_fallthru
          _
        %371 = shalt.err (0)
        %s373 = sshll.u32 %s364, 4
        %s374 = int_to_ptr.hbm [resolvable:$true] %s373
        %s375 = sshll.u32 %s365, 4
        %s376 = int_to_ptr.vmem [resolvable:$true] %s375
        %378 = dma.hbm_to_vmem [thread:$0]  %s374, 16, %s376, [#allocation2]
        %s379 = sadd.s32 %s57, 19
        %s380 = sld [smem:[#allocation4 + %s379]]
        %s381 = scalar_lea.hbm %s1, %s380
        %s382 = scalar_lea.vmem %s55, 19 [#allocation5]
        // Predicated region
        $region89: #{tpu_custom_call.1} parent=11 // pred_check
          _
        $region90: #{tpu_custom_call.1} parent=11 // pred_check_branch
          %384 = sbr.rel target = $region92
        $region91: #{tpu_custom_call.1} parent=11 // pred_region
          %385 = sst [smem:[#allocation9]] [#allocation48]
          %386 = sst [smem:[#allocation10]] [#allocation47]
        $region92: #{tpu_custom_call.1} parent=11 // pred_fallthru
          _
        %388 = shalt.err (0)
        %s390 = sshll.u32 %s381, 4
        %s391 = int_to_ptr.hbm [resolvable:$true] %s390
        %s392 = sshll.u32 %s382, 4
        %s393 = int_to_ptr.vmem [resolvable:$true] %s392
        %395 = dma.hbm_to_vmem [thread:$0]  %s391, 16, %s393, [#allocation2]
        %s396 = sadd.s32 %s57, 20
        %s397 = sld [smem:[#allocation4 + %s396]]
        %s398 = scalar_lea.hbm %s1, %s397
        %s399 = scalar_lea.vmem %s55, 20 [#allocation5]
        // Predicated region
        $region93: #{tpu_custom_call.1} parent=11 // pred_check
          _
        $region94: #{tpu_custom_call.1} parent=11 // pred_check_branch
          %401 = sbr.rel target = $region96
        $region95: #{tpu_custom_call.1} parent=11 // pred_region
          %402 = sst [smem:[#allocation9]] [#allocation50]
          %403 = sst [smem:[#allocation10]] [#allocation49]
        $region96: #{tpu_custom_call.1} parent=11 // pred_fallthru
          _
        %405 = shalt.err (0)
        %s407 = sshll.u32 %s398, 4
        %s408 = int_to_ptr.hbm [resolvable:$true] %s407
        %s409 = sshll.u32 %s399, 4
        %s410 = int_to_ptr.vmem [resolvable:$true] %s409
        %412 = dma.hbm_to_vmem [thread:$0]  %s408, 16, %s410, [#allocation2]
        %s413 = sadd.s32 %s57, 21
        %s414 = sld [smem:[#allocation4 + %s413]]
        %s415 = scalar_lea.hbm %s1, %s414
        %s416 = scalar_lea.vmem %s55, 21 [#allocation5]
        // Predicated region
        $region97: #{tpu_custom_call.1} parent=11 // pred_check
          _
        $region98: #{tpu_custom_call.1} parent=11 // pred_check_branch
          %418 = sbr.rel target = $region100
        $region99: #{tpu_custom_call.1} parent=11 // pred_region
          %419 = sst [smem:[#allocation9]] [#allocation52]
          %420 = sst [smem:[#allocation10]] [#allocation51]
        $region100: #{tpu_custom_call.1} parent=11 // pred_fallthru
          _
        %422 = shalt.err (0)
        %s424 = sshll.u32 %s415, 4
        %s425 = int_to_ptr.hbm [resolvable:$true] %s424
        %s426 = sshll.u32 %s416, 4
        %s427 = int_to_ptr.vmem [resolvable:$true] %s426
        %429 = dma.hbm_to_vmem [thread:$0]  %s425, 16, %s427, [#allocation2]
        %s430 = sadd.s32 %s57, 22
        %s431 = sld [smem:[#allocation4 + %s430]]
        %s432 = scalar_lea.hbm %s1, %s431
        %s433 = scalar_lea.vmem %s55, 22 [#allocation5]
        // Predicated region
        $region101: #{tpu_custom_call.1} parent=11 // pred_check
          _
        $region102: #{tpu_custom_call.1} parent=11 // pred_check_branch
          %435 = sbr.rel target = $region104
        $region103: #{tpu_custom_call.1} parent=11 // pred_region
          %436 = sst [smem:[#allocation9]] [#allocation54]
          %437 = sst [smem:[#allocation10]] [#allocation53]
        $region104: #{tpu_custom_call.1} parent=11 // pred_fallthru
          _
        %439 = shalt.err (0)
        %s441 = sshll.u32 %s432, 4
        %s442 = int_to_ptr.hbm [resolvable:$true] %s441
        %s443 = sshll.u32 %s433, 4
        %s444 = int_to_ptr.vmem [resolvable:$true] %s443
        %446 = dma.hbm_to_vmem [thread:$0]  %s442, 16, %s444, [#allocation2]
        %s447 = sadd.s32 %s57, 23
        %s448 = sld [smem:[#allocation4 + %s447]]
        %s449 = scalar_lea.hbm %s1, %s448
        %s450 = scalar_lea.vmem %s55, 23 [#allocation5]
        // Predicated region
        $region105: #{tpu_custom_call.1} parent=11 // pred_check
          _
        $region106: #{tpu_custom_call.1} parent=11 // pred_check_branch
          %452 = sbr.rel target = $region108
        $region107: #{tpu_custom_call.1} parent=11 // pred_region
          %453 = sst [smem:[#allocation9]] [#allocation56]
          %454 = sst [smem:[#allocation10]] [#allocation55]
        $region108: #{tpu_custom_call.1} parent=11 // pred_fallthru
          _
        %456 = shalt.err (0)
        %s458 = sshll.u32 %s449, 4
        %s459 = int_to_ptr.hbm [resolvable:$true] %s458
        %s460 = sshll.u32 %s450, 4
        %s461 = int_to_ptr.vmem [resolvable:$true] %s460
        %463 = dma.hbm_to_vmem [thread:$0]  %s459, 16, %s461, [#allocation2]
        %s464 = sadd.s32 %s57, 24
        %s465 = sld [smem:[#allocation4 + %s464]]
        %s466 = scalar_lea.hbm %s1, %s465
        %s467 = scalar_lea.vmem %s55, 24 [#allocation5]
        // Predicated region
        $region109: #{tpu_custom_call.1} parent=11 // pred_check
          _
        $region110: #{tpu_custom_call.1} parent=11 // pred_check_branch
          %469 = sbr.rel target = $region112
        $region111: #{tpu_custom_call.1} parent=11 // pred_region
          %470 = sst [smem:[#allocation9]] [#allocation58]
          %471 = sst [smem:[#allocation10]] [#allocation57]
        $region112: #{tpu_custom_call.1} parent=11 // pred_fallthru
          _
        %473 = shalt.err (0)
        %s475 = sshll.u32 %s466, 4
        %s476 = int_to_ptr.hbm [resolvable:$true] %s475
        %s477 = sshll.u32 %s467, 4
        %s478 = int_to_ptr.vmem [resolvable:$true] %s477
        %480 = dma.hbm_to_vmem [thread:$0]  %s476, 16, %s478, [#allocation2]
        %s481 = sadd.s32 %s57, 25
        %s482 = sld [smem:[#allocation4 + %s481]]
        %s483 = scalar_lea.hbm %s1, %s482
        %s484 = scalar_lea.vmem %s55, 25 [#allocation5]
        // Predicated region
        $region113: #{tpu_custom_call.1} parent=11 // pred_check
          _
        $region114: #{tpu_custom_call.1} parent=11 // pred_check_branch
          %486 = sbr.rel target = $region116
        $region115: #{tpu_custom_call.1} parent=11 // pred_region
          %487 = sst [smem:[#allocation9]] [#allocation60]
          %488 = sst [smem:[#allocation10]] [#allocation59]
        $region116: #{tpu_custom_call.1} parent=11 // pred_fallthru
          _
        %490 = shalt.err (0)
        %s492 = sshll.u32 %s483, 4
        %s493 = int_to_ptr.hbm [resolvable:$true] %s492
        %s494 = sshll.u32 %s484, 4
        %s495 = int_to_ptr.vmem [resolvable:$true] %s494
        %497 = dma.hbm_to_vmem [thread:$0]  %s493, 16, %s495, [#allocation2]
        %s498 = sadd.s32 %s57, 26
        %s499 = sld [smem:[#allocation4 + %s498]]
        %s500 = scalar_lea.hbm %s1, %s499
        %s501 = scalar_lea.vmem %s55, 26 [#allocation5]
        // Predicated region
        $region117: #{tpu_custom_call.1} parent=11 // pred_check
          _
        $region118: #{tpu_custom_call.1} parent=11 // pred_check_branch
          %503 = sbr.rel target = $region120
        $region119: #{tpu_custom_call.1} parent=11 // pred_region
          %504 = sst [smem:[#allocation9]] [#allocation62]
          %505 = sst [smem:[#allocation10]] [#allocation61]
        $region120: #{tpu_custom_call.1} parent=11 // pred_fallthru
          _
        %507 = shalt.err (0)
        %s509 = sshll.u32 %s500, 4
        %s510 = int_to_ptr.hbm [resolvable:$true] %s509
        %s511 = sshll.u32 %s501, 4
        %s512 = int_to_ptr.vmem [resolvable:$true] %s511
        %514 = dma.hbm_to_vmem [thread:$0]  %s510, 16, %s512, [#allocation2]
        %s515 = sadd.s32 %s57, 27
        %s516 = sld [smem:[#allocation4 + %s515]]
        %s517 = scalar_lea.hbm %s1, %s516
        %s518 = scalar_lea.vmem %s55, 27 [#allocation5]
        // Predicated region
        $region121: #{tpu_custom_call.1} parent=11 // pred_check
          _
        $region122: #{tpu_custom_call.1} parent=11 // pred_check_branch
          %520 = sbr.rel target = $region124
        $region123: #{tpu_custom_call.1} parent=11 // pred_region
          %521 = sst [smem:[#allocation9]] [#allocation64]
          %522 = sst [smem:[#allocation10]] [#allocation63]
        $region124: #{tpu_custom_call.1} parent=11 // pred_fallthru
          _
        %524 = shalt.err (0)
        %s526 = sshll.u32 %s517, 4
        %s527 = int_to_ptr.hbm [resolvable:$true] %s526
        %s528 = sshll.u32 %s518, 4
        %s529 = int_to_ptr.vmem [resolvable:$true] %s528
        %531 = dma.hbm_to_vmem [thread:$0]  %s527, 16, %s529, [#allocation2]
        %s532 = sadd.s32 %s57, 28
        %s533 = sld [smem:[#allocation4 + %s532]]
        %s534 = scalar_lea.hbm %s1, %s533
        %s535 = scalar_lea.vmem %s55, 28 [#allocation5]
        // Predicated region
        $region125: #{tpu_custom_call.1} parent=11 // pred_check
          _
        $region126: #{tpu_custom_call.1} parent=11 // pred_check_branch
          %537 = sbr.rel target = $region128
        $region127: #{tpu_custom_call.1} parent=11 // pred_region
          %538 = sst [smem:[#allocation9]] [#allocation66]
          %539 = sst [smem:[#allocation10]] [#allocation65]
        $region128: #{tpu_custom_call.1} parent=11 // pred_fallthru
          _
        %541 = shalt.err (0)
        %s543 = sshll.u32 %s534, 4
        %s544 = int_to_ptr.hbm [resolvable:$true] %s543
        %s545 = sshll.u32 %s535, 4
        %s546 = int_to_ptr.vmem [resolvable:$true] %s545
        %548 = dma.hbm_to_vmem [thread:$0]  %s544, 16, %s546, [#allocation2]
        %s549 = sadd.s32 %s57, 29
        %s550 = sld [smem:[#allocation4 + %s549]]
        %s551 = scalar_lea.hbm %s1, %s550
        %s552 = scalar_lea.vmem %s55, 29 [#allocation5]
        // Predicated region
        $region129: #{tpu_custom_call.1} parent=11 // pred_check
          _
        $region130: #{tpu_custom_call.1} parent=11 // pred_check_branch
          %554 = sbr.rel target = $region132
        $region131: #{tpu_custom_call.1} parent=11 // pred_region
          %555 = sst [smem:[#allocation9]] [#allocation68]
          %556 = sst [smem:[#allocation10]] [#allocation67]
        $region132: #{tpu_custom_call.1} parent=11 // pred_fallthru
          _
        %558 = shalt.err (0)
        %s560 = sshll.u32 %s551, 4
        %s561 = int_to_ptr.hbm [resolvable:$true] %s560
        %s562 = sshll.u32 %s552, 4
        %s563 = int_to_ptr.vmem [resolvable:$true] %s562
        %565 = dma.hbm_to_vmem [thread:$0]  %s561, 16, %s563, [#allocation2]
        %s566 = sadd.s32 %s57, 30
        %s567 = sld [smem:[#allocation4 + %s566]]
        %s568 = scalar_lea.hbm %s1, %s567
        %s569 = scalar_lea.vmem %s55, 30 [#allocation5]
        // Predicated region
        $region133: #{tpu_custom_call.1} parent=11 // pred_check
          _
        $region134: #{tpu_custom_call.1} parent=11 // pred_check_branch
          %571 = sbr.rel target = $region136
        $region135: #{tpu_custom_call.1} parent=11 // pred_region
          %572 = sst [smem:[#allocation9]] [#allocation70]
          %573 = sst [smem:[#allocation10]] [#allocation69]
        $region136: #{tpu_custom_call.1} parent=11 // pred_fallthru
          _
        %575 = shalt.err (0)
        %s577 = sshll.u32 %s568, 4
        %s578 = int_to_ptr.hbm [resolvable:$true] %s577
        %s579 = sshll.u32 %s569, 4
        %s580 = int_to_ptr.vmem [resolvable:$true] %s579
        %582 = dma.hbm_to_vmem [thread:$0]  %s578, 16, %s580, [#allocation2]
        %s583 = sadd.s32 %s57, 31
        %s584 = sld [smem:[#allocation4 + %s583]]
        %s585 = scalar_lea.hbm %s1, %s584
        %s586 = scalar_lea.vmem %s55, 31 [#allocation5]
        // Predicated region
        $region137: #{tpu_custom_call.1} parent=11 // pred_check
          _
        $region138: #{tpu_custom_call.1} parent=11 // pred_check_branch
          %588 = sbr.rel target = $region140
        $region139: #{tpu_custom_call.1} parent=11 // pred_region
          %589 = sst [smem:[#allocation9]] [#allocation72]
          %590 = sst [smem:[#allocation10]] [#allocation71]
        $region140: #{tpu_custom_call.1} parent=11 // pred_fallthru
          _
        %592 = shalt.err (0)
        %s594 = sshll.u32 %s585, 4
        %s595 = int_to_ptr.hbm [resolvable:$true] %s594
        %s596 = sshll.u32 %s586, 4
        %s597 = int_to_ptr.vmem [resolvable:$true] %s596
        %599 = dma.hbm_to_vmem [thread:$0]  %s595, 16, %s597, [#allocation2]
        %s600 = sadd.s32 %s57, 32
        %s601 = sld [smem:[#allocation4 + %s600]]
        %s602 = scalar_lea.hbm %s1, %s601
        %s603 = scalar_lea.vmem %s55, 32 [#allocation5]
        // Predicated region
        $region141: #{tpu_custom_call.1} parent=11 // pred_check
          _
        $region142: #{tpu_custom_call.1} parent=11 // pred_check_branch
          %605 = sbr.rel target = $region144
        $region143: #{tpu_custom_call.1} parent=11 // pred_region
          %606 = sst [smem:[#allocation9]] [#allocation74]
          %607 = sst [smem:[#allocation10]] [#allocation73]
        $region144: #{tpu_custom_call.1} parent=11 // pred_fallthru
          _
        %609 = shalt.err (0)
        %s611 = sshll.u32 %s602, 4
        %s612 = int_to_ptr.hbm [resolvable:$true] %s611
        %s613 = sshll.u32 %s603, 4
        %s614 = int_to_ptr.vmem [resolvable:$true] %s613
        %616 = dma.hbm_to_vmem [thread:$0]  %s612, 16, %s614, [#allocation2]
        %s617 = sadd.s32 %s57, 33
        %s618 = sld [smem:[#allocation4 + %s617]]
        %s619 = scalar_lea.hbm %s1, %s618
        %s620 = scalar_lea.vmem %s55, 33 [#allocation5]
        // Predicated region
        $region145: #{tpu_custom_call.1} parent=11 // pred_check
          _
        $region146: #{tpu_custom_call.1} parent=11 // pred_check_branch
          %622 = sbr.rel target = $region148
        $region147: #{tpu_custom_call.1} parent=11 // pred_region
          %623 = sst [smem:[#allocation9]] [#allocation76]
          %624 = sst [smem:[#allocation10]] [#allocation75]
        $region148: #{tpu_custom_call.1} parent=11 // pred_fallthru
          _
        %626 = shalt.err (0)
        %s628 = sshll.u32 %s619, 4
        %s629 = int_to_ptr.hbm [resolvable:$true] %s628
        %s630 = sshll.u32 %s620, 4
        %s631 = int_to_ptr.vmem [resolvable:$true] %s630
        %633 = dma.hbm_to_vmem [thread:$0]  %s629, 16, %s631, [#allocation2]
        %s634 = sadd.s32 %s57, 34
        %s635 = sld [smem:[#allocation4 + %s634]]
        %s636 = scalar_lea.hbm %s1, %s635
        %s637 = scalar_lea.vmem %s55, 34 [#allocation5]
        // Predicated region
        $region149: #{tpu_custom_call.1} parent=11 // pred_check
          _
        $region150: #{tpu_custom_call.1} parent=11 // pred_check_branch
          %639 = sbr.rel target = $region152
        $region151: #{tpu_custom_call.1} parent=11 // pred_region
          %640 = sst [smem:[#allocation9]] [#allocation78]
          %641 = sst [smem:[#allocation10]] [#allocation77]
        $region152: #{tpu_custom_call.1} parent=11 // pred_fallthru
          _
        %643 = shalt.err (0)
        %s645 = sshll.u32 %s636, 4
        %s646 = int_to_ptr.hbm [resolvable:$true] %s645
        %s647 = sshll.u32 %s637, 4
        %s648 = int_to_ptr.vmem [resolvable:$true] %s647
        %650 = dma.hbm_to_vmem [thread:$0]  %s646, 16, %s648, [#allocation2]
        %s651 = sadd.s32 %s57, 35
        %s652 = sld [smem:[#allocation4 + %s651]]
        %s653 = scalar_lea.hbm %s1, %s652
        %s654 = scalar_lea.vmem %s55, 35 [#allocation5]
        // Predicated region
        $region153: #{tpu_custom_call.1} parent=11 // pred_check
          _
        $region154: #{tpu_custom_call.1} parent=11 // pred_check_branch
          %656 = sbr.rel target = $region156
        $region155: #{tpu_custom_call.1} parent=11 // pred_region
          %657 = sst [smem:[#allocation9]] [#allocation80]
          %658 = sst [smem:[#allocation10]] [#allocation79]
        $region156: #{tpu_custom_call.1} parent=11 // pred_fallthru
          _
        %660 = shalt.err (0)
        %s662 = sshll.u32 %s653, 4
        %s663 = int_to_ptr.hbm [resolvable:$true] %s662
        %s664 = sshll.u32 %s654, 4
        %s665 = int_to_ptr.vmem [resolvable:$true] %s664
        %667 = dma.hbm_to_vmem [thread:$0]  %s663, 16, %s665, [#allocation2]
        %s668 = sadd.s32 %s57, 36
        %s669 = sld [smem:[#allocation4 + %s668]]
        %s670 = scalar_lea.hbm %s1, %s669
        %s671 = scalar_lea.vmem %s55, 36 [#allocation5]
        // Predicated region
        $region157: #{tpu_custom_call.1} parent=11 // pred_check
          _
        $region158: #{tpu_custom_call.1} parent=11 // pred_check_branch
          %673 = sbr.rel target = $region160
        $region159: #{tpu_custom_call.1} parent=11 // pred_region
          %674 = sst [smem:[#allocation9]] [#allocation82]
          %675 = sst [smem:[#allocation10]] [#allocation81]
        $region160: #{tpu_custom_call.1} parent=11 // pred_fallthru
          _
        %677 = shalt.err (0)
        %s679 = sshll.u32 %s670, 4
        %s680 = int_to_ptr.hbm [resolvable:$true] %s679
        %s681 = sshll.u32 %s671, 4
        %s682 = int_to_ptr.vmem [resolvable:$true] %s681
        %684 = dma.hbm_to_vmem [thread:$0]  %s680, 16, %s682, [#allocation2]
        %s685 = sadd.s32 %s57, 37
        %s686 = sld [smem:[#allocation4 + %s685]]
        %s687 = scalar_lea.hbm %s1, %s686
        %s688 = scalar_lea.vmem %s55, 37 [#allocation5]
        // Predicated region
        $region161: #{tpu_custom_call.1} parent=11 // pred_check
          _
        $region162: #{tpu_custom_call.1} parent=11 // pred_check_branch
          %690 = sbr.rel target = $region164
        $region163: #{tpu_custom_call.1} parent=11 // pred_region
          %691 = sst [smem:[#allocation9]] [#allocation84]
          %692 = sst [smem:[#allocation10]] [#allocation83]
        $region164: #{tpu_custom_call.1} parent=11 // pred_fallthru
          _
        %694 = shalt.err (0)
        %s696 = sshll.u32 %s687, 4
        %s697 = int_to_ptr.hbm [resolvable:$true] %s696
        %s698 = sshll.u32 %s688, 4
        %s699 = int_to_ptr.vmem [resolvable:$true] %s698
        %701 = dma.hbm_to_vmem [thread:$0]  %s697, 16, %s699, [#allocation2]
        %s702 = sadd.s32 %s57, 38
        %s703 = sld [smem:[#allocation4 + %s702]]
        %s704 = scalar_lea.hbm %s1, %s703
        %s705 = scalar_lea.vmem %s55, 38 [#allocation5]
        // Predicated region
        $region165: #{tpu_custom_call.1} parent=11 // pred_check
          _
        $region166: #{tpu_custom_call.1} parent=11 // pred_check_branch
          %707 = sbr.rel target = $region168
        $region167: #{tpu_custom_call.1} parent=11 // pred_region
          %708 = sst [smem:[#allocation9]] [#allocation86]
          %709 = sst [smem:[#allocation10]] [#allocation85]
        $region168: #{tpu_custom_call.1} parent=11 // pred_fallthru
          _
        %711 = shalt.err (0)
        %s713 = sshll.u32 %s704, 4
        %s714 = int_to_ptr.hbm [resolvable:$true] %s713
        %s715 = sshll.u32 %s705, 4
        %s716 = int_to_ptr.vmem [resolvable:$true] %s715
        %718 = dma.hbm_to_vmem [thread:$0]  %s714, 16, %s716, [#allocation2]
        %s719 = sadd.s32 %s57, 39
        %s720 = sld [smem:[#allocation4 + %s719]]
        %s721 = scalar_lea.hbm %s1, %s720
        %s722 = scalar_lea.vmem %s55, 39 [#allocation5]
        // Predicated region
        $region169: #{tpu_custom_call.1} parent=11 // pred_check
          _
        $region170: #{tpu_custom_call.1} parent=11 // pred_check_branch
          %724 = sbr.rel target = $region172
        $region171: #{tpu_custom_call.1} parent=11 // pred_region
          %725 = sst [smem:[#allocation9]] [#allocation88]
          %726 = sst [smem:[#allocation10]] [#allocation87]
        $region172: #{tpu_custom_call.1} parent=11 // pred_fallthru
          _
        %728 = shalt.err (0)
        %s730 = sshll.u32 %s721, 4
        %s731 = int_to_ptr.hbm [resolvable:$true] %s730
        %s732 = sshll.u32 %s722, 4
        %s733 = int_to_ptr.vmem [resolvable:$true] %s732
        %735 = dma.hbm_to_vmem [thread:$0]  %s731, 16, %s733, [#allocation2]
        %s736 = sadd.s32 %s57, 40
        %s737 = sld [smem:[#allocation4 + %s736]]
        %s738 = scalar_lea.hbm %s1, %s737
        %s739 = scalar_lea.vmem %s55, 40 [#allocation5]
        // Predicated region
        $region173: #{tpu_custom_call.1} parent=11 // pred_check
          _
        $region174: #{tpu_custom_call.1} parent=11 // pred_check_branch
          %741 = sbr.rel target = $region176
        $region175: #{tpu_custom_call.1} parent=11 // pred_region
          %742 = sst [smem:[#allocation9]] [#allocation90]
          %743 = sst [smem:[#allocation10]] [#allocation89]
        $region176: #{tpu_custom_call.1} parent=11 // pred_fallthru
          _
        %745 = shalt.err (0)
        %s747 = sshll.u32 %s738, 4
        %s748 = int_to_ptr.hbm [resolvable:$true] %s747
        %s749 = sshll.u32 %s739, 4
        %s750 = int_to_ptr.vmem [resolvable:$true] %s749
        %752 = dma.hbm_to_vmem [thread:$0]  %s748, 16, %s750, [#allocation2]
        %s753 = sadd.s32 %s57, 41
        %s754 = sld [smem:[#allocation4 + %s753]]
        %s755 = scalar_lea.hbm %s1, %s754
        %s756 = scalar_lea.vmem %s55, 41 [#allocation5]
        // Predicated region
        $region177: #{tpu_custom_call.1} parent=11 // pred_check
          _
        $region178: #{tpu_custom_call.1} parent=11 // pred_check_branch
          %758 = sbr.rel target = $region180
        $region179: #{tpu_custom_call.1} parent=11 // pred_region
          %759 = sst [smem:[#allocation9]] [#allocation92]
          %760 = sst [smem:[#allocation10]] [#allocation91]
        $region180: #{tpu_custom_call.1} parent=11 // pred_fallthru
          _
        %762 = shalt.err (0)
        %s764 = sshll.u32 %s755, 4
        %s765 = int_to_ptr.hbm [resolvable:$true] %s764
        %s766 = sshll.u32 %s756, 4
        %s767 = int_to_ptr.vmem [resolvable:$true] %s766
        %769 = dma.hbm_to_vmem [thread:$0]  %s765, 16, %s767, [#allocation2]
        %s770 = sadd.s32 %s57, 42
        %s771 = sld [smem:[#allocation4 + %s770]]
        %s772 = scalar_lea.hbm %s1, %s771
        %s773 = scalar_lea.vmem %s55, 42 [#allocation5]
        // Predicated region
        $region181: #{tpu_custom_call.1} parent=11 // pred_check
          _
        $region182: #{tpu_custom_call.1} parent=11 // pred_check_branch
          %775 = sbr.rel target = $region184
        $region183: #{tpu_custom_call.1} parent=11 // pred_region
          %776 = sst [smem:[#allocation9]] [#allocation94]
          %777 = sst [smem:[#allocation10]] [#allocation93]
        $region184: #{tpu_custom_call.1} parent=11 // pred_fallthru
          _
        %779 = shalt.err (0)
        %s781 = sshll.u32 %s772, 4
        %s782 = int_to_ptr.hbm [resolvable:$true] %s781
        %s783 = sshll.u32 %s773, 4
        %s784 = int_to_ptr.vmem [resolvable:$true] %s783
        %786 = dma.hbm_to_vmem [thread:$0]  %s782, 16, %s784, [#allocation2]
        %s787 = sadd.s32 %s57, 43
        %s788 = sld [smem:[#allocation4 + %s787]]
        %s789 = scalar_lea.hbm %s1, %s788
        %s790 = scalar_lea.vmem %s55, 43 [#allocation5]
        // Predicated region
        $region185: #{tpu_custom_call.1} parent=11 // pred_check
          _
        $region186: #{tpu_custom_call.1} parent=11 // pred_check_branch
          %792 = sbr.rel target = $region188
        $region187: #{tpu_custom_call.1} parent=11 // pred_region
          %793 = sst [smem:[#allocation9]] [#allocation96]
          %794 = sst [smem:[#allocation10]] [#allocation95]
        $region188: #{tpu_custom_call.1} parent=11 // pred_fallthru
          _
        %796 = shalt.err (0)
        %s798 = sshll.u32 %s789, 4
        %s799 = int_to_ptr.hbm [resolvable:$true] %s798
        %s800 = sshll.u32 %s790, 4
        %s801 = int_to_ptr.vmem [resolvable:$true] %s800
        %803 = dma.hbm_to_vmem [thread:$0]  %s799, 16, %s801, [#allocation2]
        %s804 = sadd.s32 %s57, 44
        %s805 = sld [smem:[#allocation4 + %s804]]
        %s806 = scalar_lea.hbm %s1, %s805
        %s807 = scalar_lea.vmem %s55, 44 [#allocation5]
        // Predicated region
        $region189: #{tpu_custom_call.1} parent=11 // pred_check
          _
        $region190: #{tpu_custom_call.1} parent=11 // pred_check_branch
          %809 = sbr.rel target = $region192
        $region191: #{tpu_custom_call.1} parent=11 // pred_region
          %810 = sst [smem:[#allocation9]] [#allocation98]
          %811 = sst [smem:[#allocation10]] [#allocation97]
        $region192: #{tpu_custom_call.1} parent=11 // pred_fallthru
          _
        %813 = shalt.err (0)
        %s815 = sshll.u32 %s806, 4
        %s816 = int_to_ptr.hbm [resolvable:$true] %s815
        %s817 = sshll.u32 %s807, 4
        %s818 = int_to_ptr.vmem [resolvable:$true] %s817
        %820 = dma.hbm_to_vmem [thread:$0]  %s816, 16, %s818, [#allocation2]
        %s821 = sadd.s32 %s57, 45
        %s822 = sld [smem:[#allocation4 + %s821]]
        %s823 = scalar_lea.hbm %s1, %s822
        %s824 = scalar_lea.vmem %s55, 45 [#allocation5]
        // Predicated region
        $region193: #{tpu_custom_call.1} parent=11 // pred_check
          _
        $region194: #{tpu_custom_call.1} parent=11 // pred_check_branch
          %826 = sbr.rel target = $region196
        $region195: #{tpu_custom_call.1} parent=11 // pred_region
          %827 = sst [smem:[#allocation9]] [#allocation100]
          %828 = sst [smem:[#allocation10]] [#allocation99]
        $region196: #{tpu_custom_call.1} parent=11 // pred_fallthru
          _
        %830 = shalt.err (0)
        %s832 = sshll.u32 %s823, 4
        %s833 = int_to_ptr.hbm [resolvable:$true] %s832
        %s834 = sshll.u32 %s824, 4
        %s835 = int_to_ptr.vmem [resolvable:$true] %s834
        %837 = dma.hbm_to_vmem [thread:$0]  %s833, 16, %s835, [#allocation2]
        %s838 = sadd.s32 %s57, 46
        %s839 = sld [smem:[#allocation4 + %s838]]
        %s840 = scalar_lea.hbm %s1, %s839
        %s841 = scalar_lea.vmem %s55, 46 [#allocation5]
        // Predicated region
        $region197: #{tpu_custom_call.1} parent=11 // pred_check
          _
        $region198: #{tpu_custom_call.1} parent=11 // pred_check_branch
          %843 = sbr.rel target = $region200
        $region199: #{tpu_custom_call.1} parent=11 // pred_region
          %844 = sst [smem:[#allocation9]] [#allocation102]
          %845 = sst [smem:[#allocation10]] [#allocation101]
        $region200: #{tpu_custom_call.1} parent=11 // pred_fallthru
          _
        %847 = shalt.err (0)
        %s849 = sshll.u32 %s840, 4
        %s850 = int_to_ptr.hbm [resolvable:$true] %s849
        %s851 = sshll.u32 %s841, 4
        %s852 = int_to_ptr.vmem [resolvable:$true] %s851
        %854 = dma.hbm_to_vmem [thread:$0]  %s850, 16, %s852, [#allocation2]
        %s855 = sadd.s32 %s57, 47
        %s856 = sld [smem:[#allocation4 + %s855]]
        %s857 = scalar_lea.hbm %s1, %s856
        %s858 = scalar_lea.vmem %s55, 47 [#allocation5]
        // Predicated region
        $region201: #{tpu_custom_call.1} parent=11 // pred_check
          _
        $region202: #{tpu_custom_call.1} parent=11 // pred_check_branch
          %860 = sbr.rel target = $region204
        $region203: #{tpu_custom_call.1} parent=11 // pred_region
          %861 = sst [smem:[#allocation9]] [#allocation104]
          %862 = sst [smem:[#allocation10]] [#allocation103]
        $region204: #{tpu_custom_call.1} parent=11 // pred_fallthru
          _
        %864 = shalt.err (0)
        %s866 = sshll.u32 %s857, 4
        %s867 = int_to_ptr.hbm [resolvable:$true] %s866
        %s868 = sshll.u32 %s858, 4
        %s869 = int_to_ptr.vmem [resolvable:$true] %s868
        %871 = dma.hbm_to_vmem [thread:$0]  %s867, 16, %s869, [#allocation2]
        %s872 = sadd.s32 %s57, 48
        %s873 = sld [smem:[#allocation4 + %s872]]
        %s874 = scalar_lea.hbm %s1, %s873
        %s875 = scalar_lea.vmem %s55, 48 [#allocation5]
        // Predicated region
        $region205: #{tpu_custom_call.1} parent=11 // pred_check
          _
        $region206: #{tpu_custom_call.1} parent=11 // pred_check_branch
          %877 = sbr.rel target = $region208
        $region207: #{tpu_custom_call.1} parent=11 // pred_region
          %878 = sst [smem:[#allocation9]] [#allocation106]
          %879 = sst [smem:[#allocation10]] [#allocation105]
        $region208: #{tpu_custom_call.1} parent=11 // pred_fallthru
          _
        %881 = shalt.err (0)
        %s883 = sshll.u32 %s874, 4
        %s884 = int_to_ptr.hbm [resolvable:$true] %s883
        %s885 = sshll.u32 %s875, 4
        %s886 = int_to_ptr.vmem [resolvable:$true] %s885
        %888 = dma.hbm_to_vmem [thread:$0]  %s884, 16, %s886, [#allocation2]
        %s889 = sadd.s32 %s57, 49
        %s890 = sld [smem:[#allocation4 + %s889]]
        %s891 = scalar_lea.hbm %s1, %s890
        %s892 = scalar_lea.vmem %s55, 49 [#allocation5]
        // Predicated region
        $region209: #{tpu_custom_call.1} parent=11 // pred_check
          _
        $region210: #{tpu_custom_call.1} parent=11 // pred_check_branch
          %894 = sbr.rel target = $region212
        $region211: #{tpu_custom_call.1} parent=11 // pred_region
          %895 = sst [smem:[#allocation9]] [#allocation108]
          %896 = sst [smem:[#allocation10]] [#allocation107]
        $region212: #{tpu_custom_call.1} parent=11 // pred_fallthru
          _
        %898 = shalt.err (0)
        %s900 = sshll.u32 %s891, 4
        %s901 = int_to_ptr.hbm [resolvable:$true] %s900
        %s902 = sshll.u32 %s892, 4
        %s903 = int_to_ptr.vmem [resolvable:$true] %s902
        %905 = dma.hbm_to_vmem [thread:$0]  %s901, 16, %s903, [#allocation2]
        %s906 = sadd.s32 %s57, 50
        %s907 = sld [smem:[#allocation4 + %s906]]
        %s908 = scalar_lea.hbm %s1, %s907
        %s909 = scalar_lea.vmem %s55, 50 [#allocation5]
        // Predicated region
        $region213: #{tpu_custom_call.1} parent=11 // pred_check
          _
        $region214: #{tpu_custom_call.1} parent=11 // pred_check_branch
          %911 = sbr.rel target = $region216
        $region215: #{tpu_custom_call.1} parent=11 // pred_region
          %912 = sst [smem:[#allocation9]] [#allocation110]
          %913 = sst [smem:[#allocation10]] [#allocation109]
        $region216: #{tpu_custom_call.1} parent=11 // pred_fallthru
          _
        %915 = shalt.err (0)
        %s917 = sshll.u32 %s908, 4
        %s918 = int_to_ptr.hbm [resolvable:$true] %s917
        %s919 = sshll.u32 %s909, 4
        %s920 = int_to_ptr.vmem [resolvable:$true] %s919
        %922 = dma.hbm_to_vmem [thread:$0]  %s918, 16, %s920, [#allocation2]
        %s923 = sadd.s32 %s57, 51
        %s924 = sld [smem:[#allocation4 + %s923]]
        %s925 = scalar_lea.hbm %s1, %s924
        %s926 = scalar_lea.vmem %s55, 51 [#allocation5]
        // Predicated region
        $region217: #{tpu_custom_call.1} parent=11 // pred_check
          _
        $region218: #{tpu_custom_call.1} parent=11 // pred_check_branch
          %928 = sbr.rel target = $region220
        $region219: #{tpu_custom_call.1} parent=11 // pred_region
          %929 = sst [smem:[#allocation9]] [#allocation112]
          %930 = sst [smem:[#allocation10]] [#allocation111]
        $region220: #{tpu_custom_call.1} parent=11 // pred_fallthru
          _
        %932 = shalt.err (0)
        %s934 = sshll.u32 %s925, 4
        %s935 = int_to_ptr.hbm [resolvable:$true] %s934
        %s936 = sshll.u32 %s926, 4
        %s937 = int_to_ptr.vmem [resolvable:$true] %s936
        %939 = dma.hbm_to_vmem [thread:$0]  %s935, 16, %s937, [#allocation2]
        %s940 = sadd.s32 %s57, 52
        %s941 = sld [smem:[#allocation4 + %s940]]
        %s942 = scalar_lea.hbm %s1, %s941
        %s943 = scalar_lea.vmem %s55, 52 [#allocation5]
        // Predicated region
        $region221: #{tpu_custom_call.1} parent=11 // pred_check
          _
        $region222: #{tpu_custom_call.1} parent=11 // pred_check_branch
          %945 = sbr.rel target = $region224
        $region223: #{tpu_custom_call.1} parent=11 // pred_region
          %946 = sst [smem:[#allocation9]] [#allocation114]
          %947 = sst [smem:[#allocation10]] [#allocation113]
        $region224: #{tpu_custom_call.1} parent=11 // pred_fallthru
          _
        %949 = shalt.err (0)
        %s951 = sshll.u32 %s942, 4
        %s952 = int_to_ptr.hbm [resolvable:$true] %s951
        %s953 = sshll.u32 %s943, 4
        %s954 = int_to_ptr.vmem [resolvable:$true] %s953
        %956 = dma.hbm_to_vmem [thread:$0]  %s952, 16, %s954, [#allocation2]
        %s957 = sadd.s32 %s57, 53
        %s958 = sld [smem:[#allocation4 + %s957]]
        %s959 = scalar_lea.hbm %s1, %s958
        %s960 = scalar_lea.vmem %s55, 53 [#allocation5]
        // Predicated region
        $region225: #{tpu_custom_call.1} parent=11 // pred_check
          _
        $region226: #{tpu_custom_call.1} parent=11 // pred_check_branch
          %962 = sbr.rel target = $region228
        $region227: #{tpu_custom_call.1} parent=11 // pred_region
          %963 = sst [smem:[#allocation9]] [#allocation116]
          %964 = sst [smem:[#allocation10]] [#allocation115]
        $region228: #{tpu_custom_call.1} parent=11 // pred_fallthru
          _
        %966 = shalt.err (0)
        %s968 = sshll.u32 %s959, 4
        %s969 = int_to_ptr.hbm [resolvable:$true] %s968
        %s970 = sshll.u32 %s960, 4
        %s971 = int_to_ptr.vmem [resolvable:$true] %s970
        %973 = dma.hbm_to_vmem [thread:$0]  %s969, 16, %s971, [#allocation2]
        %s974 = sadd.s32 %s57, 54
        %s975 = sld [smem:[#allocation4 + %s974]]
        %s976 = scalar_lea.hbm %s1, %s975
        %s977 = scalar_lea.vmem %s55, 54 [#allocation5]
        // Predicated region
        $region229: #{tpu_custom_call.1} parent=11 // pred_check
          _
        $region230: #{tpu_custom_call.1} parent=11 // pred_check_branch
          %979 = sbr.rel target = $region232
        $region231: #{tpu_custom_call.1} parent=11 // pred_region
          %980 = sst [smem:[#allocation9]] [#allocation118]
          %981 = sst [smem:[#allocation10]] [#allocation117]
        $region232: #{tpu_custom_call.1} parent=11 // pred_fallthru
          _
        %983 = shalt.err (0)
        %s985 = sshll.u32 %s976, 4
        %s986 = int_to_ptr.hbm [resolvable:$true] %s985
        %s987 = sshll.u32 %s977, 4
        %s988 = int_to_ptr.vmem [resolvable:$true] %s987
        %990 = dma.hbm_to_vmem [thread:$0]  %s986, 16, %s988, [#allocation2]
        %s991 = sadd.s32 %s57, 55
        %s992 = sld [smem:[#allocation4 + %s991]]
        %s993 = scalar_lea.hbm %s1, %s992
        %s994 = scalar_lea.vmem %s55, 55 [#allocation5]
        // Predicated region
        $region233: #{tpu_custom_call.1} parent=11 // pred_check
          _
        $region234: #{tpu_custom_call.1} parent=11 // pred_check_branch
          %996 = sbr.rel target = $region236
        $region235: #{tpu_custom_call.1} parent=11 // pred_region
          %997 = sst [smem:[#allocation9]] [#allocation120]
          %998 = sst [smem:[#allocation10]] [#allocation119]
        $region236: #{tpu_custom_call.1} parent=11 // pred_fallthru
          _
        %1000 = shalt.err (0)
        %s1002 = sshll.u32 %s993, 4
        %s1003 = int_to_ptr.hbm [resolvable:$true] %s1002
        %s1004 = sshll.u32 %s994, 4
        %s1005 = int_to_ptr.vmem [resolvable:$true] %s1004
        %1007 = dma.hbm_to_vmem [thread:$0]  %s1003, 16, %s1005, [#allocation2]
        %s1008 = sadd.s32 %s57, 56
        %s1009 = sld [smem:[#allocation4 + %s1008]]
        %s1010 = scalar_lea.hbm %s1, %s1009
        %s1011 = scalar_lea.vmem %s55, 56 [#allocation5]
        // Predicated region
        $region237: #{tpu_custom_call.1} parent=11 // pred_check
          _
        $region238: #{tpu_custom_call.1} parent=11 // pred_check_branch
          %1013 = sbr.rel target = $region240
        $region239: #{tpu_custom_call.1} parent=11 // pred_region
          %1014 = sst [smem:[#allocation9]] [#allocation122]
          %1015 = sst [smem:[#allocation10]] [#allocation121]
        $region240: #{tpu_custom_call.1} parent=11 // pred_fallthru
          _
        %1017 = shalt.err (0)
        %s1019 = sshll.u32 %s1010, 4
        %s1020 = int_to_ptr.hbm [resolvable:$true] %s1019
        %s1021 = sshll.u32 %s1011, 4
        %s1022 = int_to_ptr.vmem [resolvable:$true] %s1021
        %1024 = dma.hbm_to_vmem [thread:$0]  %s1020, 16, %s1022, [#allocation2]
        %s1025 = sadd.s32 %s57, 57
        %s1026 = sld [smem:[#allocation4 + %s1025]]
        %s1027 = scalar_lea.hbm %s1, %s1026
        %s1028 = scalar_lea.vmem %s55, 57 [#allocation5]
        // Predicated region
        $region241: #{tpu_custom_call.1} parent=11 // pred_check
          _
        $region242: #{tpu_custom_call.1} parent=11 // pred_check_branch
          %1030 = sbr.rel target = $region244
        $region243: #{tpu_custom_call.1} parent=11 // pred_region
          %1031 = sst [smem:[#allocation9]] [#allocation124]
          %1032 = sst [smem:[#allocation10]] [#allocation123]
        $region244: #{tpu_custom_call.1} parent=11 // pred_fallthru
          _
        %1034 = shalt.err (0)
        %s1036 = sshll.u32 %s1027, 4
        %s1037 = int_to_ptr.hbm [resolvable:$true] %s1036
        %s1038 = sshll.u32 %s1028, 4
        %s1039 = int_to_ptr.vmem [resolvable:$true] %s1038
        %1041 = dma.hbm_to_vmem [thread:$0]  %s1037, 16, %s1039, [#allocation2]
        %s1042 = sadd.s32 %s57, 58
        %s1043 = sld [smem:[#allocation4 + %s1042]]
        %s1044 = scalar_lea.hbm %s1, %s1043
        %s1045 = scalar_lea.vmem %s55, 58 [#allocation5]
        // Predicated region
        $region245: #{tpu_custom_call.1} parent=11 // pred_check
          _
        $region246: #{tpu_custom_call.1} parent=11 // pred_check_branch
          %1047 = sbr.rel target = $region248
        $region247: #{tpu_custom_call.1} parent=11 // pred_region
          %1048 = sst [smem:[#allocation9]] [#allocation126]
          %1049 = sst [smem:[#allocation10]] [#allocation125]
        $region248: #{tpu_custom_call.1} parent=11 // pred_fallthru
          _
        %1051 = shalt.err (0)
        %s1053 = sshll.u32 %s1044, 4
        %s1054 = int_to_ptr.hbm [resolvable:$true] %s1053
        %s1055 = sshll.u32 %s1045, 4
        %s1056 = int_to_ptr.vmem [resolvable:$true] %s1055
        %1058 = dma.hbm_to_vmem [thread:$0]  %s1054, 16, %s1056, [#allocation2]
        %s1059 = sadd.s32 %s57, 59
        %s1060 = sld [smem:[#allocation4 + %s1059]]
        %s1061 = scalar_lea.hbm %s1, %s1060
        %s1062 = scalar_lea.vmem %s55, 59 [#allocation5]
        // Predicated region
        $region249: #{tpu_custom_call.1} parent=11 // pred_check
          _
        $region250: #{tpu_custom_call.1} parent=11 // pred_check_branch
          %1064 = sbr.rel target = $region252
        $region251: #{tpu_custom_call.1} parent=11 // pred_region
          %1065 = sst [smem:[#allocation9]] [#allocation128]
          %1066 = sst [smem:[#allocation10]] [#allocation127]
        $region252: #{tpu_custom_call.1} parent=11 // pred_fallthru
          _
        %1068 = shalt.err (0)
        %s1070 = sshll.u32 %s1061, 4
        %s1071 = int_to_ptr.hbm [resolvable:$true] %s1070
        %s1072 = sshll.u32 %s1062, 4
        %s1073 = int_to_ptr.vmem [resolvable:$true] %s1072
        %1075 = dma.hbm_to_vmem [thread:$0]  %s1071, 16, %s1073, [#allocation2]
        %s1076 = sadd.s32 %s57, 60
        %s1077 = sld [smem:[#allocation4 + %s1076]]
        %s1078 = scalar_lea.hbm %s1, %s1077
        %s1079 = scalar_lea.vmem %s55, 60 [#allocation5]
        // Predicated region
        $region253: #{tpu_custom_call.1} parent=11 // pred_check
          _
        $region254: #{tpu_custom_call.1} parent=11 // pred_check_branch
          %1081 = sbr.rel target = $region256
        $region255: #{tpu_custom_call.1} parent=11 // pred_region
          %1082 = sst [smem:[#allocation9]] [#allocation130]
          %1083 = sst [smem:[#allocation10]] [#allocation129]
        $region256: #{tpu_custom_call.1} parent=11 // pred_fallthru
          _
        %1085 = shalt.err (0)
        %s1087 = sshll.u32 %s1078, 4
        %s1088 = int_to_ptr.hbm [resolvable:$true] %s1087
        %s1089 = sshll.u32 %s1079, 4
        %s1090 = int_to_ptr.vmem [resolvable:$true] %s1089
        %1092 = dma.hbm_to_vmem [thread:$0]  %s1088, 16, %s1090, [#allocation2]
        %s1093 = sadd.s32 %s57, 61
        %s1094 = sld [smem:[#allocation4 + %s1093]]
        %s1095 = scalar_lea.hbm %s1, %s1094
        %s1096 = scalar_lea.vmem %s55, 61 [#allocation5]
        // Predicated region
        $region257: #{tpu_custom_call.1} parent=11 // pred_check
          _
        $region258: #{tpu_custom_call.1} parent=11 // pred_check_branch
          %1098 = sbr.rel target = $region260
        $region259: #{tpu_custom_call.1} parent=11 // pred_region
          %1099 = sst [smem:[#allocation9]] [#allocation132]
          %1100 = sst [smem:[#allocation10]] [#allocation131]
        $region260: #{tpu_custom_call.1} parent=11 // pred_fallthru
          _
        %1102 = shalt.err (0)
        %s1104 = sshll.u32 %s1095, 4
        %s1105 = int_to_ptr.hbm [resolvable:$true] %s1104
        %s1106 = sshll.u32 %s1096, 4
        %s1107 = int_to_ptr.vmem [resolvable:$true] %s1106
        %1109 = dma.hbm_to_vmem [thread:$0]  %s1105, 16, %s1107, [#allocation2]
        %s1110 = sadd.s32 %s57, 62
        %s1111 = sld [smem:[#allocation4 + %s1110]]
        %s1112 = scalar_lea.hbm %s1, %s1111
        %s1113 = scalar_lea.vmem %s55, 62 [#allocation5]
        // Predicated region
        $region261: #{tpu_custom_call.1} parent=11 // pred_check
          _
        $region262: #{tpu_custom_call.1} parent=11 // pred_check_branch
          %1115 = sbr.rel target = $region264
        $region263: #{tpu_custom_call.1} parent=11 // pred_region
          %1116 = sst [smem:[#allocation9]] [#allocation134]
          %1117 = sst [smem:[#allocation10]] [#allocation133]
        $region264: #{tpu_custom_call.1} parent=11 // pred_fallthru
          _
        %1119 = shalt.err (0)
        %s1121 = sshll.u32 %s1112, 4
        %s1122 = int_to_ptr.hbm [resolvable:$true] %s1121
        %s1123 = sshll.u32 %s1113, 4
        %s1124 = int_to_ptr.vmem [resolvable:$true] %s1123
        %1126 = dma.hbm_to_vmem [thread:$0]  %s1122, 16, %s1124, [#allocation2]
        %s1127 = sadd.s32 %s57, 63
        %s1128 = sld [smem:[#allocation4 + %s1127]]
        %s1129 = scalar_lea.hbm %s1, %s1128
        %s1130 = scalar_lea.vmem %s55, 63 [#allocation5]
        // Predicated region
        $region265: #{tpu_custom_call.1} parent=11 // pred_check
          _
        $region266: #{tpu_custom_call.1} parent=11 // pred_check_branch
          %1132 = sbr.rel target = $region268
        $region267: #{tpu_custom_call.1} parent=11 // pred_region
          %1133 = sst [smem:[#allocation9]] [#allocation136]
          %1134 = sst [smem:[#allocation10]] [#allocation135]
        $region268: #{tpu_custom_call.1} parent=11 // pred_fallthru
          _
        %1136 = shalt.err (0)
        %s1138 = sshll.u32 %s1129, 4
        %s1139 = int_to_ptr.hbm [resolvable:$true] %s1138
        %s1140 = sshll.u32 %s1130, 4
        %s1141 = int_to_ptr.vmem [resolvable:$true] %s1140
        %1143 = dma.hbm_to_vmem [thread:$0]  %s1139, 16, %s1141, [#allocation2]
        %s1144 = sadd.s32 %s57, 64
        %s1145 = sld [smem:[#allocation4 + %s1144]]
        %s1146 = scalar_lea.hbm %s1, %s1145
        %s1147 = scalar_lea.vmem %s55, 64 [#allocation5]
        // Predicated region
        $region269: #{tpu_custom_call.1} parent=11 // pred_check
          _
        $region270: #{tpu_custom_call.1} parent=11 // pred_check_branch
          %1149 = sbr.rel target = $region272
        $region271: #{tpu_custom_call.1} parent=11 // pred_region
          %1150 = sst [smem:[#allocation9]] [#allocation138]
          %1151 = sst [smem:[#allocation10]] [#allocation137]
        $region272: #{tpu_custom_call.1} parent=11 // pred_fallthru
          _
        %1153 = shalt.err (0)
        %s1155 = sshll.u32 %s1146, 4
        %s1156 = int_to_ptr.hbm [resolvable:$true] %s1155
        %s1157 = sshll.u32 %s1147, 4
        %s1158 = int_to_ptr.vmem [resolvable:$true] %s1157
        %1160 = dma.hbm_to_vmem [thread:$0]  %s1156, 16, %s1158, [#allocation2]
        %s1161 = sadd.s32 %s57, 65
        %s1162 = sld [smem:[#allocation4 + %s1161]]
        %s1163 = scalar_lea.hbm %s1, %s1162
        %s1164 = scalar_lea.vmem %s55, 65 [#allocation5]
        // Predicated region
        $region273: #{tpu_custom_call.1} parent=11 // pred_check
          _
        $region274: #{tpu_custom_call.1} parent=11 // pred_check_branch
          %1166 = sbr.rel target = $region276
        $region275: #{tpu_custom_call.1} parent=11 // pred_region
          %1167 = sst [smem:[#allocation9]] [#allocation140]
          %1168 = sst [smem:[#allocation10]] [#allocation139]
        $region276: #{tpu_custom_call.1} parent=11 // pred_fallthru
          _
        %1170 = shalt.err (0)
        %s1172 = sshll.u32 %s1163, 4
        %s1173 = int_to_ptr.hbm [resolvable:$true] %s1172
        %s1174 = sshll.u32 %s1164, 4
        %s1175 = int_to_ptr.vmem [resolvable:$true] %s1174
        %1177 = dma.hbm_to_vmem [thread:$0]  %s1173, 16, %s1175, [#allocation2]
        %s1178 = sadd.s32 %s57, 66
        %s1179 = sld [smem:[#allocation4 + %s1178]]
        %s1180 = scalar_lea.hbm %s1, %s1179
        %s1181 = scalar_lea.vmem %s55, 66 [#allocation5]
        // Predicated region
        $region277: #{tpu_custom_call.1} parent=11 // pred_check
          _
        $region278: #{tpu_custom_call.1} parent=11 // pred_check_branch
          %1183 = sbr.rel target = $region280
        $region279: #{tpu_custom_call.1} parent=11 // pred_region
          %1184 = sst [smem:[#allocation9]] [#allocation142]
          %1185 = sst [smem:[#allocation10]] [#allocation141]
        $region280: #{tpu_custom_call.1} parent=11 // pred_fallthru
          _
        %1187 = shalt.err (0)
        %s1189 = sshll.u32 %s1180, 4
        %s1190 = int_to_ptr.hbm [resolvable:$true] %s1189
        %s1191 = sshll.u32 %s1181, 4
        %s1192 = int_to_ptr.vmem [resolvable:$true] %s1191
        %1194 = dma.hbm_to_vmem [thread:$0]  %s1190, 16, %s1192, [#allocation2]
        %s1195 = sadd.s32 %s57, 67
        %s1196 = sld [smem:[#allocation4 + %s1195]]
        %s1197 = scalar_lea.hbm %s1, %s1196
        %s1198 = scalar_lea.vmem %s55, 67 [#allocation5]
        // Predicated region
        $region281: #{tpu_custom_call.1} parent=11 // pred_check
          _
        $region282: #{tpu_custom_call.1} parent=11 // pred_check_branch
          %1200 = sbr.rel target = $region284
        $region283: #{tpu_custom_call.1} parent=11 // pred_region
          %1201 = sst [smem:[#allocation9]] [#allocation144]
          %1202 = sst [smem:[#allocation10]] [#allocation143]
        $region284: #{tpu_custom_call.1} parent=11 // pred_fallthru
          _
        %1204 = shalt.err (0)
        %s1206 = sshll.u32 %s1197, 4
        %s1207 = int_to_ptr.hbm [resolvable:$true] %s1206
        %s1208 = sshll.u32 %s1198, 4
        %s1209 = int_to_ptr.vmem [resolvable:$true] %s1208
        %1211 = dma.hbm_to_vmem [thread:$0]  %s1207, 16, %s1209, [#allocation2]
        %s1212 = sadd.s32 %s57, 68
        %s1213 = sld [smem:[#allocation4 + %s1212]]
        %s1214 = scalar_lea.hbm %s1, %s1213
        %s1215 = scalar_lea.vmem %s55, 68 [#allocation5]
        // Predicated region
        $region285: #{tpu_custom_call.1} parent=11 // pred_check
          _
        $region286: #{tpu_custom_call.1} parent=11 // pred_check_branch
          %1217 = sbr.rel target = $region288
        $region287: #{tpu_custom_call.1} parent=11 // pred_region
          %1218 = sst [smem:[#allocation9]] [#allocation146]
          %1219 = sst [smem:[#allocation10]] [#allocation145]
        $region288: #{tpu_custom_call.1} parent=11 // pred_fallthru
          _
        %1221 = shalt.err (0)
        %s1223 = sshll.u32 %s1214, 4
        %s1224 = int_to_ptr.hbm [resolvable:$true] %s1223
        %s1225 = sshll.u32 %s1215, 4
        %s1226 = int_to_ptr.vmem [resolvable:$true] %s1225
        %1228 = dma.hbm_to_vmem [thread:$0]  %s1224, 16, %s1226, [#allocation2]
        %s1229 = sadd.s32 %s57, 69
        %s1230 = sld [smem:[#allocation4 + %s1229]]
        %s1231 = scalar_lea.hbm %s1, %s1230
        %s1232 = scalar_lea.vmem %s55, 69 [#allocation5]
        // Predicated region
        $region289: #{tpu_custom_call.1} parent=11 // pred_check
          _
        $region290: #{tpu_custom_call.1} parent=11 // pred_check_branch
          %1234 = sbr.rel target = $region292
        $region291: #{tpu_custom_call.1} parent=11 // pred_region
          %1235 = sst [smem:[#allocation9]] [#allocation148]
          %1236 = sst [smem:[#allocation10]] [#allocation147]
        $region292: #{tpu_custom_call.1} parent=11 // pred_fallthru
          _
        %1238 = shalt.err (0)
        %s1240 = sshll.u32 %s1231, 4
        %s1241 = int_to_ptr.hbm [resolvable:$true] %s1240
        %s1242 = sshll.u32 %s1232, 4
        %s1243 = int_to_ptr.vmem [resolvable:$true] %s1242
        %1245 = dma.hbm_to_vmem [thread:$0]  %s1241, 16, %s1243, [#allocation2]
        %s1246 = sadd.s32 %s57, 70
        %s1247 = sld [smem:[#allocation4 + %s1246]]
        %s1248 = scalar_lea.hbm %s1, %s1247
        %s1249 = scalar_lea.vmem %s55, 70 [#allocation5]
        // Predicated region
        $region293: #{tpu_custom_call.1} parent=11 // pred_check
          _
        $region294: #{tpu_custom_call.1} parent=11 // pred_check_branch
          %1251 = sbr.rel target = $region296
        $region295: #{tpu_custom_call.1} parent=11 // pred_region
          %1252 = sst [smem:[#allocation9]] [#allocation150]
          %1253 = sst [smem:[#allocation10]] [#allocation149]
        $region296: #{tpu_custom_call.1} parent=11 // pred_fallthru
          _
        %1255 = shalt.err (0)
        %s1257 = sshll.u32 %s1248, 4
        %s1258 = int_to_ptr.hbm [resolvable:$true] %s1257
        %s1259 = sshll.u32 %s1249, 4
        %s1260 = int_to_ptr.vmem [resolvable:$true] %s1259
        %1262 = dma.hbm_to_vmem [thread:$0]  %s1258, 16, %s1260, [#allocation2]
        %s1263 = sadd.s32 %s57, 71
        %s1264 = sld [smem:[#allocation4 + %s1263]]
        %s1265 = scalar_lea.hbm %s1, %s1264
        %s1266 = scalar_lea.vmem %s55, 71 [#allocation5]
        // Predicated region
        $region297: #{tpu_custom_call.1} parent=11 // pred_check
          _
        $region298: #{tpu_custom_call.1} parent=11 // pred_check_branch
          %1268 = sbr.rel target = $region300
        $region299: #{tpu_custom_call.1} parent=11 // pred_region
          %1269 = sst [smem:[#allocation9]] [#allocation152]
          %1270 = sst [smem:[#allocation10]] [#allocation151]
        $region300: #{tpu_custom_call.1} parent=11 // pred_fallthru
          _
        %1272 = shalt.err (0)
        %s1274 = sshll.u32 %s1265, 4
        %s1275 = int_to_ptr.hbm [resolvable:$true] %s1274
        %s1276 = sshll.u32 %s1266, 4
        %s1277 = int_to_ptr.vmem [resolvable:$true] %s1276
        %1279 = dma.hbm_to_vmem [thread:$0]  %s1275, 16, %s1277, [#allocation2]
        %s1280 = sadd.s32 %s57, 72
        %s1281 = sld [smem:[#allocation4 + %s1280]]
        %s1282 = scalar_lea.hbm %s1, %s1281
        %s1283 = scalar_lea.vmem %s55, 72 [#allocation5]
        // Predicated region
        $region301: #{tpu_custom_call.1} parent=11 // pred_check
          _
        $region302: #{tpu_custom_call.1} parent=11 // pred_check_branch
          %1285 = sbr.rel target = $region304
        $region303: #{tpu_custom_call.1} parent=11 // pred_region
          %1286 = sst [smem:[#allocation9]] [#allocation154]
          %1287 = sst [smem:[#allocation10]] [#allocation153]
        $region304: #{tpu_custom_call.1} parent=11 // pred_fallthru
          _
        %1289 = shalt.err (0)
        %s1291 = sshll.u32 %s1282, 4
        %s1292 = int_to_ptr.hbm [resolvable:$true] %s1291
        %s1293 = sshll.u32 %s1283, 4
        %s1294 = int_to_ptr.vmem [resolvable:$true] %s1293
        %1296 = dma.hbm_to_vmem [thread:$0]  %s1292, 16, %s1294, [#allocation2]
        %s1297 = sadd.s32 %s57, 73
        %s1298 = sld [smem:[#allocation4 + %s1297]]
        %s1299 = scalar_lea.hbm %s1, %s1298
        %s1300 = scalar_lea.vmem %s55, 73 [#allocation5]
        // Predicated region
        $region305: #{tpu_custom_call.1} parent=11 // pred_check
          _
        $region306: #{tpu_custom_call.1} parent=11 // pred_check_branch
          %1302 = sbr.rel target = $region308
        $region307: #{tpu_custom_call.1} parent=11 // pred_region
          %1303 = sst [smem:[#allocation9]] [#allocation156]
          %1304 = sst [smem:[#allocation10]] [#allocation155]
        $region308: #{tpu_custom_call.1} parent=11 // pred_fallthru
          _
        %1306 = shalt.err (0)
        %s1308 = sshll.u32 %s1299, 4
        %s1309 = int_to_ptr.hbm [resolvable:$true] %s1308
        %s1310 = sshll.u32 %s1300, 4
        %s1311 = int_to_ptr.vmem [resolvable:$true] %s1310
        %1313 = dma.hbm_to_vmem [thread:$0]  %s1309, 16, %s1311, [#allocation2]
        %s1314 = sadd.s32 %s57, 74
        %s1315 = sld [smem:[#allocation4 + %s1314]]
        %s1316 = scalar_lea.hbm %s1, %s1315
        %s1317 = scalar_lea.vmem %s55, 74 [#allocation5]
        // Predicated region
        $region309: #{tpu_custom_call.1} parent=11 // pred_check
          _
        $region310: #{tpu_custom_call.1} parent=11 // pred_check_branch
          %1319 = sbr.rel target = $region312
        $region311: #{tpu_custom_call.1} parent=11 // pred_region
          %1320 = sst [smem:[#allocation9]] [#allocation158]
          %1321 = sst [smem:[#allocation10]] [#allocation157]
        $region312: #{tpu_custom_call.1} parent=11 // pred_fallthru
          _
        %1323 = shalt.err (0)
        %s1325 = sshll.u32 %s1316, 4
        %s1326 = int_to_ptr.hbm [resolvable:$true] %s1325
        %s1327 = sshll.u32 %s1317, 4
        %s1328 = int_to_ptr.vmem [resolvable:$true] %s1327
        %1330 = dma.hbm_to_vmem [thread:$0]  %s1326, 16, %s1328, [#allocation2]
        %s1331 = sadd.s32 %s57, 75
        %s1332 = sld [smem:[#allocation4 + %s1331]]
        %s1333 = scalar_lea.hbm %s1, %s1332
        %s1334 = scalar_lea.vmem %s55, 75 [#allocation5]
        // Predicated region
        $region313: #{tpu_custom_call.1} parent=11 // pred_check
          _
        $region314: #{tpu_custom_call.1} parent=11 // pred_check_branch
          %1336 = sbr.rel target = $region316
        $region315: #{tpu_custom_call.1} parent=11 // pred_region
          %1337 = sst [smem:[#allocation9]] [#allocation160]
          %1338 = sst [smem:[#allocation10]] [#allocation159]
        $region316: #{tpu_custom_call.1} parent=11 // pred_fallthru
          _
        %1340 = shalt.err (0)
        %s1342 = sshll.u32 %s1333, 4
        %s1343 = int_to_ptr.hbm [resolvable:$true] %s1342
        %s1344 = sshll.u32 %s1334, 4
        %s1345 = int_to_ptr.vmem [resolvable:$true] %s1344
        %1347 = dma.hbm_to_vmem [thread:$0]  %s1343, 16, %s1345, [#allocation2]
        %s1348 = sadd.s32 %s57, 76
        %s1349 = sld [smem:[#allocation4 + %s1348]]
        %s1350 = scalar_lea.hbm %s1, %s1349
        %s1351 = scalar_lea.vmem %s55, 76 [#allocation5]
        // Predicated region
        $region317: #{tpu_custom_call.1} parent=11 // pred_check
          _
        $region318: #{tpu_custom_call.1} parent=11 // pred_check_branch
          %1353 = sbr.rel target = $region320
        $region319: #{tpu_custom_call.1} parent=11 // pred_region
          %1354 = sst [smem:[#allocation9]] [#allocation162]
          %1355 = sst [smem:[#allocation10]] [#allocation161]
        $region320: #{tpu_custom_call.1} parent=11 // pred_fallthru
          _
        %1357 = shalt.err (0)
        %s1359 = sshll.u32 %s1350, 4
        %s1360 = int_to_ptr.hbm [resolvable:$true] %s1359
        %s1361 = sshll.u32 %s1351, 4
        %s1362 = int_to_ptr.vmem [resolvable:$true] %s1361
        %1364 = dma.hbm_to_vmem [thread:$0]  %s1360, 16, %s1362, [#allocation2]
        %s1365 = sadd.s32 %s57, 77
        %s1366 = sld [smem:[#allocation4 + %s1365]]
        %s1367 = scalar_lea.hbm %s1, %s1366
        %s1368 = scalar_lea.vmem %s55, 77 [#allocation5]
        // Predicated region
        $region321: #{tpu_custom_call.1} parent=11 // pred_check
          _
        $region322: #{tpu_custom_call.1} parent=11 // pred_check_branch
          %1370 = sbr.rel target = $region324
        $region323: #{tpu_custom_call.1} parent=11 // pred_region
          %1371 = sst [smem:[#allocation9]] [#allocation164]
          %1372 = sst [smem:[#allocation10]] [#allocation163]
        $region324: #{tpu_custom_call.1} parent=11 // pred_fallthru
          _
        %1374 = shalt.err (0)
        %s1376 = sshll.u32 %s1367, 4
        %s1377 = int_to_ptr.hbm [resolvable:$true] %s1376
        %s1378 = sshll.u32 %s1368, 4
        %s1379 = int_to_ptr.vmem [resolvable:$true] %s1378
        %1381 = dma.hbm_to_vmem [thread:$0]  %s1377, 16, %s1379, [#allocation2]
        %s1382 = sadd.s32 %s57, 78
        %s1383 = sld [smem:[#allocation4 + %s1382]]
        %s1384 = scalar_lea.hbm %s1, %s1383
        %s1385 = scalar_lea.vmem %s55, 78 [#allocation5]
        // Predicated region
        $region325: #{tpu_custom_call.1} parent=11 // pred_check
          _
        $region326: #{tpu_custom_call.1} parent=11 // pred_check_branch
          %1387 = sbr.rel target = $region328
        $region327: #{tpu_custom_call.1} parent=11 // pred_region
          %1388 = sst [smem:[#allocation9]] [#allocation166]
          %1389 = sst [smem:[#allocation10]] [#allocation165]
        $region328: #{tpu_custom_call.1} parent=11 // pred_fallthru
          _
        %1391 = shalt.err (0)
        %s1393 = sshll.u32 %s1384, 4
        %s1394 = int_to_ptr.hbm [resolvable:$true] %s1393
        %s1395 = sshll.u32 %s1385, 4
        %s1396 = int_to_ptr.vmem [resolvable:$true] %s1395
        %1398 = dma.hbm_to_vmem [thread:$0]  %s1394, 16, %s1396, [#allocation2]
        %s1399 = sadd.s32 %s57, 79
        %s1400 = sld [smem:[#allocation4 + %s1399]]
        %s1401 = scalar_lea.hbm %s1, %s1400
        %s1402 = scalar_lea.vmem %s55, 79 [#allocation5]
        // Predicated region
        $region329: #{tpu_custom_call.1} parent=11 // pred_check
          _
        $region330: #{tpu_custom_call.1} parent=11 // pred_check_branch
          %1404 = sbr.rel target = $region332
        $region331: #{tpu_custom_call.1} parent=11 // pred_region
          %1405 = sst [smem:[#allocation9]] [#allocation168]
          %1406 = sst [smem:[#allocation10]] [#allocation167]
        $region332: #{tpu_custom_call.1} parent=11 // pred_fallthru
          _
        %1408 = shalt.err (0)
        %s1410 = sshll.u32 %s1401, 4
        %s1411 = int_to_ptr.hbm [resolvable:$true] %s1410
        %s1412 = sshll.u32 %s1402, 4
        %s1413 = int_to_ptr.vmem [resolvable:$true] %s1412
        %1415 = dma.hbm_to_vmem [thread:$0]  %s1411, 16, %s1413, [#allocation2]
        %s1416 = sadd.s32 %s57, 80
        %s1417 = sld [smem:[#allocation4 + %s1416]]
        %s1418 = scalar_lea.hbm %s1, %s1417
        %s1419 = scalar_lea.vmem %s55, 80 [#allocation5]
        // Predicated region
        $region333: #{tpu_custom_call.1} parent=11 // pred_check
          _
        $region334: #{tpu_custom_call.1} parent=11 // pred_check_branch
          %1421 = sbr.rel target = $region336
        $region335: #{tpu_custom_call.1} parent=11 // pred_region
          %1422 = sst [smem:[#allocation9]] [#allocation170]
          %1423 = sst [smem:[#allocation10]] [#allocation169]
        $region336: #{tpu_custom_call.1} parent=11 // pred_fallthru
          _
        %1425 = shalt.err (0)
        %s1427 = sshll.u32 %s1418, 4
        %s1428 = int_to_ptr.hbm [resolvable:$true] %s1427
        %s1429 = sshll.u32 %s1419, 4
        %s1430 = int_to_ptr.vmem [resolvable:$true] %s1429
        %1432 = dma.hbm_to_vmem [thread:$0]  %s1428, 16, %s1430, [#allocation2]
        %s1433 = sadd.s32 %s57, 81
        %s1434 = sld [smem:[#allocation4 + %s1433]]
        %s1435 = scalar_lea.hbm %s1, %s1434
        %s1436 = scalar_lea.vmem %s55, 81 [#allocation5]
        // Predicated region
        $region337: #{tpu_custom_call.1} parent=11 // pred_check
          _
        $region338: #{tpu_custom_call.1} parent=11 // pred_check_branch
          %1438 = sbr.rel target = $region340
        $region339: #{tpu_custom_call.1} parent=11 // pred_region
          %1439 = sst [smem:[#allocation9]] [#allocation172]
          %1440 = sst [smem:[#allocation10]] [#allocation171]
        $region340: #{tpu_custom_call.1} parent=11 // pred_fallthru
          _
        %1442 = shalt.err (0)
        %s1444 = sshll.u32 %s1435, 4
        %s1445 = int_to_ptr.hbm [resolvable:$true] %s1444
        %s1446 = sshll.u32 %s1436, 4
        %s1447 = int_to_ptr.vmem [resolvable:$true] %s1446
        %1449 = dma.hbm_to_vmem [thread:$0]  %s1445, 16, %s1447, [#allocation2]
        %s1450 = sadd.s32 %s57, 82
        %s1451 = sld [smem:[#allocation4 + %s1450]]
        %s1452 = scalar_lea.hbm %s1, %s1451
        %s1453 = scalar_lea.vmem %s55, 82 [#allocation5]
        // Predicated region
        $region341: #{tpu_custom_call.1} parent=11 // pred_check
          _
        $region342: #{tpu_custom_call.1} parent=11 // pred_check_branch
          %1455 = sbr.rel target = $region344
        $region343: #{tpu_custom_call.1} parent=11 // pred_region
          %1456 = sst [smem:[#allocation9]] [#allocation174]
          %1457 = sst [smem:[#allocation10]] [#allocation173]
        $region344: #{tpu_custom_call.1} parent=11 // pred_fallthru
          _
        %1459 = shalt.err (0)
        %s1461 = sshll.u32 %s1452, 4
        %s1462 = int_to_ptr.hbm [resolvable:$true] %s1461
        %s1463 = sshll.u32 %s1453, 4
        %s1464 = int_to_ptr.vmem [resolvable:$true] %s1463
        %1466 = dma.hbm_to_vmem [thread:$0]  %s1462, 16, %s1464, [#allocation2]
        %s1467 = sadd.s32 %s57, 83
        %s1468 = sld [smem:[#allocation4 + %s1467]]
        %s1469 = scalar_lea.hbm %s1, %s1468
        %s1470 = scalar_lea.vmem %s55, 83 [#allocation5]
        // Predicated region
        $region345: #{tpu_custom_call.1} parent=11 // pred_check
          _
        $region346: #{tpu_custom_call.1} parent=11 // pred_check_branch
          %1472 = sbr.rel target = $region348
        $region347: #{tpu_custom_call.1} parent=11 // pred_region
          %1473 = sst [smem:[#allocation9]] [#allocation176]
          %1474 = sst [smem:[#allocation10]] [#allocation175]
        $region348: #{tpu_custom_call.1} parent=11 // pred_fallthru
          _
        %1476 = shalt.err (0)
        %s1478 = sshll.u32 %s1469, 4
        %s1479 = int_to_ptr.hbm [resolvable:$true] %s1478
        %s1480 = sshll.u32 %s1470, 4
        %s1481 = int_to_ptr.vmem [resolvable:$true] %s1480
        %1483 = dma.hbm_to_vmem [thread:$0]  %s1479, 16, %s1481, [#allocation2]
        %s1484 = sadd.s32 %s57, 84
        %s1485 = sld [smem:[#allocation4 + %s1484]]
        %s1486 = scalar_lea.hbm %s1, %s1485
        %s1487 = scalar_lea.vmem %s55, 84 [#allocation5]
        // Predicated region
        $region349: #{tpu_custom_call.1} parent=11 // pred_check
          _
        $region350: #{tpu_custom_call.1} parent=11 // pred_check_branch
          %1489 = sbr.rel target = $region352
        $region351: #{tpu_custom_call.1} parent=11 // pred_region
          %1490 = sst [smem:[#allocation9]] [#allocation178]
          %1491 = sst [smem:[#allocation10]] [#allocation177]
        $region352: #{tpu_custom_call.1} parent=11 // pred_fallthru
          _
        %1493 = shalt.err (0)
        %s1495 = sshll.u32 %s1486, 4
        %s1496 = int_to_ptr.hbm [resolvable:$true] %s1495
        %s1497 = sshll.u32 %s1487, 4
        %s1498 = int_to_ptr.vmem [resolvable:$true] %s1497
        %1500 = dma.hbm_to_vmem [thread:$0]  %s1496, 16, %s1498, [#allocation2]
        %s1501 = sadd.s32 %s57, 85
        %s1502 = sld [smem:[#allocation4 + %s1501]]
        %s1503 = scalar_lea.hbm %s1, %s1502
        %s1504 = scalar_lea.vmem %s55, 85 [#allocation5]
        // Predicated region
        $region353: #{tpu_custom_call.1} parent=11 // pred_check
          _
        $region354: #{tpu_custom_call.1} parent=11 // pred_check_branch
          %1506 = sbr.rel target = $region356
        $region355: #{tpu_custom_call.1} parent=11 // pred_region
          %1507 = sst [smem:[#allocation9]] [#allocation180]
          %1508 = sst [smem:[#allocation10]] [#allocation179]
        $region356: #{tpu_custom_call.1} parent=11 // pred_fallthru
          _
        %1510 = shalt.err (0)
        %s1512 = sshll.u32 %s1503, 4
        %s1513 = int_to_ptr.hbm [resolvable:$true] %s1512
        %s1514 = sshll.u32 %s1504, 4
        %s1515 = int_to_ptr.vmem [resolvable:$true] %s1514
        %1517 = dma.hbm_to_vmem [thread:$0]  %s1513, 16, %s1515, [#allocation2]
        %s1518 = sadd.s32 %s57, 86
        %s1519 = sld [smem:[#allocation4 + %s1518]]
        %s1520 = scalar_lea.hbm %s1, %s1519
        %s1521 = scalar_lea.vmem %s55, 86 [#allocation5]
        // Predicated region
        $region357: #{tpu_custom_call.1} parent=11 // pred_check
          _
        $region358: #{tpu_custom_call.1} parent=11 // pred_check_branch
          %1523 = sbr.rel target = $region360
        $region359: #{tpu_custom_call.1} parent=11 // pred_region
          %1524 = sst [smem:[#allocation9]] [#allocation182]
          %1525 = sst [smem:[#allocation10]] [#allocation181]
        $region360: #{tpu_custom_call.1} parent=11 // pred_fallthru
          _
        %1527 = shalt.err (0)
        %s1529 = sshll.u32 %s1520, 4
        %s1530 = int_to_ptr.hbm [resolvable:$true] %s1529
        %s1531 = sshll.u32 %s1521, 4
        %s1532 = int_to_ptr.vmem [resolvable:$true] %s1531
        %1534 = dma.hbm_to_vmem [thread:$0]  %s1530, 16, %s1532, [#allocation2]
        %s1535 = sadd.s32 %s57, 87
        %s1536 = sld [smem:[#allocation4 + %s1535]]
        %s1537 = scalar_lea.hbm %s1, %s1536
        %s1538 = scalar_lea.vmem %s55, 87 [#allocation5]
        // Predicated region
        $region361: #{tpu_custom_call.1} parent=11 // pred_check
          _
        $region362: #{tpu_custom_call.1} parent=11 // pred_check_branch
          %1540 = sbr.rel target = $region364
        $region363: #{tpu_custom_call.1} parent=11 // pred_region
          %1541 = sst [smem:[#allocation9]] [#allocation184]
          %1542 = sst [smem:[#allocation10]] [#allocation183]
        $region364: #{tpu_custom_call.1} parent=11 // pred_fallthru
          _
        %1544 = shalt.err (0)
        %s1546 = sshll.u32 %s1537, 4
        %s1547 = int_to_ptr.hbm [resolvable:$true] %s1546
        %s1548 = sshll.u32 %s1538, 4
        %s1549 = int_to_ptr.vmem [resolvable:$true] %s1548
        %1551 = dma.hbm_to_vmem [thread:$0]  %s1547, 16, %s1549, [#allocation2]
        %s1552 = sadd.s32 %s57, 88
        %s1553 = sld [smem:[#allocation4 + %s1552]]
        %s1554 = scalar_lea.hbm %s1, %s1553
        %s1555 = scalar_lea.vmem %s55, 88 [#allocation5]
        // Predicated region
        $region365: #{tpu_custom_call.1} parent=11 // pred_check
          _
        $region366: #{tpu_custom_call.1} parent=11 // pred_check_branch
          %1557 = sbr.rel target = $region368
        $region367: #{tpu_custom_call.1} parent=11 // pred_region
          %1558 = sst [smem:[#allocation9]] [#allocation186]
          %1559 = sst [smem:[#allocation10]] [#allocation185]
        $region368: #{tpu_custom_call.1} parent=11 // pred_fallthru
          _
        %1561 = shalt.err (0)
        %s1563 = sshll.u32 %s1554, 4
        %s1564 = int_to_ptr.hbm [resolvable:$true] %s1563
        %s1565 = sshll.u32 %s1555, 4
        %s1566 = int_to_ptr.vmem [resolvable:$true] %s1565
        %1568 = dma.hbm_to_vmem [thread:$0]  %s1564, 16, %s1566, [#allocation2]
        %s1569 = sadd.s32 %s57, 89
        %s1570 = sld [smem:[#allocation4 + %s1569]]
        %s1571 = scalar_lea.hbm %s1, %s1570
        %s1572 = scalar_lea.vmem %s55, 89 [#allocation5]
        // Predicated region
        $region369: #{tpu_custom_call.1} parent=11 // pred_check
          _
        $region370: #{tpu_custom_call.1} parent=11 // pred_check_branch
          %1574 = sbr.rel target = $region372
        $region371: #{tpu_custom_call.1} parent=11 // pred_region
          %1575 = sst [smem:[#allocation9]] [#allocation188]
          %1576 = sst [smem:[#allocation10]] [#allocation187]
        $region372: #{tpu_custom_call.1} parent=11 // pred_fallthru
          _
        %1578 = shalt.err (0)
        %s1580 = sshll.u32 %s1571, 4
        %s1581 = int_to_ptr.hbm [resolvable:$true] %s1580
        %s1582 = sshll.u32 %s1572, 4
        %s1583 = int_to_ptr.vmem [resolvable:$true] %s1582
        %1585 = dma.hbm_to_vmem [thread:$0]  %s1581, 16, %s1583, [#allocation2]
        %s1586 = sadd.s32 %s57, 90
        %s1587 = sld [smem:[#allocation4 + %s1586]]
        %s1588 = scalar_lea.hbm %s1, %s1587
        %s1589 = scalar_lea.vmem %s55, 90 [#allocation5]
        // Predicated region
        $region373: #{tpu_custom_call.1} parent=11 // pred_check
          _
        $region374: #{tpu_custom_call.1} parent=11 // pred_check_branch
          %1591 = sbr.rel target = $region376
        $region375: #{tpu_custom_call.1} parent=11 // pred_region
          %1592 = sst [smem:[#allocation9]] [#allocation190]
          %1593 = sst [smem:[#allocation10]] [#allocation189]
        $region376: #{tpu_custom_call.1} parent=11 // pred_fallthru
          _
        %1595 = shalt.err (0)
        %s1597 = sshll.u32 %s1588, 4
        %s1598 = int_to_ptr.hbm [resolvable:$true] %s1597
        %s1599 = sshll.u32 %s1589, 4
        %s1600 = int_to_ptr.vmem [resolvable:$true] %s1599
        %1602 = dma.hbm_to_vmem [thread:$0]  %s1598, 16, %s1600, [#allocation2]
        %s1603 = sadd.s32 %s57, 91
        %s1604 = sld [smem:[#allocation4 + %s1603]]
        %s1605 = scalar_lea.hbm %s1, %s1604
        %s1606 = scalar_lea.vmem %s55, 91 [#allocation5]
        // Predicated region
        $region377: #{tpu_custom_call.1} parent=11 // pred_check
          _
        $region378: #{tpu_custom_call.1} parent=11 // pred_check_branch
          %1608 = sbr.rel target = $region380
        $region379: #{tpu_custom_call.1} parent=11 // pred_region
          %1609 = sst [smem:[#allocation9]] [#allocation192]
          %1610 = sst [smem:[#allocation10]] [#allocation191]
        $region380: #{tpu_custom_call.1} parent=11 // pred_fallthru
          _
        %1612 = shalt.err (0)
        %s1614 = sshll.u32 %s1605, 4
        %s1615 = int_to_ptr.hbm [resolvable:$true] %s1614
        %s1616 = sshll.u32 %s1606, 4
        %s1617 = int_to_ptr.vmem [resolvable:$true] %s1616
        %1619 = dma.hbm_to_vmem [thread:$0]  %s1615, 16, %s1617, [#allocation2]
        %s1620 = sadd.s32 %s57, 92
        %s1621 = sld [smem:[#allocation4 + %s1620]]
        %s1622 = scalar_lea.hbm %s1, %s1621
        %s1623 = scalar_lea.vmem %s55, 92 [#allocation5]
        // Predicated region
        $region381: #{tpu_custom_call.1} parent=11 // pred_check
          _
        $region382: #{tpu_custom_call.1} parent=11 // pred_check_branch
          %1625 = sbr.rel target = $region384
        $region383: #{tpu_custom_call.1} parent=11 // pred_region
          %1626 = sst [smem:[#allocation9]] [#allocation194]
          %1627 = sst [smem:[#allocation10]] [#allocation193]
        $region384: #{tpu_custom_call.1} parent=11 // pred_fallthru
          _
        %1629 = shalt.err (0)
        %s1631 = sshll.u32 %s1622, 4
        %s1632 = int_to_ptr.hbm [resolvable:$true] %s1631
        %s1633 = sshll.u32 %s1623, 4
        %s1634 = int_to_ptr.vmem [resolvable:$true] %s1633
        %1636 = dma.hbm_to_vmem [thread:$0]  %s1632, 16, %s1634, [#allocation2]
        %s1637 = sadd.s32 %s57, 93
        %s1638 = sld [smem:[#allocation4 + %s1637]]
        %s1639 = scalar_lea.hbm %s1, %s1638
        %s1640 = scalar_lea.vmem %s55, 93 [#allocation5]
        // Predicated region
        $region385: #{tpu_custom_call.1} parent=11 // pred_check
          _
        $region386: #{tpu_custom_call.1} parent=11 // pred_check_branch
          %1642 = sbr.rel target = $region388
        $region387: #{tpu_custom_call.1} parent=11 // pred_region
          %1643 = sst [smem:[#allocation9]] [#allocation196]
          %1644 = sst [smem:[#allocation10]] [#allocation195]
        $region388: #{tpu_custom_call.1} parent=11 // pred_fallthru
          _
        %1646 = shalt.err (0)
        %s1648 = sshll.u32 %s1639, 4
        %s1649 = int_to_ptr.hbm [resolvable:$true] %s1648
        %s1650 = sshll.u32 %s1640, 4
        %s1651 = int_to_ptr.vmem [resolvable:$true] %s1650
        %1653 = dma.hbm_to_vmem [thread:$0]  %s1649, 16, %s1651, [#allocation2]
        %s1654 = sadd.s32 %s57, 94
        %s1655 = sld [smem:[#allocation4 + %s1654]]
        %s1656 = scalar_lea.hbm %s1, %s1655
        %s1657 = scalar_lea.vmem %s55, 94 [#allocation5]
        // Predicated region
        $region389: #{tpu_custom_call.1} parent=11 // pred_check
          _
        $region390: #{tpu_custom_call.1} parent=11 // pred_check_branch
          %1659 = sbr.rel target = $region392
        $region391: #{tpu_custom_call.1} parent=11 // pred_region
          %1660 = sst [smem:[#allocation9]] [#allocation198]
          %1661 = sst [smem:[#allocation10]] [#allocation197]
        $region392: #{tpu_custom_call.1} parent=11 // pred_fallthru
          _
        %1663 = shalt.err (0)
        %s1665 = sshll.u32 %s1656, 4
        %s1666 = int_to_ptr.hbm [resolvable:$true] %s1665
        %s1667 = sshll.u32 %s1657, 4
        %s1668 = int_to_ptr.vmem [resolvable:$true] %s1667
        %1670 = dma.hbm_to_vmem [thread:$0]  %s1666, 16, %s1668, [#allocation2]
        %s1671 = sadd.s32 %s57, 95
        %s1672 = sld [smem:[#allocation4 + %s1671]]
        %s1673 = scalar_lea.hbm %s1, %s1672
        %s1674 = scalar_lea.vmem %s55, 95 [#allocation5]
        // Predicated region
        $region393: #{tpu_custom_call.1} parent=11 // pred_check
          _
        $region394: #{tpu_custom_call.1} parent=11 // pred_check_branch
          %1676 = sbr.rel target = $region396
        $region395: #{tpu_custom_call.1} parent=11 // pred_region
          %1677 = sst [smem:[#allocation9]] [#allocation200]
          %1678 = sst [smem:[#allocation10]] [#allocation199]
        $region396: #{tpu_custom_call.1} parent=11 // pred_fallthru
          _
        %1680 = shalt.err (0)
        %s1682 = sshll.u32 %s1673, 4
        %s1683 = int_to_ptr.hbm [resolvable:$true] %s1682
        %s1684 = sshll.u32 %s1674, 4
        %s1685 = int_to_ptr.vmem [resolvable:$true] %s1684
        %1687 = dma.hbm_to_vmem [thread:$0]  %s1683, 16, %s1685, [#allocation2]
        %s1688 = sadd.s32 %s57, 96
        %s1689 = sld [smem:[#allocation4 + %s1688]]
        %s1690 = scalar_lea.hbm %s1, %s1689
        %s1691 = scalar_lea.vmem %s55, 96 [#allocation5]
        // Predicated region
        $region397: #{tpu_custom_call.1} parent=11 // pred_check
          _
        $region398: #{tpu_custom_call.1} parent=11 // pred_check_branch
          %1693 = sbr.rel target = $region400
        $region399: #{tpu_custom_call.1} parent=11 // pred_region
          %1694 = sst [smem:[#allocation9]] [#allocation202]
          %1695 = sst [smem:[#allocation10]] [#allocation201]
        $region400: #{tpu_custom_call.1} parent=11 // pred_fallthru
          _
        %1697 = shalt.err (0)
        %s1699 = sshll.u32 %s1690, 4
        %s1700 = int_to_ptr.hbm [resolvable:$true] %s1699
        %s1701 = sshll.u32 %s1691, 4
        %s1702 = int_to_ptr.vmem [resolvable:$true] %s1701
        %1704 = dma.hbm_to_vmem [thread:$0]  %s1700, 16, %s1702, [#allocation2]
        %s1705 = sadd.s32 %s57, 97
        %s1706 = sld [smem:[#allocation4 + %s1705]]
        %s1707 = scalar_lea.hbm %s1, %s1706
        %s1708 = scalar_lea.vmem %s55, 97 [#allocation5]
        // Predicated region
        $region401: #{tpu_custom_call.1} parent=11 // pred_check
          _
        $region402: #{tpu_custom_call.1} parent=11 // pred_check_branch
          %1710 = sbr.rel target = $region404
        $region403: #{tpu_custom_call.1} parent=11 // pred_region
          %1711 = sst [smem:[#allocation9]] [#allocation204]
          %1712 = sst [smem:[#allocation10]] [#allocation203]
        $region404: #{tpu_custom_call.1} parent=11 // pred_fallthru
          _
        %1714 = shalt.err (0)
        %s1716 = sshll.u32 %s1707, 4
        %s1717 = int_to_ptr.hbm [resolvable:$true] %s1716
        %s1718 = sshll.u32 %s1708, 4
        %s1719 = int_to_ptr.vmem [resolvable:$true] %s1718
        %1721 = dma.hbm_to_vmem [thread:$0]  %s1717, 16, %s1719, [#allocation2]
        %s1722 = sadd.s32 %s57, 98
        %s1723 = sld [smem:[#allocation4 + %s1722]]
        %s1724 = scalar_lea.hbm %s1, %s1723
        %s1725 = scalar_lea.vmem %s55, 98 [#allocation5]
        // Predicated region
        $region405: #{tpu_custom_call.1} parent=11 // pred_check
          _
        $region406: #{tpu_custom_call.1} parent=11 // pred_check_branch
          %1727 = sbr.rel target = $region408
        $region407: #{tpu_custom_call.1} parent=11 // pred_region
          %1728 = sst [smem:[#allocation9]] [#allocation206]
          %1729 = sst [smem:[#allocation10]] [#allocation205]
        $region408: #{tpu_custom_call.1} parent=11 // pred_fallthru
          _
        %1731 = shalt.err (0)
        %s1733 = sshll.u32 %s1724, 4
        %s1734 = int_to_ptr.hbm [resolvable:$true] %s1733
        %s1735 = sshll.u32 %s1725, 4
        %s1736 = int_to_ptr.vmem [resolvable:$true] %s1735
        %1738 = dma.hbm_to_vmem [thread:$0]  %s1734, 16, %s1736, [#allocation2]
        %s1739 = sadd.s32 %s57, 99
        %s1740 = sld [smem:[#allocation4 + %s1739]]
        %s1741 = scalar_lea.hbm %s1, %s1740
        %s1742 = scalar_lea.vmem %s55, 99 [#allocation5]
        // Predicated region
        $region409: #{tpu_custom_call.1} parent=11 // pred_check
          _
        $region410: #{tpu_custom_call.1} parent=11 // pred_check_branch
          %1744 = sbr.rel target = $region412
        $region411: #{tpu_custom_call.1} parent=11 // pred_region
          %1745 = sst [smem:[#allocation9]] [#allocation208]
          %1746 = sst [smem:[#allocation10]] [#allocation207]
        $region412: #{tpu_custom_call.1} parent=11 // pred_fallthru
          _
        %1748 = shalt.err (0)
        %s1750 = sshll.u32 %s1741, 4
        %s1751 = int_to_ptr.hbm [resolvable:$true] %s1750
        %s1752 = sshll.u32 %s1742, 4
        %s1753 = int_to_ptr.vmem [resolvable:$true] %s1752
        %1755 = dma.hbm_to_vmem [thread:$0]  %s1751, 16, %s1753, [#allocation2]
        %s1756 = sadd.s32 %s57, 100
        %s1757 = sld [smem:[#allocation4 + %s1756]]
        %s1758 = scalar_lea.hbm %s1, %s1757
        %s1759 = scalar_lea.vmem %s55, 100 [#allocation5]
        // Predicated region
        $region413: #{tpu_custom_call.1} parent=11 // pred_check
          _
        $region414: #{tpu_custom_call.1} parent=11 // pred_check_branch
          %1761 = sbr.rel target = $region416
        $region415: #{tpu_custom_call.1} parent=11 // pred_region
          %1762 = sst [smem:[#allocation9]] [#allocation210]
          %1763 = sst [smem:[#allocation10]] [#allocation209]
        $region416: #{tpu_custom_call.1} parent=11 // pred_fallthru
          _
        %1765 = shalt.err (0)
        %s1767 = sshll.u32 %s1758, 4
        %s1768 = int_to_ptr.hbm [resolvable:$true] %s1767
        %s1769 = sshll.u32 %s1759, 4
        %s1770 = int_to_ptr.vmem [resolvable:$true] %s1769
        %1772 = dma.hbm_to_vmem [thread:$0]  %s1768, 16, %s1770, [#allocation2]
        %s1773 = sadd.s32 %s57, 101
        %s1774 = sld [smem:[#allocation4 + %s1773]]
        %s1775 = scalar_lea.hbm %s1, %s1774
        %s1776 = scalar_lea.vmem %s55, 101 [#allocation5]
        // Predicated region
        $region417: #{tpu_custom_call.1} parent=11 // pred_check
          _
        $region418: #{tpu_custom_call.1} parent=11 // pred_check_branch
          %1778 = sbr.rel target = $region420
        $region419: #{tpu_custom_call.1} parent=11 // pred_region
          %1779 = sst [smem:[#allocation9]] [#allocation212]
          %1780 = sst [smem:[#allocation10]] [#allocation211]
        $region420: #{tpu_custom_call.1} parent=11 // pred_fallthru
          _
        %1782 = shalt.err (0)
        %s1784 = sshll.u32 %s1775, 4
        %s1785 = int_to_ptr.hbm [resolvable:$true] %s1784
        %s1786 = sshll.u32 %s1776, 4
        %s1787 = int_to_ptr.vmem [resolvable:$true] %s1786
        %1789 = dma.hbm_to_vmem [thread:$0]  %s1785, 16, %s1787, [#allocation2]
        %s1790 = sadd.s32 %s57, 102
        %s1791 = sld [smem:[#allocation4 + %s1790]]
        %s1792 = scalar_lea.hbm %s1, %s1791
        %s1793 = scalar_lea.vmem %s55, 102 [#allocation5]
        // Predicated region
        $region421: #{tpu_custom_call.1} parent=11 // pred_check
          _
        $region422: #{tpu_custom_call.1} parent=11 // pred_check_branch
          %1795 = sbr.rel target = $region424
        $region423: #{tpu_custom_call.1} parent=11 // pred_region
          %1796 = sst [smem:[#allocation9]] [#allocation214]
          %1797 = sst [smem:[#allocation10]] [#allocation213]
        $region424: #{tpu_custom_call.1} parent=11 // pred_fallthru
          _
        %1799 = shalt.err (0)
        %s1801 = sshll.u32 %s1792, 4
        %s1802 = int_to_ptr.hbm [resolvable:$true] %s1801
        %s1803 = sshll.u32 %s1793, 4
        %s1804 = int_to_ptr.vmem [resolvable:$true] %s1803
        %1806 = dma.hbm_to_vmem [thread:$0]  %s1802, 16, %s1804, [#allocation2]
        %s1807 = sadd.s32 %s57, 103
        %s1808 = sld [smem:[#allocation4 + %s1807]]
        %s1809 = scalar_lea.hbm %s1, %s1808
        %s1810 = scalar_lea.vmem %s55, 103 [#allocation5]
        // Predicated region
        $region425: #{tpu_custom_call.1} parent=11 // pred_check
          _
        $region426: #{tpu_custom_call.1} parent=11 // pred_check_branch
          %1812 = sbr.rel target = $region428
        $region427: #{tpu_custom_call.1} parent=11 // pred_region
          %1813 = sst [smem:[#allocation9]] [#allocation216]
          %1814 = sst [smem:[#allocation10]] [#allocation215]
        $region428: #{tpu_custom_call.1} parent=11 // pred_fallthru
          _
        %1816 = shalt.err (0)
        %s1818 = sshll.u32 %s1809, 4
        %s1819 = int_to_ptr.hbm [resolvable:$true] %s1818
        %s1820 = sshll.u32 %s1810, 4
        %s1821 = int_to_ptr.vmem [resolvable:$true] %s1820
        %1823 = dma.hbm_to_vmem [thread:$0]  %s1819, 16, %s1821, [#allocation2]
        %s1824 = sadd.s32 %s57, 104
        %s1825 = sld [smem:[#allocation4 + %s1824]]
        %s1826 = scalar_lea.hbm %s1, %s1825
        %s1827 = scalar_lea.vmem %s55, 104 [#allocation5]
        // Predicated region
        $region429: #{tpu_custom_call.1} parent=11 // pred_check
          _
        $region430: #{tpu_custom_call.1} parent=11 // pred_check_branch
          %1829 = sbr.rel target = $region432
        $region431: #{tpu_custom_call.1} parent=11 // pred_region
          %1830 = sst [smem:[#allocation9]] [#allocation218]
          %1831 = sst [smem:[#allocation10]] [#allocation217]
        $region432: #{tpu_custom_call.1} parent=11 // pred_fallthru
          _
        %1833 = shalt.err (0)
        %s1835 = sshll.u32 %s1826, 4
        %s1836 = int_to_ptr.hbm [resolvable:$true] %s1835
        %s1837 = sshll.u32 %s1827, 4
        %s1838 = int_to_ptr.vmem [resolvable:$true] %s1837
        %1840 = dma.hbm_to_vmem [thread:$0]  %s1836, 16, %s1838, [#allocation2]
        %s1841 = sadd.s32 %s57, 105
        %s1842 = sld [smem:[#allocation4 + %s1841]]
        %s1843 = scalar_lea.hbm %s1, %s1842
        %s1844 = scalar_lea.vmem %s55, 105 [#allocation5]
        // Predicated region
        $region433: #{tpu_custom_call.1} parent=11 // pred_check
          _
        $region434: #{tpu_custom_call.1} parent=11 // pred_check_branch
          %1846 = sbr.rel target = $region436
        $region435: #{tpu_custom_call.1} parent=11 // pred_region
          %1847 = sst [smem:[#allocation9]] [#allocation220]
          %1848 = sst [smem:[#allocation10]] [#allocation219]
        $region436: #{tpu_custom_call.1} parent=11 // pred_fallthru
          _
        %1850 = shalt.err (0)
        %s1852 = sshll.u32 %s1843, 4
        %s1853 = int_to_ptr.hbm [resolvable:$true] %s1852
        %s1854 = sshll.u32 %s1844, 4
        %s1855 = int_to_ptr.vmem [resolvable:$true] %s1854
        %1857 = dma.hbm_to_vmem [thread:$0]  %s1853, 16, %s1855, [#allocation2]
        %s1858 = sadd.s32 %s57, 106
        %s1859 = sld [smem:[#allocation4 + %s1858]]
        %s1860 = scalar_lea.hbm %s1, %s1859
        %s1861 = scalar_lea.vmem %s55, 106 [#allocation5]
        // Predicated region
        $region437: #{tpu_custom_call.1} parent=11 // pred_check
          _
        $region438: #{tpu_custom_call.1} parent=11 // pred_check_branch
          %1863 = sbr.rel target = $region440
        $region439: #{tpu_custom_call.1} parent=11 // pred_region
          %1864 = sst [smem:[#allocation9]] [#allocation222]
          %1865 = sst [smem:[#allocation10]] [#allocation221]
        $region440: #{tpu_custom_call.1} parent=11 // pred_fallthru
          _
        %1867 = shalt.err (0)
        %s1869 = sshll.u32 %s1860, 4
        %s1870 = int_to_ptr.hbm [resolvable:$true] %s1869
        %s1871 = sshll.u32 %s1861, 4
        %s1872 = int_to_ptr.vmem [resolvable:$true] %s1871
        %1874 = dma.hbm_to_vmem [thread:$0]  %s1870, 16, %s1872, [#allocation2]
        %s1875 = sadd.s32 %s57, 107
        %s1876 = sld [smem:[#allocation4 + %s1875]]
        %s1877 = scalar_lea.hbm %s1, %s1876
        %s1878 = scalar_lea.vmem %s55, 107 [#allocation5]
        // Predicated region
        $region441: #{tpu_custom_call.1} parent=11 // pred_check
          _
        $region442: #{tpu_custom_call.1} parent=11 // pred_check_branch
          %1880 = sbr.rel target = $region444
        $region443: #{tpu_custom_call.1} parent=11 // pred_region
          %1881 = sst [smem:[#allocation9]] [#allocation224]
          %1882 = sst [smem:[#allocation10]] [#allocation223]
        $region444: #{tpu_custom_call.1} parent=11 // pred_fallthru
          _
        %1884 = shalt.err (0)
        %s1886 = sshll.u32 %s1877, 4
        %s1887 = int_to_ptr.hbm [resolvable:$true] %s1886
        %s1888 = sshll.u32 %s1878, 4
        %s1889 = int_to_ptr.vmem [resolvable:$true] %s1888
        %1891 = dma.hbm_to_vmem [thread:$0]  %s1887, 16, %s1889, [#allocation2]
        %s1892 = sadd.s32 %s57, 108
        %s1893 = sld [smem:[#allocation4 + %s1892]]
        %s1894 = scalar_lea.hbm %s1, %s1893
        %s1895 = scalar_lea.vmem %s55, 108 [#allocation5]
        // Predicated region
        $region445: #{tpu_custom_call.1} parent=11 // pred_check
          _
        $region446: #{tpu_custom_call.1} parent=11 // pred_check_branch
          %1897 = sbr.rel target = $region448
        $region447: #{tpu_custom_call.1} parent=11 // pred_region
          %1898 = sst [smem:[#allocation9]] [#allocation226]
          %1899 = sst [smem:[#allocation10]] [#allocation225]
        $region448: #{tpu_custom_call.1} parent=11 // pred_fallthru
          _
        %1901 = shalt.err (0)
        %s1903 = sshll.u32 %s1894, 4
        %s1904 = int_to_ptr.hbm [resolvable:$true] %s1903
        %s1905 = sshll.u32 %s1895, 4
        %s1906 = int_to_ptr.vmem [resolvable:$true] %s1905
        %1908 = dma.hbm_to_vmem [thread:$0]  %s1904, 16, %s1906, [#allocation2]
        %s1909 = sadd.s32 %s57, 109
        %s1910 = sld [smem:[#allocation4 + %s1909]]
        %s1911 = scalar_lea.hbm %s1, %s1910
        %s1912 = scalar_lea.vmem %s55, 109 [#allocation5]
        // Predicated region
        $region449: #{tpu_custom_call.1} parent=11 // pred_check
          _
        $region450: #{tpu_custom_call.1} parent=11 // pred_check_branch
          %1914 = sbr.rel target = $region452
        $region451: #{tpu_custom_call.1} parent=11 // pred_region
          %1915 = sst [smem:[#allocation9]] [#allocation228]
          %1916 = sst [smem:[#allocation10]] [#allocation227]
        $region452: #{tpu_custom_call.1} parent=11 // pred_fallthru
          _
        %1918 = shalt.err (0)
        %s1920 = sshll.u32 %s1911, 4
        %s1921 = int_to_ptr.hbm [resolvable:$true] %s1920
        %s1922 = sshll.u32 %s1912, 4
        %s1923 = int_to_ptr.vmem [resolvable:$true] %s1922
        %1925 = dma.hbm_to_vmem [thread:$0]  %s1921, 16, %s1923, [#allocation2]
        %s1926 = sadd.s32 %s57, 110
        %s1927 = sld [smem:[#allocation4 + %s1926]]
        %s1928 = scalar_lea.hbm %s1, %s1927
        %s1929 = scalar_lea.vmem %s55, 110 [#allocation5]
        // Predicated region
        $region453: #{tpu_custom_call.1} parent=11 // pred_check
          _
        $region454: #{tpu_custom_call.1} parent=11 // pred_check_branch
          %1931 = sbr.rel target = $region456
        $region455: #{tpu_custom_call.1} parent=11 // pred_region
          %1932 = sst [smem:[#allocation9]] [#allocation230]
          %1933 = sst [smem:[#allocation10]] [#allocation229]
        $region456: #{tpu_custom_call.1} parent=11 // pred_fallthru
          _
        %1935 = shalt.err (0)
        %s1937 = sshll.u32 %s1928, 4
        %s1938 = int_to_ptr.hbm [resolvable:$true] %s1937
        %s1939 = sshll.u32 %s1929, 4
        %s1940 = int_to_ptr.vmem [resolvable:$true] %s1939
        %1942 = dma.hbm_to_vmem [thread:$0]  %s1938, 16, %s1940, [#allocation2]
        %s1943 = sadd.s32 %s57, 111
        %s1944 = sld [smem:[#allocation4 + %s1943]]
        %s1945 = scalar_lea.hbm %s1, %s1944
        %s1946 = scalar_lea.vmem %s55, 111 [#allocation5]
        // Predicated region
        $region457: #{tpu_custom_call.1} parent=11 // pred_check
          _
        $region458: #{tpu_custom_call.1} parent=11 // pred_check_branch
          %1948 = sbr.rel target = $region460
        $region459: #{tpu_custom_call.1} parent=11 // pred_region
          %1949 = sst [smem:[#allocation9]] [#allocation232]
          %1950 = sst [smem:[#allocation10]] [#allocation231]
        $region460: #{tpu_custom_call.1} parent=11 // pred_fallthru
          _
        %1952 = shalt.err (0)
        %s1954 = sshll.u32 %s1945, 4
        %s1955 = int_to_ptr.hbm [resolvable:$true] %s1954
        %s1956 = sshll.u32 %s1946, 4
        %s1957 = int_to_ptr.vmem [resolvable:$true] %s1956
        %1959 = dma.hbm_to_vmem [thread:$0]  %s1955, 16, %s1957, [#allocation2]
        %s1960 = sadd.s32 %s57, 112
        %s1961 = sld [smem:[#allocation4 + %s1960]]
        %s1962 = scalar_lea.hbm %s1, %s1961
        %s1963 = scalar_lea.vmem %s55, 112 [#allocation5]
        // Predicated region
        $region461: #{tpu_custom_call.1} parent=11 // pred_check
          _
        $region462: #{tpu_custom_call.1} parent=11 // pred_check_branch
          %1965 = sbr.rel target = $region464
        $region463: #{tpu_custom_call.1} parent=11 // pred_region
          %1966 = sst [smem:[#allocation9]] [#allocation234]
          %1967 = sst [smem:[#allocation10]] [#allocation233]
        $region464: #{tpu_custom_call.1} parent=11 // pred_fallthru
          _
        %1969 = shalt.err (0)
        %s1971 = sshll.u32 %s1962, 4
        %s1972 = int_to_ptr.hbm [resolvable:$true] %s1971
        %s1973 = sshll.u32 %s1963, 4
        %s1974 = int_to_ptr.vmem [resolvable:$true] %s1973
        %1976 = dma.hbm_to_vmem [thread:$0]  %s1972, 16, %s1974, [#allocation2]
        %s1977 = sadd.s32 %s57, 113
        %s1978 = sld [smem:[#allocation4 + %s1977]]
        %s1979 = scalar_lea.hbm %s1, %s1978
        %s1980 = scalar_lea.vmem %s55, 113 [#allocation5]
        // Predicated region
        $region465: #{tpu_custom_call.1} parent=11 // pred_check
          _
        $region466: #{tpu_custom_call.1} parent=11 // pred_check_branch
          %1982 = sbr.rel target = $region468
        $region467: #{tpu_custom_call.1} parent=11 // pred_region
          %1983 = sst [smem:[#allocation9]] [#allocation236]
          %1984 = sst [smem:[#allocation10]] [#allocation235]
        $region468: #{tpu_custom_call.1} parent=11 // pred_fallthru
          _
        %1986 = shalt.err (0)
        %s1988 = sshll.u32 %s1979, 4
        %s1989 = int_to_ptr.hbm [resolvable:$true] %s1988
        %s1990 = sshll.u32 %s1980, 4
        %s1991 = int_to_ptr.vmem [resolvable:$true] %s1990
        %1993 = dma.hbm_to_vmem [thread:$0]  %s1989, 16, %s1991, [#allocation2]
        %s1994 = sadd.s32 %s57, 114
        %s1995 = sld [smem:[#allocation4 + %s1994]]
        %s1996 = scalar_lea.hbm %s1, %s1995
        %s1997 = scalar_lea.vmem %s55, 114 [#allocation5]
        // Predicated region
        $region469: #{tpu_custom_call.1} parent=11 // pred_check
          _
        $region470: #{tpu_custom_call.1} parent=11 // pred_check_branch
          %1999 = sbr.rel target = $region472
        $region471: #{tpu_custom_call.1} parent=11 // pred_region
          %2000 = sst [smem:[#allocation9]] [#allocation238]
          %2001 = sst [smem:[#allocation10]] [#allocation237]
        $region472: #{tpu_custom_call.1} parent=11 // pred_fallthru
          _
        %2003 = shalt.err (0)
        %s2005 = sshll.u32 %s1996, 4
        %s2006 = int_to_ptr.hbm [resolvable:$true] %s2005
        %s2007 = sshll.u32 %s1997, 4
        %s2008 = int_to_ptr.vmem [resolvable:$true] %s2007
        %2010 = dma.hbm_to_vmem [thread:$0]  %s2006, 16, %s2008, [#allocation2]
        %s2011 = sadd.s32 %s57, 115
        %s2012 = sld [smem:[#allocation4 + %s2011]]
        %s2013 = scalar_lea.hbm %s1, %s2012
        %s2014 = scalar_lea.vmem %s55, 115 [#allocation5]
        // Predicated region
        $region473: #{tpu_custom_call.1} parent=11 // pred_check
          _
        $region474: #{tpu_custom_call.1} parent=11 // pred_check_branch
          %2016 = sbr.rel target = $region476
        $region475: #{tpu_custom_call.1} parent=11 // pred_region
          %2017 = sst [smem:[#allocation9]] [#allocation240]
          %2018 = sst [smem:[#allocation10]] [#allocation239]
        $region476: #{tpu_custom_call.1} parent=11 // pred_fallthru
          _
        %2020 = shalt.err (0)
        %s2022 = sshll.u32 %s2013, 4
        %s2023 = int_to_ptr.hbm [resolvable:$true] %s2022
        %s2024 = sshll.u32 %s2014, 4
        %s2025 = int_to_ptr.vmem [resolvable:$true] %s2024
        %2027 = dma.hbm_to_vmem [thread:$0]  %s2023, 16, %s2025, [#allocation2]
        %s2028 = sadd.s32 %s57, 116
        %s2029 = sld [smem:[#allocation4 + %s2028]]
        %s2030 = scalar_lea.hbm %s1, %s2029
        %s2031 = scalar_lea.vmem %s55, 116 [#allocation5]
        // Predicated region
        $region477: #{tpu_custom_call.1} parent=11 // pred_check
          _
        $region478: #{tpu_custom_call.1} parent=11 // pred_check_branch
          %2033 = sbr.rel target = $region480
        $region479: #{tpu_custom_call.1} parent=11 // pred_region
          %2034 = sst [smem:[#allocation9]] [#allocation242]
          %2035 = sst [smem:[#allocation10]] [#allocation241]
        $region480: #{tpu_custom_call.1} parent=11 // pred_fallthru
          _
        %2037 = shalt.err (0)
        %s2039 = sshll.u32 %s2030, 4
        %s2040 = int_to_ptr.hbm [resolvable:$true] %s2039
        %s2041 = sshll.u32 %s2031, 4
        %s2042 = int_to_ptr.vmem [resolvable:$true] %s2041
        %2044 = dma.hbm_to_vmem [thread:$0]  %s2040, 16, %s2042, [#allocation2]
        %s2045 = sadd.s32 %s57, 117
        %s2046 = sld [smem:[#allocation4 + %s2045]]
        %s2047 = scalar_lea.hbm %s1, %s2046
        %s2048 = scalar_lea.vmem %s55, 117 [#allocation5]
        // Predicated region
        $region481: #{tpu_custom_call.1} parent=11 // pred_check
          _
        $region482: #{tpu_custom_call.1} parent=11 // pred_check_branch
          %2050 = sbr.rel target = $region484
        $region483: #{tpu_custom_call.1} parent=11 // pred_region
          %2051 = sst [smem:[#allocation9]] [#allocation244]
          %2052 = sst [smem:[#allocation10]] [#allocation243]
        $region484: #{tpu_custom_call.1} parent=11 // pred_fallthru
          _
        %2054 = shalt.err (0)
        %s2056 = sshll.u32 %s2047, 4
        %s2057 = int_to_ptr.hbm [resolvable:$true] %s2056
        %s2058 = sshll.u32 %s2048, 4
        %s2059 = int_to_ptr.vmem [resolvable:$true] %s2058
        %2061 = dma.hbm_to_vmem [thread:$0]  %s2057, 16, %s2059, [#allocation2]
        %s2062 = sadd.s32 %s57, 118
        %s2063 = sld [smem:[#allocation4 + %s2062]]
        %s2064 = scalar_lea.hbm %s1, %s2063
        %s2065 = scalar_lea.vmem %s55, 118 [#allocation5]
        // Predicated region
        $region485: #{tpu_custom_call.1} parent=11 // pred_check
          _
        $region486: #{tpu_custom_call.1} parent=11 // pred_check_branch
          %2067 = sbr.rel target = $region488
        $region487: #{tpu_custom_call.1} parent=11 // pred_region
          %2068 = sst [smem:[#allocation9]] [#allocation246]
          %2069 = sst [smem:[#allocation10]] [#allocation245]
        $region488: #{tpu_custom_call.1} parent=11 // pred_fallthru
          _
        %2071 = shalt.err (0)
        %s2073 = sshll.u32 %s2064, 4
        %s2074 = int_to_ptr.hbm [resolvable:$true] %s2073
        %s2075 = sshll.u32 %s2065, 4
        %s2076 = int_to_ptr.vmem [resolvable:$true] %s2075
        %2078 = dma.hbm_to_vmem [thread:$0]  %s2074, 16, %s2076, [#allocation2]
        %s2079 = sadd.s32 %s57, 119
        %s2080 = sld [smem:[#allocation4 + %s2079]]
        %s2081 = scalar_lea.hbm %s1, %s2080
        %s2082 = scalar_lea.vmem %s55, 119 [#allocation5]
        // Predicated region
        $region489: #{tpu_custom_call.1} parent=11 // pred_check
          _
        $region490: #{tpu_custom_call.1} parent=11 // pred_check_branch
          %2084 = sbr.rel target = $region492
        $region491: #{tpu_custom_call.1} parent=11 // pred_region
          %2085 = sst [smem:[#allocation9]] [#allocation248]
          %2086 = sst [smem:[#allocation10]] [#allocation247]
        $region492: #{tpu_custom_call.1} parent=11 // pred_fallthru
          _
        %2088 = shalt.err (0)
        %s2090 = sshll.u32 %s2081, 4
        %s2091 = int_to_ptr.hbm [resolvable:$true] %s2090
        %s2092 = sshll.u32 %s2082, 4
        %s2093 = int_to_ptr.vmem [resolvable:$true] %s2092
        %2095 = dma.hbm_to_vmem [thread:$0]  %s2091, 16, %s2093, [#allocation2]
        %s2096 = sadd.s32 %s57, 120
        %s2097 = sld [smem:[#allocation4 + %s2096]]
        %s2098 = scalar_lea.hbm %s1, %s2097
        %s2099 = scalar_lea.vmem %s55, 120 [#allocation5]
        // Predicated region
        $region493: #{tpu_custom_call.1} parent=11 // pred_check
          _
        $region494: #{tpu_custom_call.1} parent=11 // pred_check_branch
          %2101 = sbr.rel target = $region496
        $region495: #{tpu_custom_call.1} parent=11 // pred_region
          %2102 = sst [smem:[#allocation9]] [#allocation250]
          %2103 = sst [smem:[#allocation10]] [#allocation249]
        $region496: #{tpu_custom_call.1} parent=11 // pred_fallthru
          _
        %2105 = shalt.err (0)
        %s2107 = sshll.u32 %s2098, 4
        %s2108 = int_to_ptr.hbm [resolvable:$true] %s2107
        %s2109 = sshll.u32 %s2099, 4
        %s2110 = int_to_ptr.vmem [resolvable:$true] %s2109
        %2112 = dma.hbm_to_vmem [thread:$0]  %s2108, 16, %s2110, [#allocation2]
        %s2113 = sadd.s32 %s57, 121
        %s2114 = sld [smem:[#allocation4 + %s2113]]
        %s2115 = scalar_lea.hbm %s1, %s2114
        %s2116 = scalar_lea.vmem %s55, 121 [#allocation5]
        // Predicated region
        $region497: #{tpu_custom_call.1} parent=11 // pred_check
          _
        $region498: #{tpu_custom_call.1} parent=11 // pred_check_branch
          %2118 = sbr.rel target = $region500
        $region499: #{tpu_custom_call.1} parent=11 // pred_region
          %2119 = sst [smem:[#allocation9]] [#allocation252]
          %2120 = sst [smem:[#allocation10]] [#allocation251]
        $region500: #{tpu_custom_call.1} parent=11 // pred_fallthru
          _
        %2122 = shalt.err (0)
        %s2124 = sshll.u32 %s2115, 4
        %s2125 = int_to_ptr.hbm [resolvable:$true] %s2124
        %s2126 = sshll.u32 %s2116, 4
        %s2127 = int_to_ptr.vmem [resolvable:$true] %s2126
        %2129 = dma.hbm_to_vmem [thread:$0]  %s2125, 16, %s2127, [#allocation2]
        %s2130 = sadd.s32 %s57, 122
        %s2131 = sld [smem:[#allocation4 + %s2130]]
        %s2132 = scalar_lea.hbm %s1, %s2131
        %s2133 = scalar_lea.vmem %s55, 122 [#allocation5]
        // Predicated region
        $region501: #{tpu_custom_call.1} parent=11 // pred_check
          _
        $region502: #{tpu_custom_call.1} parent=11 // pred_check_branch
          %2135 = sbr.rel target = $region504
        $region503: #{tpu_custom_call.1} parent=11 // pred_region
          %2136 = sst [smem:[#allocation9]] [#allocation254]
          %2137 = sst [smem:[#allocation10]] [#allocation253]
        $region504: #{tpu_custom_call.1} parent=11 // pred_fallthru
          _
        %2139 = shalt.err (0)
        %s2141 = sshll.u32 %s2132, 4
        %s2142 = int_to_ptr.hbm [resolvable:$true] %s2141
        %s2143 = sshll.u32 %s2133, 4
        %s2144 = int_to_ptr.vmem [resolvable:$true] %s2143
        %2146 = dma.hbm_to_vmem [thread:$0]  %s2142, 16, %s2144, [#allocation2]
        %s2147 = sadd.s32 %s57, 123
        %s2148 = sld [smem:[#allocation4 + %s2147]]
        %s2149 = scalar_lea.hbm %s1, %s2148
        %s2150 = scalar_lea.vmem %s55, 123 [#allocation5]
        // Predicated region
        $region505: #{tpu_custom_call.1} parent=11 // pred_check
          _
        $region506: #{tpu_custom_call.1} parent=11 // pred_check_branch
          %2152 = sbr.rel target = $region508
        $region507: #{tpu_custom_call.1} parent=11 // pred_region
          %2153 = sst [smem:[#allocation9]] [#allocation256]
          %2154 = sst [smem:[#allocation10]] [#allocation255]
        $region508: #{tpu_custom_call.1} parent=11 // pred_fallthru
          _
        %2156 = shalt.err (0)
        %s2158 = sshll.u32 %s2149, 4
        %s2159 = int_to_ptr.hbm [resolvable:$true] %s2158
        %s2160 = sshll.u32 %s2150, 4
        %s2161 = int_to_ptr.vmem [resolvable:$true] %s2160
        %2163 = dma.hbm_to_vmem [thread:$0]  %s2159, 16, %s2161, [#allocation2]
        %s2164 = sadd.s32 %s57, 124
        %s2165 = sld [smem:[#allocation4 + %s2164]]
        %s2166 = scalar_lea.hbm %s1, %s2165
        %s2167 = scalar_lea.vmem %s55, 124 [#allocation5]
        // Predicated region
        $region509: #{tpu_custom_call.1} parent=11 // pred_check
          _
        $region510: #{tpu_custom_call.1} parent=11 // pred_check_branch
          %2169 = sbr.rel target = $region512
        $region511: #{tpu_custom_call.1} parent=11 // pred_region
          %2170 = sst [smem:[#allocation9]] [#allocation258]
          %2171 = sst [smem:[#allocation10]] [#allocation257]
        $region512: #{tpu_custom_call.1} parent=11 // pred_fallthru
          _
        %2173 = shalt.err (0)
        %s2175 = sshll.u32 %s2166, 4
        %s2176 = int_to_ptr.hbm [resolvable:$true] %s2175
        %s2177 = sshll.u32 %s2167, 4
        %s2178 = int_to_ptr.vmem [resolvable:$true] %s2177
        %2180 = dma.hbm_to_vmem [thread:$0]  %s2176, 16, %s2178, [#allocation2]
        %s2181 = sadd.s32 %s57, 125
        %s2182 = sld [smem:[#allocation4 + %s2181]]
        %s2183 = scalar_lea.hbm %s1, %s2182
        %s2184 = scalar_lea.vmem %s55, 125 [#allocation5]
        // Predicated region
        $region513: #{tpu_custom_call.1} parent=11 // pred_check
          _
        $region514: #{tpu_custom_call.1} parent=11 // pred_check_branch
          %2186 = sbr.rel target = $region516
        $region515: #{tpu_custom_call.1} parent=11 // pred_region
          %2187 = sst [smem:[#allocation9]] [#allocation260]
          %2188 = sst [smem:[#allocation10]] [#allocation259]
        $region516: #{tpu_custom_call.1} parent=11 // pred_fallthru
          _
        %2190 = shalt.err (0)
        %s2192 = sshll.u32 %s2183, 4
        %s2193 = int_to_ptr.hbm [resolvable:$true] %s2192
        %s2194 = sshll.u32 %s2184, 4
        %s2195 = int_to_ptr.vmem [resolvable:$true] %s2194
        %2197 = dma.hbm_to_vmem [thread:$0]  %s2193, 16, %s2195, [#allocation2]
        %s2198 = sadd.s32 %s57, 126
        %s2199 = sld [smem:[#allocation4 + %s2198]]
        %s2200 = scalar_lea.hbm %s1, %s2199
        %s2201 = scalar_lea.vmem %s55, 126 [#allocation5]
        // Predicated region
        $region517: #{tpu_custom_call.1} parent=11 // pred_check
          _
        $region518: #{tpu_custom_call.1} parent=11 // pred_check_branch
          %2203 = sbr.rel target = $region520
        $region519: #{tpu_custom_call.1} parent=11 // pred_region
          %2204 = sst [smem:[#allocation9]] [#allocation262]
          %2205 = sst [smem:[#allocation10]] [#allocation261]
        $region520: #{tpu_custom_call.1} parent=11 // pred_fallthru
          _
        %2207 = shalt.err (0)
        %s2209 = sshll.u32 %s2200, 4
        %s2210 = int_to_ptr.hbm [resolvable:$true] %s2209
        %s2211 = sshll.u32 %s2201, 4
        %s2212 = int_to_ptr.vmem [resolvable:$true] %s2211
        %2214 = dma.hbm_to_vmem [thread:$0]  %s2210, 16, %s2212, [#allocation2]
        %s2215 = sadd.s32 %s57, 127
        %s2216 = sld [smem:[#allocation4 + %s2215]]
        %s2217 = scalar_lea.hbm %s1, %s2216
        %s2218 = scalar_lea.vmem %s55, 127 [#allocation5]
        // Predicated region
        $region521: #{tpu_custom_call.1} parent=11 // pred_check
          _
        $region522: #{tpu_custom_call.1} parent=11 // pred_check_branch
          %2220 = sbr.rel target = $region524
        $region523: #{tpu_custom_call.1} parent=11 // pred_region
          %2221 = sst [smem:[#allocation9]] [#allocation264]
          %2222 = sst [smem:[#allocation10]] [#allocation263]
        $region524: #{tpu_custom_call.1} parent=11 // pred_fallthru
          _
        %2224 = shalt.err (0)
        %s2226 = sshll.u32 %s2217, 4
        %s2227 = int_to_ptr.hbm [resolvable:$true] %s2226
        %s2228 = sshll.u32 %s2218, 4
        %s2229 = int_to_ptr.vmem [resolvable:$true] %s2228
        %2231 = dma.hbm_to_vmem [thread:$0]  %s2227, 16, %s2229, [#allocation2]
        %2233 = dma.done [#allocation2], 16
        %2235 = dma.done [#allocation2], 16
        %2237 = dma.done [#allocation2], 16
        %2239 = dma.done [#allocation2], 16
        %2241 = dma.done [#allocation2], 16
        %2243 = dma.done [#allocation2], 16
        %2245 = dma.done [#allocation2], 16
        %2247 = dma.done [#allocation2], 16
        %2249 = dma.done [#allocation2], 16
        %2251 = dma.done [#allocation2], 16
        %2253 = dma.done [#allocation2], 16
        %2255 = dma.done [#allocation2], 16
        %2257 = dma.done [#allocation2], 16
        %2259 = dma.done [#allocation2], 16
        %2261 = dma.done [#allocation2], 16
        %2263 = dma.done [#allocation2], 16
        %2265 = dma.done [#allocation2], 16
        %2267 = dma.done [#allocation2], 16
        %2269 = dma.done [#allocation2], 16
        %2271 = dma.done [#allocation2], 16
        %2273 = dma.done [#allocation2], 16
        %2275 = dma.done [#allocation2], 16
        %2277 = dma.done [#allocation2], 16
        %2279 = dma.done [#allocation2], 16
        %2281 = dma.done [#allocation2], 16
        %2283 = dma.done [#allocation2], 16
        %2285 = dma.done [#allocation2], 16
        %2287 = dma.done [#allocation2], 16
        %2289 = dma.done [#allocation2], 16
        %2291 = dma.done [#allocation2], 16
        %2293 = dma.done [#allocation2], 16
        %2295 = dma.done [#allocation2], 16
        %2297 = dma.done [#allocation2], 16
        %2299 = dma.done [#allocation2], 16
        %2301 = dma.done [#allocation2], 16
        %2303 = dma.done [#allocation2], 16
        %2305 = dma.done [#allocation2], 16
        %2307 = dma.done [#allocation2], 16
        %2309 = dma.done [#allocation2], 16
        %2311 = dma.done [#allocation2], 16
        %2313 = dma.done [#allocation2], 16
        %2315 = dma.done [#allocation2], 16
        %2317 = dma.done [#allocation2], 16
        %2319 = dma.done [#allocation2], 16
        %2321 = dma.done [#allocation2], 16
        %2323 = dma.done [#allocation2], 16
        %2325 = dma.done [#allocation2], 16
        %2327 = dma.done [#allocation2], 16
        %2329 = dma.done [#allocation2], 16
        %2331 = dma.done [#allocation2], 16
        %2333 = dma.done [#allocation2], 16
        %2335 = dma.done [#allocation2], 16
        %2337 = dma.done [#allocation2], 16
        %2339 = dma.done [#allocation2], 16
        %2341 = dma.done [#allocation2], 16
        %2343 = dma.done [#allocation2], 16
        %2345 = dma.done [#allocation2], 16
        %2347 = dma.done [#allocation2], 16
        %2349 = dma.done [#allocation2], 16
        %2351 = dma.done [#allocation2], 16
        %2353 = dma.done [#allocation2], 16
        %2355 = dma.done [#allocation2], 16
        %2357 = dma.done [#allocation2], 16
        %2359 = dma.done [#allocation2], 16
        %2361 = dma.done [#allocation2], 16
        %2363 = dma.done [#allocation2], 16
        %2365 = dma.done [#allocation2], 16
        %2367 = dma.done [#allocation2], 16
        %2369 = dma.done [#allocation2], 16
        %2371 = dma.done [#allocation2], 16
        %2373 = dma.done [#allocation2], 16
        %2375 = dma.done [#allocation2], 16
        %2377 = dma.done [#allocation2], 16
        %2379 = dma.done [#allocation2], 16
        %2381 = dma.done [#allocation2], 16
        %2383 = dma.done [#allocation2], 16
        %2385 = dma.done [#allocation2], 16
        %2387 = dma.done [#allocation2], 16
        %2389 = dma.done [#allocation2], 16
        %2391 = dma.done [#allocation2], 16
        %2393 = dma.done [#allocation2], 16
        %2395 = dma.done [#allocation2], 16
        %2397 = dma.done [#allocation2], 16
        %2399 = dma.done [#allocation2], 16
        %2401 = dma.done [#allocation2], 16
        %2403 = dma.done [#allocation2], 16
        %2405 = dma.done [#allocation2], 16
        %2407 = dma.done [#allocation2], 16
        %2409 = dma.done [#allocation2], 16
        %2411 = dma.done [#allocation2], 16
        %2413 = dma.done [#allocation2], 16
        %2415 = dma.done [#allocation2], 16
        %2417 = dma.done [#allocation2], 16
        %2419 = dma.done [#allocation2], 16
        %2421 = dma.done [#allocation2], 16
        %2423 = dma.done [#allocation2], 16
        %2425 = dma.done [#allocation2], 16
        %2427 = dma.done [#allocation2], 16
        %2429 = dma.done [#allocation2], 16
        %2431 = dma.done [#allocation2], 16
        %2433 = dma.done [#allocation2], 16
        %2435 = dma.done [#allocation2], 16
        %2437 = dma.done [#allocation2], 16
        %2439 = dma.done [#allocation2], 16
        %2441 = dma.done [#allocation2], 16
        %2443 = dma.done [#allocation2], 16
        %2445 = dma.done [#allocation2], 16
        %2447 = dma.done [#allocation2], 16
        %2449 = dma.done [#allocation2], 16
        %2451 = dma.done [#allocation2], 16
        %2453 = dma.done [#allocation2], 16
        %2455 = dma.done [#allocation2], 16
        %2457 = dma.done [#allocation2], 16
        %2459 = dma.done [#allocation2], 16
        %2461 = dma.done [#allocation2], 16
        %2463 = dma.done [#allocation2], 16
        %2465 = dma.done [#allocation2], 16
        %2467 = dma.done [#allocation2], 16
        %2469 = dma.done [#allocation2], 16
        %2471 = dma.done [#allocation2], 16
        %2473 = dma.done [#allocation2], 16
        %2475 = dma.done [#allocation2], 16
        %2477 = dma.done [#allocation2], 16
        %2479 = dma.done [#allocation2], 16
        %2481 = dma.done [#allocation2], 16
        %2483 = dma.done [#allocation2], 16
        %2485 = dma.done [#allocation2], 16
        %2487 = dma.done [#allocation2], 16
        %v2488 = vld [vmem:[%s55] sm:$0xff]
        %v2489 = vld [vmem:[%s55 + $0x8] sm:$0xff]
        %v2490 = vld [vmem:[%s55 + $0x10] sm:$0xff]
        %v2491 = vld [vmem:[%s55 + $0x18] sm:$0xff]
        %v2492 = vld [vmem:[%s55 + $0x20] sm:$0xff]
        %v2493 = vld [vmem:[%s55 + $0x28] sm:$0xff]
        %v2494 = vld [vmem:[%s55 + $0x30] sm:$0xff]
        %v2495 = vld [vmem:[%s55 + $0x38] sm:$0xff]
        %v2496 = vld [vmem:[%s55 + $0x40] sm:$0xff]
        %v2497 = vld [vmem:[%s55 + $0x48] sm:$0xff]
        %v2498 = vld [vmem:[%s55 + $0x50] sm:$0xff]
        %v2499 = vld [vmem:[%s55 + $0x58] sm:$0xff]
        %v2500 = vld [vmem:[%s55 + $0x60] sm:$0xff]
        %v2501 = vld [vmem:[%s55 + $0x68] sm:$0xff]
        %v2502 = vld [vmem:[%s55 + $0x70] sm:$0xff]
        %v2503 = vld [vmem:[%s55 + $0x78] sm:$0xff]
        %v2504 = vmul.f32 %v2488, 11.313708
        %v2505 = vmul.f32 %v2489, 11.313708
        %v2506 = vmul.f32 %v2490, 11.313708
        %v2507 = vmul.f32 %v2491, 11.313708
        %v2508 = vmul.f32 %v2492, 11.313708
        %v2509 = vmul.f32 %v2493, 11.313708
        %v2510 = vmul.f32 %v2494, 11.313708
        %v2511 = vmul.f32 %v2495, 11.313708
        %v2512 = vmul.f32 %v2496, 11.313708
        %v2513 = vmul.f32 %v2497, 11.313708
        %v2514 = vmul.f32 %v2498, 11.313708
        %v2515 = vmul.f32 %v2499, 11.313708
        %v2516 = vmul.f32 %v2500, 11.313708
        %v2517 = vmul.f32 %v2501, 11.313708
        %v2518 = vmul.f32 %v2502, 11.313708
        %v2519 = vmul.f32 %v2503, 11.313708
        %2520 = vst [vmem:[%s55] sm:$0xff] %v2504
        %2521 = vst [vmem:[%s55 + $0x8] sm:$0xff] %v2505
        %2522 = vst [vmem:[%s55 + $0x10] sm:$0xff] %v2506
        %2523 = vst [vmem:[%s55 + $0x18] sm:$0xff] %v2507
        %2524 = vst [vmem:[%s55 + $0x20] sm:$0xff] %v2508
        %2525 = vst [vmem:[%s55 + $0x28] sm:$0xff] %v2509
        %2526 = vst [vmem:[%s55 + $0x30] sm:$0xff] %v2510
        %2527 = vst [vmem:[%s55 + $0x38] sm:$0xff] %v2511
        %2528 = vst [vmem:[%s55 + $0x40] sm:$0xff] %v2512
        %2529 = vst [vmem:[%s55 + $0x48] sm:$0xff] %v2513
        %2530 = vst [vmem:[%s55 + $0x50] sm:$0xff] %v2514
        %2531 = vst [vmem:[%s55 + $0x58] sm:$0xff] %v2515
        %2532 = vst [vmem:[%s55 + $0x60] sm:$0xff] %v2516
        %2533 = vst [vmem:[%s55 + $0x68] sm:$0xff] %v2517
        %2534 = vst [vmem:[%s55 + $0x70] sm:$0xff] %v2518
        %2535 = vst [vmem:[%s55 + $0x78] sm:$0xff] %v2519
        %s2536 = sand.u32 %s28, 1
        %s2537 = scalar_lea.sflag [#allocation6], %s2536
        %s2538 = sand.u32 %s28, 1
        %s2539 = smul.addr %s2538, 128
        %s2540 = scalar_lea.vmem [#allocation5], %s2539
        // Predicated region
        $region525: #{tpu_custom_call.1} parent=11 // pred_check
          %p2541 = pneg %p34
        $region526: #{tpu_custom_call.1} parent=11 // pred_check_branch
          %2543 = sbr.rel (%p2541) target = $region528
        $region527: #{tpu_custom_call.1} parent=11 // pred_region
          %s2544 = smul.u32 16, %s19
          %2546 = vsyncadd %s2537, 0
          %s2547 = smul.addr %s2544, 8
          %s2548 = scalar_lea.hbm %s2, %s2547
          %s2549 = sshll.u32 %s2540, 4
          %s2550 = int_to_ptr.vmem [resolvable:$true] %s2549
          %s2551 = sshll.u32 %s2548, 4
          %s2552 = int_to_ptr.hbm [resolvable:$true] %s2551
          %2557 = dma.vmem_to_hbm [thread:$0]  %s2550, 2048, %s2552, %s2537, 128, 128, 8
        $region528: #{tpu_custom_call.1} parent=11 // pred_fallthru
          _
      $region12: #{tpu_custom_call.1} parent=5 // pred_fallthru
        _
      %p2558 = scmp.le.s32.totalorder 1, %s19
      // Predicated region
      $region529: #{tpu_custom_call.1} parent=5 // pred_check
        %p2559 = pneg %p2558
      $region530: #{tpu_custom_call.1} parent=5 // pred_check_branch
        %2561 = sbr.rel (%p2559) target = $region532
      $region531: #{tpu_custom_call.1} parent=5 // pred_region
        %s2562 = ssub.s32 %s19, 1
        // Predicated region
        $region533: #{tpu_custom_call.1} parent=531 // pred_check
          %p2563 = pneg %p40
        $region534: #{tpu_custom_call.1} parent=531 // pred_check_branch
          %2565 = sbr.rel (%p2563) target = $region536
        $region535: #{tpu_custom_call.1} parent=531 // pred_region
          %s2566 = sand.u32 %s31, 1
          %s2567 = scalar_lea.sflag [#allocation6], %s2566
          %s2568 = sand.u32 %s31, 1
          %s2569 = smul.addr %s2568, 128
          %s2570 = scalar_lea.vmem [#allocation5], %s2569
          %2572 = dma.done %s2567, 2048
        $region536: #{tpu_custom_call.1} parent=531 // pred_fallthru
          _
      $region532: #{tpu_custom_call.1} parent=5 // pred_fallthru
        _
    $region6: #{tpu_custom_call.1} parent=1 // loop_footer
      %s23 = sadd.s32 1, %s19
    $region7: #{tpu_custom_call.1} parent=1 // loop_footer_branch
      %18 = sbr.rel target = $region3
    $region8: #{tpu_custom_call.1} parent=1 // loop_exit
      _
    %2573 = vsyncpa [#allocation6], 1
    %s2574 = scalar_lea.sflag [#allocation6], 1
    %2575 = vsyncpa %s2574, 1
  %2576 = vsyncmov [#allocation2]
  %s2577 = vpop.sfrf %2576
  %p2578 = scmp.eq.s32.totalorder %s2577, 0
  %p2579 = pneg %p2578
  %2581 = shalt.err (%p2579)

</llo_original>
